<compile_context>
chip_gen: v7x
topology: tpu7x:2x2x1
jax: 0.10.0
libtpu: 0.0.40
codegen_flags: <defaults>
</compile_context>

<pallas_src>
import functools

import jax
import jax.numpy as jnp
from jax import lax
from jax.experimental import pallas as pl
from jax.experimental.pallas import tpu as pltpu

VMEM = pl.BlockSpec(memory_space=pltpu.MemorySpace.VMEM)
EPS = 1e-5
BF16 = jnp.bfloat16

# Above the 16/32 MiB scoped defaults, below v7x's 64 MiB physical VMEM.
COMPILER_PARAMS = pltpu.CompilerParams(vmem_limit_bytes=48 * 1024 * 1024)

# Stride-2 conv1 taps grouped by the phase buffer they read; the order here fixes
# both the K-concatenation order of the weights (wrapper) and of the LHS slabs
# (kernel).  Group (1,1) also carries the folded 1x1 skip weight along N.
PHASE_GROUPS = (((0, 0), ((0, 0), (0, 2), (2, 0), (2, 2))),
                ((0, 1), ((0, 1), (2, 1))),
                ((1, 0), ((1, 0), (1, 2))),
                ((1, 1), ((1, 1),)))


def _dot_bf16(a, b):
    """MXU matmul with bf16 inputs and f32 accumulation."""
    return jnp.dot(a.astype(BF16), b.astype(BF16),
                   preferred_element_type=jnp.float32)


def _valid_mask(Mi, D, Hg, Wg, Ho, Wo):
    """(Mi, 1) bool: flat-grid row (i + D) is a real output pixel, not ring padding.

    Computed in-kernel from an iota (float div/floor only; exact for these ranges).
    """
    r = lax.broadcasted_iota(jnp.int32, (Mi, 1), 0).astype(jnp.float32) + float(D)
    row = jnp.floor(r / float(Wg) + 5e-3)                       # row in (B*Hg) space
    col = r - row * float(Wg)                                   # column within the row
    y = row - jnp.floor(row / float(Hg) + 5e-3) * float(Hg)     # row within one image
    return (y >= 1.0) & (y <= float(Ho)) & (col >= 1.0) & (col <= float(Wo))


# ----------------------------------------------------------------------------
# Kernel 1: stem  Conv3x3(pad1, stride1, +bias) -> ReLU -> BN -> dense MaxPool
# ----------------------------------------------------------------------------
def _stem_pool_kernel(xf_ref, w_ref, cb_ref, s_ref, b_ref, o_ref, *, Wg, Mi, L):
    D = Wg + 1
    xv = xf_ref[...].astype(jnp.float32)                # (Mg, Cin_pad): one upcast
    slabs = []
    for ki in range(3):
        for kj in range(3):
            start = D + (ki - 1) * Wg + (kj - 1)        # flat shift of tap (ki,kj)
            slabs.append(xv[start:start + Mi, :])
    lhs = jnp.concatenate(slabs, axis=1)                # (Mi, 9*Cin_pad)
    acc = _dot_bf16(lhs, w_ref[...])                    # single K-concatenated matmul
    y = jnp.maximum(acc + cb_ref[...], 0.0)             # conv bias + ReLU
    y = y * s_ref[...] + b_ref[...]                     # folded BatchNorm affine
    # dense 2x2 max pool on the flat grid; the wrapper keeps the stride-2 anchors
    pooled = jnp.maximum(jnp.maximum(y[0:L, :], y[1:L + 1, :]),
                         jnp.maximum(y[Wg:L + Wg, :], y[Wg + 1:L + Wg + 1, :]))
    o_ref[...] = pooled.astype(o_ref.dtype)             # one full-tile store (bf16)


def stem_conv_pool(x, p):
    """x: (B, H, W, 3) NHWC -> ring-padded pooled map (B, H//2+2, W//2+2, 32) bf16."""
    B, H, W, C = x.shape
    assert H % 2 == 0 and W % 2 == 0
    Hg, Wg = H + 2, W + 2
    Mg = B * Hg * Wg
    D = Wg + 1
    Mi = Mg - 2 * D
    L = Mi - Wg - 1
    Cpad = p['w'].shape[0] // 9
    Cout = p['w'].shape[1]

    xp = jnp.pad(x, ((0, 0), (1, 1), (1, 1), (0, Cpad - C))).astype(BF16)
    xf = xp.reshape(Mg, Cpad)                            # flat zero-ring-padded grid

    out = pl.pallas_call(
        functools.partial(_stem_pool_kernel, Wg=Wg, Mi=Mi, L=L),
        out_shape=jax.ShapeDtypeStruct((L, Cout), BF16),
        in_specs=[VMEM] * 5,
        out_specs=VMEM,
        compiler_params=COMPILER_PARAMS,
    )(xf, p['w'], p['conv_b'], p['bn_s'], p['bn_b'])

    # TODO(synk): at production shapes emit the stride-2 anchors (and the ring)
    #             directly from the kernel instead of this XLA glue.
    full = jnp.pad(out, ((D, Mg - D - L), (0, 0)))
    y = full.reshape(B, Hg, Wg, Cout)[:, 1:1 + H:2, 1:1 + W:2, :]   # pool anchors
    return jnp.pad(y, ((0, 0), (1, 1), (1, 1), (0, 0)))             # ring for rb1


# ----------------------------------------------------------------------------
# Kernels 2/3: fused ResidualBlock(stride=2, projection skip) [+ optional tail]
#   conv1(3x3,s2)+BN+ReLU -> conv2(3x3,s1)+BN (+) skip conv1x1(s2)+BN -> ReLU
# ----------------------------------------------------------------------------
def _resblock_body(ph_refs, wg_refs, w2_ref, s1_ref, b1_ref, s2_ref, b2_ref,
                   ss_ref, bs_ref, *, Hg, Wg, Ho, Wo, Mi):
    D = Wg + 1
    cout = w2_ref.shape[-1]

    valid = _valid_mask(Mi, D, Hg, Wg, Ho, Wo)           # (Mi, 1) bool, in-kernel
    mask = valid.astype(jnp.float32)

    # ---- conv1 (3x3, stride 2): one K-concatenated matmul per phase group; the
    #      1x1 stride-2 skip is folded into the (1,1)-phase matmul along N.
    acc = jnp.zeros((Mi, cout), jnp.float32)
    ident = None
    for idx, (pq, taps) in enumerate(PHASE_GROUPS):
        xv = ph_refs[idx][...].astype(jnp.float32)       # (Mg, Cin): single upcast
        slabs = []
        for ki, kj in taps:
            start = D + (ki // 2 - 1) * Wg + (kj // 2 - 1)
            slabs.append(xv[start:start + Mi, :])
        lhs = slabs[0] if len(slabs) == 1 else jnp.concatenate(slabs, axis=1)
        res = _dot_bf16(lhs, wg_refs[idx][...])
        if pq == (1, 1):
            acc = acc + res[:, :cout]
            ident = res[:, cout:]                        # skip conv (1x1, stride 2)
        else:
            acc = acc + res
    h = jnp.maximum(acc * s1_ref[...] + b1_ref[...], 0.0) * mask     # BN + ReLU

    # ---- h with an explicit zero ring (acts as conv2's zero padding); stays on-chip.
    # TODO(synk): at production sizes stage this in a bf16 VMEM scratch.
    zring = jnp.zeros((D, cout), jnp.float32)
    hfull = jnp.concatenate([zring, h, zring], axis=0)   # (Mg, cout)

    # ---- conv2 (3x3, stride 1): single K-concatenated matmul (K = 9*cout)
    slabs2 = []
    for di in range(3):
        for dj in range(3):
            start = D + (di - 1) * Wg + (dj - 1)
            slabs2.append(hfull[start:start + Mi, :])
    acc2 = _dot_bf16(jnp.concatenate(slabs2, axis=1), w2_ref[...])
    acc2 = acc2 * s2_ref[...] + b2_ref[...]              # BN (no ReLU before the add)

    ident = ident * ss_ref[...] + bs_ref[...]            # skip BN
    out = jnp.maximum(acc2 + ident, 0.0)                 # residual add + ReLU
    return out, valid, mask


def _resblock_kernel(ph00, ph01, ph10, ph11, wg00, wg01, wg10, wg11s, w2,
                     s1, b1, s2, b2, ss, bs, o_ref, *, Hg, Wg, Ho, Wo, Mi):
    D = Wg + 1
    out, _, mask = _resblock_body((ph00, ph01, ph10, ph11),
                                  (wg00, wg01, wg10, wg11s), w2,
                                  s1, b1, s2, b2, ss, bs,
                                  Hg=Hg, Wg=Wg, Ho=Ho, Wo=Wo, Mi=Mi)
    # Emit the FULL flat grid with zero rings: reshaped by the wrapper it is exactly
    # the ring-padded NHWC input of the next residual block (no pad/slice glue).
    cout = o_ref.shape[-1]
    zring = jnp.zeros((D, cout), jnp.float32)
    full = jnp.concatenate([zring, out * mask, zring], axis=0)
    o_ref[...] = full.astype(o_ref.dtype)                # one aligned full-tile store


def _resblock_tail_kernel(ph00, ph01, ph10, ph11, wg00, wg01, wg10, wg11s, w2,
                          s1, b1, s2, b2, ss, bs, wh, bh, oc_ref, ot_ref, *,
                          Hg, Wg, Ho, Wo, Mi, B, n_color):
    D = Wg + 1
    out, valid, _ = _resblock_body((ph00, ph01, ph10, ph11),
                                   (wg00, wg01, wg10, wg11s), w2,
                                   s1, b1, s2, b2, ss, bs,
                                   Hg=Hg, Wg=Wg, Ho=Ho, Wo=Wo, Mi=Mi)
    # AdaptiveMaxPool2d((1,1)): out >= 0 post-ReLU, so filling the non-pixel grid
    # positions with -1 keeps the per-image max correct.
    outm = jnp.where(valid, out, -1.0)
    G = Hg * Wg
    feats = []
    for b in range(B):
        lo = max(b * G - D, 0)
        hi = min((b + 1) * G - D, Mi)
        feats.append(jnp.max(outm[lo:hi, :], axis=0, keepdims=True))
    feat = feats[0] if B == 1 else jnp.concatenate(feats, axis=0)     # (B, C)

    z = _dot_bf16(feat, wh[...]) + bh[...]               # both heads in one matmul
    zc = z[:, :n_color]
    m = jnp.max(zc, axis=-1, keepdims=True)
    lse = jnp.log(jnp.sum(jnp.exp(zc - m), axis=-1, keepdims=True)) + m
    oc_ref[...] = zc - lse                               # LogSoftmax (color head)
    ot_ref[...] = z[:, n_color:]                         # type head logits


def _phases_from_padded(xp):
    """xp: ring-padded NHWC (B, Hi+2, Wi+2, Cin) bf16 -> 4 flat stride-2 phase buffers."""
    B, Hp, Wp, Cin = xp.shape
    Hi, Wi = Hp - 2, Wp - 2
    assert Hi % 2 == 0 and Wi % 2 == 0
    Ho, Wo = Hi // 2, Wi // 2
    Hg, Wg = Ho + 2, Wo + 2
    Mg = B * Hg * Wg
    phases = []
    for p in range(2):
        for q in range(2):
            ph = xp[:, p::2, q::2, :]
            ph = jnp.pad(ph, ((0, 0), (0, Hg - ph.shape[1]),
                              (0, Wg - ph.shape[2]), (0, 0)))
            phases.append(ph.reshape(Mg, Cin))
    return phases, (Ho, Wo, Hg, Wg, Mg)


def residual_block(xp, p, *, fuse_tail=False):
    """xp: ring-padded NHWC (B, Hi+2, Wi+2, Cin) bf16.

    fuse_tail=False -> ring-padded NHWC output (B, Hi//2+2, Wi//2+2, Cout) bf16.
    fuse_tail=True  -> ((B, 7) color log-probs, (B, 4) type logits).
    """
    B = xp.shape[0]
    phases, (Ho, Wo, Hg, Wg, Mg) = _phases_from_padded(xp)
    D = Wg + 1
    Mi = Mg - 2 * D
    Cout = p['w2'].shape[-1]

    args = phases + [p['wg00'], p['wg01'], p['wg10'], p['wg11s'], p['w2'],
                     p['bn1_s'], p['bn1_b'], p['bn2_s'], p['bn2_b'],
                     p['bns_s'], p['bns_b']]

    if fuse_tail:
        n_color = 7
        n_all = p['w_heads'].shape[-1]
        args += [p['w_heads'], p['b_heads']]
        return pl.pallas_call(
            functools.partial(_resblock_tail_kernel, Hg=Hg, Wg=Wg, Ho=Ho, Wo=Wo,
                              Mi=Mi, B=B, n_color=n_color),
            out_shape=(jax.ShapeDtypeStruct((B, n_color), jnp.float32),
                       jax.ShapeDtypeStruct((B, n_all - n_color), jnp.float32)),
            in_specs=[VMEM] * len(args),
            out_specs=(VMEM, VMEM),
            compiler_params=COMPILER_PARAMS,
        )(*args)

    out_full = pl.pallas_call(
        functools.partial(_resblock_kernel, Hg=Hg, Wg=Wg, Ho=Ho, Wo=Wo, Mi=Mi),
        out_shape=jax.ShapeDtypeStruct((Mg, Cout), BF16),
        in_specs=[VMEM] * len(args),
        out_specs=VMEM,
        compiler_params=COMPILER_PARAMS,
    )(*args)
    # flat grid with zero rings -> ring-padded NHWC input of the next block
    return out_full.reshape(B, Hg, Wg, Cout)


# ----------------------------------------------------------------------------
# Parameters (random init, PyTorch layouts converted to the kernels' layouts)
# ----------------------------------------------------------------------------
def _bn_fold(key, c):
    # TODO(synk): inference-mode folded affine; train-mode batch stats not modeled.
    k1, k2, k3, k4 = jax.random.split(key, 4)
    gamma = 1.0 + 0.1 * jax.random.normal(k1, (c,), jnp.float32)
    beta = 0.1 * jax.random.normal(k2, (c,), jnp.float32)
    mean = 0.1 * jax.random.normal(k3, (c,), jnp.float32)
    var = jax.random.uniform(k4, (c,), jnp.float32, minval=0.5, maxval=1.5)
    s = gamma / jnp.sqrt(var + EPS)
    b = beta - mean * s
    return s.reshape(1, c), b.reshape(1, c)


def _taps(w):
    """PyTorch (Cout, Cin, 3, 3) -> dict[(ki,kj)] = (Cin, Cout) matmul weights."""
    return {(ki, kj): jnp.transpose(w[:, :, ki, kj], (1, 0))
            for ki in range(3) for kj in range(3)}


def build_params(key):
    keys = jax.random.split(key, 6)
    p = {}

    # stem: Conv2d(3, 32, 3, padding=1, bias=True) -> ReLU -> BatchNorm2d(32)
    w = jax.random.normal(keys[0], (32, 3, 3, 3), jnp.float32) / jnp.sqrt(27.0)
    t = _taps(w)
    wcat = jnp.concatenate(
        [jnp.pad(t[(ki, kj)], ((0, 8 - 3), (0, 0)))        # Cin 3 -> 8 (lane pad)
         for ki in range(3) for kj in range(3)], axis=0)   # (72, 32)
    bn_s, bn_b = _bn_fold(keys[1], 32)
    p['stem'] = dict(w=wcat.astype(BF16),
                     conv_b=0.1 * jax.random.normal(keys[2], (1, 32), jnp.float32),
                     bn_s=bn_s, bn_b=bn_b)

    def res_params(kk, cin, cout):
        k = jax.random.split(kk, 6)
        w1 = jax.random.normal(k[0], (cout, cin, 3, 3), jnp.float32) / jnp.sqrt(cin * 9.0)
        w2 = jax.random.normal(k[1], (cout, cout, 3, 3), jnp.float32) / jnp.sqrt(cout * 9.0)
        ws = jax.random.normal(k[2], (cout, cin, 1, 1), jnp.float32) / jnp.sqrt(float(cin))
        t1, t2 = _taps(w1), _taps(w2)
        ws_m = jnp.transpose(ws[:, :, 0, 0], (1, 0))                     # (cin, cout)
        wg = {pq: jnp.concatenate([t1[tap] for tap in taps], axis=0)     # K-concat
              for pq, taps in PHASE_GROUPS}
        wg11s = jnp.concatenate([wg[(1, 1)], ws_m], axis=1)              # fold skip (N)
        w2cat = jnp.concatenate([t2[(di, dj)] for di in range(3)
                                 for dj in range(3)], axis=0)            # (9*cout, cout)
        bn1_s, bn1_b = _bn_fold(k[3], cout)
        bn2_s, bn2_b = _bn_fold(k[4], cout)
        bns_s, bns_b = _bn_fold(k[5], cout)
        return dict(wg00=wg[(0, 0)].astype(BF16), wg01=wg[(0, 1)].astype(BF16),
                    wg10=wg[(1, 0)].astype(BF16), wg11s=wg11s.astype(BF16),
                    w2=w2cat.astype(BF16),
                    bn1_s=bn1_s, bn1_b=bn1_b, bn2_s=bn2_s, bn2_b=bn2_b,
                    bns_s=bns_s, bns_b=bns_b)

    p['rb1'] = res_params(keys[3], 32, 64)
    p['rb2'] = res_params(keys[4], 64, 128)

    kc1, kc2, kt1, kt2 = jax.random.split(keys[5], 4)
    wc = jax.random.normal(kc1, (128, 7), jnp.float32) / jnp.sqrt(128.0)
    wt = jax.random.normal(kt1, (128, 4), jnp.float32) / jnp.sqrt(128.0)
    bc = 0.1 * jax.random.normal(kc2, (7,), jnp.float32)
    bt = 0.1 * jax.random.normal(kt2, (4,), jnp.float32)
    p['rb2']['w_heads'] = jnp.concatenate([wc, wt], axis=1).astype(BF16)   # (128, 11)
    p['rb2']['b_heads'] = jnp.concatenate([bc, bt]).reshape(1, 11)
    return p


# ----------------------------------------------------------------------------
# Forward pass
# ----------------------------------------------------------------------------
def forward(params, x_nchw):
    x = jnp.transpose(x_nchw, (0, 2, 3, 1)).astype(jnp.float32)   # NCHW -> NHWC
    xp1 = stem_conv_pool(x, params['stem'])                 # (B, H/2+2, W/2+2, 32)
    xp2 = residual_block(xp1, params['rb1'])                # (B, H/4+2, W/4+2, 64)
    return residual_block(xp2, params['rb2'], fuse_tail=True)   # ((B,7), (B,4))


# ----------------------------------------------------------------------------
if __name__ == "__main__":
    key = jax.random.PRNGKey(0)
    kp, kx = jax.random.split(key)
    params = build_params(kp)
    x = jax.random.normal(kx, (2, 3, 16, 16), jnp.float32)   # NCHW like PyTorch

    out_color, out_type = jax.jit(forward)(params, x)
    jax.block_until_ready((out_color, out_type))

    assert out_color.shape == (2, 7) and out_type.shape == (2, 4)
    assert bool(jnp.all(jnp.isfinite(out_color))) and bool(jnp.all(jnp.isfinite(out_type)))
    # log-softmax rows must sum (in prob space) to ~1
    assert jnp.allclose(jnp.sum(jnp.exp(out_color), axis=1), 1.0, atol=1e-4)
    print("KERNEL_OK")
</pallas_src>

<mosaic_0001>
module attributes {stable_mosaic.version = 11 : i64} {
  func.func @_stem_pool_kernel(%arg0: memref<648x8xbf16, #tpu.memory_space<vmem>>, %arg1: memref<72x32xbf16, #tpu.memory_space<vmem>>, %arg2: memref<1x32xf32, #tpu.memory_space<vmem>>, %arg3: memref<1x32xf32, #tpu.memory_space<vmem>>, %arg4: memref<1x32xf32, #tpu.memory_space<vmem>>, %arg5: memref<591x32xbf16, #tpu.memory_space<vmem>>) attributes {dimension_semantics = [], scalar_prefetch = 0 : i64, scratch_operands = 0 : i64, tpu.core_type = #tpu.core_type<tc>} {
    %c0 = arith.constant 0 : index
    %c0_0 = arith.constant 0 : index
    %0 = vector.load %arg0[%c0, %c0_0] : memref<648x8xbf16, #tpu.memory_space<vmem>>, vector<648x8xbf16>
    %1 = arith.extf %0 : vector<648x8xbf16> to vector<648x8xf32>
    %2 = vector.extract_strided_slice %1 {offsets = [0, 0], sizes = [610, 8], strides = [1, 1]} : vector<648x8xf32> to vector<610x8xf32>
    %3 = vector.extract_strided_slice %1 {offsets = [1, 0], sizes = [610, 8], strides = [1, 1]} : vector<648x8xf32> to vector<610x8xf32>
    %4 = vector.extract_strided_slice %1 {offsets = [2, 0], sizes = [610, 8], strides = [1, 1]} : vector<648x8xf32> to vector<610x8xf32>
    %5 = vector.extract_strided_slice %1 {offsets = [18, 0], sizes = [610, 8], strides = [1, 1]} : vector<648x8xf32> to vector<610x8xf32>
    %6 = vector.extract_strided_slice %1 {offsets = [19, 0], sizes = [610, 8], strides = [1, 1]} : vector<648x8xf32> to vector<610x8xf32>
    %7 = vector.extract_strided_slice %1 {offsets = [20, 0], sizes = [610, 8], strides = [1, 1]} : vector<648x8xf32> to vector<610x8xf32>
    %8 = vector.extract_strided_slice %1 {offsets = [36, 0], sizes = [610, 8], strides = [1, 1]} : vector<648x8xf32> to vector<610x8xf32>
    %9 = vector.extract_strided_slice %1 {offsets = [37, 0], sizes = [610, 8], strides = [1, 1]} : vector<648x8xf32> to vector<610x8xf32>
    %10 = vector.extract_strided_slice %1 {offsets = [38, 0], sizes = [610, 8], strides = [1, 1]} : vector<648x8xf32> to vector<610x8xf32>
    %11 = tpu.concatenate %2, %3, %4, %5, %6, %7, %8, %9, %10 in 1 : vector<610x8xf32>, vector<610x8xf32>, vector<610x8xf32>, vector<610x8xf32>, vector<610x8xf32>, vector<610x8xf32>, vector<610x8xf32>, vector<610x8xf32>, vector<610x8xf32> -> vector<610x72xf32>
    %c0_1 = arith.constant 0 : index
    %c0_2 = arith.constant 0 : index
    %12 = vector.load %arg1[%c0_1, %c0_2] : memref<72x32xbf16, #tpu.memory_space<vmem>>, vector<72x32xbf16>
    %13 = arith.truncf %11 : vector<610x72xf32> to vector<610x72xbf16>
    %cst = arith.constant dense<0.000000e+00> : vector<610x32xf32>
    %14 = tpu.matmul %13, %12, %cst {dimension_numbers = #tpu.dot_dimension_numbers<[1], [0], [0], [1], [0, 0, 1, 1], [], []>} : vector<610x72xbf16>, vector<72x32xbf16>, vector<610x32xf32> -> vector<610x32xf32>
    %c0_3 = arith.constant 0 : index
    %c0_4 = arith.constant 0 : index
    %15 = vector.load %arg2[%c0_3, %c0_4] : memref<1x32xf32, #tpu.memory_space<vmem>>, vector<1x32xf32>
    %16 = vector.broadcast %15 : vector<1x32xf32> to vector<610x32xf32>
    %17 = arith.addf %14, %16 : vector<610x32xf32>
    %cst_5 = arith.constant 0.000000e+00 : f32
    %18 = vector.broadcast %cst_5 : f32 to vector<610x32xf32>
    %19 = arith.maximumf %17, %18 : vector<610x32xf32>
    %c0_6 = arith.constant 0 : index
    %c0_7 = arith.constant 0 : index
    %20 = vector.load %arg3[%c0_6, %c0_7] : memref<1x32xf32, #tpu.memory_space<vmem>>, vector<1x32xf32>
    %21 = vector.broadcast %20 : vector<1x32xf32> to vector<610x32xf32>
    %22 = arith.mulf %19, %21 : vector<610x32xf32>
    %c0_8 = arith.constant 0 : index
    %c0_9 = arith.constant 0 : index
    %23 = vector.load %arg4[%c0_8, %c0_9] : memref<1x32xf32, #tpu.memory_space<vmem>>, vector<1x32xf32>
    %24 = vector.broadcast %23 : vector<1x32xf32> to vector<610x32xf32>
    %25 = arith.addf %22, %24 : vector<610x32xf32>
    %26 = vector.extract_strided_slice %25 {offsets = [0, 0], sizes = [591, 32], strides = [1, 1]} : vector<610x32xf32> to vector<591x32xf32>
    %27 = vector.extract_strided_slice %25 {offsets = [1, 0], sizes = [591, 32], strides = [1, 1]} : vector<610x32xf32> to vector<591x32xf32>
    %28 = arith.maximumf %26, %27 : vector<591x32xf32>
    %29 = vector.extract_strided_slice %25 {offsets = [18, 0], sizes = [591, 32], strides = [1, 1]} : vector<610x32xf32> to vector<591x32xf32>
    %30 = vector.extract_strided_slice %25 {offsets = [19, 0], sizes = [591, 32], strides = [1, 1]} : vector<610x32xf32> to vector<591x32xf32>
    %31 = arith.maximumf %29, %30 : vector<591x32xf32>
    %32 = arith.maximumf %28, %31 : vector<591x32xf32>
    %33 = arith.truncf %32 : vector<591x32xf32> to vector<591x32xbf16>
    %c0_10 = arith.constant 0 : index
    %c0_11 = arith.constant 0 : index
    %34 = vector.load %arg5[%c0_10, %c0_11] : memref<591x32xbf16, #tpu.memory_space<vmem>>, vector<591x32xbf16>
    tpu.vector_store %arg5[%c0_10, %c0_11], %33 {strides = array<i32>} : memref<591x32xbf16, #tpu.memory_space<vmem>>, vector<591x32xbf16>,
    return
  }
}

module attributes {stable_mosaic.version = 11 : i64} {
  func.func @_resblock_kernel(%arg0: memref<72x32xbf16, #tpu.memory_space<vmem>>, %arg1: memref<72x32xbf16, #tpu.memory_space<vmem>>, %arg2: memref<72x32xbf16, #tpu.memory_space<vmem>>, %arg3: memref<72x32xbf16, #tpu.memory_space<vmem>>, %arg4: memref<128x64xbf16, #tpu.memory_space<vmem>>, %arg5: memref<64x64xbf16, #tpu.memory_space<vmem>>, %arg6: memref<64x64xbf16, #tpu.memory_space<vmem>>, %arg7: memref<32x128xbf16, #tpu.memory_space<vmem>>, %arg8: memref<576x64xbf16, #tpu.memory_space<vmem>>, %arg9: memref<1x64xf32, #tpu.memory_space<vmem>>, %arg10: memref<1x64xf32, #tpu.memory_space<vmem>>, %arg11: memref<1x64xf32, #tpu.memory_space<vmem>>, %arg12: memref<1x64xf32, #tpu.memory_space<vmem>>, %arg13: memref<1x64xf32, #tpu.memory_space<vmem>>, %arg14: memref<1x64xf32, #tpu.memory_space<vmem>>, %arg15: memref<72x64xbf16, #tpu.memory_space<vmem>>) attributes {dimension_semantics = [], scalar_prefetch = 0 : i64, scratch_operands = 0 : i64, tpu.core_type = #tpu.core_type<tc>} {
    %0 = tpu.iota {dimensions = array<i32: 0>} : vector<58x1xi32>
    %1 = arith.sitofp %0 : vector<58x1xi32> to vector<58x1xf32>
    %cst = arith.constant 7.000000e+00 : f32
    %2 = vector.broadcast %cst : f32 to vector<58x1xf32>
    %3 = arith.addf %1, %2 : vector<58x1xf32>
    %cst_0 = arith.constant 6.000000e+00 : f32
    %4 = vector.broadcast %cst_0 : f32 to vector<58x1xf32>
    %5 = arith.divf %3, %4 : vector<58x1xf32>
    %cst_1 = arith.constant 5.000000e-03 : f32
    %6 = vector.broadcast %cst_1 : f32 to vector<58x1xf32>
    %7 = arith.addf %5, %6 : vector<58x1xf32>
    %8 = math.floor %7 : vector<58x1xf32>
    %cst_2 = arith.constant 6.000000e+00 : f32
    %9 = vector.broadcast %cst_2 : f32 to vector<58x1xf32>
    %10 = arith.mulf %8, %9 : vector<58x1xf32>
    %11 = arith.subf %3, %10 : vector<58x1xf32>
    %cst_3 = arith.constant 6.000000e+00 : f32
    %12 = vector.broadcast %cst_3 : f32 to vector<58x1xf32>
    %13 = arith.divf %8, %12 : vector<58x1xf32>
    %cst_4 = arith.constant 5.000000e-03 : f32
    %14 = vector.broadcast %cst_4 : f32 to vector<58x1xf32>
    %15 = arith.addf %13, %14 : vector<58x1xf32>
    %16 = math.floor %15 : vector<58x1xf32>
    %cst_5 = arith.constant 6.000000e+00 : f32
    %17 = vector.broadcast %cst_5 : f32 to vector<58x1xf32>
    %18 = arith.mulf %16, %17 : vector<58x1xf32>
    %19 = arith.subf %8, %18 : vector<58x1xf32>
    %cst_6 = arith.constant 1.000000e+00 : f32
    %20 = vector.broadcast %cst_6 : f32 to vector<58x1xf32>
    %21 = arith.cmpf oge, %19, %20 : vector<58x1xf32>
    %cst_7 = arith.constant 4.000000e+00 : f32
    %22 = vector.broadcast %cst_7 : f32 to vector<58x1xf32>
    %23 = arith.cmpf ole, %19, %22 : vector<58x1xf32>
    %24 = arith.andi %21, %23 : vector<58x1xi1>
    %cst_8 = arith.constant 1.000000e+00 : f32
    %25 = vector.broadcast %cst_8 : f32 to vector<58x1xf32>
    %26 = arith.cmpf oge, %11, %25 : vector<58x1xf32>
    %27 = arith.andi %24, %26 : vector<58x1xi1>
    %cst_9 = arith.constant 4.000000e+00 : f32
    %28 = vector.broadcast %cst_9 : f32 to vector<58x1xf32>
    %29 = arith.cmpf ole, %11, %28 : vector<58x1xf32>
    %30 = arith.andi %27, %29 : vector<58x1xi1>
    %31 = arith.extui %30 : vector<58x1xi1> to vector<58x1xi32>
    %32 = arith.sitofp %31 : vector<58x1xi32> to vector<58x1xf32>
    %cst_10 = arith.constant 0.000000e+00 : f32
    %33 = vector.broadcast %cst_10 : f32 to vector<58x64xf32>
    %c0 = arith.constant 0 : index
    %c0_11 = arith.constant 0 : index
    %34 = vector.load %arg0[%c0, %c0_11] : memref<72x32xbf16, #tpu.memory_space<vmem>>, vector<72x32xbf16>
    %35 = arith.extf %34 : vector<72x32xbf16> to vector<72x32xf32>
    %36 = vector.extract_strided_slice %35 {offsets = [0, 0], sizes = [58, 32], strides = [1, 1]} : vector<72x32xf32> to vector<58x32xf32>
    %37 = vector.extract_strided_slice %35 {offsets = [1, 0], sizes = [58, 32], strides = [1, 1]} : vector<72x32xf32> to vector<58x32xf32>
    %38 = vector.extract_strided_slice %35 {offsets = [6, 0], sizes = [58, 32], strides = [1, 1]} : vector<72x32xf32> to vector<58x32xf32>
    %39 = vector.extract_strided_slice %35 {offsets = [7, 0], sizes = [58, 32], strides = [1, 1]} : vector<72x32xf32> to vector<58x32xf32>
    %40 = tpu.concatenate %36, %37, %38, %39 in 1 : vector<58x32xf32>, vector<58x32xf32>, vector<58x32xf32>, vector<58x32xf32> -> vector<58x128xf32>
    %c0_12 = arith.constant 0 : index
    %c0_13 = arith.constant 0 : index
    %41 = vector.load %arg4[%c0_12, %c0_13] : memref<128x64xbf16, #tpu.memory_space<vmem>>, vector<128x64xbf16>
    %42 = arith.truncf %40 : vector<58x128xf32> to vector<58x128xbf16>
    %cst_14 = arith.constant dense<0.000000e+00> : vector<58x64xf32>
    %43 = tpu.matmul %42, %41, %cst_14 {dimension_numbers = #tpu.dot_dimension_numbers<[1], [0], [0], [1], [0, 0, 1, 1], [], []>} : vector<58x128xbf16>, vector<128x64xbf16>, vector<58x64xf32> -> vector<58x64xf32>
    %44 = arith.addf %33, %43 : vector<58x64xf32>
    %c0_15 = arith.constant 0 : index
    %c0_16 = arith.constant 0 : index
    %45 = vector.load %arg1[%c0_15, %c0_16] : memref<72x32xbf16, #tpu.memory_space<vmem>>, vector<72x32xbf16>
    %46 = arith.extf %45 : vector<72x32xbf16> to vector<72x32xf32>
    %47 = vector.extract_strided_slice %46 {offsets = [0, 0], sizes = [58, 32], strides = [1, 1]} : vector<72x32xf32> to vector<58x32xf32>
    %48 = vector.extract_strided_slice %46 {offsets = [6, 0], sizes = [58, 32], strides = [1, 1]} : vector<72x32xf32> to vector<58x32xf32>
    %49 = tpu.concatenate %47, %48 in 1 : vector<58x32xf32>, vector<58x32xf32> -> vector<58x64xf32>
    %c0_17 = arith.constant 0 : index
    %c0_18 = arith.constant 0 : index
    %50 = vector.load %arg5[%c0_17, %c0_18] : memref<64x64xbf16, #tpu.memory_space<vmem>>, vector<64x64xbf16>
    %51 = arith.truncf %49 : vector<58x64xf32> to vector<58x64xbf16>
    %cst_19 = arith.constant dense<0.000000e+00> : vector<58x64xf32>
    %52 = tpu.matmul %51, %50, %cst_19 {dimension_numbers = #tpu.dot_dimension_numbers<[1], [0], [0], [1], [0, 0, 1, 1], [], []>} : vector<58x64xbf16>, vector<64x64xbf16>, vector<58x64xf32> -> vector<58x64xf32>
    %53 = arith.addf %44, %52 : vector<58x64xf32>
    %c0_20 = arith.constant 0 : index
    %c0_21 = arith.constant 0 : index
    %54 = vector.load %arg2[%c0_20, %c0_21] : memref<72x32xbf16, #tpu.memory_space<vmem>>, vector<72x32xbf16>
    %55 = arith.extf %54 : vector<72x32xbf16> to vector<72x32xf32>
    %56 = vector.extract_strided_slice %55 {offsets = [0, 0], sizes = [58, 32], strides = [1, 1]} : vector<72x32xf32> to vector<58x32xf32>
    %57 = vector.extract_strided_slice %55 {offsets = [1, 0], sizes = [58, 32], strides = [1, 1]} : vector<72x32xf32> to vector<58x32xf32>
    %58 = tpu.concatenate %56, %57 in 1 : vector<58x32xf32>, vector<58x32xf32> -> vector<58x64xf32>
    %c0_22 = arith.constant 0 : index
    %c0_23 = arith.constant 0 : index
    %59 = vector.load %arg6[%c0_22, %c0_23] : memref<64x64xbf16, #tpu.memory_space<vmem>>, vector<64x64xbf16>
    %60 = arith.truncf %58 : vector<58x64xf32> to vector<58x64xbf16>
    %cst_24 = arith.constant dense<0.000000e+00> : vector<58x64xf32>
    %61 = tpu.matmul %60, %59, %cst_24 {dimension_numbers = #tpu.dot_dimension_numbers<[1], [0], [0], [1], [0, 0, 1, 1], [], []>} : vector<58x64xbf16>, vector<64x64xbf16>, vector<58x64xf32> -> vector<58x64xf32>
    %62 = arith.addf %53, %61 : vector<58x64xf32>
    %c0_25 = arith.constant 0 : index
    %c0_26 = arith.constant 0 : index
    %63 = vector.load %arg3[%c0_25, %c0_26] : memref<72x32xbf16, #tpu.memory_space<vmem>>, vector<72x32xbf16>
    %64 = arith.extf %63 : vector<72x32xbf16> to vector<72x32xf32>
    %65 = vector.extract_strided_slice %64 {offsets = [0, 0], sizes = [58, 32], strides = [1, 1]} : vector<72x32xf32> to vector<58x32xf32>
    %c0_27 = arith.constant 0 : index
    %c0_28 = arith.constant 0 : index
    %66 = vector.load %arg7[%c0_27, %c0_28] : memref<32x128xbf16, #tpu.memory_space<vmem>>, vector<32x128xbf16>
    %67 = arith.truncf %65 : vector<58x32xf32> to vector<58x32xbf16>
    %cst_29 = arith.constant dense<0.000000e+00> : vector<58x128xf32>
    %68 = tpu.matmul %67, %66, %cst_29 {dimension_numbers = #tpu.dot_dimension_numbers<[1], [0], [0], [1], [0, 0, 1, 1], [], []>} : vector<58x32xbf16>, vector<32x128xbf16>, vector<58x128xf32> -> vector<58x128xf32>
    %69 = vector.extract_strided_slice %68 {offsets = [0, 0], sizes = [58, 64], strides = [1, 1]} : vector<58x128xf32> to vector<58x64xf32>
    %70 = arith.addf %62, %69 : vector<58x64xf32>
    %71 = vector.extract_strided_slice %68 {offsets = [0, 64], sizes = [58, 64], strides = [1, 1]} : vector<58x128xf32> to vector<58x64xf32>
    %c0_30 = arith.constant 0 : index
    %c0_31 = arith.constant 0 : index
    %72 = vector.load %arg9[%c0_30, %c0_31] : memref<1x64xf32, #tpu.memory_space<vmem>>, vector<1x64xf32>
    %73 = vector.broadcast %72 : vector<1x64xf32> to vector<58x64xf32>
    %74 = arith.mulf %70, %73 : vector<58x64xf32>
    %c0_32 = arith.constant 0 : index
    %c0_33 = arith.constant 0 : index
    %75 = vector.load %arg10[%c0_32, %c0_33] : memref<1x64xf32, #tpu.memory_space<vmem>>, vector<1x64xf32>
    %76 = vector.broadcast %75 : vector<1x64xf32> to vector<58x64xf32>
    %77 = arith.addf %74, %76 : vector<58x64xf32>
    %cst_34 = arith.constant 0.000000e+00 : f32
    %78 = vector.broadcast %cst_34 : f32 to vector<58x64xf32>
    %79 = arith.maximumf %77, %78 : vector<58x64xf32>
    %80 = vector.broadcast %32 : vector<58x1xf32> to vector<58x64xf32>
    %81 = arith.mulf %79, %80 : vector<58x64xf32>
    %cst_35 = arith.constant 0.000000e+00 : f32
    %82 = vector.broadcast %cst_35 : f32 to vector<7x64xf32>
    %83 = tpu.concatenate %82, %81, %82 in 0 : vector<7x64xf32>, vector<58x64xf32>, vector<7x64xf32> -> vector<72x64xf32>
    %84 = vector.extract_strided_slice %83 {offsets = [0, 0], sizes = [58, 64], strides = [1, 1]} : vector<72x64xf32> to vector<58x64xf32>
    %85 = vector.extract_strided_slice %83 {offsets = [1, 0], sizes = [58, 64], strides = [1, 1]} : vector<72x64xf32> to vector<58x64xf32>
    %86 = vector.extract_strided_slice %83 {offsets = [2, 0], sizes = [58, 64], strides = [1, 1]} : vector<72x64xf32> to vector<58x64xf32>
    %87 = vector.extract_strided_slice %83 {offsets = [6, 0], sizes = [58, 64], strides = [1, 1]} : vector<72x64xf32> to vector<58x64xf32>
    %88 = vector.extract_strided_slice %83 {offsets = [7, 0], sizes = [58, 64], strides = [1, 1]} : vector<72x64xf32> to vector<58x64xf32>
    %89 = vector.extract_strided_slice %83 {offsets = [8, 0], sizes = [58, 64], strides = [1, 1]} : vector<72x64xf32> to vector<58x64xf32>
    %90 = vector.extract_strided_slice %83 {offsets = [12, 0], sizes = [58, 64], strides = [1, 1]} : vector<72x64xf32> to vector<58x64xf32>
    %91 = vector.extract_strided_slice %83 {offsets = [13, 0], sizes = [58, 64], strides = [1, 1]} : vector<72x64xf32> to vector<58x64xf32>
    %92 = vector.extract_strided_slice %83 {offsets = [14, 0], sizes = [58, 64], strides = [1, 1]} : vector<72x64xf32> to vector<58x64xf32>
    %93 = tpu.concatenate %84, %85, %86, %87, %88, %89, %90, %91, %92 in 1 : vector<58x64xf32>, vector<58x64xf32>, vector<58x64xf32>, vector<58x64xf32>, vector<58x64xf32>, vector<58x64xf32>, vector<58x64xf32>, vector<58x64xf32>, vector<58x64xf32> -> vector<58x576xf32>
    %c0_36 = arith.constant 0 : index
    %c0_37 = arith.constant 0 : index
    %94 = vector.load %arg8[%c0_36, %c0_37] : memref<576x64xbf16, #tpu.memory_space<vmem>>, vector<576x64xbf16>
    %95 = arith.truncf %93 : vector<58x576xf32> to vector<58x576xbf16>
    %cst_38 = arith.constant dense<0.000000e+00> : vector<58x64xf32>
    %96 = tpu.matmul %95, %94, %cst_38 {dimension_numbers = #tpu.dot_dimension_numbers<[1], [0], [0], [1], [0, 0, 1, 1], [], []>} : vector<58x576xbf16>, vector<576x64xbf16>, vector<58x64xf32> -> vector<58x64xf32>
    %c0_39 = arith.constant 0 : index
    %c0_40 = arith.constant 0 : index
    %97 = vector.load %arg11[%c0_39, %c0_40] : memref<1x64xf32, #tpu.memory_space<vmem>>, vector<1x64xf32>
    %98 = vector.broadcast %97 : vector<1x64xf32> to vector<58x64xf32>
    %99 = arith.mulf %96, %98 : vector<58x64xf32>
    %c0_41 = arith.constant 0 : index
    %c0_42 = arith.constant 0 : index
    %100 = vector.load %arg12[%c0_41, %c0_42] : memref<1x64xf32, #tpu.memory_space<vmem>>, vector<1x64xf32>
    %101 = vector.broadcast %100 : vector<1x64xf32> to vector<58x64xf32>
    %102 = arith.addf %99, %101 : vector<58x64xf32>
    %c0_43 = arith.constant 0 : index
    %c0_44 = arith.constant 0 : index
    %103 = vector.load %arg13[%c0_43, %c0_44] : memref<1x64xf32, #tpu.memory_space<vmem>>, vector<1x64xf32>
    %104 = vector.broadcast %103 : vector<1x64xf32> to vector<58x64xf32>
    %105 = arith.mulf %71, %104 : vector<58x64xf32>
    %c0_45 = arith.constant 0 : index
    %c0_46 = arith.constant 0 : index
    %106 = vector.load %arg14[%c0_45, %c0_46] : memref<1x64xf32, #tpu.memory_space<vmem>>, vector<1x64xf32>
    %107 = vector.broadcast %106 : vector<1x64xf32> to vector<58x64xf32>
    %108 = arith.addf %105, %107 : vector<58x64xf32>
    %109 = arith.addf %102, %108 : vector<58x64xf32>
    %cst_47 = arith.constant 0.000000e+00 : f32
    %110 = vector.broadcast %cst_47 : f32 to vector<58x64xf32>
    %111 = arith.maximumf %109, %110 : vector<58x64xf32>
    %cst_48 = arith.constant 0.000000e+00 : f32
    %112 = vector.broadcast %cst_48 : f32 to vector<7x64xf32>
    %113 = vector.broadcast %32 : vector<58x1xf32> to vector<58x64xf32>
    %114 = arith.mulf %111, %113 : vector<58x64xf32>
    %115 = tpu.concatenate %112, %114, %112 in 0 : vector<7x64xf32>, vector<58x64xf32>, vector<7x64xf32> -> vector<72x64xf32>
    %116 = arith.truncf %115 : vector<72x64xf32> to vector<72x64xbf16>
    %c0_49 = arith.constant 0 : index
    %c0_50 = arith.constant 0 : index
    %117 = vector.load %arg15[%c0_49, %c0_50] : memref<72x64xbf16, #tpu.memory_space<vmem>>, vector<72x64xbf16>
    tpu.vector_store %arg15[%c0_49, %c0_50], %116 {strides = array<i32>} : memref<72x64xbf16, #tpu.memory_space<vmem>>, vector<72x64xbf16>,
    return
  }
}

module attributes {stable_mosaic.version = 11 : i64} {
  func.func @_resblock_tail_kernel(%arg0: memref<32x64xbf16, #tpu.memory_space<vmem>>, %arg1: memref<32x64xbf16, #tpu.memory_space<vmem>>, %arg2: memref<32x64xbf16, #tpu.memory_space<vmem>>, %arg3: memref<32x64xbf16, #tpu.memory_space<vmem>>, %arg4: memref<256x128xbf16, #tpu.memory_space<vmem>>, %arg5: memref<128x128xbf16, #tpu.memory_space<vmem>>, %arg6: memref<128x128xbf16, #tpu.memory_space<vmem>>, %arg7: memref<64x256xbf16, #tpu.memory_space<vmem>>, %arg8: memref<1152x128xbf16, #tpu.memory_space<vmem>>, %arg9: memref<1x128xf32, #tpu.memory_space<vmem>>, %arg10: memref<1x128xf32, #tpu.memory_space<vmem>>, %arg11: memref<1x128xf32, #tpu.memory_space<vmem>>, %arg12: memref<1x128xf32, #tpu.memory_space<vmem>>, %arg13: memref<1x128xf32, #tpu.memory_space<vmem>>, %arg14: memref<1x128xf32, #tpu.memory_space<vmem>>, %arg15: memref<128x11xbf16, #tpu.memory_space<vmem>>, %arg16: memref<1x11xf32, #tpu.memory_space<vmem>>, %arg17: memref<2x7xf32, #tpu.memory_space<vmem>>, %arg18: memref<2x4xf32, #tpu.memory_space<vmem>>) attributes {dimension_semantics = [], scalar_prefetch = 0 : i64, scratch_operands = 0 : i64, tpu.core_type = #tpu.core_type<tc>} {
    %0 = tpu.iota {dimensions = array<i32: 0>} : vector<22x1xi32>
    %1 = arith.sitofp %0 : vector<22x1xi32> to vector<22x1xf32>
    %cst = arith.constant 5.000000e+00 : f32
    %2 = vector.broadcast %cst : f32 to vector<22x1xf32>
    %3 = arith.addf %1, %2 : vector<22x1xf32>
    %cst_0 = arith.constant 4.000000e+00 : f32
    %4 = vector.broadcast %cst_0 : f32 to vector<22x1xf32>
    %5 = arith.divf %3, %4 : vector<22x1xf32>
    %cst_1 = arith.constant 5.000000e-03 : f32
    %6 = vector.broadcast %cst_1 : f32 to vector<22x1xf32>
    %7 = arith.addf %5, %6 : vector<22x1xf32>
    %8 = math.floor %7 : vector<22x1xf32>
    %cst_2 = arith.constant 4.000000e+00 : f32
    %9 = vector.broadcast %cst_2 : f32 to vector<22x1xf32>
    %10 = arith.mulf %8, %9 : vector<22x1xf32>
    %11 = arith.subf %3, %10 : vector<22x1xf32>
    %cst_3 = arith.constant 4.000000e+00 : f32
    %12 = vector.broadcast %cst_3 : f32 to vector<22x1xf32>
    %13 = arith.divf %8, %12 : vector<22x1xf32>
    %cst_4 = arith.constant 5.000000e-03 : f32
    %14 = vector.broadcast %cst_4 : f32 to vector<22x1xf32>
    %15 = arith.addf %13, %14 : vector<22x1xf32>
    %16 = math.floor %15 : vector<22x1xf32>
    %cst_5 = arith.constant 4.000000e+00 : f32
    %17 = vector.broadcast %cst_5 : f32 to vector<22x1xf32>
    %18 = arith.mulf %16, %17 : vector<22x1xf32>
    %19 = arith.subf %8, %18 : vector<22x1xf32>
    %cst_6 = arith.constant 1.000000e+00 : f32
    %20 = vector.broadcast %cst_6 : f32 to vector<22x1xf32>
    %21 = arith.cmpf oge, %19, %20 : vector<22x1xf32>
    %cst_7 = arith.constant 2.000000e+00 : f32
    %22 = vector.broadcast %cst_7 : f32 to vector<22x1xf32>
    %23 = arith.cmpf ole, %19, %22 : vector<22x1xf32>
    %24 = arith.andi %21, %23 : vector<22x1xi1>
    %cst_8 = arith.constant 1.000000e+00 : f32
    %25 = vector.broadcast %cst_8 : f32 to vector<22x1xf32>
    %26 = arith.cmpf oge, %11, %25 : vector<22x1xf32>
    %27 = arith.andi %24, %26 : vector<22x1xi1>
    %cst_9 = arith.constant 2.000000e+00 : f32
    %28 = vector.broadcast %cst_9 : f32 to vector<22x1xf32>
    %29 = arith.cmpf ole, %11, %28 : vector<22x1xf32>
    %30 = arith.andi %27, %29 : vector<22x1xi1>
    %31 = arith.extui %30 : vector<22x1xi1> to vector<22x1xi32>
    %32 = arith.sitofp %31 : vector<22x1xi32> to vector<22x1xf32>
    %cst_10 = arith.constant 0.000000e+00 : f32
    %33 = vector.broadcast %cst_10 : f32 to vector<22x128xf32>
    %c0 = arith.constant 0 : index
    %c0_11 = arith.constant 0 : index
    %34 = vector.load %arg0[%c0, %c0_11] : memref<32x64xbf16, #tpu.memory_space<vmem>>, vector<32x64xbf16>
    %35 = arith.extf %34 : vector<32x64xbf16> to vector<32x64xf32>
    %36 = vector.extract_strided_slice %35 {offsets = [0, 0], sizes = [22, 64], strides = [1, 1]} : vector<32x64xf32> to vector<22x64xf32>
    %37 = vector.extract_strided_slice %35 {offsets = [1, 0], sizes = [22, 64], strides = [1, 1]} : vector<32x64xf32> to vector<22x64xf32>
    %38 = vector.extract_strided_slice %35 {offsets = [4, 0], sizes = [22, 64], strides = [1, 1]} : vector<32x64xf32> to vector<22x64xf32>
    %39 = vector.extract_strided_slice %35 {offsets = [5, 0], sizes = [22, 64], strides = [1, 1]} : vector<32x64xf32> to vector<22x64xf32>
    %40 = tpu.concatenate %36, %37, %38, %39 in 1 : vector<22x64xf32>, vector<22x64xf32>, vector<22x64xf32>, vector<22x64xf32> -> vector<22x256xf32>
    %c0_12 = arith.constant 0 : index
    %c0_13 = arith.constant 0 : index
    %41 = vector.load %arg4[%c0_12, %c0_13] : memref<256x128xbf16, #tpu.memory_space<vmem>>, vector<256x128xbf16>
    %42 = arith.truncf %40 : vector<22x256xf32> to vector<22x256xbf16>
    %cst_14 = arith.constant dense<0.000000e+00> : vector<22x128xf32>
    %43 = tpu.matmul %42, %41, %cst_14 {dimension_numbers = #tpu.dot_dimension_numbers<[1], [0], [0], [1], [0, 0, 1, 1], [], []>} : vector<22x256xbf16>, vector<256x128xbf16>, vector<22x128xf32> -> vector<22x128xf32>
    %44 = arith.addf %33, %43 : vector<22x128xf32>
    %c0_15 = arith.constant 0 : index
    %c0_16 = arith.constant 0 : index
    %45 = vector.load %arg1[%c0_15, %c0_16] : memref<32x64xbf16, #tpu.memory_space<vmem>>, vector<32x64xbf16>
    %46 = arith.extf %45 : vector<32x64xbf16> to vector<32x64xf32>
    %47 = vector.extract_strided_slice %46 {offsets = [0, 0], sizes = [22, 64], strides = [1, 1]} : vector<32x64xf32> to vector<22x64xf32>
    %48 = vector.extract_strided_slice %46 {offsets = [4, 0], sizes = [22, 64], strides = [1, 1]} : vector<32x64xf32> to vector<22x64xf32>
    %49 = tpu.concatenate %47, %48 in 1 : vector<22x64xf32>, vector<22x64xf32> -> vector<22x128xf32>
    %c0_17 = arith.constant 0 : index
    %c0_18 = arith.constant 0 : index
    %50 = vector.load %arg5[%c0_17, %c0_18] : memref<128x128xbf16, #tpu.memory_space<vmem>>, vector<128x128xbf16>
    %51 = arith.truncf %49 : vector<22x128xf32> to vector<22x128xbf16>
    %cst_19 = arith.constant dense<0.000000e+00> : vector<22x128xf32>
    %52 = tpu.matmul %51, %50, %cst_19 {dimension_numbers = #tpu.dot_dimension_numbers<[1], [0], [0], [1], [0, 0, 1, 1], [], []>} : vector<22x128xbf16>, vector<128x128xbf16>, vector<22x128xf32> -> vector<22x128xf32>
    %53 = arith.addf %44, %52 : vector<22x128xf32>
    %c0_20 = arith.constant 0 : index
    %c0_21 = arith.constant 0 : index
    %54 = vector.load %arg2[%c0_20, %c0_21] : memref<32x64xbf16, #tpu.memory_space<vmem>>, vector<32x64xbf16>
    %55 = arith.extf %54 : vector<32x64xbf16> to vector<32x64xf32>
    %56 = vector.extract_strided_slice %55 {offsets = [0, 0], sizes = [22, 64], strides = [1, 1]} : vector<32x64xf32> to vector<22x64xf32>
    %57 = vector.extract_strided_slice %55 {offsets = [1, 0], sizes = [22, 64], strides = [1, 1]} : vector<32x64xf32> to vector<22x64xf32>
    %58 = tpu.concatenate %56, %57 in 1 : vector<22x64xf32>, vector<22x64xf32> -> vector<22x128xf32>
    %c0_22 = arith.constant 0 : index
    %c0_23 = arith.constant 0 : index
    %59 = vector.load %arg6[%c0_22, %c0_23] : memref<128x128xbf16, #tpu.memory_space<vmem>>, vector<128x128xbf16>
    %60 = arith.truncf %58 : vector<22x128xf32> to vector<22x128xbf16>
    %cst_24 = arith.constant dense<0.000000e+00> : vector<22x128xf32>
    %61 = tpu.matmul %60, %59, %cst_24 {dimension_numbers = #tpu.dot_dimension_numbers<[1], [0], [0], [1], [0, 0, 1, 1], [], []>} : vector<22x128xbf16>, vector<128x128xbf16>, vector<22x128xf32> -> vector<22x128xf32>
    %62 = arith.addf %53, %61 : vector<22x128xf32>
    %c0_25 = arith.constant 0 : index
    %c0_26 = arith.constant 0 : index
    %63 = vector.load %arg3[%c0_25, %c0_26] : memref<32x64xbf16, #tpu.memory_space<vmem>>, vector<32x64xbf16>
    %64 = arith.extf %63 : vector<32x64xbf16> to vector<32x64xf32>
    %65 = vector.extract_strided_slice %64 {offsets = [0, 0], sizes = [22, 64], strides = [1, 1]} : vector<32x64xf32> to vector<22x64xf32>
    %c0_27 = arith.constant 0 : index
    %c0_28 = arith.constant 0 : index
    %66 = vector.load %arg7[%c0_27, %c0_28] : memref<64x256xbf16, #tpu.memory_space<vmem>>, vector<64x256xbf16>
    %67 = arith.truncf %65 : vector<22x64xf32> to vector<22x64xbf16>
    %cst_29 = arith.constant dense<0.000000e+00> : vector<22x256xf32>
    %68 = tpu.matmul %67, %66, %cst_29 {dimension_numbers = #tpu.dot_dimension_numbers<[1], [0], [0], [1], [0, 0, 1, 1], [], []>} : vector<22x64xbf16>, vector<64x256xbf16>, vector<22x256xf32> -> vector<22x256xf32>
    %69 = vector.extract_strided_slice %68 {offsets = [0, 0], sizes = [22, 128], strides = [1, 1]} : vector<22x256xf32> to vector<22x128xf32>
    %70 = arith.addf %62, %69 : vector<22x128xf32>
    %71 = vector.extract_strided_slice %68 {offsets = [0, 128], sizes = [22, 128], strides = [1, 1]} : vector<22x256xf32> to vector<22x128xf32>
    %c0_30 = arith.constant 0 : index
    %c0_31 = arith.constant 0 : index
    %72 = vector.load %arg9[%c0_30, %c0_31] : memref<1x128xf32, #tpu.memory_space<vmem>>, vector<1x128xf32>
    %73 = vector.broadcast %72 : vector<1x128xf32> to vector<22x128xf32>
    %74 = arith.mulf %70, %73 : vector<22x128xf32>
    %c0_32 = arith.constant 0 : index
    %c0_33 = arith.constant 0 : index
    %75 = vector.load %arg10[%c0_32, %c0_33] : memref<1x128xf32, #tpu.memory_space<vmem>>, vector<1x128xf32>
    %76 = vector.broadcast %75 : vector<1x128xf32> to vector<22x128xf32>
    %77 = arith.addf %74, %76 : vector<22x128xf32>
    %cst_34 = arith.constant 0.000000e+00 : f32
    %78 = vector.broadcast %cst_34 : f32 to vector<22x128xf32>
    %79 = arith.maximumf %77, %78 : vector<22x128xf32>
    %80 = vector.broadcast %32 : vector<22x1xf32> to vector<22x128xf32>
    %81 = arith.mulf %79, %80 : vector<22x128xf32>
    %cst_35 = arith.constant 0.000000e+00 : f32
    %82 = vector.broadcast %cst_35 : f32 to vector<5x128xf32>
    %83 = tpu.concatenate %82, %81, %82 in 0 : vector<5x128xf32>, vector<22x128xf32>, vector<5x128xf32> -> vector<32x128xf32>
    %84 = vector.extract_strided_slice %83 {offsets = [0, 0], sizes = [22, 128], strides = [1, 1]} : vector<32x128xf32> to vector<22x128xf32>
    %85 = vector.extract_strided_slice %83 {offsets = [1, 0], sizes = [22, 128], strides = [1, 1]} : vector<32x128xf32> to vector<22x128xf32>
    %86 = vector.extract_strided_slice %83 {offsets = [2, 0], sizes = [22, 128], strides = [1, 1]} : vector<32x128xf32> to vector<22x128xf32>
    %87 = vector.extract_strided_slice %83 {offsets = [4, 0], sizes = [22, 128], strides = [1, 1]} : vector<32x128xf32> to vector<22x128xf32>
    %88 = vector.extract_strided_slice %83 {offsets = [5, 0], sizes = [22, 128], strides = [1, 1]} : vector<32x128xf32> to vector<22x128xf32>
    %89 = vector.extract_strided_slice %83 {offsets = [6, 0], sizes = [22, 128], strides = [1, 1]} : vector<32x128xf32> to vector<22x128xf32>
    %90 = vector.extract_strided_slice %83 {offsets = [8, 0], sizes = [22, 128], strides = [1, 1]} : vector<32x128xf32> to vector<22x128xf32>
    %91 = vector.extract_strided_slice %83 {offsets = [9, 0], sizes = [22, 128], strides = [1, 1]} : vector<32x128xf32> to vector<22x128xf32>
    %92 = vector.extract_strided_slice %83 {offsets = [10, 0], sizes = [22, 128], strides = [1, 1]} : vector<32x128xf32> to vector<22x128xf32>
    %93 = tpu.concatenate %84, %85, %86, %87, %88, %89, %90, %91, %92 in 1 : vector<22x128xf32>, vector<22x128xf32>, vector<22x128xf32>, vector<22x128xf32>, vector<22x128xf32>, vector<22x128xf32>, vector<22x128xf32>, vector<22x128xf32>, vector<22x128xf32> -> vector<22x1152xf32>
    %c0_36 = arith.constant 0 : index
    %c0_37 = arith.constant 0 : index
    %94 = vector.load %arg8[%c0_36, %c0_37] : memref<1152x128xbf16, #tpu.memory_space<vmem>>, vector<1152x128xbf16>
    %95 = arith.truncf %93 : vector<22x1152xf32> to vector<22x1152xbf16>
    %cst_38 = arith.constant dense<0.000000e+00> : vector<22x128xf32>
    %96 = tpu.matmul %95, %94, %cst_38 {dimension_numbers = #tpu.dot_dimension_numbers<[1], [0], [0], [1], [0, 0, 1, 1], [], []>} : vector<22x1152xbf16>, vector<1152x128xbf16>, vector<22x128xf32> -> vector<22x128xf32>
    %c0_39 = arith.constant 0 : index
    %c0_40 = arith.constant 0 : index
    %97 = vector.load %arg11[%c0_39, %c0_40] : memref<1x128xf32, #tpu.memory_space<vmem>>, vector<1x128xf32>
    %98 = vector.broadcast %97 : vector<1x128xf32> to vector<22x128xf32>
    %99 = arith.mulf %96, %98 : vector<22x128xf32>
    %c0_41 = arith.constant 0 : index
    %c0_42 = arith.constant 0 : index
    %100 = vector.load %arg12[%c0_41, %c0_42] : memref<1x128xf32, #tpu.memory_space<vmem>>, vector<1x128xf32>
    %101 = vector.broadcast %100 : vector<1x128xf32> to vector<22x128xf32>
    %102 = arith.addf %99, %101 : vector<22x128xf32>
    %c0_43 = arith.constant 0 : index
    %c0_44 = arith.constant 0 : index
    %103 = vector.load %arg13[%c0_43, %c0_44] : memref<1x128xf32, #tpu.memory_space<vmem>>, vector<1x128xf32>
    %104 = vector.broadcast %103 : vector<1x128xf32> to vector<22x128xf32>
    %105 = arith.mulf %71, %104 : vector<22x128xf32>
    %c0_45 = arith.constant 0 : index
    %c0_46 = arith.constant 0 : index
    %106 = vector.load %arg14[%c0_45, %c0_46] : memref<1x128xf32, #tpu.memory_space<vmem>>, vector<1x128xf32>
    %107 = vector.broadcast %106 : vector<1x128xf32> to vector<22x128xf32>
    %108 = arith.addf %105, %107 : vector<22x128xf32>
    %109 = arith.addf %102, %108 : vector<22x128xf32>
    %cst_47 = arith.constant 0.000000e+00 : f32
    %110 = vector.broadcast %cst_47 : f32 to vector<22x128xf32>
    %111 = arith.maximumf %109, %110 : vector<22x128xf32>
    %cst_48 = arith.constant -1.000000e+00 : f32
    %112 = vector.shape_cast %30 : vector<22x1xi1> to vector<22x1xi1>
    %113 = vector.broadcast %112 : vector<22x1xi1> to vector<22x128xi1>
    %114 = vector.broadcast %cst_48 : f32 to vector<22x128xf32>
    %115 = arith.select %113, %111, %114 : vector<22x128xi1>, vector<22x128xf32>
    %116 = vector.extract_strided_slice %115 {offsets = [0, 0], sizes = [11, 128], strides = [1, 1]} : vector<22x128xf32> to vector<11x128xf32>
    %cst_49 = arith.constant dense<0xFF800000> : vector<128xf32>
    %117 = vector.multi_reduction <maximumf>, %116, %cst_49 [0] : vector<11x128xf32> to vector<128xf32>
    %118 = vector.shape_cast %117 : vector<128xf32> to vector<1x128xf32>
    %119 = vector.extract_strided_slice %115 {offsets = [11, 0], sizes = [11, 128], strides = [1, 1]} : vector<22x128xf32> to vector<11x128xf32>
    %cst_50 = arith.constant dense<0xFF800000> : vector<128xf32>
    %120 = vector.multi_reduction <maximumf>, %119, %cst_50 [0] : vector<11x128xf32> to vector<128xf32>
    %121 = vector.shape_cast %120 : vector<128xf32> to vector<1x128xf32>
    %122 = tpu.concatenate %118, %121 in 0 : vector<1x128xf32>, vector<1x128xf32> -> vector<2x128xf32>
    %c0_51 = arith.constant 0 : index
    %c0_52 = arith.constant 0 : index
    %123 = vector.load %arg15[%c0_51, %c0_52] : memref<128x11xbf16, #tpu.memory_space<vmem>>, vector<128x11xbf16>
    %124 = arith.truncf %122 : vector<2x128xf32> to vector<2x128xbf16>
    %cst_53 = arith.constant dense<0.000000e+00> : vector<2x11xf32>
    %125 = tpu.matmul %124, %123, %cst_53 {dimension_numbers = #tpu.dot_dimension_numbers<[1], [0], [0], [1], [0, 0, 1, 1], [], []>} : vector<2x128xbf16>, vector<128x11xbf16>, vector<2x11xf32> -> vector<2x11xf32>
    %c0_54 = arith.constant 0 : index
    %c0_55 = arith.constant 0 : index
    %126 = vector.load %arg16[%c0_54, %c0_55] : memref<1x11xf32, #tpu.memory_space<vmem>>, vector<1x11xf32>
    %127 = vector.broadcast %126 : vector<1x11xf32> to vector<2x11xf32>
    %128 = arith.addf %125, %127 : vector<2x11xf32>
    %129 = vector.extract_strided_slice %128 {offsets = [0, 0], sizes = [2, 7], strides = [1, 1]} : vector<2x11xf32> to vector<2x7xf32>
    %cst_56 = arith.constant dense<0xFF800000> : vector<2xf32>
    %130 = vector.multi_reduction <maximumf>, %129, %cst_56 [1] : vector<2x7xf32> to vector<2xf32>
    %131 = vector.shape_cast %130 : vector<2xf32> to vector<2x1xf32>
    %132 = vector.broadcast %131 : vector<2x1xf32> to vector<2x7xf32>
    %133 = arith.subf %129, %132 : vector<2x7xf32>
    %134 = math.exp %133 : vector<2x7xf32>
    %cst_57 = arith.constant dense<0.000000e+00> : vector<2xf32>
    %135 = vector.multi_reduction <add>, %134, %cst_57 [1] : vector<2x7xf32> to vector<2xf32>
    %136 = vector.shape_cast %135 : vector<2xf32> to vector<2x1xf32>
    %137 = math.log %136 : vector<2x1xf32>
    %138 = arith.addf %137, %131 : vector<2x1xf32>
    %139 = vector.broadcast %138 : vector<2x1xf32> to vector<2x7xf32>
    %140 = arith.subf %129, %139 : vector<2x7xf32>
    %c0_58 = arith.constant 0 : index
    %c0_59 = arith.constant 0 : index
    %141 = vector.load %arg17[%c0_58, %c0_59] : memref<2x7xf32, #tpu.memory_space<vmem>>, vector<2x7xf32>
    tpu.vector_store %arg17[%c0_58, %c0_59], %140 {strides = array<i32>} : memref<2x7xf32, #tpu.memory_space<vmem>>, vector<2x7xf32>,
    %142 = vector.extract_strided_slice %128 {offsets = [0, 7], sizes = [2, 4], strides = [1, 1]} : vector<2x11xf32> to vector<2x4xf32>
    %c0_60 = arith.constant 0 : index
    %c0_61 = arith.constant 0 : index
    %143 = vector.load %arg18[%c0_60, %c0_61] : memref<2x4xf32, #tpu.memory_space<vmem>>, vector<2x4xf32>
    tpu.vector_store %arg18[%c0_60, %c0_61], %142 {strides = array<i32>} : memref<2x4xf32, #tpu.memory_space<vmem>>, vector<2x4xf32>,
    return
  }
}

</mosaic_0001>

<llo_original>
// kernel: forward.4
$region0: #{forward.4}
  #allocation0 [shape = 'u32[]', space=smem, size = 0x4, offset = 0x4, fixed_abs, tag = 'smem constant byte address 0x4 - core index']
  #allocation1 [shape = 'u32[144,128]{1,0:T(1,128)}', space=vmem, size = 0x12000, scoped, tag = 'internal scratch']
  %s0 = inlined_call_operand.vmem [shape: bf16[72,32], index: 0, kind: input, shape index: {}]
  %s1 = inlined_call_operand.vmem [shape: bf16[72,32], index: 1, kind: input, shape index: {}]
  %s2 = inlined_call_operand.vmem [shape: bf16[72,32], index: 2, kind: input, shape index: {}]
  %s3 = inlined_call_operand.vmem [shape: bf16[72,32], index: 3, kind: input, shape index: {}]
  %s4 = inlined_call_operand.vmem [shape: bf16[128,64], index: 4, kind: input, shape index: {}]
  %s5 = inlined_call_operand.vmem [shape: bf16[64,64], index: 5, kind: input, shape index: {}]
  %s6 = inlined_call_operand.vmem [shape: bf16[64,64], index: 6, kind: input, shape index: {}]
  %s7 = inlined_call_operand.vmem [shape: bf16[32,128], index: 7, kind: input, shape index: {}]
  %s8 = inlined_call_operand.vmem [shape: bf16[576,64], index: 8, kind: input, shape index: {}]
  %s9 = inlined_call_operand.vmem [shape: f32[1,64], index: 9, kind: input, shape index: {}]
  %s10 = inlined_call_operand.vmem [shape: f32[1,64], index: 10, kind: input, shape index: {}]
  %s11 = inlined_call_operand.vmem [shape: f32[1,64], index: 11, kind: input, shape index: {}]
  %s12 = inlined_call_operand.vmem [shape: f32[1,64], index: 12, kind: input, shape index: {}]
  %s13 = inlined_call_operand.vmem [shape: f32[1,64], index: 13, kind: input, shape index: {}]
  %s14 = inlined_call_operand.vmem [shape: f32[1,64], index: 14, kind: input, shape index: {}]
  %s15 = inlined_call_operand.vmem [shape: bf16[72,64], index: 15, kind: output, shape index: {}]
  %s16 = sld [smem:[#allocation0]]
  $region70: #{forward.4} parent=0
    _
  %s18 = ssub.s32 1, %s16
  %s19 = scalar_select 0, %s18, %s16
  // Predicated region
  $region2: #{forward.4} parent=0 // pred_check
    _
  $region3: #{forward.4} parent=0 // pred_check_branch
    %21 = sbr.rel (0) target = $region5
  $region4: #{forward.4} parent=0 // pred_region
    _
  $region5: #{forward.4} parent=0 // pred_fallthru
    _
  // Predicated region
  $region6: #{forward.4} parent=0 // pred_check
    _
  $region7: #{forward.4} parent=0 // pred_check_branch
    %23 = sbr.rel (0) target = $region9
  $region8: #{forward.4} parent=0 // pred_region
    _
  $region9: #{forward.4} parent=0 // pred_fallthru
    _
  // Predicated region
  $region10: #{forward.4} parent=0 // pred_check
    _
  $region11: #{forward.4} parent=0 // pred_check_branch
    %25 = sbr.rel (0) target = $region13
  $region12: #{forward.4} parent=0 // pred_region
    _
  $region13: #{forward.4} parent=0 // pred_fallthru
    _
  // Predicated region
  $region14: #{forward.4} parent=0 // pred_check
    _
  $region15: #{forward.4} parent=0 // pred_check_branch
    %27 = sbr.rel (0) target = $region17
  $region16: #{forward.4} parent=0 // pred_region
    _
  $region17: #{forward.4} parent=0 // pred_fallthru
    _
  // Predicated region
  $region18: #{forward.4} parent=0 // pred_check
    _
  $region19: #{forward.4} parent=0 // pred_check_branch
    %29 = sbr.rel (0) target = $region21
  $region20: #{forward.4} parent=0 // pred_region
    _
  $region21: #{forward.4} parent=0 // pred_fallthru
    _
  // Predicated region
  $region22: #{forward.4} parent=0 // pred_check
    _
  $region23: #{forward.4} parent=0 // pred_check_branch
    %31 = sbr.rel (0) target = $region25
  $region24: #{forward.4} parent=0 // pred_region
    _
  $region25: #{forward.4} parent=0 // pred_fallthru
    _
  // Predicated region
  $region26: #{forward.4} parent=0 // pred_check
    _
  $region27: #{forward.4} parent=0 // pred_check_branch
    %33 = sbr.rel (0) target = $region29
  $region28: #{forward.4} parent=0 // pred_region
    _
  $region29: #{forward.4} parent=0 // pred_fallthru
    _
  // Predicated region
  $region30: #{forward.4} parent=0 // pred_check
    _
  $region31: #{forward.4} parent=0 // pred_check_branch
    %35 = sbr.rel (0) target = $region33
  $region32: #{forward.4} parent=0 // pred_region
    _
  $region33: #{forward.4} parent=0 // pred_fallthru
    _
  // Predicated region
  $region34: #{forward.4} parent=0 // pred_check
    _
  $region35: #{forward.4} parent=0 // pred_check_branch
    %37 = sbr.rel (0) target = $region37
  $region36: #{forward.4} parent=0 // pred_region
    _
  $region37: #{forward.4} parent=0 // pred_fallthru
    _
  // Predicated region
  $region38: #{forward.4} parent=0 // pred_check
    _
  $region39: #{forward.4} parent=0 // pred_check_branch
    %39 = sbr.rel (0) target = $region41
  $region40: #{forward.4} parent=0 // pred_region
    _
  $region41: #{forward.4} parent=0 // pred_fallthru
    _
  // Predicated region
  $region42: #{forward.4} parent=0 // pred_check
    _
  $region43: #{forward.4} parent=0 // pred_check_branch
    %41 = sbr.rel (0) target = $region45
  $region44: #{forward.4} parent=0 // pred_region
    _
  $region45: #{forward.4} parent=0 // pred_fallthru
    _
  // Predicated region
  $region46: #{forward.4} parent=0 // pred_check
    _
  $region47: #{forward.4} parent=0 // pred_check_branch
    %43 = sbr.rel (0) target = $region49
  $region48: #{forward.4} parent=0 // pred_region
    _
  $region49: #{forward.4} parent=0 // pred_fallthru
    _
  // Predicated region
  $region50: #{forward.4} parent=0 // pred_check
    _
  $region51: #{forward.4} parent=0 // pred_check_branch
    %45 = sbr.rel (0) target = $region53
  $region52: #{forward.4} parent=0 // pred_region
    _
  $region53: #{forward.4} parent=0 // pred_fallthru
    _
  // Predicated region
  $region54: #{forward.4} parent=0 // pred_check
    _
  $region55: #{forward.4} parent=0 // pred_check_branch
    %47 = sbr.rel (0) target = $region57
  $region56: #{forward.4} parent=0 // pred_region
    _
  $region57: #{forward.4} parent=0 // pred_fallthru
    _
  // Predicated region
  $region58: #{forward.4} parent=0 // pred_check
    _
  $region59: #{forward.4} parent=0 // pred_check_branch
    %49 = sbr.rel (0) target = $region61
  $region60: #{forward.4} parent=0 // pred_region
    _
  $region61: #{forward.4} parent=0 // pred_fallthru
    _
  %v51 = vlaneseq
  %v52 = vshrl.u32 %v51, 7
  %v53 = vadd.s32 %v52, 8
  %v54 = vadd.s32 %v52, 16
  %v55 = vadd.s32 %v52, 24
  %v56 = vadd.s32 %v52, 32
  %v57 = vadd.s32 %v52, 40
  %v58 = vadd.s32 %v52, 48
  %v59 = vadd.s32 %v52, 56
  %v60 = vcvt.s32.f32 %v52
  %v61 = vcvt.s32.f32 %v53
  %v62 = vcvt.s32.f32 %v54
  %v63 = vcvt.s32.f32 %v55
  %v64 = vcvt.s32.f32 %v56
  %v65 = vcvt.s32.f32 %v57
  %v66 = vcvt.s32.f32 %v58
  %v67 = vcvt.s32.f32 %v59
  %v68 = vadd.f32 %v60, 7.0
  %v69 = vadd.f32 %v61, 7.0
  %v70 = vadd.f32 %v62, 7.0
  %v71 = vadd.f32 %v63, 7.0
  %v72 = vadd.f32 %v64, 7.0
  %v73 = vadd.f32 %v65, 7.0
  %v74 = vadd.f32 %v66, 7.0
  %v75 = vadd.f32 %v67, 7.0
  %v76 = vrcp.pop 6.0
  %v77 = vmul.f32 %v68, %v76
  %v78 = vmul.f32 %v69, %v76
  %v79 = vmul.f32 %v70, %v76
  %v80 = vmul.f32 %v71, %v76
  %v81 = vmul.f32 %v72, %v76
  %v82 = vmul.f32 %v73, %v76
  %v83 = vmul.f32 %v74, %v76
  %v84 = vmul.f32 %v75, %v76
  %v85 = vadd.f32 %v77, 0.005
  %v86 = vadd.f32 %v78, 0.005
  %v87 = vadd.f32 %v79, 0.005
  %v88 = vadd.f32 %v80, 0.005
  %v89 = vadd.f32 %v81, 0.005
  %v90 = vadd.f32 %v82, 0.005
  %v91 = vadd.f32 %v83, 0.005
  %v92 = vadd.f32 %v84, 0.005
  %v93 = vfloor.f32 %v85
  %v94 = vfloor.f32 %v86
  %v95 = vfloor.f32 %v87
  %v96 = vfloor.f32 %v88
  %v97 = vfloor.f32 %v89
  %v98 = vfloor.f32 %v90
  %v99 = vfloor.f32 %v91
  %v100 = vfloor.f32 %v92
  %v101 = vmul.f32 %v93, 6.0
  %v102 = vmul.f32 %v94, 6.0
  %v103 = vmul.f32 %v95, 6.0
  %v104 = vmul.f32 %v96, 6.0
  %v105 = vmul.f32 %v97, 6.0
  %v106 = vmul.f32 %v98, 6.0
  %v107 = vmul.f32 %v99, 6.0
  %v108 = vmul.f32 %v100, 6.0
  %v109 = vsub.f32 %v68, %v101
  %v110 = vsub.f32 %v69, %v102
  %v111 = vsub.f32 %v70, %v103
  %v112 = vsub.f32 %v71, %v104
  %v113 = vsub.f32 %v72, %v105
  %v114 = vsub.f32 %v73, %v106
  %v115 = vsub.f32 %v74, %v107
  %v116 = vsub.f32 %v75, %v108
  %v117 = vmul.f32 %v93, %v76
  %v118 = vmul.f32 %v94, %v76
  %v119 = vmul.f32 %v95, %v76
  %v120 = vmul.f32 %v96, %v76
  %v121 = vmul.f32 %v97, %v76
  %v122 = vmul.f32 %v98, %v76
  %v123 = vmul.f32 %v99, %v76
  %v124 = vmul.f32 %v100, %v76
  %v125 = vadd.f32 %v117, 0.005
  %v126 = vadd.f32 %v118, 0.005
  %v127 = vadd.f32 %v119, 0.005
  %v128 = vadd.f32 %v120, 0.005
  %v129 = vadd.f32 %v121, 0.005
  %v130 = vadd.f32 %v122, 0.005
  %v131 = vadd.f32 %v123, 0.005
  %v132 = vadd.f32 %v124, 0.005
  %v133 = vfloor.f32 %v125
  %v134 = vfloor.f32 %v126
  %v135 = vfloor.f32 %v127
  %v136 = vfloor.f32 %v128
  %v137 = vfloor.f32 %v129
  %v138 = vfloor.f32 %v130
  %v139 = vfloor.f32 %v131
  %v140 = vfloor.f32 %v132
  %v141 = vmul.f32 %v133, 6.0
  %v142 = vmul.f32 %v134, 6.0
  %v143 = vmul.f32 %v135, 6.0
  %v144 = vmul.f32 %v136, 6.0
  %v145 = vmul.f32 %v137, 6.0
  %v146 = vmul.f32 %v138, 6.0
  %v147 = vmul.f32 %v139, 6.0
  %v148 = vmul.f32 %v140, 6.0
  %v149 = vsub.f32 %v93, %v141
  %v150 = vsub.f32 %v94, %v142
  %v151 = vsub.f32 %v95, %v143
  %v152 = vsub.f32 %v96, %v144
  %v153 = vsub.f32 %v97, %v145
  %v154 = vsub.f32 %v98, %v146
  %v155 = vsub.f32 %v99, %v147
  %v156 = vsub.f32 %v100, %v148
  %vm157 = vcmp.ge.f32.partialorder %v149, 1.0
  %vm158 = vcmp.ge.f32.partialorder %v150, 1.0
  %vm159 = vcmp.ge.f32.partialorder %v151, 1.0
  %vm160 = vcmp.ge.f32.partialorder %v152, 1.0
  %vm161 = vcmp.ge.f32.partialorder %v153, 1.0
  %vm162 = vcmp.ge.f32.partialorder %v154, 1.0
  %vm163 = vcmp.ge.f32.partialorder %v155, 1.0
  %vm164 = vcmp.ge.f32.partialorder %v156, 1.0
  %vm165 = vcmp.le.f32.partialorder %v149, 4.0
  %vm166 = vcmp.le.f32.partialorder %v150, 4.0
  %vm167 = vcmp.le.f32.partialorder %v151, 4.0
  %vm168 = vcmp.le.f32.partialorder %v152, 4.0
  %vm169 = vcmp.le.f32.partialorder %v153, 4.0
  %vm170 = vcmp.le.f32.partialorder %v154, 4.0
  %vm171 = vcmp.le.f32.partialorder %v155, 4.0
  %vm172 = vcmp.le.f32.partialorder %v156, 4.0
  %vm173 = vmand %vm157, %vm165
  %vm174 = vmand %vm158, %vm166
  %vm175 = vmand %vm159, %vm167
  %vm176 = vmand %vm160, %vm168
  %vm177 = vmand %vm161, %vm169
  %vm178 = vmand %vm162, %vm170
  %vm179 = vmand %vm163, %vm171
  %vm180 = vmand %vm164, %vm172
  %vm181 = vcmp.ge.f32.partialorder %v109, 1.0
  %vm182 = vcmp.ge.f32.partialorder %v110, 1.0
  %vm183 = vcmp.ge.f32.partialorder %v111, 1.0
  %vm184 = vcmp.ge.f32.partialorder %v112, 1.0
  %vm185 = vcmp.ge.f32.partialorder %v113, 1.0
  %vm186 = vcmp.ge.f32.partialorder %v114, 1.0
  %vm187 = vcmp.ge.f32.partialorder %v115, 1.0
  %vm188 = vcmp.ge.f32.partialorder %v116, 1.0
  %vm189 = vmand %vm173, %vm181
  %vm190 = vmand %vm174, %vm182
  %vm191 = vmand %vm175, %vm183
  %vm192 = vmand %vm176, %vm184
  %vm193 = vmand %vm177, %vm185
  %vm194 = vmand %vm178, %vm186
  %vm195 = vmand %vm179, %vm187
  %vm196 = vmand %vm180, %vm188
  %vm197 = vcmp.le.f32.partialorder %v109, 4.0
  %vm198 = vcmp.le.f32.partialorder %v110, 4.0
  %vm199 = vcmp.le.f32.partialorder %v111, 4.0
  %vm200 = vcmp.le.f32.partialorder %v112, 4.0
  %vm201 = vcmp.le.f32.partialorder %v113, 4.0
  %vm202 = vcmp.le.f32.partialorder %v114, 4.0
  %vm203 = vcmp.le.f32.partialorder %v115, 4.0
  %vm204 = vcmp.le.f32.partialorder %v116, 4.0
  %vm205 = vmand %vm189, %vm197
  %vm206 = vmand %vm190, %vm198
  %vm207 = vmand %vm191, %vm199
  %vm208 = vmand %vm192, %vm200
  %vm209 = vmand %vm193, %vm201
  %vm210 = vmand %vm194, %vm202
  %vm211 = vmand %vm195, %vm203
  %vm212 = vmand %vm196, %vm204
  %v213 = vsel %vm205, 1, 0
  %v214 = vsel %vm206, 1, 0
  %v215 = vsel %vm207, 1, 0
  %v216 = vsel %vm208, 1, 0
  %v217 = vsel %vm209, 1, 0
  %v218 = vsel %vm210, 1, 0
  %v219 = vsel %vm211, 1, 0
  %v220 = vsel %vm212, 1, 0
  %v221 = vcvt.s32.f32 %v213
  %v222 = vcvt.s32.f32 %v214
  %v223 = vcvt.s32.f32 %v215
  %v224 = vcvt.s32.f32 %v216
  %v225 = vcvt.s32.f32 %v217
  %v226 = vcvt.s32.f32 %v218
  %v227 = vcvt.s32.f32 %v219
  %v228 = vcvt.s32.f32 %v220
  %v229 = vld [vmem:[%s0] sm:$0xf]
  %v230 = vld [vmem:[%s0 + $0x4] sm:$0xf]
  %v231 = vld [vmem:[%s0 + $0x8] sm:$0xf]
  %v232 = vld [vmem:[%s0 + $0xc] sm:$0xf]
  %v233 = vld [vmem:[%s0 + $0x10] sm:$0xf]
  %v234 = vld [vmem:[%s0 + $0x14] sm:$0xf]
  %v235 = vld [vmem:[%s0 + $0x18] sm:$0xf]
  %v236 = vld [vmem:[%s0 + $0x1c] sm:$0xf]
  %v237 = vld [vmem:[%s0 + $0x20] sm:$0xf]
  %v238 = vunpack.c.l.bf16 %v229
  %v239 = vunpack.c.l.bf16 %v230
  %v240 = vunpack.c.l.bf16 %v231
  %v241 = vunpack.c.l.bf16 %v232
  %v242 = vunpack.c.l.bf16 %v233
  %v243 = vunpack.c.l.bf16 %v234
  %v244 = vunpack.c.l.bf16 %v235
  %v245 = vunpack.c.l.bf16 %v236
  %v246 = vunpack.c.l.bf16 %v237
  %vm255 = vcmask 1046528
  %v256 = vrot.slane %v238, 1
  %v257 = vrot.slane %v239, 1
  %v258 = vsel %vm255, %v256, %v257
  %v259 = vrot.slane %v240, 1
  %v260 = vsel %vm255, %v257, %v259
  %v261 = vrot.slane %v241, 1
  %v262 = vsel %vm255, %v259, %v261
  %v263 = vrot.slane %v242, 1
  %v264 = vsel %vm255, %v261, %v263
  %v265 = vrot.slane %v243, 1
  %v266 = vsel %vm255, %v263, %v265
  %v267 = vrot.slane %v244, 1
  %v268 = vsel %vm255, %v265, %v267
  %v269 = vrot.slane %v245, 1
  %v270 = vsel %vm255, %v267, %v269
  %271 = vrot.lane.b32.xlu0 %v258, 32
  %v272 = vpop.permute.xlu0 %271
  %273 = vrot.lane.b32.xlu0 %v260, 32
  %v274 = vpop.permute.xlu0 %273
  %275 = vrot.lane.b32.xlu0 %v262, 32
  %v276 = vpop.permute.xlu0 %275
  %277 = vrot.lane.b32.xlu0 %v264, 32
  %v278 = vpop.permute.xlu0 %277
  %279 = vrot.lane.b32.xlu0 %v266, 32
  %v280 = vpop.permute.xlu0 %279
  %281 = vrot.lane.b32.xlu0 %v268, 32
  %v282 = vpop.permute.xlu0 %281
  %283 = vrot.lane.b32.xlu0 %v270, 32
  %v284 = vpop.permute.xlu0 %283
  %285 = vrot.lane.b32.xlu0 %v269, 32
  %v286 = vpop.permute.xlu0 %285
  %vm295 = vcmask 1041408
  %v296 = vrot.slane %v238, 6
  %v297 = vrot.slane %v239, 6
  %v298 = vsel %vm295, %v296, %v297
  %v299 = vrot.slane %v240, 6
  %v300 = vsel %vm295, %v297, %v299
  %v301 = vrot.slane %v241, 6
  %v302 = vsel %vm295, %v299, %v301
  %v303 = vrot.slane %v242, 6
  %v304 = vsel %vm295, %v301, %v303
  %v305 = vrot.slane %v243, 6
  %v306 = vsel %vm295, %v303, %v305
  %v307 = vrot.slane %v244, 6
  %v308 = vsel %vm295, %v305, %v307
  %v309 = vrot.slane %v245, 6
  %v310 = vsel %vm295, %v307, %v309
  %311 = vrot.lane.b32.xlu0 %v298, 64
  %v312 = vpop.permute.xlu0 %311
  %313 = vrot.lane.b32.xlu0 %v300, 64
  %v314 = vpop.permute.xlu0 %313
  %315 = vrot.lane.b32.xlu0 %v302, 64
  %v316 = vpop.permute.xlu0 %315
  %317 = vrot.lane.b32.xlu0 %v304, 64
  %v318 = vpop.permute.xlu0 %317
  %319 = vrot.lane.b32.xlu0 %v306, 64
  %v320 = vpop.permute.xlu0 %319
  %321 = vrot.lane.b32.xlu0 %v308, 64
  %v322 = vpop.permute.xlu0 %321
  %323 = vrot.lane.b32.xlu0 %v310, 64
  %v324 = vpop.permute.xlu0 %323
  %325 = vrot.lane.b32.xlu0 %v309, 64
  %v326 = vpop.permute.xlu0 %325
  %vm336 = vcmask 1040384
  %v337 = vrot.slane %v238, 7
  %v338 = vrot.slane %v239, 7
  %v339 = vsel %vm336, %v337, %v338
  %v340 = vrot.slane %v240, 7
  %v341 = vsel %vm336, %v338, %v340
  %v342 = vrot.slane %v241, 7
  %v343 = vsel %vm336, %v340, %v342
  %v344 = vrot.slane %v242, 7
  %v345 = vsel %vm336, %v342, %v344
  %v346 = vrot.slane %v243, 7
  %v347 = vsel %vm336, %v344, %v346
  %v348 = vrot.slane %v244, 7
  %v349 = vsel %vm336, %v346, %v348
  %v350 = vrot.slane %v245, 7
  %v351 = vsel %vm336, %v348, %v350
  %v352 = vrot.slane %v246, 7
  %v353 = vsel %vm336, %v350, %v352
  %354 = vrot.lane.b32.xlu0 %v339, 96
  %v355 = vpop.permute.xlu0 %354
  %356 = vrot.lane.b32.xlu0 %v341, 96
  %v357 = vpop.permute.xlu0 %356
  %358 = vrot.lane.b32.xlu0 %v343, 96
  %v359 = vpop.permute.xlu0 %358
  %360 = vrot.lane.b32.xlu0 %v345, 96
  %v361 = vpop.permute.xlu0 %360
  %362 = vrot.lane.b32.xlu0 %v347, 96
  %v363 = vpop.permute.xlu0 %362
  %364 = vrot.lane.b32.xlu0 %v349, 96
  %v365 = vpop.permute.xlu0 %364
  %366 = vrot.lane.b32.xlu0 %v351, 96
  %v367 = vpop.permute.xlu0 %366
  %368 = vrot.lane.b32.xlu0 %v353, 96
  %v369 = vpop.permute.xlu0 %368
  %vm378 = vcmask 261120
  %v379 = vsel %vm378, %v238, %v272
  %v380 = vsel %vm378, %v239, %v274
  %v381 = vsel %vm378, %v240, %v276
  %v382 = vsel %vm378, %v241, %v278
  %v383 = vsel %vm378, %v242, %v280
  %v384 = vsel %vm378, %v243, %v282
  %v385 = vsel %vm378, %v244, %v284
  %v386 = vsel %vm378, %v245, %v286
  %vm387 = vcmask 523264
  %v388 = vsel %vm387, %v379, %v312
  %v389 = vsel %vm387, %v380, %v314
  %v390 = vsel %vm387, %v381, %v316
  %v391 = vsel %vm387, %v382, %v318
  %v392 = vsel %vm387, %v383, %v320
  %v393 = vsel %vm387, %v384, %v322
  %v394 = vsel %vm387, %v385, %v324
  %v395 = vsel %vm387, %v386, %v326
  %vm396 = vcmask 785408
  %v397 = vsel %vm396, %v388, %v355
  %v398 = vsel %vm396, %v389, %v357
  %v399 = vsel %vm396, %v390, %v359
  %v400 = vsel %vm396, %v391, %v361
  %v401 = vsel %vm396, %v392, %v363
  %v402 = vsel %vm396, %v393, %v365
  %v403 = vsel %vm396, %v394, %v367
  %v404 = vsel %vm396, %v395, %v369
  %v405 = vld [vmem:[%s4] sm:$0xf]
  %v406 = vld [vmem:[%s4 + $0x4] sm:$0xf]
  %v407 = vld [vmem:[%s4 + $0x8] sm:$0xf]
  %v408 = vld [vmem:[%s4 + $0xc] sm:$0xf]
  %v409 = vld [vmem:[%s4 + $0x10] sm:$0xf]
  %v410 = vld [vmem:[%s4 + $0x14] sm:$0xf]
  %v411 = vld [vmem:[%s4 + $0x18] sm:$0xf]
  %v412 = vld [vmem:[%s4 + $0x1c] sm:$0xf]
  %v413 = vld [vmem:[%s4 + $0x20] sm:$0xf]
  %v414 = vld [vmem:[%s4 + $0x24] sm:$0xf]
  %v415 = vld [vmem:[%s4 + $0x28] sm:$0xf]
  %v416 = vld [vmem:[%s4 + $0x2c] sm:$0xf]
  %v417 = vld [vmem:[%s4 + $0x30] sm:$0xf]
  %v418 = vld [vmem:[%s4 + $0x34] sm:$0xf]
  %v419 = vld [vmem:[%s4 + $0x38] sm:$0xf]
  %v420 = vld [vmem:[%s4 + $0x3c] sm:$0xf]
  %v421 = vpack.c.bf16 %v398, %v397
  %v422 = vpack.c.bf16 %v400, %v399
  %v423 = vpack.c.bf16 %v402, %v401
  %v424 = vpack.c.bf16 %v404, %v403
  %v425 = vld [vmem:[%s1] sm:$0xf]
  %v426 = vld [vmem:[%s1 + $0x4] sm:$0xf]
  %v427 = vld [vmem:[%s1 + $0x8] sm:$0xf]
  %v428 = vld [vmem:[%s1 + $0xc] sm:$0xf]
  %v429 = vld [vmem:[%s1 + $0x10] sm:$0xf]
  %v430 = vld [vmem:[%s1 + $0x14] sm:$0xf]
  %v431 = vld [vmem:[%s1 + $0x18] sm:$0xf]
  %v432 = vld [vmem:[%s1 + $0x1c] sm:$0xf]
  %v433 = vunpack.c.l.bf16 %v425
  %v434 = vunpack.c.l.bf16 %v426
  %v435 = vunpack.c.l.bf16 %v427
  %v436 = vunpack.c.l.bf16 %v428
  %v437 = vunpack.c.l.bf16 %v429
  %v438 = vunpack.c.l.bf16 %v430
  %v439 = vunpack.c.l.bf16 %v431
  %v440 = vunpack.c.l.bf16 %v432
  %v449 = vrot.slane %v433, 6
  %v450 = vrot.slane %v434, 6
  %v451 = vsel %vm295, %v449, %v450
  %v452 = vrot.slane %v435, 6
  %v453 = vsel %vm295, %v450, %v452
  %v454 = vrot.slane %v436, 6
  %v455 = vsel %vm295, %v452, %v454
  %v456 = vrot.slane %v437, 6
  %v457 = vsel %vm295, %v454, %v456
  %v458 = vrot.slane %v438, 6
  %v459 = vsel %vm295, %v456, %v458
  %v460 = vrot.slane %v439, 6
  %v461 = vsel %vm295, %v458, %v460
  %v462 = vrot.slane %v440, 6
  %v463 = vsel %vm295, %v460, %v462
  %464 = vrot.lane.b32.xlu0 %v451, 32
  %v465 = vpop.permute.xlu0 %464
  %466 = vrot.lane.b32.xlu0 %v453, 32
  %v467 = vpop.permute.xlu0 %466
  %468 = vrot.lane.b32.xlu0 %v455, 32
  %v469 = vpop.permute.xlu0 %468
  %470 = vrot.lane.b32.xlu0 %v457, 32
  %v471 = vpop.permute.xlu0 %470
  %472 = vrot.lane.b32.xlu0 %v459, 32
  %v473 = vpop.permute.xlu0 %472
  %474 = vrot.lane.b32.xlu0 %v461, 32
  %v475 = vpop.permute.xlu0 %474
  %476 = vrot.lane.b32.xlu0 %v463, 32
  %v477 = vpop.permute.xlu0 %476
  %478 = vrot.lane.b32.xlu0 %v462, 32
  %v479 = vpop.permute.xlu0 %478
  %v488 = vsel %vm378, %v433, %v465
  %v489 = vsel %vm378, %v434, %v467
  %v490 = vsel %vm378, %v435, %v469
  %v491 = vsel %vm378, %v436, %v471
  %v492 = vsel %vm378, %v437, %v473
  %v493 = vsel %vm378, %v438, %v475
  %v494 = vsel %vm378, %v439, %v477
  %v495 = vsel %vm378, %v440, %v479
  %v496 = vld [vmem:[%s5] sm:$0xf]
  %v497 = vld [vmem:[%s5 + $0x4] sm:$0xf]
  %v498 = vld [vmem:[%s5 + $0x8] sm:$0xf]
  %v499 = vld [vmem:[%s5 + $0xc] sm:$0xf]
  %v500 = vld [vmem:[%s5 + $0x10] sm:$0xf]
  %v501 = vld [vmem:[%s5 + $0x14] sm:$0xf]
  %v502 = vld [vmem:[%s5 + $0x18] sm:$0xf]
  %v503 = vld [vmem:[%s5 + $0x1c] sm:$0xf]
  %v504 = vpack.c.bf16 %v489, %v488
  %v505 = vpack.c.bf16 %v491, %v490
  %v506 = vpack.c.bf16 %v493, %v492
  %v507 = vpack.c.bf16 %v495, %v494
  %v516 = vunpack.c.l.b16 %v496
  %v517 = vunpack.c.l.b16 %v497
  %v518 = vunpack.c.l.b16 %v498
  %v519 = vunpack.c.l.b16 %v499
  %v520 = vunpack.c.l.b16 %v500
  %v521 = vunpack.c.l.b16 %v501
  %v522 = vunpack.c.l.b16 %v502
  %v523 = vunpack.c.l.b16 %v503
  %v524 = vpack.c.b16 %v517, %v516
  %v525 = vpack.c.b16 %v519, %v518
  %v526 = vpack.c.b16 %v521, %v520
  %v527 = vpack.c.b16 %v523, %v522
  %v533 = vsel %vm387, %v504, 0
  %v536 = vsel %vm387, %v505, 0
  %v539 = vsel %vm387, %v506, 0
  %v542 = vsel %vm387, %v507, 0
  %544 = vmatprep.subr.bf16.mxu0 0
  %545 = vmatpush1.bf16.msra.mxu0 %v524
  %546 = vmatprep.subr.bf16.mxu0 0
  %547 = vmatpush1.bf16.msra.mxu0 %v525
  %548 = vmatprep.subr.bf16.mxu0 0
  %549 = vmatpush1.bf16.msra.mxu0 %v526
  %550 = vmatprep.subr.bf16.mxu0 0
  %551 = vmatpush1.bf16.msra.mxu0 %v527
  %552 = vmatprep.subr.bf16.mxu0 0
  %553 = vmatpush1.bf16.msra.mxu0 0
  %554 = vmatprep.subr.bf16.mxu0 0
  %555 = vmatpush1.bf16.msra.mxu0 0
  %556 = vmatprep.subr.bf16.mxu0 0
  %557 = vmatpush1.bf16.msra.mxu0 0
  %558 = vmatprep.subr.bf16.mxu0 0
  %559 = vmatpush1.bf16.msra.mxu0 0
  %560 = vmatprep.subr.bf16.mxu0 0
  %561 = vmatpush1.bf16.msra.mxu0 0
  %562 = vmatprep.subr.bf16.mxu0 0
  %563 = vmatpush1.bf16.msra.mxu0 0
  %564 = vmatprep.subr.bf16.mxu0 0
  %565 = vmatpush1.bf16.msra.mxu0 0
  %566 = vmatprep.subr.bf16.mxu0 0
  %567 = vmatpush1.bf16.msra.mxu0 0
  %568 = vmatprep.subr.bf16.mxu0 0
  %569 = vmatpush1.bf16.msra.mxu0 0
  %570 = vmatprep.subr.bf16.mxu0 0
  %571 = vmatpush1.bf16.msra.mxu0 0
  %572 = vmatprep.subr.bf16.mxu0 0
  %573 = vmatpush1.bf16.msra.mxu0 0
  %574 = vmatprep.subr.bf16.mxu0 0
  %575 = vmatpush1.bf16.msra.mxu0 0
  %576 = vmatprep.mubr.bf16.mxu0 0
  %577 = vmatmul.mubr.bf16.gmra.mrb[0].mxu0 %v533
  %v578 = vpop.f32.mrb[0].mxu0
  %v579 = vadd.f32 0.0, %v578
  %v580 = vpop.f32.mrb[0].mxu0
  %v581 = vpop.f32.mrb[0].mxu0
  %v582 = vadd.f32 0.0, %v581
  %v583 = vpop.f32.mrb[0].mxu0
  %584 = vmatprep.mubr.bf16.mxu0 0
  %585 = vmatmul.mubr.bf16.gmra.mrb[0].mxu0 %v536
  %v586 = vpop.f32.mrb[0].mxu0
  %v587 = vadd.f32 0.0, %v586
  %v588 = vpop.f32.mrb[0].mxu0
  %v589 = vpop.f32.mrb[0].mxu0
  %v590 = vadd.f32 0.0, %v589
  %v591 = vpop.f32.mrb[0].mxu0
  %592 = vmatprep.mubr.bf16.mxu0 0
  %593 = vmatmul.mubr.bf16.gmra.mrb[0].mxu0 %v539
  %v594 = vpop.f32.mrb[0].mxu0
  %v595 = vadd.f32 0.0, %v594
  %v596 = vpop.f32.mrb[0].mxu0
  %v597 = vpop.f32.mrb[0].mxu0
  %v598 = vadd.f32 0.0, %v597
  %v599 = vpop.f32.mrb[0].mxu0
  %600 = vmatprep.mubr.bf16.mxu0 0
  %601 = vmatmul.mubr.bf16.gmra.mrb[0].mxu0 %v542
  %v602 = vpop.f32.mrb[0].mxu0
  %v603 = vadd.f32 0.0, %v602
  %v604 = vpop.f32.mrb[0].mxu0
  %v605 = vpop.f32.mrb[0].mxu0
  %v606 = vadd.f32 0.0, %v605
  %v607 = vpop.f32.mrb[0].mxu0
  %608 = vdwg.mxu0
  %v625 = vunpack.c.l.b16 %v405
  %v626 = vunpack.c.l.b16 %v406
  %v627 = vunpack.c.l.b16 %v407
  %v628 = vunpack.c.l.b16 %v408
  %v629 = vunpack.c.l.b16 %v409
  %v630 = vunpack.c.l.b16 %v410
  %v631 = vunpack.c.l.b16 %v411
  %v632 = vunpack.c.l.b16 %v412
  %v633 = vunpack.c.l.b16 %v413
  %v634 = vunpack.c.l.b16 %v414
  %v635 = vunpack.c.l.b16 %v415
  %v636 = vunpack.c.l.b16 %v416
  %v637 = vunpack.c.l.b16 %v417
  %v638 = vunpack.c.l.b16 %v418
  %v639 = vunpack.c.l.b16 %v419
  %v640 = vunpack.c.l.b16 %v420
  %v641 = vpack.c.b16 %v626, %v625
  %v642 = vpack.c.b16 %v628, %v627
  %v643 = vpack.c.b16 %v630, %v629
  %v644 = vpack.c.b16 %v632, %v631
  %v645 = vpack.c.b16 %v634, %v633
  %v646 = vpack.c.b16 %v636, %v635
  %v647 = vpack.c.b16 %v638, %v637
  %v648 = vpack.c.b16 %v640, %v639
  %657 = vmatprep.subr.bf16.mxu0 0
  %658 = vmatpush1.bf16.msra.mxu0 %v641
  %659 = vmatprep.subr.bf16.mxu0 0
  %660 = vmatpush1.bf16.msra.mxu0 %v642
  %661 = vmatprep.subr.bf16.mxu0 0
  %662 = vmatpush1.bf16.msra.mxu0 %v643
  %663 = vmatprep.subr.bf16.mxu0 0
  %664 = vmatpush1.bf16.msra.mxu0 %v644
  %665 = vmatprep.subr.bf16.mxu0 0
  %666 = vmatpush1.bf16.msra.mxu0 %v645
  %667 = vmatprep.subr.bf16.mxu0 0
  %668 = vmatpush1.bf16.msra.mxu0 %v646
  %669 = vmatprep.subr.bf16.mxu0 0
  %670 = vmatpush1.bf16.msra.mxu0 %v647
  %671 = vmatprep.subr.bf16.mxu0 0
  %672 = vmatpush1.bf16.msra.mxu0 %v648
  %673 = vmatprep.subr.bf16.mxu0 0
  %674 = vmatpush1.bf16.msra.mxu0 0
  %675 = vmatprep.subr.bf16.mxu0 0
  %676 = vmatpush1.bf16.msra.mxu0 0
  %677 = vmatprep.subr.bf16.mxu0 0
  %678 = vmatpush1.bf16.msra.mxu0 0
  %679 = vmatprep.subr.bf16.mxu0 0
  %680 = vmatpush1.bf16.msra.mxu0 0
  %681 = vmatprep.subr.bf16.mxu0 0
  %682 = vmatpush1.bf16.msra.mxu0 0
  %683 = vmatprep.subr.bf16.mxu0 0
  %684 = vmatpush1.bf16.msra.mxu0 0
  %685 = vmatprep.subr.bf16.mxu0 0
  %686 = vmatpush1.bf16.msra.mxu0 0
  %687 = vmatprep.subr.bf16.mxu0 0
  %688 = vmatpush1.bf16.msra.mxu0 0
  %689 = vmatprep.mubr.bf16.mxu0 0
  %690 = vmatmul.mubr.bf16.gmra.mrb[0].mxu0 %v421
  %v691 = vpop.f32.mrb[0].mxu0
  %v692 = vadd.f32 %v579, %v691
  %v693 = vpop.f32.mrb[0].mxu0
  %v694 = vpop.f32.mrb[0].mxu0
  %v695 = vadd.f32 %v582, %v694
  %v696 = vpop.f32.mrb[0].mxu0
  %697 = vmatprep.mubr.bf16.mxu0 0
  %698 = vmatmul.mubr.bf16.gmra.mrb[0].mxu0 %v422
  %v699 = vpop.f32.mrb[0].mxu0
  %v700 = vadd.f32 %v587, %v699
  %v701 = vpop.f32.mrb[0].mxu0
  %v702 = vpop.f32.mrb[0].mxu0
  %v703 = vadd.f32 %v590, %v702
  %v704 = vpop.f32.mrb[0].mxu0
  %705 = vmatprep.mubr.bf16.mxu0 0
  %706 = vmatmul.mubr.bf16.gmra.mrb[0].mxu0 %v423
  %v707 = vpop.f32.mrb[0].mxu0
  %v708 = vadd.f32 %v595, %v707
  %v709 = vpop.f32.mrb[0].mxu0
  %v710 = vpop.f32.mrb[0].mxu0
  %v711 = vadd.f32 %v598, %v710
  %v712 = vpop.f32.mrb[0].mxu0
  %713 = vmatprep.mubr.bf16.mxu0 0
  %714 = vmatmul.mubr.bf16.gmra.mrb[0].mxu0 %v424
  %v715 = vpop.f32.mrb[0].mxu0
  %v716 = vadd.f32 %v603, %v715
  %v717 = vpop.f32.mrb[0].mxu0
  %v718 = vpop.f32.mrb[0].mxu0
  %v719 = vadd.f32 %v606, %v718
  %v720 = vpop.f32.mrb[0].mxu0
  %721 = vdwg.mxu0
  %v722 = vld [vmem:[%s2] sm:$0xf]
  %v723 = vld [vmem:[%s2 + $0x4] sm:$0xf]
  %v724 = vld [vmem:[%s2 + $0x8] sm:$0xf]
  %v725 = vld [vmem:[%s2 + $0xc] sm:$0xf]
  %v726 = vld [vmem:[%s2 + $0x10] sm:$0xf]
  %v727 = vld [vmem:[%s2 + $0x14] sm:$0xf]
  %v728 = vld [vmem:[%s2 + $0x18] sm:$0xf]
  %v729 = vld [vmem:[%s2 + $0x1c] sm:$0xf]
  %v730 = vunpack.c.l.bf16 %v722
  %v731 = vunpack.c.l.bf16 %v723
  %v732 = vunpack.c.l.bf16 %v724
  %v733 = vunpack.c.l.bf16 %v725
  %v734 = vunpack.c.l.bf16 %v726
  %v735 = vunpack.c.l.bf16 %v727
  %v736 = vunpack.c.l.bf16 %v728
  %v737 = vunpack.c.l.bf16 %v729
  %v746 = vrot.slane %v730, 1
  %v747 = vrot.slane %v731, 1
  %v748 = vsel %vm255, %v746, %v747
  %v749 = vrot.slane %v732, 1
  %v750 = vsel %vm255, %v747, %v749
  %v751 = vrot.slane %v733, 1
  %v752 = vsel %vm255, %v749, %v751
  %v753 = vrot.slane %v734, 1
  %v754 = vsel %vm255, %v751, %v753
  %v755 = vrot.slane %v735, 1
  %v756 = vsel %vm255, %v753, %v755
  %v757 = vrot.slane %v736, 1
  %v758 = vsel %vm255, %v755, %v757
  %v759 = vrot.slane %v737, 1
  %v760 = vsel %vm255, %v757, %v759
  %761 = vrot.lane.b32.xlu0 %v748, 32
  %v762 = vpop.permute.xlu0 %761
  %763 = vrot.lane.b32.xlu0 %v750, 32
  %v764 = vpop.permute.xlu0 %763
  %765 = vrot.lane.b32.xlu0 %v752, 32
  %v766 = vpop.permute.xlu0 %765
  %767 = vrot.lane.b32.xlu0 %v754, 32
  %v768 = vpop.permute.xlu0 %767
  %769 = vrot.lane.b32.xlu0 %v756, 32
  %v770 = vpop.permute.xlu0 %769
  %771 = vrot.lane.b32.xlu0 %v758, 32
  %v772 = vpop.permute.xlu0 %771
  %773 = vrot.lane.b32.xlu0 %v760, 32
  %v774 = vpop.permute.xlu0 %773
  %775 = vrot.lane.b32.xlu0 %v759, 32
  %v776 = vpop.permute.xlu0 %775
  %v785 = vsel %vm378, %v730, %v762
  %v786 = vsel %vm378, %v731, %v764
  %v787 = vsel %vm378, %v732, %v766
  %v788 = vsel %vm378, %v733, %v768
  %v789 = vsel %vm378, %v734, %v770
  %v790 = vsel %vm378, %v735, %v772
  %v791 = vsel %vm378, %v736, %v774
  %v792 = vsel %vm378, %v737, %v776
  %v793 = vld [vmem:[%s6] sm:$0xf]
  %v794 = vld [vmem:[%s6 + $0x4] sm:$0xf]
  %v795 = vld [vmem:[%s6 + $0x8] sm:$0xf]
  %v796 = vld [vmem:[%s6 + $0xc] sm:$0xf]
  %v797 = vld [vmem:[%s6 + $0x10] sm:$0xf]
  %v798 = vld [vmem:[%s6 + $0x14] sm:$0xf]
  %v799 = vld [vmem:[%s6 + $0x18] sm:$0xf]
  %v800 = vld [vmem:[%s6 + $0x1c] sm:$0xf]
  %v801 = vpack.c.bf16 %v786, %v785
  %v802 = vpack.c.bf16 %v788, %v787
  %v803 = vpack.c.bf16 %v790, %v789
  %v804 = vpack.c.bf16 %v792, %v791
  %v813 = vunpack.c.l.b16 %v793
  %v814 = vunpack.c.l.b16 %v794
  %v815 = vunpack.c.l.b16 %v795
  %v816 = vunpack.c.l.b16 %v796
  %v817 = vunpack.c.l.b16 %v797
  %v818 = vunpack.c.l.b16 %v798
  %v819 = vunpack.c.l.b16 %v799
  %v820 = vunpack.c.l.b16 %v800
  %v821 = vpack.c.b16 %v814, %v813
  %v822 = vpack.c.b16 %v816, %v815
  %v823 = vpack.c.b16 %v818, %v817
  %v824 = vpack.c.b16 %v820, %v819
  %v830 = vsel %vm387, %v801, 0
  %v833 = vsel %vm387, %v802, 0
  %v836 = vsel %vm387, %v803, 0
  %v839 = vsel %vm387, %v804, 0
  %841 = vmatprep.subr.bf16.mxu0 0
  %842 = vmatpush1.bf16.msra.mxu0 %v821
  %843 = vmatprep.subr.bf16.mxu0 0
  %844 = vmatpush1.bf16.msra.mxu0 %v822
  %845 = vmatprep.subr.bf16.mxu0 0
  %846 = vmatpush1.bf16.msra.mxu0 %v823
  %847 = vmatprep.subr.bf16.mxu0 0
  %848 = vmatpush1.bf16.msra.mxu0 %v824
  %849 = vmatprep.subr.bf16.mxu0 0
  %850 = vmatpush1.bf16.msra.mxu0 0
  %851 = vmatprep.subr.bf16.mxu0 0
  %852 = vmatpush1.bf16.msra.mxu0 0
  %853 = vmatprep.subr.bf16.mxu0 0
  %854 = vmatpush1.bf16.msra.mxu0 0
  %855 = vmatprep.subr.bf16.mxu0 0
  %856 = vmatpush1.bf16.msra.mxu0 0
  %857 = vmatprep.subr.bf16.mxu0 0
  %858 = vmatpush1.bf16.msra.mxu0 0
  %859 = vmatprep.subr.bf16.mxu0 0
  %860 = vmatpush1.bf16.msra.mxu0 0
  %861 = vmatprep.subr.bf16.mxu0 0
  %862 = vmatpush1.bf16.msra.mxu0 0
  %863 = vmatprep.subr.bf16.mxu0 0
  %864 = vmatpush1.bf16.msra.mxu0 0
  %865 = vmatprep.subr.bf16.mxu0 0
  %866 = vmatpush1.bf16.msra.mxu0 0
  %867 = vmatprep.subr.bf16.mxu0 0
  %868 = vmatpush1.bf16.msra.mxu0 0
  %869 = vmatprep.subr.bf16.mxu0 0
  %870 = vmatpush1.bf16.msra.mxu0 0
  %871 = vmatprep.subr.bf16.mxu0 0
  %872 = vmatpush1.bf16.msra.mxu0 0
  %873 = vmatprep.mubr.bf16.mxu0 0
  %874 = vmatmul.mubr.bf16.gmra.mrb[0].mxu0 %v830
  %v875 = vpop.f32.mrb[0].mxu0
  %v876 = vadd.f32 0.0, %v875
  %v877 = vpop.f32.mrb[0].mxu0
  %v878 = vpop.f32.mrb[0].mxu0
  %v879 = vadd.f32 0.0, %v878
  %v880 = vpop.f32.mrb[0].mxu0
  %881 = vmatprep.mubr.bf16.mxu0 0
  %882 = vmatmul.mubr.bf16.gmra.mrb[0].mxu0 %v833
  %v883 = vpop.f32.mrb[0].mxu0
  %v884 = vadd.f32 0.0, %v883
  %v885 = vpop.f32.mrb[0].mxu0
  %v886 = vpop.f32.mrb[0].mxu0
  %v887 = vadd.f32 0.0, %v886
  %v888 = vpop.f32.mrb[0].mxu0
  %889 = vmatprep.mubr.bf16.mxu0 0
  %890 = vmatmul.mubr.bf16.gmra.mrb[0].mxu0 %v836
  %v891 = vpop.f32.mrb[0].mxu0
  %v892 = vadd.f32 0.0, %v891
  %v893 = vpop.f32.mrb[0].mxu0
  %v894 = vpop.f32.mrb[0].mxu0
  %v895 = vadd.f32 0.0, %v894
  %v896 = vpop.f32.mrb[0].mxu0
  %897 = vmatprep.mubr.bf16.mxu0 0
  %898 = vmatmul.mubr.bf16.gmra.mrb[0].mxu0 %v839
  %v899 = vpop.f32.mrb[0].mxu0
  %v900 = vadd.f32 0.0, %v899
  %v901 = vpop.f32.mrb[0].mxu0
  %v902 = vpop.f32.mrb[0].mxu0
  %v903 = vadd.f32 0.0, %v902
  %v904 = vpop.f32.mrb[0].mxu0
  %905 = vdwg.mxu0
  %v906 = vadd.f32 %v692, %v876
  %v907 = vadd.f32 %v695, %v879
  %v908 = vadd.f32 %v700, %v884
  %v909 = vadd.f32 %v703, %v887
  %v910 = vadd.f32 %v708, %v892
  %v911 = vadd.f32 %v711, %v895
  %v912 = vadd.f32 %v716, %v900
  %v913 = vadd.f32 %v719, %v903
  %v914 = vld [vmem:[%s3] sm:$0xf]
  %v915 = vld [vmem:[%s3 + $0x4] sm:$0xf]
  %v916 = vld [vmem:[%s3 + $0x8] sm:$0xf]
  %v917 = vld [vmem:[%s3 + $0xc] sm:$0xf]
  %v918 = vld [vmem:[%s3 + $0x10] sm:$0xf]
  %v919 = vld [vmem:[%s3 + $0x14] sm:$0xf]
  %v920 = vld [vmem:[%s3 + $0x18] sm:$0xf]
  %v921 = vld [vmem:[%s3 + $0x1c] sm:$0xf]
  %v922 = vunpack.c.l.bf16 %v914
  %v923 = vunpack.c.l.bf16 %v915
  %v924 = vunpack.c.l.bf16 %v916
  %v925 = vunpack.c.l.bf16 %v917
  %v926 = vunpack.c.l.bf16 %v918
  %v927 = vunpack.c.l.bf16 %v919
  %v928 = vunpack.c.l.bf16 %v920
  %v929 = vunpack.c.l.bf16 %v921
  %v930 = vld [vmem:[%s7] sm:$0xf]
  %v931 = vld [vmem:[%s7 + $0x4] sm:$0xf]
  %v932 = vld [vmem:[%s7 + $0x8] sm:$0xf]
  %v933 = vld [vmem:[%s7 + $0xc] sm:$0xf]
  %v934 = vpack.c.bf16 %v923, %v922
  %v935 = vpack.c.bf16 %v925, %v924
  %v936 = vpack.c.bf16 %v927, %v926
  %v937 = vpack.c.bf16 %v929, %v928
  %v942 = vunpack.c.l.b16 %v930
  %v943 = vunpack.c.l.b16 %v931
  %v944 = vunpack.c.l.b16 %v932
  %v945 = vunpack.c.l.b16 %v933
  %v946 = vpack.c.b16 %v943, %v942
  %v947 = vpack.c.b16 %v945, %v944
  %v951 = vsel %vm378, %v934, 0
  %v954 = vsel %vm378, %v935, 0
  %v957 = vsel %vm378, %v936, 0
  %v960 = vsel %vm378, %v937, 0
  %962 = vmatprep.subr.bf16.mxu0 0
  %963 = vmatpush1.bf16.msra.mxu0 %v946
  %964 = vmatprep.subr.bf16.mxu0 0
  %965 = vmatpush1.bf16.msra.mxu0 %v947
  %966 = vmatprep.subr.bf16.mxu0 0
  %967 = vmatpush1.bf16.msra.mxu0 0
  %968 = vmatprep.subr.bf16.mxu0 0
  %969 = vmatpush1.bf16.msra.mxu0 0
  %970 = vmatprep.subr.bf16.mxu0 0
  %971 = vmatpush1.bf16.msra.mxu0 0
  %972 = vmatprep.subr.bf16.mxu0 0
  %973 = vmatpush1.bf16.msra.mxu0 0
  %974 = vmatprep.subr.bf16.mxu0 0
  %975 = vmatpush1.bf16.msra.mxu0 0
  %976 = vmatprep.subr.bf16.mxu0 0
  %977 = vmatpush1.bf16.msra.mxu0 0
  %978 = vmatprep.subr.bf16.mxu0 0
  %979 = vmatpush1.bf16.msra.mxu0 0
  %980 = vmatprep.subr.bf16.mxu0 0
  %981 = vmatpush1.bf16.msra.mxu0 0
  %982 = vmatprep.subr.bf16.mxu0 0
  %983 = vmatpush1.bf16.msra.mxu0 0
  %984 = vmatprep.subr.bf16.mxu0 0
  %985 = vmatpush1.bf16.msra.mxu0 0
  %986 = vmatprep.subr.bf16.mxu0 0
  %987 = vmatpush1.bf16.msra.mxu0 0
  %988 = vmatprep.subr.bf16.mxu0 0
  %989 = vmatpush1.bf16.msra.mxu0 0
  %990 = vmatprep.subr.bf16.mxu0 0
  %991 = vmatpush1.bf16.msra.mxu0 0
  %992 = vmatprep.subr.bf16.mxu0 0
  %993 = vmatpush1.bf16.msra.mxu0 0
  %994 = vmatprep.mubr.bf16.mxu0 0
  %995 = vmatmul.mubr.bf16.gmra.mrb[0].mxu0 %v951
  %v996 = vpop.f32.mrb[0].mxu0
  %v997 = vadd.f32 0.0, %v996
  %v998 = vpop.f32.mrb[0].mxu0
  %v999 = vpop.f32.mrb[0].mxu0
  %v1000 = vadd.f32 0.0, %v999
  %v1001 = vpop.f32.mrb[0].mxu0
  %1002 = vmatprep.mubr.bf16.mxu0 0
  %1003 = vmatmul.mubr.bf16.gmra.mrb[0].mxu0 %v954
  %v1004 = vpop.f32.mrb[0].mxu0
  %v1005 = vadd.f32 0.0, %v1004
  %v1006 = vpop.f32.mrb[0].mxu0
  %v1007 = vpop.f32.mrb[0].mxu0
  %v1008 = vadd.f32 0.0, %v1007
  %v1009 = vpop.f32.mrb[0].mxu0
  %1010 = vmatprep.mubr.bf16.mxu0 0
  %1011 = vmatmul.mubr.bf16.gmra.mrb[0].mxu0 %v957
  %v1012 = vpop.f32.mrb[0].mxu0
  %v1013 = vadd.f32 0.0, %v1012
  %v1014 = vpop.f32.mrb[0].mxu0
  %v1015 = vpop.f32.mrb[0].mxu0
  %v1016 = vadd.f32 0.0, %v1015
  %v1017 = vpop.f32.mrb[0].mxu0
  %1018 = vmatprep.mubr.bf16.mxu0 0
  %1019 = vmatmul.mubr.bf16.gmra.mrb[0].mxu0 %v960
  %v1020 = vpop.f32.mrb[0].mxu0
  %v1021 = vadd.f32 0.0, %v1020
  %v1022 = vpop.f32.mrb[0].mxu0
  %v1023 = vpop.f32.mrb[0].mxu0
  %v1024 = vadd.f32 0.0, %v1023
  %v1025 = vpop.f32.mrb[0].mxu0
  %1026 = vdwg.mxu0
  %v1027 = vadd.f32 %v906, %v997
  %v1028 = vadd.f32 %v907, %v1000
  %v1029 = vadd.f32 %v908, %v1005
  %v1030 = vadd.f32 %v909, %v1008
  %v1031 = vadd.f32 %v910, %v1013
  %v1032 = vadd.f32 %v911, %v1016
  %v1033 = vadd.f32 %v912, %v1021
  %v1034 = vadd.f32 %v913, %v1024
  %v1035 = vld [vmem:[%s9] sm:$0x1]
  %v1037 = vlaneseq
  %v1038 = vshrl.u32 %v1037, 7
  %v1039 = vsub.s32 0, %v1038
  %v1040 = vrot.slane %v1035, %v1039
  %v1042 = vmul.f32 %v1027, %v1040
  %v1043 = vmul.f32 %v1028, %v1040
  %v1044 = vmul.f32 %v1029, %v1040
  %v1045 = vmul.f32 %v1030, %v1040
  %v1046 = vmul.f32 %v1031, %v1040
  %v1047 = vmul.f32 %v1032, %v1040
  %v1048 = vmul.f32 %v1033, %v1040
  %v1049 = vmul.f32 %v1034, %v1040
  %v1050 = vld [vmem:[%s10] sm:$0x1]
  %v1052 = vlaneseq
  %v1053 = vshrl.u32 %v1052, 7
  %v1054 = vsub.s32 0, %v1053
  %v1055 = vrot.slane %v1050, %v1054
  %v1057 = vadd.f32 %v1042, %v1055
  %v1058 = vadd.f32 %v1043, %v1055
  %v1059 = vadd.f32 %v1044, %v1055
  %v1060 = vadd.f32 %v1045, %v1055
  %v1061 = vadd.f32 %v1046, %v1055
  %v1062 = vadd.f32 %v1047, %v1055
  %v1063 = vadd.f32 %v1048, %v1055
  %v1064 = vadd.f32 %v1049, %v1055
  %v1065 = vmax.f32 %v1057, 0.0
  %v1066 = vmax.f32 %v1058, 0.0
  %v1067 = vmax.f32 %v1059, 0.0
  %v1068 = vmax.f32 %v1060, 0.0
  %v1069 = vmax.f32 %v1061, 0.0
  %v1070 = vmax.f32 %v1062, 0.0
  %v1071 = vmax.f32 %v1063, 0.0
  %v1072 = vmax.f32 %v1064, 0.0
  %v1073 = vmul.f32 %v1065, %v221
  %v1074 = vmul.f32 %v1066, %v222
  %v1075 = vmul.f32 %v1067, %v223
  %v1076 = vmul.f32 %v1068, %v224
  %v1077 = vmul.f32 %v1069, %v225
  %v1078 = vmul.f32 %v1070, %v226
  %v1079 = vmul.f32 %v1071, %v227
  %v1080 = vmul.f32 %v1072, %v228
  %v1089 = vrot.slane %v1073, 1
  %v1090 = vrot.slane %v1074, 1
  %v1091 = vsel %vm255, %v1089, %v1090
  %v1092 = vrot.slane %v1075, 1
  %v1093 = vsel %vm255, %v1090, %v1092
  %v1094 = vrot.slane %v1076, 1
  %v1095 = vsel %vm255, %v1092, %v1094
  %v1096 = vrot.slane %v1077, 1
  %v1097 = vsel %vm255, %v1094, %v1096
  %v1098 = vrot.slane %v1078, 1
  %v1099 = vsel %vm255, %v1096, %v1098
  %v1100 = vrot.slane %v1079, 1
  %v1101 = vsel %vm255, %v1098, %v1100
  %v1102 = vrot.slane %v1080, 1
  %v1103 = vsel %vm255, %v1100, %v1102
  %v1113 = vsel %vm255, 0.0, %v1089
  %v1114 = vsel %vm336, %v1102, 0.0
  %v1116 = vrot.slane %v1113, 1
  %v1117 = vrot.slane %v1091, 1
  %v1118 = vsel %vm255, %v1116, %v1117
  %v1119 = vrot.slane %v1093, 1
  %v1120 = vsel %vm255, %v1117, %v1119
  %v1121 = vrot.slane %v1095, 1
  %v1122 = vsel %vm255, %v1119, %v1121
  %v1123 = vrot.slane %v1097, 1
  %v1124 = vsel %vm255, %v1121, %v1123
  %v1125 = vrot.slane %v1099, 1
  %v1126 = vsel %vm255, %v1123, %v1125
  %v1127 = vrot.slane %v1101, 1
  %v1128 = vsel %vm255, %v1125, %v1127
  %v1129 = vrot.slane %v1103, 1
  %v1130 = vsel %vm255, %v1127, %v1129
  %1131 = vrot.lane.b32.xlu0 %v1118, 64
  %v1132 = vpop.permute.xlu0 %1131
  %1133 = vrot.lane.b32.xlu0 %v1120, 64
  %v1134 = vpop.permute.xlu0 %1133
  %1135 = vrot.lane.b32.xlu0 %v1122, 64
  %v1136 = vpop.permute.xlu0 %1135
  %1137 = vrot.lane.b32.xlu0 %v1124, 64
  %v1138 = vpop.permute.xlu0 %1137
  %1139 = vrot.lane.b32.xlu0 %v1126, 64
  %v1140 = vpop.permute.xlu0 %1139
  %1141 = vrot.lane.b32.xlu0 %v1128, 64
  %v1142 = vpop.permute.xlu0 %1141
  %1143 = vrot.lane.b32.xlu0 %v1130, 64
  %v1144 = vpop.permute.xlu0 %1143
  %1145 = vrot.lane.b32.xlu0 %v1129, 64
  %v1146 = vpop.permute.xlu0 %1145
  %vm1155 = vcmask 1045504
  %v1156 = vrot.slane %v1113, 2
  %v1157 = vrot.slane %v1091, 2
  %v1158 = vsel %vm1155, %v1156, %v1157
  %v1159 = vrot.slane %v1093, 2
  %v1160 = vsel %vm1155, %v1157, %v1159
  %v1161 = vrot.slane %v1095, 2
  %v1162 = vsel %vm1155, %v1159, %v1161
  %v1163 = vrot.slane %v1097, 2
  %v1164 = vsel %vm1155, %v1161, %v1163
  %v1165 = vrot.slane %v1099, 2
  %v1166 = vsel %vm1155, %v1163, %v1165
  %v1167 = vrot.slane %v1101, 2
  %v1168 = vsel %vm1155, %v1165, %v1167
  %v1169 = vrot.slane %v1103, 2
  %v1170 = vsel %vm1155, %v1167, %v1169
  %v1179 = vrot.slane %v1113, 6
  %v1180 = vrot.slane %v1091, 6
  %v1181 = vsel %vm295, %v1179, %v1180
  %v1182 = vrot.slane %v1093, 6
  %v1183 = vsel %vm295, %v1180, %v1182
  %v1184 = vrot.slane %v1095, 6
  %v1185 = vsel %vm295, %v1182, %v1184
  %v1186 = vrot.slane %v1097, 6
  %v1187 = vsel %vm295, %v1184, %v1186
  %v1188 = vrot.slane %v1099, 6
  %v1189 = vsel %vm295, %v1186, %v1188
  %v1190 = vrot.slane %v1101, 6
  %v1191 = vsel %vm295, %v1188, %v1190
  %v1192 = vrot.slane %v1103, 6
  %v1193 = vsel %vm295, %v1190, %v1192
  %1194 = vrot.lane.b32.xlu0 %v1181, 64
  %v1195 = vpop.permute.xlu0 %1194
  %1196 = vrot.lane.b32.xlu0 %v1183, 64
  %v1197 = vpop.permute.xlu0 %1196
  %1198 = vrot.lane.b32.xlu0 %v1185, 64
  %v1199 = vpop.permute.xlu0 %1198
  %1200 = vrot.lane.b32.xlu0 %v1187, 64
  %v1201 = vpop.permute.xlu0 %1200
  %1202 = vrot.lane.b32.xlu0 %v1189, 64
  %v1203 = vpop.permute.xlu0 %1202
  %1204 = vrot.lane.b32.xlu0 %v1191, 64
  %v1205 = vpop.permute.xlu0 %1204
  %1206 = vrot.lane.b32.xlu0 %v1193, 64
  %v1207 = vpop.permute.xlu0 %1206
  %1208 = vrot.lane.b32.xlu0 %v1192, 64
  %v1209 = vpop.permute.xlu0 %1208
  %v1219 = vrot.slane %v1113, 7
  %v1220 = vrot.slane %v1091, 7
  %v1221 = vsel %vm336, %v1219, %v1220
  %v1222 = vrot.slane %v1093, 7
  %v1223 = vsel %vm336, %v1220, %v1222
  %v1224 = vrot.slane %v1095, 7
  %v1225 = vsel %vm336, %v1222, %v1224
  %v1226 = vrot.slane %v1097, 7
  %v1227 = vsel %vm336, %v1224, %v1226
  %v1228 = vrot.slane %v1099, 7
  %v1229 = vsel %vm336, %v1226, %v1228
  %v1230 = vrot.slane %v1101, 7
  %v1231 = vsel %vm336, %v1228, %v1230
  %v1232 = vrot.slane %v1103, 7
  %v1233 = vsel %vm336, %v1230, %v1232
  %v1234 = vrot.slane %v1114, 7
  %v1235 = vsel %vm336, %v1232, %v1234
  %1244 = vrot.lane.b32.xlu0 %v1091, 64
  %v1245 = vpop.permute.xlu0 %1244
  %1246 = vrot.lane.b32.xlu0 %v1093, 64
  %v1247 = vpop.permute.xlu0 %1246
  %1248 = vrot.lane.b32.xlu0 %v1095, 64
  %v1249 = vpop.permute.xlu0 %1248
  %1250 = vrot.lane.b32.xlu0 %v1097, 64
  %v1251 = vpop.permute.xlu0 %1250
  %1252 = vrot.lane.b32.xlu0 %v1099, 64
  %v1253 = vpop.permute.xlu0 %1252
  %1254 = vrot.lane.b32.xlu0 %v1101, 64
  %v1255 = vpop.permute.xlu0 %1254
  %1256 = vrot.lane.b32.xlu0 %v1103, 64
  %v1257 = vpop.permute.xlu0 %1256
  %1258 = vrot.lane.b32.xlu0 %v1114, 64
  %v1259 = vpop.permute.xlu0 %1258
  %vm1268 = vcmask 1043456
  %v1269 = vrot.slane %v1091, 4
  %v1270 = vrot.slane %v1093, 4
  %v1271 = vsel %vm1268, %v1269, %v1270
  %v1272 = vrot.slane %v1095, 4
  %v1273 = vsel %vm1268, %v1270, %v1272
  %v1274 = vrot.slane %v1097, 4
  %v1275 = vsel %vm1268, %v1272, %v1274
  %v1276 = vrot.slane %v1099, 4
  %v1277 = vsel %vm1268, %v1274, %v1276
  %v1278 = vrot.slane %v1101, 4
  %v1279 = vsel %vm1268, %v1276, %v1278
  %v1280 = vrot.slane %v1103, 4
  %v1281 = vsel %vm1268, %v1278, %v1280
  %v1282 = vrot.slane %v1114, 4
  %v1283 = vsel %vm1268, %v1280, %v1282
  %vm1292 = vcmask 1042432
  %v1293 = vrot.slane %v1091, 5
  %v1294 = vrot.slane %v1093, 5
  %v1295 = vsel %vm1292, %v1293, %v1294
  %v1296 = vrot.slane %v1095, 5
  %v1297 = vsel %vm1292, %v1294, %v1296
  %v1298 = vrot.slane %v1097, 5
  %v1299 = vsel %vm1292, %v1296, %v1298
  %v1300 = vrot.slane %v1099, 5
  %v1301 = vsel %vm1292, %v1298, %v1300
  %v1302 = vrot.slane %v1101, 5
  %v1303 = vsel %vm1292, %v1300, %v1302
  %v1304 = vrot.slane %v1103, 5
  %v1305 = vsel %vm1292, %v1302, %v1304
  %v1306 = vrot.slane %v1114, 5
  %v1307 = vsel %vm1292, %v1304, %v1306
  %1308 = vrot.lane.b32.xlu0 %v1295, 64
  %v1309 = vpop.permute.xlu0 %1308
  %1310 = vrot.lane.b32.xlu0 %v1297, 64
  %v1311 = vpop.permute.xlu0 %1310
  %1312 = vrot.lane.b32.xlu0 %v1299, 64
  %v1313 = vpop.permute.xlu0 %1312
  %1314 = vrot.lane.b32.xlu0 %v1301, 64
  %v1315 = vpop.permute.xlu0 %1314
  %1316 = vrot.lane.b32.xlu0 %v1303, 64
  %v1317 = vpop.permute.xlu0 %1316
  %1318 = vrot.lane.b32.xlu0 %v1305, 64
  %v1319 = vpop.permute.xlu0 %1318
  %1320 = vrot.lane.b32.xlu0 %v1307, 64
  %v1321 = vpop.permute.xlu0 %1320
  %1322 = vrot.lane.b32.xlu0 %v1306, 64
  %v1323 = vpop.permute.xlu0 %1322
  %v1332 = vrot.slane %v1114, 6
  %v1333 = vsel %vm295, %v1192, %v1332
  %v1342 = vsel %vm387, %v1113, %v1132
  %v1343 = vsel %vm387, %v1091, %v1134
  %v1344 = vsel %vm387, %v1093, %v1136
  %v1345 = vsel %vm387, %v1095, %v1138
  %v1346 = vsel %vm387, %v1097, %v1140
  %v1347 = vsel %vm387, %v1099, %v1142
  %v1348 = vsel %vm387, %v1101, %v1144
  %v1349 = vsel %vm387, %v1103, %v1146
  %v1350 = vsel %vm387, %v1158, %v1195
  %v1351 = vsel %vm387, %v1160, %v1197
  %v1352 = vsel %vm387, %v1162, %v1199
  %v1353 = vsel %vm387, %v1164, %v1201
  %v1354 = vsel %vm387, %v1166, %v1203
  %v1355 = vsel %vm387, %v1168, %v1205
  %v1356 = vsel %vm387, %v1170, %v1207
  %v1357 = vsel %vm387, %v1169, %v1209
  %v1358 = vsel %vm387, %v1221, %v1245
  %v1359 = vsel %vm387, %v1223, %v1247
  %v1360 = vsel %vm387, %v1225, %v1249
  %v1361 = vsel %vm387, %v1227, %v1251
  %v1362 = vsel %vm387, %v1229, %v1253
  %v1363 = vsel %vm387, %v1231, %v1255
  %v1364 = vsel %vm387, %v1233, %v1257
  %v1365 = vsel %vm387, %v1235, %v1259
  %v1366 = vsel %vm387, %v1271, %v1309
  %v1367 = vsel %vm387, %v1273, %v1311
  %v1368 = vsel %vm387, %v1275, %v1313
  %v1369 = vsel %vm387, %v1277, %v1315
  %v1370 = vsel %vm387, %v1279, %v1317
  %v1371 = vsel %vm387, %v1281, %v1319
  %v1372 = vsel %vm387, %v1283, %v1321
  %v1373 = vsel %vm387, %v1282, %v1323
  %v1374 = vld [vmem:[%s8] sm:$0xf]
  %v1375 = vld [vmem:[%s8 + $0x4] sm:$0xf]
  %v1376 = vld [vmem:[%s8 + $0x8] sm:$0xf]
  %v1377 = vld [vmem:[%s8 + $0xc] sm:$0xf]
  %v1378 = vld [vmem:[%s8 + $0x10] sm:$0xf]
  %v1379 = vld [vmem:[%s8 + $0x14] sm:$0xf]
  %v1380 = vld [vmem:[%s8 + $0x18] sm:$0xf]
  %v1381 = vld [vmem:[%s8 + $0x1c] sm:$0xf]
  %v1382 = vld [vmem:[%s8 + $0x20] sm:$0xf]
  %v1383 = vld [vmem:[%s8 + $0x24] sm:$0xf]
  %v1384 = vld [vmem:[%s8 + $0x28] sm:$0xf]
  %v1385 = vld [vmem:[%s8 + $0x2c] sm:$0xf]
  %v1386 = vld [vmem:[%s8 + $0x30] sm:$0xf]
  %v1387 = vld [vmem:[%s8 + $0x34] sm:$0xf]
  %v1388 = vld [vmem:[%s8 + $0x38] sm:$0xf]
  %v1389 = vld [vmem:[%s8 + $0x3c] sm:$0xf]
  %v1390 = vld [vmem:[%s8 + $0x40] sm:$0xf]
  %v1391 = vld [vmem:[%s8 + $0x44] sm:$0xf]
  %v1392 = vld [vmem:[%s8 + $0x48] sm:$0xf]
  %v1393 = vld [vmem:[%s8 + $0x4c] sm:$0xf]
  %v1394 = vld [vmem:[%s8 + $0x50] sm:$0xf]
  %v1395 = vld [vmem:[%s8 + $0x54] sm:$0xf]
  %v1396 = vld [vmem:[%s8 + $0x58] sm:$0xf]
  %v1397 = vld [vmem:[%s8 + $0x5c] sm:$0xf]
  %v1398 = vld [vmem:[%s8 + $0x60] sm:$0xf]
  %v1399 = vld [vmem:[%s8 + $0x64] sm:$0xf]
  %v1400 = vld [vmem:[%s8 + $0x68] sm:$0xf]
  %v1401 = vld [vmem:[%s8 + $0x6c] sm:$0xf]
  %v1402 = vld [vmem:[%s8 + $0x70] sm:$0xf]
  %v1403 = vld [vmem:[%s8 + $0x74] sm:$0xf]
  %v1404 = vld [vmem:[%s8 + $0x78] sm:$0xf]
  %v1405 = vld [vmem:[%s8 + $0x7c] sm:$0xf]
  %v1406 = vld [vmem:[%s8 + $0x80] sm:$0xf]
  %v1407 = vld [vmem:[%s8 + $0x84] sm:$0xf]
  %v1408 = vld [vmem:[%s8 + $0x88] sm:$0xf]
  %v1409 = vld [vmem:[%s8 + $0x8c] sm:$0xf]
  %v1410 = vld [vmem:[%s8 + $0x90] sm:$0xf]
  %v1411 = vld [vmem:[%s8 + $0x94] sm:$0xf]
  %v1412 = vld [vmem:[%s8 + $0x98] sm:$0xf]
  %v1413 = vld [vmem:[%s8 + $0x9c] sm:$0xf]
  %v1414 = vld [vmem:[%s8 + $0xa0] sm:$0xf]
  %v1415 = vld [vmem:[%s8 + $0xa4] sm:$0xf]
  %v1416 = vld [vmem:[%s8 + $0xa8] sm:$0xf]
  %v1417 = vld [vmem:[%s8 + $0xac] sm:$0xf]
  %v1418 = vld [vmem:[%s8 + $0xb0] sm:$0xf]
  %v1419 = vld [vmem:[%s8 + $0xb4] sm:$0xf]
  %v1420 = vld [vmem:[%s8 + $0xb8] sm:$0xf]
  %v1421 = vld [vmem:[%s8 + $0xbc] sm:$0xf]
  %v1422 = vld [vmem:[%s8 + $0xc0] sm:$0xf]
  %v1423 = vld [vmem:[%s8 + $0xc4] sm:$0xf]
  %v1424 = vld [vmem:[%s8 + $0xc8] sm:$0xf]
  %v1425 = vld [vmem:[%s8 + $0xcc] sm:$0xf]
  %v1426 = vld [vmem:[%s8 + $0xd0] sm:$0xf]
  %v1427 = vld [vmem:[%s8 + $0xd4] sm:$0xf]
  %v1428 = vld [vmem:[%s8 + $0xd8] sm:$0xf]
  %v1429 = vld [vmem:[%s8 + $0xdc] sm:$0xf]
  %v1430 = vld [vmem:[%s8 + $0xe0] sm:$0xf]
  %v1431 = vld [vmem:[%s8 + $0xe4] sm:$0xf]
  %v1432 = vld [vmem:[%s8 + $0xe8] sm:$0xf]
  %v1433 = vld [vmem:[%s8 + $0xec] sm:$0xf]
  %v1434 = vld [vmem:[%s8 + $0xf0] sm:$0xf]
  %v1435 = vld [vmem:[%s8 + $0xf4] sm:$0xf]
  %v1436 = vld [vmem:[%s8 + $0xf8] sm:$0xf]
  %v1437 = vld [vmem:[%s8 + $0xfc] sm:$0xf]
  %v1438 = vld [vmem:[%s8 + $0x100] sm:$0xf]
  %v1439 = vld [vmem:[%s8 + $0x104] sm:$0xf]
  %v1440 = vld [vmem:[%s8 + $0x108] sm:$0xf]
  %v1441 = vld [vmem:[%s8 + $0x10c] sm:$0xf]
  %v1442 = vld [vmem:[%s8 + $0x110] sm:$0xf]
  %v1443 = vld [vmem:[%s8 + $0x114] sm:$0xf]
  %v1444 = vld [vmem:[%s8 + $0x118] sm:$0xf]
  %v1445 = vld [vmem:[%s8 + $0x11c] sm:$0xf]
  %v1446 = vpack.c.bf16 %v1343, %v1342
  %v1447 = vpack.c.bf16 %v1351, %v1350
  %v1448 = vpack.c.bf16 %v1359, %v1358
  %v1449 = vpack.c.bf16 %v1367, %v1366
  %v1450 = vpack.c.bf16 %v1185, %v1183
  %v1451 = vpack.c.bf16 %v1345, %v1344
  %v1452 = vpack.c.bf16 %v1353, %v1352
  %v1453 = vpack.c.bf16 %v1361, %v1360
  %v1454 = vpack.c.bf16 %v1369, %v1368
  %v1455 = vpack.c.bf16 %v1189, %v1187
  %v1456 = vpack.c.bf16 %v1347, %v1346
  %v1457 = vpack.c.bf16 %v1355, %v1354
  %v1458 = vpack.c.bf16 %v1363, %v1362
  %v1459 = vpack.c.bf16 %v1371, %v1370
  %v1460 = vpack.c.bf16 %v1193, %v1191
  %v1461 = vpack.c.bf16 %v1349, %v1348
  %v1462 = vpack.c.bf16 %v1357, %v1356
  %v1463 = vpack.c.bf16 %v1365, %v1364
  %v1464 = vpack.c.bf16 %v1373, %v1372
  %v1465 = vpack.c.bf16 %v1332, %v1333
  %v1538 = vunpack.c.l.b16 %v1374
  %v1539 = vunpack.c.l.b16 %v1375
  %v1540 = vunpack.c.l.b16 %v1376
  %v1541 = vunpack.c.l.b16 %v1377
  %v1542 = vunpack.c.l.b16 %v1378
  %v1543 = vunpack.c.l.b16 %v1379
  %v1544 = vunpack.c.l.b16 %v1380
  %v1545 = vunpack.c.l.b16 %v1381
  %v1546 = vunpack.c.l.b16 %v1382
  %v1547 = vunpack.c.l.b16 %v1383
  %v1548 = vunpack.c.l.b16 %v1384
  %v1549 = vunpack.c.l.b16 %v1385
  %v1550 = vunpack.c.l.b16 %v1386
  %v1551 = vunpack.c.l.b16 %v1387
  %v1552 = vunpack.c.l.b16 %v1388
  %v1553 = vunpack.c.l.b16 %v1389
  %v1554 = vunpack.c.l.b16 %v1390
  %v1555 = vunpack.c.l.b16 %v1391
  %v1556 = vunpack.c.l.b16 %v1392
  %v1557 = vunpack.c.l.b16 %v1393
  %v1558 = vunpack.c.l.b16 %v1394
  %v1559 = vunpack.c.l.b16 %v1395
  %v1560 = vunpack.c.l.b16 %v1396
  %v1561 = vunpack.c.l.b16 %v1397
  %v1562 = vunpack.c.l.b16 %v1398
  %v1563 = vunpack.c.l.b16 %v1399
  %v1564 = vunpack.c.l.b16 %v1400
  %v1565 = vunpack.c.l.b16 %v1401
  %v1566 = vunpack.c.l.b16 %v1402
  %v1567 = vunpack.c.l.b16 %v1403
  %v1568 = vunpack.c.l.b16 %v1404
  %v1569 = vunpack.c.l.b16 %v1405
  %v1570 = vunpack.c.l.b16 %v1406
  %v1571 = vunpack.c.l.b16 %v1407
  %v1572 = vunpack.c.l.b16 %v1408
  %v1573 = vunpack.c.l.b16 %v1409
  %v1574 = vunpack.c.l.b16 %v1410
  %v1575 = vunpack.c.l.b16 %v1411
  %v1576 = vunpack.c.l.b16 %v1412
  %v1577 = vunpack.c.l.b16 %v1413
  %v1578 = vunpack.c.l.b16 %v1414
  %v1579 = vunpack.c.l.b16 %v1415
  %v1580 = vunpack.c.l.b16 %v1416
  %v1581 = vunpack.c.l.b16 %v1417
  %v1582 = vunpack.c.l.b16 %v1418
  %v1583 = vunpack.c.l.b16 %v1419
  %v1584 = vunpack.c.l.b16 %v1420
  %v1585 = vunpack.c.l.b16 %v1421
  %v1586 = vunpack.c.l.b16 %v1422
  %v1587 = vunpack.c.l.b16 %v1423
  %v1588 = vunpack.c.l.b16 %v1424
  %v1589 = vunpack.c.l.b16 %v1425
  %v1590 = vunpack.c.l.b16 %v1426
  %v1591 = vunpack.c.l.b16 %v1427
  %v1592 = vunpack.c.l.b16 %v1428
  %v1593 = vunpack.c.l.b16 %v1429
  %v1594 = vunpack.c.l.b16 %v1430
  %v1595 = vunpack.c.l.b16 %v1431
  %v1596 = vunpack.c.l.b16 %v1432
  %v1597 = vunpack.c.l.b16 %v1433
  %v1598 = vunpack.c.l.b16 %v1434
  %v1599 = vunpack.c.l.b16 %v1435
  %v1600 = vunpack.c.l.b16 %v1436
  %v1601 = vunpack.c.l.b16 %v1437
  %v1602 = vunpack.c.l.b16 %v1438
  %v1603 = vunpack.c.l.b16 %v1439
  %v1604 = vunpack.c.l.b16 %v1440
  %v1605 = vunpack.c.l.b16 %v1441
  %v1606 = vunpack.c.l.b16 %v1442
  %v1607 = vunpack.c.l.b16 %v1443
  %v1608 = vunpack.c.l.b16 %v1444
  %v1609 = vunpack.c.l.b16 %v1445
  %v1610 = vpack.c.b16 %v1539, %v1538
  %v1611 = vpack.c.b16 %v1541, %v1540
  %v1612 = vpack.c.b16 %v1543, %v1542
  %v1613 = vpack.c.b16 %v1545, %v1544
  %v1614 = vpack.c.b16 %v1547, %v1546
  %v1615 = vpack.c.b16 %v1549, %v1548
  %v1616 = vpack.c.b16 %v1551, %v1550
  %v1617 = vpack.c.b16 %v1553, %v1552
  %v1618 = vpack.c.b16 %v1555, %v1554
  %v1619 = vpack.c.b16 %v1557, %v1556
  %v1620 = vpack.c.b16 %v1559, %v1558
  %v1621 = vpack.c.b16 %v1561, %v1560
  %v1622 = vpack.c.b16 %v1563, %v1562
  %v1623 = vpack.c.b16 %v1565, %v1564
  %v1624 = vpack.c.b16 %v1567, %v1566
  %v1625 = vpack.c.b16 %v1569, %v1568
  %v1626 = vpack.c.b16 %v1571, %v1570
  %v1627 = vpack.c.b16 %v1573, %v1572
  %v1628 = vpack.c.b16 %v1575, %v1574
  %v1629 = vpack.c.b16 %v1577, %v1576
  %v1630 = vpack.c.b16 %v1579, %v1578
  %v1631 = vpack.c.b16 %v1581, %v1580
  %v1632 = vpack.c.b16 %v1583, %v1582
  %v1633 = vpack.c.b16 %v1585, %v1584
  %v1634 = vpack.c.b16 %v1587, %v1586
  %v1635 = vpack.c.b16 %v1589, %v1588
  %v1636 = vpack.c.b16 %v1591, %v1590
  %v1637 = vpack.c.b16 %v1593, %v1592
  %v1638 = vpack.c.b16 %v1595, %v1594
  %v1639 = vpack.c.b16 %v1597, %v1596
  %v1640 = vpack.c.b16 %v1599, %v1598
  %v1641 = vpack.c.b16 %v1601, %v1600
  %v1642 = vpack.c.b16 %v1603, %v1602
  %v1643 = vpack.c.b16 %v1605, %v1604
  %v1644 = vpack.c.b16 %v1607, %v1606
  %v1645 = vpack.c.b16 %v1609, %v1608
  %v1683 = vsel %vm387, %v1450, 0
  %v1686 = vsel %vm387, %v1455, 0
  %v1689 = vsel %vm387, %v1460, 0
  %v1692 = vsel %vm387, %v1465, 0
  %1694 = vmatprep.subr.bf16.mxu0 0
  %1695 = vmatpush1.bf16.msra.mxu0 %v1610
  %1696 = vmatprep.subr.bf16.mxu0 0
  %1697 = vmatpush1.bf16.msra.mxu0 %v1611
  %1698 = vmatprep.subr.bf16.mxu0 0
  %1699 = vmatpush1.bf16.msra.mxu0 %v1612
  %1700 = vmatprep.subr.bf16.mxu0 0
  %1701 = vmatpush1.bf16.msra.mxu0 %v1613
  %1702 = vmatprep.subr.bf16.mxu0 0
  %1703 = vmatpush1.bf16.msra.mxu0 %v1614
  %1704 = vmatprep.subr.bf16.mxu0 0
  %1705 = vmatpush1.bf16.msra.mxu0 %v1615
  %1706 = vmatprep.subr.bf16.mxu0 0
  %1707 = vmatpush1.bf16.msra.mxu0 %v1616
  %1708 = vmatprep.subr.bf16.mxu0 0
  %1709 = vmatpush1.bf16.msra.mxu0 %v1617
  %1710 = vmatprep.subr.bf16.mxu0 0
  %1711 = vmatpush1.bf16.msra.mxu0 %v1618
  %1712 = vmatprep.subr.bf16.mxu0 0
  %1713 = vmatpush1.bf16.msra.mxu0 %v1619
  %1714 = vmatprep.subr.bf16.mxu0 0
  %1715 = vmatpush1.bf16.msra.mxu0 %v1620
  %1716 = vmatprep.subr.bf16.mxu0 0
  %1717 = vmatpush1.bf16.msra.mxu0 %v1621
  %1718 = vmatprep.subr.bf16.mxu0 0
  %1719 = vmatpush1.bf16.msra.mxu0 %v1622
  %1720 = vmatprep.subr.bf16.mxu0 0
  %1721 = vmatpush1.bf16.msra.mxu0 %v1623
  %1722 = vmatprep.subr.bf16.mxu0 0
  %1723 = vmatpush1.bf16.msra.mxu0 %v1624
  %1724 = vmatprep.subr.bf16.mxu0 0
  %1725 = vmatpush1.bf16.msra.mxu0 %v1625
  %1726 = vmatprep.mubr.bf16.mxu0 %v1447
  %1727 = vmatmul.mubr.bf16.gmra.mrb[0].mxu0 %v1446
  %v1728 = vpop.f32.mrb[0].mxu0
  %v1729 = vadd.f32 0.0, %v1728
  %v1730 = vpop.f32.mrb[0].mxu0
  %v1731 = vpop.f32.mrb[0].mxu0
  %v1732 = vadd.f32 0.0, %v1731
  %v1733 = vpop.f32.mrb[0].mxu0
  %1734 = vmatprep.mubr.bf16.mxu0 %v1452
  %1735 = vmatmul.mubr.bf16.gmra.mrb[0].mxu0 %v1451
  %v1736 = vpop.f32.mrb[0].mxu0
  %v1737 = vadd.f32 0.0, %v1736
  %v1738 = vpop.f32.mrb[0].mxu0
  %v1739 = vpop.f32.mrb[0].mxu0
  %v1740 = vadd.f32 0.0, %v1739
  %v1741 = vpop.f32.mrb[0].mxu0
  %1742 = vmatprep.mubr.bf16.mxu0 %v1457
  %1743 = vmatmul.mubr.bf16.gmra.mrb[0].mxu0 %v1456
  %v1744 = vpop.f32.mrb[0].mxu0
  %v1745 = vadd.f32 0.0, %v1744
  %v1746 = vpop.f32.mrb[0].mxu0
  %v1747 = vpop.f32.mrb[0].mxu0
  %v1748 = vadd.f32 0.0, %v1747
  %v1749 = vpop.f32.mrb[0].mxu0
  %1750 = vmatprep.mubr.bf16.mxu0 %v1462
  %1751 = vmatmul.mubr.bf16.gmra.mrb[0].mxu0 %v1461
  %v1752 = vpop.f32.mrb[0].mxu0
  %v1753 = vadd.f32 0.0, %v1752
  %v1754 = vpop.f32.mrb[0].mxu0
  %v1755 = vpop.f32.mrb[0].mxu0
  %v1756 = vadd.f32 0.0, %v1755
  %v1757 = vpop.f32.mrb[0].mxu0
  %1758 = vdwg.mxu0
  %1759 = vmatprep.subr.bf16.mxu0 0
  %1760 = vmatpush1.bf16.msra.mxu0 %v1626
  %1761 = vmatprep.subr.bf16.mxu0 0
  %1762 = vmatpush1.bf16.msra.mxu0 %v1627
  %1763 = vmatprep.subr.bf16.mxu0 0
  %1764 = vmatpush1.bf16.msra.mxu0 %v1628
  %1765 = vmatprep.subr.bf16.mxu0 0
  %1766 = vmatpush1.bf16.msra.mxu0 %v1629
  %1767 = vmatprep.subr.bf16.mxu0 0
  %1768 = vmatpush1.bf16.msra.mxu0 %v1630
  %1769 = vmatprep.subr.bf16.mxu0 0
  %1770 = vmatpush1.bf16.msra.mxu0 %v1631
  %1771 = vmatprep.subr.bf16.mxu0 0
  %1772 = vmatpush1.bf16.msra.mxu0 %v1632
  %1773 = vmatprep.subr.bf16.mxu0 0
  %1774 = vmatpush1.bf16.msra.mxu0 %v1633
  %1775 = vmatprep.subr.bf16.mxu0 0
  %1776 = vmatpush1.bf16.msra.mxu0 %v1634
  %1777 = vmatprep.subr.bf16.mxu0 0
  %1778 = vmatpush1.bf16.msra.mxu0 %v1635
  %1779 = vmatprep.subr.bf16.mxu0 0
  %1780 = vmatpush1.bf16.msra.mxu0 %v1636
  %1781 = vmatprep.subr.bf16.mxu0 0
  %1782 = vmatpush1.bf16.msra.mxu0 %v1637
  %1783 = vmatprep.subr.bf16.mxu0 0
  %1784 = vmatpush1.bf16.msra.mxu0 %v1638
  %1785 = vmatprep.subr.bf16.mxu0 0
  %1786 = vmatpush1.bf16.msra.mxu0 %v1639
  %1787 = vmatprep.subr.bf16.mxu0 0
  %1788 = vmatpush1.bf16.msra.mxu0 %v1640
  %1789 = vmatprep.subr.bf16.mxu0 0
  %1790 = vmatpush1.bf16.msra.mxu0 %v1641
  %1791 = vmatprep.mubr.bf16.mxu0 %v1449
  %1792 = vmatmul.mubr.bf16.gmra.mrb[0].mxu0 %v1448
  %v1793 = vpop.f32.mrb[0].mxu0
  %v1794 = vadd.f32 %v1729, %v1793
  %v1795 = vpop.f32.mrb[0].mxu0
  %v1796 = vpop.f32.mrb[0].mxu0
  %v1797 = vadd.f32 %v1732, %v1796
  %v1798 = vpop.f32.mrb[0].mxu0
  %1799 = vmatprep.mubr.bf16.mxu0 %v1454
  %1800 = vmatmul.mubr.bf16.gmra.mrb[0].mxu0 %v1453
  %v1801 = vpop.f32.mrb[0].mxu0
  %v1802 = vadd.f32 %v1737, %v1801
  %v1803 = vpop.f32.mrb[0].mxu0
  %v1804 = vpop.f32.mrb[0].mxu0
  %v1805 = vadd.f32 %v1740, %v1804
  %v1806 = vpop.f32.mrb[0].mxu0
  %1807 = vmatprep.mubr.bf16.mxu0 %v1459
  %1808 = vmatmul.mubr.bf16.gmra.mrb[0].mxu0 %v1458
  %v1809 = vpop.f32.mrb[0].mxu0
  %v1810 = vadd.f32 %v1745, %v1809
  %v1811 = vpop.f32.mrb[0].mxu0
  %v1812 = vpop.f32.mrb[0].mxu0
  %v1813 = vadd.f32 %v1748, %v1812
  %v1814 = vpop.f32.mrb[0].mxu0
  %1815 = vmatprep.mubr.bf16.mxu0 %v1464
  %1816 = vmatmul.mubr.bf16.gmra.mrb[0].mxu0 %v1463
  %v1817 = vpop.f32.mrb[0].mxu0
  %v1818 = vadd.f32 %v1753, %v1817
  %v1819 = vpop.f32.mrb[0].mxu0
  %v1820 = vpop.f32.mrb[0].mxu0
  %v1821 = vadd.f32 %v1756, %v1820
  %v1822 = vpop.f32.mrb[0].mxu0
  %1823 = vdwg.mxu0
  %1824 = vmatprep.subr.bf16.mxu0 0
  %1825 = vmatpush1.bf16.msra.mxu0 %v1642
  %1826 = vmatprep.subr.bf16.mxu0 0
  %1827 = vmatpush1.bf16.msra.mxu0 %v1643
  %1828 = vmatprep.subr.bf16.mxu0 0
  %1829 = vmatpush1.bf16.msra.mxu0 %v1644
  %1830 = vmatprep.subr.bf16.mxu0 0
  %1831 = vmatpush1.bf16.msra.mxu0 %v1645
  %1832 = vmatprep.subr.bf16.mxu0 0
  %1833 = vmatpush1.bf16.msra.mxu0 0
  %1834 = vmatprep.subr.bf16.mxu0 0
  %1835 = vmatpush1.bf16.msra.mxu0 0
  %1836 = vmatprep.subr.bf16.mxu0 0
  %1837 = vmatpush1.bf16.msra.mxu0 0
  %1838 = vmatprep.subr.bf16.mxu0 0
  %1839 = vmatpush1.bf16.msra.mxu0 0
  %1840 = vmatprep.subr.bf16.mxu0 0
  %1841 = vmatpush1.bf16.msra.mxu0 0
  %1842 = vmatprep.subr.bf16.mxu0 0
  %1843 = vmatpush1.bf16.msra.mxu0 0
  %1844 = vmatprep.subr.bf16.mxu0 0
  %1845 = vmatpush1.bf16.msra.mxu0 0
  %1846 = vmatprep.subr.bf16.mxu0 0
  %1847 = vmatpush1.bf16.msra.mxu0 0
  %1848 = vmatprep.subr.bf16.mxu0 0
  %1849 = vmatpush1.bf16.msra.mxu0 0
  %1850 = vmatprep.subr.bf16.mxu0 0
  %1851 = vmatpush1.bf16.msra.mxu0 0
  %1852 = vmatprep.subr.bf16.mxu0 0
  %1853 = vmatpush1.bf16.msra.mxu0 0
  %1854 = vmatprep.subr.bf16.mxu0 0
  %1855 = vmatpush1.bf16.msra.mxu0 0
  %1856 = vmatprep.mubr.bf16.mxu0 0
  %1857 = vmatmul.mubr.bf16.gmra.mrb[0].mxu0 %v1683
  %v1858 = vpop.f32.mrb[0].mxu0
  %v1859 = vadd.f32 %v1794, %v1858
  %v1860 = vpop.f32.mrb[0].mxu0
  %v1861 = vpop.f32.mrb[0].mxu0
  %v1862 = vadd.f32 %v1797, %v1861
  %v1863 = vpop.f32.mrb[0].mxu0
  %1864 = vmatprep.mubr.bf16.mxu0 0
  %1865 = vmatmul.mubr.bf16.gmra.mrb[0].mxu0 %v1686
  %v1866 = vpop.f32.mrb[0].mxu0
  %v1867 = vadd.f32 %v1802, %v1866
  %v1868 = vpop.f32.mrb[0].mxu0
  %v1869 = vpop.f32.mrb[0].mxu0
  %v1870 = vadd.f32 %v1805, %v1869
  %v1871 = vpop.f32.mrb[0].mxu0
  %1872 = vmatprep.mubr.bf16.mxu0 0
  %1873 = vmatmul.mubr.bf16.gmra.mrb[0].mxu0 %v1689
  %v1874 = vpop.f32.mrb[0].mxu0
  %v1875 = vadd.f32 %v1810, %v1874
  %v1876 = vpop.f32.mrb[0].mxu0
  %v1877 = vpop.f32.mrb[0].mxu0
  %v1878 = vadd.f32 %v1813, %v1877
  %v1879 = vpop.f32.mrb[0].mxu0
  %1880 = vmatprep.mubr.bf16.mxu0 0
  %1881 = vmatmul.mubr.bf16.gmra.mrb[0].mxu0 %v1692
  %v1882 = vpop.f32.mrb[0].mxu0
  %v1883 = vadd.f32 %v1818, %v1882
  %v1884 = vpop.f32.mrb[0].mxu0
  %v1885 = vpop.f32.mrb[0].mxu0
  %v1886 = vadd.f32 %v1821, %v1885
  %v1887 = vpop.f32.mrb[0].mxu0
  %1888 = vdwg.mxu0
  %v1889 = vld [vmem:[%s11] sm:$0x1]
  %v1891 = vlaneseq
  %v1892 = vshrl.u32 %v1891, 7
  %v1893 = vsub.s32 0, %v1892
  %v1894 = vrot.slane %v1889, %v1893
  %v1896 = vmul.f32 %v1859, %v1894
  %v1897 = vmul.f32 %v1862, %v1894
  %v1898 = vmul.f32 %v1867, %v1894
  %v1899 = vmul.f32 %v1870, %v1894
  %v1900 = vmul.f32 %v1875, %v1894
  %v1901 = vmul.f32 %v1878, %v1894
  %v1902 = vmul.f32 %v1883, %v1894
  %v1903 = vmul.f32 %v1886, %v1894
  %v1904 = vld [vmem:[%s12] sm:$0x1]
  %v1906 = vlaneseq
  %v1907 = vshrl.u32 %v1906, 7
  %v1908 = vsub.s32 0, %v1907
  %v1909 = vrot.slane %v1904, %v1908
  %v1911 = vadd.f32 %v1896, %v1909
  %v1912 = vadd.f32 %v1897, %v1909
  %v1913 = vadd.f32 %v1898, %v1909
  %v1914 = vadd.f32 %v1899, %v1909
  %v1915 = vadd.f32 %v1900, %v1909
  %v1916 = vadd.f32 %v1901, %v1909
  %v1917 = vadd.f32 %v1902, %v1909
  %v1918 = vadd.f32 %v1903, %v1909
  %v1919 = vld [vmem:[%s13] sm:$0x1]
  %v1921 = vlaneseq
  %v1922 = vshrl.u32 %v1921, 7
  %v1923 = vsub.s32 0, %v1922
  %v1924 = vrot.slane %v1919, %v1923
  %1925 = vrot.lane.b32.xlu0 %v1924, 64
  %v1926 = vpop.permute.xlu0 %1925
  %v1928 = vmul.f32 %v997, %v1926
  %v1929 = vmul.f32 %v1000, %v1926
  %v1930 = vmul.f32 %v1005, %v1926
  %v1931 = vmul.f32 %v1008, %v1926
  %v1932 = vmul.f32 %v1013, %v1926
  %v1933 = vmul.f32 %v1016, %v1926
  %v1934 = vmul.f32 %v1021, %v1926
  %v1935 = vmul.f32 %v1024, %v1926
  %v1936 = vld [vmem:[%s14] sm:$0x1]
  %v1938 = vlaneseq
  %v1939 = vshrl.u32 %v1938, 7
  %v1940 = vsub.s32 0, %v1939
  %v1941 = vrot.slane %v1936, %v1940
  %1942 = vrot.lane.b32.xlu0 %v1941, 64
  %v1943 = vpop.permute.xlu0 %1942
  %v1945 = vadd.f32 %v1928, %v1943
  %v1946 = vadd.f32 %v1929, %v1943
  %v1947 = vadd.f32 %v1930, %v1943
  %v1948 = vadd.f32 %v1931, %v1943
  %v1949 = vadd.f32 %v1932, %v1943
  %v1950 = vadd.f32 %v1933, %v1943
  %v1951 = vadd.f32 %v1934, %v1943
  %v1952 = vadd.f32 %v1935, %v1943
  %1961 = vrot.lane.b32.xlu0 %v1945, 64
  %v1962 = vpop.permute.xlu0 %1961
  %1963 = vrot.lane.b32.xlu0 %v1946, 64
  %v1964 = vpop.permute.xlu0 %1963
  %1965 = vrot.lane.b32.xlu0 %v1947, 64
  %v1966 = vpop.permute.xlu0 %1965
  %1967 = vrot.lane.b32.xlu0 %v1948, 64
  %v1968 = vpop.permute.xlu0 %1967
  %1969 = vrot.lane.b32.xlu0 %v1949, 64
  %v1970 = vpop.permute.xlu0 %1969
  %1971 = vrot.lane.b32.xlu0 %v1950, 64
  %v1972 = vpop.permute.xlu0 %1971
  %1973 = vrot.lane.b32.xlu0 %v1951, 64
  %v1974 = vpop.permute.xlu0 %1973
  %1975 = vrot.lane.b32.xlu0 %v1952, 64
  %v1976 = vpop.permute.xlu0 %1975
  %v1985 = vadd.f32 %v1911, %v1962
  %v1986 = vadd.f32 %v1912, %v1964
  %v1987 = vadd.f32 %v1913, %v1966
  %v1988 = vadd.f32 %v1914, %v1968
  %v1989 = vadd.f32 %v1915, %v1970
  %v1990 = vadd.f32 %v1916, %v1972
  %v1991 = vadd.f32 %v1917, %v1974
  %v1992 = vadd.f32 %v1918, %v1976
  %v1993 = vmax.f32 %v1985, 0.0
  %v1994 = vmax.f32 %v1986, 0.0
  %v1995 = vmax.f32 %v1987, 0.0
  %v1996 = vmax.f32 %v1988, 0.0
  %v1997 = vmax.f32 %v1989, 0.0
  %v1998 = vmax.f32 %v1990, 0.0
  %v1999 = vmax.f32 %v1991, 0.0
  %v2000 = vmax.f32 %v1992, 0.0
  %v2001 = vmul.f32 %v1993, %v221
  %v2002 = vmul.f32 %v1994, %v222
  %v2003 = vmul.f32 %v1995, %v223
  %v2004 = vmul.f32 %v1996, %v224
  %v2005 = vmul.f32 %v1997, %v225
  %v2006 = vmul.f32 %v1998, %v226
  %v2007 = vmul.f32 %v1999, %v227
  %v2008 = vmul.f32 %v2000, %v228
  %v2017 = vrot.slane %v2001, 1
  %v2018 = vrot.slane %v2002, 1
  %v2019 = vsel %vm255, %v2017, %v2018
  %v2020 = vrot.slane %v2003, 1
  %v2021 = vsel %vm255, %v2018, %v2020
  %v2022 = vrot.slane %v2004, 1
  %v2023 = vsel %vm255, %v2020, %v2022
  %v2024 = vrot.slane %v2005, 1
  %v2025 = vsel %vm255, %v2022, %v2024
  %v2026 = vrot.slane %v2006, 1
  %v2027 = vsel %vm255, %v2024, %v2026
  %v2028 = vrot.slane %v2007, 1
  %v2029 = vsel %vm255, %v2026, %v2028
  %v2030 = vrot.slane %v2008, 1
  %v2031 = vsel %vm255, %v2028, %v2030
  %v2041 = vsel %vm255, 0.0, %v2017
  %v2042 = vsel %vm336, %v2030, 0.0
  %v2043 = vpack.c.bf16 %v2019, %v2041
  %v2044 = vpack.c.bf16 %v2023, %v2021
  %v2045 = vpack.c.bf16 %v2027, %v2025
  %v2046 = vpack.c.bf16 %v2031, %v2029
  %v2047 = vpack.c.bf16 %v2042, %v2042
  %v2053 = vunpack.c.l.b16 %v2043
  %v2054 = vunpack.c.h.b16 %v2043
  %v2055 = vunpack.c.l.b16 %v2044
  %v2056 = vunpack.c.h.b16 %v2044
  %v2057 = vunpack.c.l.b16 %v2045
  %v2058 = vunpack.c.h.b16 %v2045
  %v2059 = vunpack.c.l.b16 %v2046
  %v2060 = vunpack.c.h.b16 %v2046
  %v2061 = vunpack.c.l.b16 %v2047
  %v2062 = vpack.c.b16 %v2053, %v2053
  %v2063 = vpack.c.b16 %v2054, %v2054
  %v2064 = vpack.c.b16 %v2055, %v2055
  %v2065 = vpack.c.b16 %v2056, %v2056
  %v2066 = vpack.c.b16 %v2057, %v2057
  %v2067 = vpack.c.b16 %v2058, %v2058
  %v2068 = vpack.c.b16 %v2059, %v2059
  %v2069 = vpack.c.b16 %v2060, %v2060
  %v2070 = vpack.c.b16 %v2061, %v2061
  %vm2080 = vcmask 519168
  %2081 = vst.msk [vmem:[%s15] sm:$0xf] %vm2080, %v2062
  %2082 = vst.msk [vmem:[%s15 + $0x4] sm:$0xf] %vm2080, %v2063
  %2083 = vst.msk [vmem:[%s15 + $0x8] sm:$0xf] %vm2080, %v2064
  %2084 = vst.msk [vmem:[%s15 + $0xc] sm:$0xf] %vm2080, %v2065
  %2085 = vst.msk [vmem:[%s15 + $0x10] sm:$0xf] %vm2080, %v2066
  %2086 = vst.msk [vmem:[%s15 + $0x14] sm:$0xf] %vm2080, %v2067
  %2087 = vst.msk [vmem:[%s15 + $0x18] sm:$0xf] %vm2080, %v2068
  %2088 = vst.msk [vmem:[%s15 + $0x1c] sm:$0xf] %vm2080, %v2069
  %2089 = vst.msk [vmem:[%s15 + $0x20] sm:$0xf] %vm2080, %v2070
  // Predicated region
  $region62: #{forward.4} parent=0 // pred_check
    _
  $region63: #{forward.4} parent=0 // pred_check_branch
    %2091 = sbr.rel (0) target = $region65
  $region64: #{forward.4} parent=0 // pred_region
    _
  $region65: #{forward.4} parent=0 // pred_fallthru
    _
  // Predicated region
  $region66: #{forward.4} parent=0 // pred_check
    _
  $region67: #{forward.4} parent=0 // pred_check_branch
    %2093 = sbr.rel (0) target = $region69
  $region68: #{forward.4} parent=0 // pred_region
    _
  $region69: #{forward.4} parent=0 // pred_fallthru
    _

// kernel: forward.5
$region0: #{forward.5}
  #allocation0 [shape = 'u32[]', space=smem, size = 0x4, offset = 0x4, fixed_abs, tag = 'smem constant byte address 0x4 - core index']
  #allocation1 [shape = 'u32[144,128]{1,0:T(1,128)}', space=vmem, size = 0x12000, scoped, tag = 'internal scratch']
  %s0 = inlined_call_operand.vmem [shape: bf16[32,64], index: 0, kind: input, shape index: {}]
  %s1 = inlined_call_operand.vmem [shape: bf16[32,64], index: 1, kind: input, shape index: {}]
  %s2 = inlined_call_operand.vmem [shape: bf16[32,64], index: 2, kind: input, shape index: {}]
  %s3 = inlined_call_operand.vmem [shape: bf16[32,64], index: 3, kind: input, shape index: {}]
  %s4 = inlined_call_operand.vmem [shape: bf16[256,128], index: 4, kind: input, shape index: {}]
  %s5 = inlined_call_operand.vmem [shape: bf16[128,128], index: 5, kind: input, shape index: {}]
  %s6 = inlined_call_operand.vmem [shape: bf16[128,128], index: 6, kind: input, shape index: {}]
  %s7 = inlined_call_operand.vmem [shape: bf16[64,256], index: 7, kind: input, shape index: {}]
  %s8 = inlined_call_operand.vmem [shape: bf16[1152,128], index: 8, kind: input, shape index: {}]
  %s9 = inlined_call_operand.vmem [shape: f32[1,128], index: 9, kind: input, shape index: {}]
  %s10 = inlined_call_operand.vmem [shape: f32[1,128], index: 10, kind: input, shape index: {}]
  %s11 = inlined_call_operand.vmem [shape: f32[1,128], index: 11, kind: input, shape index: {}]
  %s12 = inlined_call_operand.vmem [shape: f32[1,128], index: 12, kind: input, shape index: {}]
  %s13 = inlined_call_operand.vmem [shape: f32[1,128], index: 13, kind: input, shape index: {}]
  %s14 = inlined_call_operand.vmem [shape: f32[1,128], index: 14, kind: input, shape index: {}]
  %s15 = inlined_call_operand.vmem [shape: bf16[128,11], index: 15, kind: input, shape index: {}]
  %s16 = inlined_call_operand.vmem [shape: f32[1,11], index: 16, kind: input, shape index: {}]
  %s17 = inlined_call_operand.hbm [shape: f32[2,7], index: 17, kind: output, shape index: {0}]
  %s18 = inlined_call_operand.hbm [shape: f32[2,4], index: 18, kind: output, shape index: {1}]
  %19 = xla_tuple %s17, %s18
  %s20 = sld [smem:[#allocation0]]
  $region86: #{forward.5} parent=0
    _
  %s22 = ssub.s32 1, %s20
  %s23 = scalar_select 0, %s22, %s20
  $region1: #{forward.5} parent=0
    #allocation2 [shape = 'u8[1024]{0}', space=vmem, size = 0x400, scoped, tag = 'output window, operand 0, single buffered']
    #allocation3 [shape = 's32[1]{0}', space=sflag, size = 0x4, scoped, tag = 'scoped memory for forward.5']
    #allocation4 [shape = 'u8[1024]{0}', space=vmem, size = 0x400, scoped, tag = 'output window, operand 1, single buffered']
    #allocation5 [shape = 's32[1]{0}', space=sflag, size = 0x4, scoped, tag = 'scoped memory for forward.5']
    %24 = vsyncpa [#allocation3], 0
    %25 = vsyncpa [#allocation5], 0
    // Predicated region
    $region2: #{forward.5} parent=1 // pred_check
      _
    $region3: #{forward.5} parent=1 // pred_check_branch
      %27 = sbr.rel (0) target = $region5
    $region4: #{forward.5} parent=1 // pred_region
      _
    $region5: #{forward.5} parent=1 // pred_fallthru
      _
    // Predicated region
    $region6: #{forward.5} parent=1 // pred_check
      _
    $region7: #{forward.5} parent=1 // pred_check_branch
      %29 = sbr.rel (0) target = $region9
    $region8: #{forward.5} parent=1 // pred_region
      _
    $region9: #{forward.5} parent=1 // pred_fallthru
      _
    // Predicated region
    $region10: #{forward.5} parent=1 // pred_check
      _
    $region11: #{forward.5} parent=1 // pred_check_branch
      %31 = sbr.rel (0) target = $region13
    $region12: #{forward.5} parent=1 // pred_region
      _
    $region13: #{forward.5} parent=1 // pred_fallthru
      _
    // Predicated region
    $region14: #{forward.5} parent=1 // pred_check
      _
    $region15: #{forward.5} parent=1 // pred_check_branch
      %33 = sbr.rel (0) target = $region17
    $region16: #{forward.5} parent=1 // pred_region
      _
    $region17: #{forward.5} parent=1 // pred_fallthru
      _
    // Predicated region
    $region18: #{forward.5} parent=1 // pred_check
      _
    $region19: #{forward.5} parent=1 // pred_check_branch
      %35 = sbr.rel (0) target = $region21
    $region20: #{forward.5} parent=1 // pred_region
      _
    $region21: #{forward.5} parent=1 // pred_fallthru
      _
    // Predicated region
    $region22: #{forward.5} parent=1 // pred_check
      _
    $region23: #{forward.5} parent=1 // pred_check_branch
      %37 = sbr.rel (0) target = $region25
    $region24: #{forward.5} parent=1 // pred_region
      _
    $region25: #{forward.5} parent=1 // pred_fallthru
      _
    // Predicated region
    $region26: #{forward.5} parent=1 // pred_check
      _
    $region27: #{forward.5} parent=1 // pred_check_branch
      %39 = sbr.rel (0) target = $region29
    $region28: #{forward.5} parent=1 // pred_region
      _
    $region29: #{forward.5} parent=1 // pred_fallthru
      _
    // Predicated region
    $region30: #{forward.5} parent=1 // pred_check
      _
    $region31: #{forward.5} parent=1 // pred_check_branch
      %41 = sbr.rel (0) target = $region33
    $region32: #{forward.5} parent=1 // pred_region
      _
    $region33: #{forward.5} parent=1 // pred_fallthru
      _
    // Predicated region
    $region34: #{forward.5} parent=1 // pred_check
      _
    $region35: #{forward.5} parent=1 // pred_check_branch
      %43 = sbr.rel (0) target = $region37
    $region36: #{forward.5} parent=1 // pred_region
      _
    $region37: #{forward.5} parent=1 // pred_fallthru
      _
    // Predicated region
    $region38: #{forward.5} parent=1 // pred_check
      _
    $region39: #{forward.5} parent=1 // pred_check_branch
      %45 = sbr.rel (0) target = $region41
    $region40: #{forward.5} parent=1 // pred_region
      _
    $region41: #{forward.5} parent=1 // pred_fallthru
      _
    // Predicated region
    $region42: #{forward.5} parent=1 // pred_check
      _
    $region43: #{forward.5} parent=1 // pred_check_branch
      %47 = sbr.rel (0) target = $region45
    $region44: #{forward.5} parent=1 // pred_region
      _
    $region45: #{forward.5} parent=1 // pred_fallthru
      _
    // Predicated region
    $region46: #{forward.5} parent=1 // pred_check
      _
    $region47: #{forward.5} parent=1 // pred_check_branch
      %49 = sbr.rel (0) target = $region49
    $region48: #{forward.5} parent=1 // pred_region
      _
    $region49: #{forward.5} parent=1 // pred_fallthru
      _
    // Predicated region
    $region50: #{forward.5} parent=1 // pred_check
      _
    $region51: #{forward.5} parent=1 // pred_check_branch
      %51 = sbr.rel (0) target = $region53
    $region52: #{forward.5} parent=1 // pred_region
      _
    $region53: #{forward.5} parent=1 // pred_fallthru
      _
    // Predicated region
    $region54: #{forward.5} parent=1 // pred_check
      _
    $region55: #{forward.5} parent=1 // pred_check_branch
      %53 = sbr.rel (0) target = $region57
    $region56: #{forward.5} parent=1 // pred_region
      _
    $region57: #{forward.5} parent=1 // pred_fallthru
      _
    // Predicated region
    $region58: #{forward.5} parent=1 // pred_check
      _
    $region59: #{forward.5} parent=1 // pred_check_branch
      %55 = sbr.rel (0) target = $region61
    $region60: #{forward.5} parent=1 // pred_region
      _
    $region61: #{forward.5} parent=1 // pred_fallthru
      _
    // Predicated region
    $region62: #{forward.5} parent=1 // pred_check
      _
    $region63: #{forward.5} parent=1 // pred_check_branch
      %57 = sbr.rel (0) target = $region65
    $region64: #{forward.5} parent=1 // pred_region
      _
    $region65: #{forward.5} parent=1 // pred_fallthru
      _
    // Predicated region
    $region66: #{forward.5} parent=1 // pred_check
      _
    $region67: #{forward.5} parent=1 // pred_check_branch
      %59 = sbr.rel (0) target = $region69
    $region68: #{forward.5} parent=1 // pred_region
      _
    $region69: #{forward.5} parent=1 // pred_fallthru
      _
    %v61 = vlaneseq
    %v62 = vshrl.u32 %v61, 7
    %v63 = vadd.s32 %v62, 8
    %v64 = vadd.s32 %v62, 16
    %v65 = vcvt.s32.f32 %v62
    %v66 = vcvt.s32.f32 %v63
    %v67 = vcvt.s32.f32 %v64
    %v68 = vadd.f32 %v65, 5.0
    %v69 = vadd.f32 %v66, 5.0
    %v70 = vadd.f32 %v67, 5.0
    %v71 = vrcp.pop 4.0
    %v72 = vmul.f32 %v68, %v71
    %v73 = vmul.f32 %v69, %v71
    %v74 = vmul.f32 %v70, %v71
    %v75 = vadd.f32 %v72, 0.005
    %v76 = vadd.f32 %v73, 0.005
    %v77 = vadd.f32 %v74, 0.005
    %v78 = vfloor.f32 %v75
    %v79 = vfloor.f32 %v76
    %v80 = vfloor.f32 %v77
    %v81 = vmul.f32 %v78, 4.0
    %v82 = vmul.f32 %v79, 4.0
    %v83 = vmul.f32 %v80, 4.0
    %v84 = vsub.f32 %v68, %v81
    %v85 = vsub.f32 %v69, %v82
    %v86 = vsub.f32 %v70, %v83
    %v87 = vmul.f32 %v78, %v71
    %v88 = vmul.f32 %v79, %v71
    %v89 = vmul.f32 %v80, %v71
    %v90 = vadd.f32 %v87, 0.005
    %v91 = vadd.f32 %v88, 0.005
    %v92 = vadd.f32 %v89, 0.005
    %v93 = vfloor.f32 %v90
    %v94 = vfloor.f32 %v91
    %v95 = vfloor.f32 %v92
    %v96 = vmul.f32 %v93, 4.0
    %v97 = vmul.f32 %v94, 4.0
    %v98 = vmul.f32 %v95, 4.0
    %v99 = vsub.f32 %v78, %v96
    %v100 = vsub.f32 %v79, %v97
    %v101 = vsub.f32 %v80, %v98
    %vm102 = vcmp.ge.f32.partialorder %v99, 1.0
    %vm103 = vcmp.ge.f32.partialorder %v100, 1.0
    %vm104 = vcmp.ge.f32.partialorder %v101, 1.0
    %vm105 = vcmp.le.f32.partialorder %v99, 2.0
    %vm106 = vcmp.le.f32.partialorder %v100, 2.0
    %vm107 = vcmp.le.f32.partialorder %v101, 2.0
    %vm108 = vmand %vm102, %vm105
    %vm109 = vmand %vm103, %vm106
    %vm110 = vmand %vm104, %vm107
    %vm111 = vcmp.ge.f32.partialorder %v84, 1.0
    %vm112 = vcmp.ge.f32.partialorder %v85, 1.0
    %vm113 = vcmp.ge.f32.partialorder %v86, 1.0
    %vm114 = vmand %vm108, %vm111
    %vm115 = vmand %vm109, %vm112
    %vm116 = vmand %vm110, %vm113
    %vm117 = vcmp.le.f32.partialorder %v84, 2.0
    %vm118 = vcmp.le.f32.partialorder %v85, 2.0
    %vm119 = vcmp.le.f32.partialorder %v86, 2.0
    %vm120 = vmand %vm114, %vm117
    %vm121 = vmand %vm115, %vm118
    %vm122 = vmand %vm116, %vm119
    %v123 = vsel %vm120, 1, 0
    %v124 = vsel %vm121, 1, 0
    %v125 = vsel %vm122, 1, 0
    %v126 = vcvt.s32.f32 %v123
    %v127 = vcvt.s32.f32 %v124
    %v128 = vcvt.s32.f32 %v125
    %v129 = vld [vmem:[%s0] sm:$0xf]
    %v130 = vld [vmem:[%s0 + $0x4] sm:$0xf]
    %v131 = vld [vmem:[%s0 + $0x8] sm:$0xf]
    %v132 = vld [vmem:[%s0 + $0xc] sm:$0xf]
    %v133 = vunpack.c.l.bf16 %v129
    %v134 = vunpack.c.l.bf16 %v130
    %v135 = vunpack.c.l.bf16 %v131
    %v136 = vunpack.c.l.bf16 %v132
    %vm140 = vcmask 1046528
    %v141 = vrot.slane %v133, 1
    %v142 = vrot.slane %v134, 1
    %v143 = vsel %vm140, %v141, %v142
    %v144 = vrot.slane %v135, 1
    %v145 = vsel %vm140, %v142, %v144
    %146 = vrot.lane.b32.xlu0 %v143, 64
    %v147 = vpop.permute.xlu0 %146
    %148 = vrot.lane.b32.xlu0 %v145, 64
    %v149 = vpop.permute.xlu0 %148
    %150 = vrot.lane.b32.xlu0 %v144, 64
    %v151 = vpop.permute.xlu0 %150
    %vm156 = vcmask 1043456
    %v157 = vrot.slane %v133, 4
    %v158 = vrot.slane %v134, 4
    %v159 = vsel %vm156, %v157, %v158
    %v160 = vrot.slane %v135, 4
    %v161 = vsel %vm156, %v158, %v160
    %v162 = vrot.slane %v136, 4
    %v163 = vsel %vm156, %v160, %v162
    %vm167 = vcmask 1042432
    %v168 = vrot.slane %v133, 5
    %v169 = vrot.slane %v134, 5
    %v170 = vsel %vm167, %v168, %v169
    %v171 = vrot.slane %v135, 5
    %v172 = vsel %vm167, %v169, %v171
    %v173 = vrot.slane %v136, 5
    %v174 = vsel %vm167, %v171, %v173
    %175 = vrot.lane.b32.xlu0 %v170, 64
    %v176 = vpop.permute.xlu0 %175
    %177 = vrot.lane.b32.xlu0 %v172, 64
    %v178 = vpop.permute.xlu0 %177
    %179 = vrot.lane.b32.xlu0 %v174, 64
    %v180 = vpop.permute.xlu0 %179
    %vm184 = vcmask 523264
    %v185 = vsel %vm184, %v133, %v147
    %v186 = vsel %vm184, %v134, %v149
    %v187 = vsel %vm184, %v135, %v151
    %v188 = vsel %vm184, %v159, %v176
    %v189 = vsel %vm184, %v161, %v178
    %v190 = vsel %vm184, %v163, %v180
    %v191 = vld [vmem:[%s4] sm:$0xf]
    %v192 = vld [vmem:[%s4 + $0x4] sm:$0xf]
    %v193 = vld [vmem:[%s4 + $0x8] sm:$0xf]
    %v194 = vld [vmem:[%s4 + $0xc] sm:$0xf]
    %v195 = vld [vmem:[%s4 + $0x10] sm:$0xf]
    %v196 = vld [vmem:[%s4 + $0x14] sm:$0xf]
    %v197 = vld [vmem:[%s4 + $0x18] sm:$0xf]
    %v198 = vld [vmem:[%s4 + $0x1c] sm:$0xf]
    %v199 = vld [vmem:[%s4 + $0x20] sm:$0xf]
    %v200 = vld [vmem:[%s4 + $0x24] sm:$0xf]
    %v201 = vld [vmem:[%s4 + $0x28] sm:$0xf]
    %v202 = vld [vmem:[%s4 + $0x2c] sm:$0xf]
    %v203 = vld [vmem:[%s4 + $0x30] sm:$0xf]
    %v204 = vld [vmem:[%s4 + $0x34] sm:$0xf]
    %v205 = vld [vmem:[%s4 + $0x38] sm:$0xf]
    %v206 = vld [vmem:[%s4 + $0x3c] sm:$0xf]
    %v207 = vld [vmem:[%s4 + $0x40] sm:$0xf]
    %v208 = vld [vmem:[%s4 + $0x44] sm:$0xf]
    %v209 = vld [vmem:[%s4 + $0x48] sm:$0xf]
    %v210 = vld [vmem:[%s4 + $0x4c] sm:$0xf]
    %v211 = vld [vmem:[%s4 + $0x50] sm:$0xf]
    %v212 = vld [vmem:[%s4 + $0x54] sm:$0xf]
    %v213 = vld [vmem:[%s4 + $0x58] sm:$0xf]
    %v214 = vld [vmem:[%s4 + $0x5c] sm:$0xf]
    %v215 = vld [vmem:[%s4 + $0x60] sm:$0xf]
    %v216 = vld [vmem:[%s4 + $0x64] sm:$0xf]
    %v217 = vld [vmem:[%s4 + $0x68] sm:$0xf]
    %v218 = vld [vmem:[%s4 + $0x6c] sm:$0xf]
    %v219 = vld [vmem:[%s4 + $0x70] sm:$0xf]
    %v220 = vld [vmem:[%s4 + $0x74] sm:$0xf]
    %v221 = vld [vmem:[%s4 + $0x78] sm:$0xf]
    %v222 = vld [vmem:[%s4 + $0x7c] sm:$0xf]
    %v223 = vpack.c.bf16 %v186, %v185
    %v224 = vpack.c.bf16 %v189, %v188
    %v225 = vpack.c.bf16 %v187, %v187
    %v226 = vpack.c.bf16 %v190, %v190
    %v227 = vld [vmem:[%s1] sm:$0xf]
    %v228 = vld [vmem:[%s1 + $0x4] sm:$0xf]
    %v229 = vld [vmem:[%s1 + $0x8] sm:$0xf]
    %v230 = vld [vmem:[%s1 + $0xc] sm:$0xf]
    %v231 = vunpack.c.l.bf16 %v227
    %v232 = vunpack.c.l.bf16 %v228
    %v233 = vunpack.c.l.bf16 %v229
    %v234 = vunpack.c.l.bf16 %v230
    %v239 = vrot.slane %v231, 4
    %v240 = vrot.slane %v232, 4
    %v241 = vsel %vm156, %v239, %v240
    %v242 = vrot.slane %v233, 4
    %v243 = vsel %vm156, %v240, %v242
    %v244 = vrot.slane %v234, 4
    %v245 = vsel %vm156, %v242, %v244
    %246 = vrot.lane.b32.xlu0 %v241, 64
    %v247 = vpop.permute.xlu0 %246
    %248 = vrot.lane.b32.xlu0 %v243, 64
    %v249 = vpop.permute.xlu0 %248
    %250 = vrot.lane.b32.xlu0 %v245, 64
    %v251 = vpop.permute.xlu0 %250
    %v255 = vsel %vm184, %v231, %v247
    %v256 = vsel %vm184, %v232, %v249
    %v257 = vsel %vm184, %v233, %v251
    %v258 = vld [vmem:[%s5] sm:$0xf]
    %v259 = vld [vmem:[%s5 + $0x4] sm:$0xf]
    %v260 = vld [vmem:[%s5 + $0x8] sm:$0xf]
    %v261 = vld [vmem:[%s5 + $0xc] sm:$0xf]
    %v262 = vld [vmem:[%s5 + $0x10] sm:$0xf]
    %v263 = vld [vmem:[%s5 + $0x14] sm:$0xf]
    %v264 = vld [vmem:[%s5 + $0x18] sm:$0xf]
    %v265 = vld [vmem:[%s5 + $0x1c] sm:$0xf]
    %v266 = vld [vmem:[%s5 + $0x20] sm:$0xf]
    %v267 = vld [vmem:[%s5 + $0x24] sm:$0xf]
    %v268 = vld [vmem:[%s5 + $0x28] sm:$0xf]
    %v269 = vld [vmem:[%s5 + $0x2c] sm:$0xf]
    %v270 = vld [vmem:[%s5 + $0x30] sm:$0xf]
    %v271 = vld [vmem:[%s5 + $0x34] sm:$0xf]
    %v272 = vld [vmem:[%s5 + $0x38] sm:$0xf]
    %v273 = vld [vmem:[%s5 + $0x3c] sm:$0xf]
    %v274 = vpack.c.bf16 %v256, %v255
    %v275 = vpack.c.bf16 %v257, %v257
    %v292 = vunpack.c.l.b16 %v258
    %v293 = vunpack.c.l.b16 %v259
    %v294 = vunpack.c.l.b16 %v260
    %v295 = vunpack.c.l.b16 %v261
    %v296 = vunpack.c.l.b16 %v262
    %v297 = vunpack.c.l.b16 %v263
    %v298 = vunpack.c.l.b16 %v264
    %v299 = vunpack.c.l.b16 %v265
    %v300 = vunpack.c.l.b16 %v266
    %v301 = vunpack.c.l.b16 %v267
    %v302 = vunpack.c.l.b16 %v268
    %v303 = vunpack.c.l.b16 %v269
    %v304 = vunpack.c.l.b16 %v270
    %v305 = vunpack.c.l.b16 %v271
    %v306 = vunpack.c.l.b16 %v272
    %v307 = vunpack.c.l.b16 %v273
    %v308 = vpack.c.b16 %v293, %v292
    %v309 = vpack.c.b16 %v295, %v294
    %v310 = vpack.c.b16 %v297, %v296
    %v311 = vpack.c.b16 %v299, %v298
    %v312 = vpack.c.b16 %v301, %v300
    %v313 = vpack.c.b16 %v303, %v302
    %v314 = vpack.c.b16 %v305, %v304
    %v315 = vpack.c.b16 %v307, %v306
    %324 = vmatprep.subr.bf16.mxu0 0
    %325 = vmatpush1.bf16.msra.mxu0 %v308
    %326 = vmatprep.subr.bf16.mxu0 0
    %327 = vmatpush1.bf16.msra.mxu0 %v309
    %328 = vmatprep.subr.bf16.mxu0 0
    %329 = vmatpush1.bf16.msra.mxu0 %v310
    %330 = vmatprep.subr.bf16.mxu0 0
    %331 = vmatpush1.bf16.msra.mxu0 %v311
    %332 = vmatprep.subr.bf16.mxu0 0
    %333 = vmatpush1.bf16.msra.mxu0 %v312
    %334 = vmatprep.subr.bf16.mxu0 0
    %335 = vmatpush1.bf16.msra.mxu0 %v313
    %336 = vmatprep.subr.bf16.mxu0 0
    %337 = vmatpush1.bf16.msra.mxu0 %v314
    %338 = vmatprep.subr.bf16.mxu0 0
    %339 = vmatpush1.bf16.msra.mxu0 %v315
    %340 = vmatprep.subr.bf16.mxu0 0
    %341 = vmatpush1.bf16.msra.mxu0 0
    %342 = vmatprep.subr.bf16.mxu0 0
    %343 = vmatpush1.bf16.msra.mxu0 0
    %344 = vmatprep.subr.bf16.mxu0 0
    %345 = vmatpush1.bf16.msra.mxu0 0
    %346 = vmatprep.subr.bf16.mxu0 0
    %347 = vmatpush1.bf16.msra.mxu0 0
    %348 = vmatprep.subr.bf16.mxu0 0
    %349 = vmatpush1.bf16.msra.mxu0 0
    %350 = vmatprep.subr.bf16.mxu0 0
    %351 = vmatpush1.bf16.msra.mxu0 0
    %352 = vmatprep.subr.bf16.mxu0 0
    %353 = vmatpush1.bf16.msra.mxu0 0
    %354 = vmatprep.subr.bf16.mxu0 0
    %355 = vmatpush1.bf16.msra.mxu0 0
    %356 = vmatprep.mubr.bf16.mxu0 0
    %357 = vmatmul.mubr.bf16.gmra.mrb[0].mxu0 %v274
    %v358 = vpop.f32.mrb[0].mxu0
    %v359 = vadd.f32 0.0, %v358
    %v360 = vpop.f32.mrb[0].mxu0
    %v361 = vpop.f32.mrb[0].mxu0
    %v362 = vadd.f32 0.0, %v361
    %v363 = vpop.f32.mrb[0].mxu0
    %364 = vmatprep.mubr.bf16.mxu0 0
    %365 = vmatmul.mubr.bf16.gmra.mrb[0].mxu0 %v275
    %v366 = vpop.f32.mrb[0].mxu0
    %v367 = vadd.f32 0.0, %v366
    %v368 = vpop.f32.mrb[0].mxu0
    %v369 = vpop.f32.mrb[0].mxu0
    %v370 = vpop.f32.mrb[0].mxu0
    %371 = vdwg.mxu0
    %v404 = vunpack.c.l.b16 %v191
    %v405 = vunpack.c.l.b16 %v192
    %v406 = vunpack.c.l.b16 %v193
    %v407 = vunpack.c.l.b16 %v194
    %v408 = vunpack.c.l.b16 %v195
    %v409 = vunpack.c.l.b16 %v196
    %v410 = vunpack.c.l.b16 %v197
    %v411 = vunpack.c.l.b16 %v198
    %v412 = vunpack.c.l.b16 %v199
    %v413 = vunpack.c.l.b16 %v200
    %v414 = vunpack.c.l.b16 %v201
    %v415 = vunpack.c.l.b16 %v202
    %v416 = vunpack.c.l.b16 %v203
    %v417 = vunpack.c.l.b16 %v204
    %v418 = vunpack.c.l.b16 %v205
    %v419 = vunpack.c.l.b16 %v206
    %v420 = vunpack.c.l.b16 %v207
    %v421 = vunpack.c.l.b16 %v208
    %v422 = vunpack.c.l.b16 %v209
    %v423 = vunpack.c.l.b16 %v210
    %v424 = vunpack.c.l.b16 %v211
    %v425 = vunpack.c.l.b16 %v212
    %v426 = vunpack.c.l.b16 %v213
    %v427 = vunpack.c.l.b16 %v214
    %v428 = vunpack.c.l.b16 %v215
    %v429 = vunpack.c.l.b16 %v216
    %v430 = vunpack.c.l.b16 %v217
    %v431 = vunpack.c.l.b16 %v218
    %v432 = vunpack.c.l.b16 %v219
    %v433 = vunpack.c.l.b16 %v220
    %v434 = vunpack.c.l.b16 %v221
    %v435 = vunpack.c.l.b16 %v222
    %v436 = vpack.c.b16 %v405, %v404
    %v437 = vpack.c.b16 %v407, %v406
    %v438 = vpack.c.b16 %v409, %v408
    %v439 = vpack.c.b16 %v411, %v410
    %v440 = vpack.c.b16 %v413, %v412
    %v441 = vpack.c.b16 %v415, %v414
    %v442 = vpack.c.b16 %v417, %v416
    %v443 = vpack.c.b16 %v419, %v418
    %v444 = vpack.c.b16 %v421, %v420
    %v445 = vpack.c.b16 %v423, %v422
    %v446 = vpack.c.b16 %v425, %v424
    %v447 = vpack.c.b16 %v427, %v426
    %v448 = vpack.c.b16 %v429, %v428
    %v449 = vpack.c.b16 %v431, %v430
    %v450 = vpack.c.b16 %v433, %v432
    %v451 = vpack.c.b16 %v435, %v434
    %468 = vmatprep.subr.bf16.mxu0 0
    %469 = vmatpush1.bf16.msra.mxu0 %v436
    %470 = vmatprep.subr.bf16.mxu0 0
    %471 = vmatpush1.bf16.msra.mxu0 %v437
    %472 = vmatprep.subr.bf16.mxu0 0
    %473 = vmatpush1.bf16.msra.mxu0 %v438
    %474 = vmatprep.subr.bf16.mxu0 0
    %475 = vmatpush1.bf16.msra.mxu0 %v439
    %476 = vmatprep.subr.bf16.mxu0 0
    %477 = vmatpush1.bf16.msra.mxu0 %v440
    %478 = vmatprep.subr.bf16.mxu0 0
    %479 = vmatpush1.bf16.msra.mxu0 %v441
    %480 = vmatprep.subr.bf16.mxu0 0
    %481 = vmatpush1.bf16.msra.mxu0 %v442
    %482 = vmatprep.subr.bf16.mxu0 0
    %483 = vmatpush1.bf16.msra.mxu0 %v443
    %484 = vmatprep.subr.bf16.mxu0 0
    %485 = vmatpush1.bf16.msra.mxu0 %v444
    %486 = vmatprep.subr.bf16.mxu0 0
    %487 = vmatpush1.bf16.msra.mxu0 %v445
    %488 = vmatprep.subr.bf16.mxu0 0
    %489 = vmatpush1.bf16.msra.mxu0 %v446
    %490 = vmatprep.subr.bf16.mxu0 0
    %491 = vmatpush1.bf16.msra.mxu0 %v447
    %492 = vmatprep.subr.bf16.mxu0 0
    %493 = vmatpush1.bf16.msra.mxu0 %v448
    %494 = vmatprep.subr.bf16.mxu0 0
    %495 = vmatpush1.bf16.msra.mxu0 %v449
    %496 = vmatprep.subr.bf16.mxu0 0
    %497 = vmatpush1.bf16.msra.mxu0 %v450
    %498 = vmatprep.subr.bf16.mxu0 0
    %499 = vmatpush1.bf16.msra.mxu0 %v451
    %500 = vmatprep.mubr.bf16.mxu0 %v224
    %501 = vmatmul.mubr.bf16.gmra.mrb[0].mxu0 %v223
    %v502 = vpop.f32.mrb[0].mxu0
    %v503 = vadd.f32 %v359, %v502
    %v504 = vpop.f32.mrb[0].mxu0
    %v505 = vpop.f32.mrb[0].mxu0
    %v506 = vadd.f32 %v362, %v505
    %v507 = vpop.f32.mrb[0].mxu0
    %508 = vmatprep.mubr.bf16.mxu0 %v226
    %509 = vmatmul.mubr.bf16.gmra.mrb[0].mxu0 %v225
    %v510 = vpop.f32.mrb[0].mxu0
    %v511 = vadd.f32 %v367, %v510
    %v512 = vpop.f32.mrb[0].mxu0
    %v513 = vpop.f32.mrb[0].mxu0
    %v514 = vpop.f32.mrb[0].mxu0
    %515 = vdwg.mxu0
    %v516 = vld [vmem:[%s2] sm:$0xf]
    %v517 = vld [vmem:[%s2 + $0x4] sm:$0xf]
    %v518 = vld [vmem:[%s2 + $0x8] sm:$0xf]
    %v519 = vunpack.c.l.bf16 %v516
    %v520 = vunpack.c.l.bf16 %v517
    %v521 = vunpack.c.l.bf16 %v518
    %v525 = vrot.slane %v519, 1
    %v526 = vrot.slane %v520, 1
    %v527 = vsel %vm140, %v525, %v526
    %v528 = vrot.slane %v521, 1
    %v529 = vsel %vm140, %v526, %v528
    %530 = vrot.lane.b32.xlu0 %v527, 64
    %v531 = vpop.permute.xlu0 %530
    %532 = vrot.lane.b32.xlu0 %v529, 64
    %v533 = vpop.permute.xlu0 %532
    %534 = vrot.lane.b32.xlu0 %v528, 64
    %v535 = vpop.permute.xlu0 %534
    %v539 = vsel %vm184, %v519, %v531
    %v540 = vsel %vm184, %v520, %v533
    %v541 = vsel %vm184, %v521, %v535
    %v542 = vld [vmem:[%s6] sm:$0xf]
    %v543 = vld [vmem:[%s6 + $0x4] sm:$0xf]
    %v544 = vld [vmem:[%s6 + $0x8] sm:$0xf]
    %v545 = vld [vmem:[%s6 + $0xc] sm:$0xf]
    %v546 = vld [vmem:[%s6 + $0x10] sm:$0xf]
    %v547 = vld [vmem:[%s6 + $0x14] sm:$0xf]
    %v548 = vld [vmem:[%s6 + $0x18] sm:$0xf]
    %v549 = vld [vmem:[%s6 + $0x1c] sm:$0xf]
    %v550 = vld [vmem:[%s6 + $0x20] sm:$0xf]
    %v551 = vld [vmem:[%s6 + $0x24] sm:$0xf]
    %v552 = vld [vmem:[%s6 + $0x28] sm:$0xf]
    %v553 = vld [vmem:[%s6 + $0x2c] sm:$0xf]
    %v554 = vld [vmem:[%s6 + $0x30] sm:$0xf]
    %v555 = vld [vmem:[%s6 + $0x34] sm:$0xf]
    %v556 = vld [vmem:[%s6 + $0x38] sm:$0xf]
    %v557 = vld [vmem:[%s6 + $0x3c] sm:$0xf]
    %v558 = vpack.c.bf16 %v540, %v539
    %v559 = vpack.c.bf16 %v541, %v541
    %v576 = vunpack.c.l.b16 %v542
    %v577 = vunpack.c.l.b16 %v543
    %v578 = vunpack.c.l.b16 %v544
    %v579 = vunpack.c.l.b16 %v545
    %v580 = vunpack.c.l.b16 %v546
    %v581 = vunpack.c.l.b16 %v547
    %v582 = vunpack.c.l.b16 %v548
    %v583 = vunpack.c.l.b16 %v549
    %v584 = vunpack.c.l.b16 %v550
    %v585 = vunpack.c.l.b16 %v551
    %v586 = vunpack.c.l.b16 %v552
    %v587 = vunpack.c.l.b16 %v553
    %v588 = vunpack.c.l.b16 %v554
    %v589 = vunpack.c.l.b16 %v555
    %v590 = vunpack.c.l.b16 %v556
    %v591 = vunpack.c.l.b16 %v557
    %v592 = vpack.c.b16 %v577, %v576
    %v593 = vpack.c.b16 %v579, %v578
    %v594 = vpack.c.b16 %v581, %v580
    %v595 = vpack.c.b16 %v583, %v582
    %v596 = vpack.c.b16 %v585, %v584
    %v597 = vpack.c.b16 %v587, %v586
    %v598 = vpack.c.b16 %v589, %v588
    %v599 = vpack.c.b16 %v591, %v590
    %608 = vmatprep.subr.bf16.mxu0 0
    %609 = vmatpush1.bf16.msra.mxu0 %v592
    %610 = vmatprep.subr.bf16.mxu0 0
    %611 = vmatpush1.bf16.msra.mxu0 %v593
    %612 = vmatprep.subr.bf16.mxu0 0
    %613 = vmatpush1.bf16.msra.mxu0 %v594
    %614 = vmatprep.subr.bf16.mxu0 0
    %615 = vmatpush1.bf16.msra.mxu0 %v595
    %616 = vmatprep.subr.bf16.mxu0 0
    %617 = vmatpush1.bf16.msra.mxu0 %v596
    %618 = vmatprep.subr.bf16.mxu0 0
    %619 = vmatpush1.bf16.msra.mxu0 %v597
    %620 = vmatprep.subr.bf16.mxu0 0
    %621 = vmatpush1.bf16.msra.mxu0 %v598
    %622 = vmatprep.subr.bf16.mxu0 0
    %623 = vmatpush1.bf16.msra.mxu0 %v599
    %624 = vmatprep.subr.bf16.mxu0 0
    %625 = vmatpush1.bf16.msra.mxu0 0
    %626 = vmatprep.subr.bf16.mxu0 0
    %627 = vmatpush1.bf16.msra.mxu0 0
    %628 = vmatprep.subr.bf16.mxu0 0
    %629 = vmatpush1.bf16.msra.mxu0 0
    %630 = vmatprep.subr.bf16.mxu0 0
    %631 = vmatpush1.bf16.msra.mxu0 0
    %632 = vmatprep.subr.bf16.mxu0 0
    %633 = vmatpush1.bf16.msra.mxu0 0
    %634 = vmatprep.subr.bf16.mxu0 0
    %635 = vmatpush1.bf16.msra.mxu0 0
    %636 = vmatprep.subr.bf16.mxu0 0
    %637 = vmatpush1.bf16.msra.mxu0 0
    %638 = vmatprep.subr.bf16.mxu0 0
    %639 = vmatpush1.bf16.msra.mxu0 0
    %640 = vmatprep.mubr.bf16.mxu0 0
    %641 = vmatmul.mubr.bf16.gmra.mrb[0].mxu0 %v558
    %v642 = vpop.f32.mrb[0].mxu0
    %v643 = vadd.f32 0.0, %v642
    %v644 = vpop.f32.mrb[0].mxu0
    %v645 = vpop.f32.mrb[0].mxu0
    %v646 = vadd.f32 0.0, %v645
    %v647 = vpop.f32.mrb[0].mxu0
    %648 = vmatprep.mubr.bf16.mxu0 0
    %649 = vmatmul.mubr.bf16.gmra.mrb[0].mxu0 %v559
    %v650 = vpop.f32.mrb[0].mxu0
    %v651 = vadd.f32 0.0, %v650
    %v652 = vpop.f32.mrb[0].mxu0
    %v653 = vpop.f32.mrb[0].mxu0
    %v654 = vpop.f32.mrb[0].mxu0
    %655 = vdwg.mxu0
    %v656 = vadd.f32 %v503, %v643
    %v657 = vadd.f32 %v506, %v646
    %v658 = vadd.f32 %v511, %v651
    %v659 = vld [vmem:[%s3] sm:$0xf]
    %v660 = vld [vmem:[%s3 + $0x4] sm:$0xf]
    %v661 = vld [vmem:[%s3 + $0x8] sm:$0xf]
    %v662 = vunpack.c.l.bf16 %v659
    %v663 = vunpack.c.l.bf16 %v660
    %v664 = vunpack.c.l.bf16 %v661
    %v665 = vld [vmem:[%s7] sm:$0xff]
    %v666 = vld [vmem:[%s7 + $0x8] sm:$0xff]
    %v667 = vld [vmem:[%s7 + $0x10] sm:$0xff]
    %v668 = vld [vmem:[%s7 + $0x18] sm:$0xff]
    %v669 = vld [vmem:[%s7 + $0x20] sm:$0xff]
    %v670 = vld [vmem:[%s7 + $0x28] sm:$0xff]
    %v671 = vld [vmem:[%s7 + $0x30] sm:$0xff]
    %v672 = vld [vmem:[%s7 + $0x38] sm:$0xff]
    %v673 = vpack.c.bf16 %v663, %v662
    %v674 = vpack.c.bf16 %v664, %v664
    %v683 = vunpack.c.l.b16 %v665
    %v684 = vunpack.c.h.b16 %v665
    %v685 = vunpack.c.l.b16 %v666
    %v686 = vunpack.c.h.b16 %v666
    %v687 = vunpack.c.l.b16 %v667
    %v688 = vunpack.c.h.b16 %v667
    %v689 = vunpack.c.l.b16 %v668
    %v690 = vunpack.c.h.b16 %v668
    %v691 = vunpack.c.l.b16 %v669
    %v692 = vunpack.c.h.b16 %v669
    %v693 = vunpack.c.l.b16 %v670
    %v694 = vunpack.c.h.b16 %v670
    %v695 = vunpack.c.l.b16 %v671
    %v696 = vunpack.c.h.b16 %v671
    %v697 = vunpack.c.l.b16 %v672
    %v698 = vunpack.c.h.b16 %v672
    %v699 = vpack.c.b16 %v685, %v683
    %v700 = vpack.c.b16 %v686, %v684
    %v701 = vpack.c.b16 %v689, %v687
    %v702 = vpack.c.b16 %v690, %v688
    %v703 = vpack.c.b16 %v693, %v691
    %v704 = vpack.c.b16 %v694, %v692
    %v705 = vpack.c.b16 %v697, %v695
    %v706 = vpack.c.b16 %v698, %v696
    %v716 = vsel %vm184, %v673, 0
    %v719 = vsel %vm184, %v674, 0
    %721 = vmatprep.subr.bf16.mxu0 %v700
    %722 = vmatpush1.bf16.msra.mxu0 %v699
    %723 = vmatprep.subr.bf16.mxu0 %v702
    %724 = vmatpush1.bf16.msra.mxu0 %v701
    %725 = vmatprep.subr.bf16.mxu0 %v704
    %726 = vmatpush1.bf16.msra.mxu0 %v703
    %727 = vmatprep.subr.bf16.mxu0 %v706
    %728 = vmatpush1.bf16.msra.mxu0 %v705
    %729 = vmatprep.subr.bf16.mxu0 0
    %730 = vmatpush1.bf16.msra.mxu0 0
    %731 = vmatprep.subr.bf16.mxu0 0
    %732 = vmatpush1.bf16.msra.mxu0 0
    %733 = vmatprep.subr.bf16.mxu0 0
    %734 = vmatpush1.bf16.msra.mxu0 0
    %735 = vmatprep.subr.bf16.mxu0 0
    %736 = vmatpush1.bf16.msra.mxu0 0
    %737 = vmatprep.subr.bf16.mxu0 0
    %738 = vmatpush1.bf16.msra.mxu0 0
    %739 = vmatprep.subr.bf16.mxu0 0
    %740 = vmatpush1.bf16.msra.mxu0 0
    %741 = vmatprep.subr.bf16.mxu0 0
    %742 = vmatpush1.bf16.msra.mxu0 0
    %743 = vmatprep.subr.bf16.mxu0 0
    %744 = vmatpush1.bf16.msra.mxu0 0
    %745 = vmatprep.subr.bf16.mxu0 0
    %746 = vmatpush1.bf16.msra.mxu0 0
    %747 = vmatprep.subr.bf16.mxu0 0
    %748 = vmatpush1.bf16.msra.mxu0 0
    %749 = vmatprep.subr.bf16.mxu0 0
    %750 = vmatpush1.bf16.msra.mxu0 0
    %751 = vmatprep.subr.bf16.mxu0 0
    %752 = vmatpush1.bf16.msra.mxu0 0
    %753 = vmatprep.mubr.bf16.mxu0 0
    %754 = vmatmul.mubr.bf16.gmra.mrb[0].mxu0 %v716
    %v755 = vpop.f32.mrb[0].mxu0
    %v756 = vadd.f32 0.0, %v755
    %v757 = vpop.f32.mrb[0].mxu0
    %v758 = vadd.f32 0.0, %v757
    %v759 = vpop.f32.mrb[0].mxu0
    %v760 = vadd.f32 0.0, %v759
    %v761 = vpop.f32.mrb[0].mxu0
    %v762 = vadd.f32 0.0, %v761
    %763 = vmatprep.mubr.bf16.mxu0 0
    %764 = vmatmul.mubr.bf16.gmra.mrb[0].mxu0 %v719
    %v765 = vpop.f32.mrb[0].mxu0
    %v766 = vadd.f32 0.0, %v765
    %v767 = vpop.f32.mrb[0].mxu0
    %v768 = vadd.f32 0.0, %v767
    %v769 = vpop.f32.mrb[0].mxu0
    %v770 = vpop.f32.mrb[0].mxu0
    %771 = vdwg.mxu0
    %v772 = vadd.f32 %v656, %v756
    %v773 = vadd.f32 %v657, %v760
    %v774 = vadd.f32 %v658, %v766
    %v775 = vld [vmem:[%s9] sm:$0x1]
    %v777 = vlaneseq
    %v778 = vshrl.u32 %v777, 7
    %v779 = vsub.s32 0, %v778
    %v780 = vrot.slane %v775, %v779
    %v782 = vmul.f32 %v772, %v780
    %v783 = vmul.f32 %v773, %v780
    %v784 = vmul.f32 %v774, %v780
    %v785 = vld [vmem:[%s10] sm:$0x1]
    %v787 = vlaneseq
    %v788 = vshrl.u32 %v787, 7
    %v789 = vsub.s32 0, %v788
    %v790 = vrot.slane %v785, %v789
    %v792 = vadd.f32 %v782, %v790
    %v793 = vadd.f32 %v783, %v790
    %v794 = vadd.f32 %v784, %v790
    %v795 = vmax.f32 %v792, 0.0
    %v796 = vmax.f32 %v793, 0.0
    %v797 = vmax.f32 %v794, 0.0
    %v798 = vmul.f32 %v795, %v126
    %v799 = vmul.f32 %v796, %v127
    %v800 = vmul.f32 %v797, %v128
    %vm804 = vcmask 1044480
    %v805 = vrot.slane %v798, 3
    %v806 = vrot.slane %v799, 3
    %v807 = vsel %vm804, %v805, %v806
    %v808 = vrot.slane %v800, 3
    %v809 = vsel %vm804, %v806, %v808
    %v814 = vsel %vm804, 0.0, %v805
    %v815 = vsel %vm167, %v808, 0.0
    %v817 = vrot.slane %v814, 1
    %v818 = vrot.slane %v807, 1
    %v819 = vsel %vm140, %v817, %v818
    %v820 = vrot.slane %v809, 1
    %v821 = vsel %vm140, %v818, %v820
    %vm825 = vcmask 1045504
    %v826 = vrot.slane %v814, 2
    %v827 = vrot.slane %v807, 2
    %v828 = vsel %vm825, %v826, %v827
    %v829 = vrot.slane %v809, 2
    %v830 = vsel %vm825, %v827, %v829
    %v835 = vrot.slane %v814, 4
    %v836 = vrot.slane %v807, 4
    %v837 = vsel %vm156, %v835, %v836
    %v838 = vrot.slane %v809, 4
    %v839 = vsel %vm156, %v836, %v838
    %v840 = vrot.slane %v815, 4
    %v841 = vsel %vm156, %v838, %v840
    %v845 = vrot.slane %v814, 5
    %v846 = vrot.slane %v807, 5
    %v847 = vsel %vm167, %v845, %v846
    %v848 = vrot.slane %v809, 5
    %v849 = vsel %vm167, %v846, %v848
    %v850 = vrot.slane %v815, 5
    %v851 = vsel %vm167, %v848, %v850
    %vm855 = vcmask 1041408
    %v856 = vrot.slane %v814, 6
    %v857 = vrot.slane %v807, 6
    %v858 = vsel %vm855, %v856, %v857
    %v859 = vrot.slane %v809, 6
    %v860 = vsel %vm855, %v857, %v859
    %v861 = vrot.slane %v815, 6
    %v862 = vsel %vm855, %v859, %v861
    %v866 = vrot.slane %v815, 1
    %v867 = vsel %vm140, %v820, %v866
    %v870 = vrot.slane %v815, 2
    %v871 = vsel %vm825, %v829, %v870
    %v874 = vld [vmem:[%s8] sm:$0xf]
    %v875 = vld [vmem:[%s8 + $0x4] sm:$0xf]
    %v876 = vld [vmem:[%s8 + $0x8] sm:$0xf]
    %v877 = vld [vmem:[%s8 + $0xc] sm:$0xf]
    %v878 = vld [vmem:[%s8 + $0x10] sm:$0xf]
    %v879 = vld [vmem:[%s8 + $0x14] sm:$0xf]
    %v880 = vld [vmem:[%s8 + $0x18] sm:$0xf]
    %v881 = vld [vmem:[%s8 + $0x1c] sm:$0xf]
    %v882 = vld [vmem:[%s8 + $0x20] sm:$0xf]
    %v883 = vld [vmem:[%s8 + $0x24] sm:$0xf]
    %v884 = vld [vmem:[%s8 + $0x28] sm:$0xf]
    %v885 = vld [vmem:[%s8 + $0x2c] sm:$0xf]
    %v886 = vld [vmem:[%s8 + $0x30] sm:$0xf]
    %v887 = vld [vmem:[%s8 + $0x34] sm:$0xf]
    %v888 = vld [vmem:[%s8 + $0x38] sm:$0xf]
    %v889 = vld [vmem:[%s8 + $0x3c] sm:$0xf]
    %v890 = vld [vmem:[%s8 + $0x40] sm:$0xf]
    %v891 = vld [vmem:[%s8 + $0x44] sm:$0xf]
    %v892 = vld [vmem:[%s8 + $0x48] sm:$0xf]
    %v893 = vld [vmem:[%s8 + $0x4c] sm:$0xf]
    %v894 = vld [vmem:[%s8 + $0x50] sm:$0xf]
    %v895 = vld [vmem:[%s8 + $0x54] sm:$0xf]
    %v896 = vld [vmem:[%s8 + $0x58] sm:$0xf]
    %v897 = vld [vmem:[%s8 + $0x5c] sm:$0xf]
    %v898 = vld [vmem:[%s8 + $0x60] sm:$0xf]
    %v899 = vld [vmem:[%s8 + $0x64] sm:$0xf]
    %v900 = vld [vmem:[%s8 + $0x68] sm:$0xf]
    %v901 = vld [vmem:[%s8 + $0x6c] sm:$0xf]
    %v902 = vld [vmem:[%s8 + $0x70] sm:$0xf]
    %v903 = vld [vmem:[%s8 + $0x74] sm:$0xf]
    %v904 = vld [vmem:[%s8 + $0x78] sm:$0xf]
    %v905 = vld [vmem:[%s8 + $0x7c] sm:$0xf]
    %v906 = vld [vmem:[%s8 + $0x80] sm:$0xf]
    %v907 = vld [vmem:[%s8 + $0x84] sm:$0xf]
    %v908 = vld [vmem:[%s8 + $0x88] sm:$0xf]
    %v909 = vld [vmem:[%s8 + $0x8c] sm:$0xf]
    %v910 = vld [vmem:[%s8 + $0x90] sm:$0xf]
    %v911 = vld [vmem:[%s8 + $0x94] sm:$0xf]
    %v912 = vld [vmem:[%s8 + $0x98] sm:$0xf]
    %v913 = vld [vmem:[%s8 + $0x9c] sm:$0xf]
    %v914 = vld [vmem:[%s8 + $0xa0] sm:$0xf]
    %v915 = vld [vmem:[%s8 + $0xa4] sm:$0xf]
    %v916 = vld [vmem:[%s8 + $0xa8] sm:$0xf]
    %v917 = vld [vmem:[%s8 + $0xac] sm:$0xf]
    %v918 = vld [vmem:[%s8 + $0xb0] sm:$0xf]
    %v919 = vld [vmem:[%s8 + $0xb4] sm:$0xf]
    %v920 = vld [vmem:[%s8 + $0xb8] sm:$0xf]
    %v921 = vld [vmem:[%s8 + $0xbc] sm:$0xf]
    %v922 = vld [vmem:[%s8 + $0xc0] sm:$0xf]
    %v923 = vld [vmem:[%s8 + $0xc4] sm:$0xf]
    %v924 = vld [vmem:[%s8 + $0xc8] sm:$0xf]
    %v925 = vld [vmem:[%s8 + $0xcc] sm:$0xf]
    %v926 = vld [vmem:[%s8 + $0xd0] sm:$0xf]
    %v927 = vld [vmem:[%s8 + $0xd4] sm:$0xf]
    %v928 = vld [vmem:[%s8 + $0xd8] sm:$0xf]
    %v929 = vld [vmem:[%s8 + $0xdc] sm:$0xf]
    %v930 = vld [vmem:[%s8 + $0xe0] sm:$0xf]
    %v931 = vld [vmem:[%s8 + $0xe4] sm:$0xf]
    %v932 = vld [vmem:[%s8 + $0xe8] sm:$0xf]
    %v933 = vld [vmem:[%s8 + $0xec] sm:$0xf]
    %v934 = vld [vmem:[%s8 + $0xf0] sm:$0xf]
    %v935 = vld [vmem:[%s8 + $0xf4] sm:$0xf]
    %v936 = vld [vmem:[%s8 + $0xf8] sm:$0xf]
    %v937 = vld [vmem:[%s8 + $0xfc] sm:$0xf]
    %v938 = vld [vmem:[%s8 + $0x100] sm:$0xf]
    %v939 = vld [vmem:[%s8 + $0x104] sm:$0xf]
    %v940 = vld [vmem:[%s8 + $0x108] sm:$0xf]
    %v941 = vld [vmem:[%s8 + $0x10c] sm:$0xf]
    %v942 = vld [vmem:[%s8 + $0x110] sm:$0xf]
    %v943 = vld [vmem:[%s8 + $0x114] sm:$0xf]
    %v944 = vld [vmem:[%s8 + $0x118] sm:$0xf]
    %v945 = vld [vmem:[%s8 + $0x11c] sm:$0xf]
    %v946 = vld [vmem:[%s8 + $0x120] sm:$0xf]
    %v947 = vld [vmem:[%s8 + $0x124] sm:$0xf]
    %v948 = vld [vmem:[%s8 + $0x128] sm:$0xf]
    %v949 = vld [vmem:[%s8 + $0x12c] sm:$0xf]
    %v950 = vld [vmem:[%s8 + $0x130] sm:$0xf]
    %v951 = vld [vmem:[%s8 + $0x134] sm:$0xf]
    %v952 = vld [vmem:[%s8 + $0x138] sm:$0xf]
    %v953 = vld [vmem:[%s8 + $0x13c] sm:$0xf]
    %v954 = vld [vmem:[%s8 + $0x140] sm:$0xf]
    %v955 = vld [vmem:[%s8 + $0x144] sm:$0xf]
    %v956 = vld [vmem:[%s8 + $0x148] sm:$0xf]
    %v957 = vld [vmem:[%s8 + $0x14c] sm:$0xf]
    %v958 = vld [vmem:[%s8 + $0x150] sm:$0xf]
    %v959 = vld [vmem:[%s8 + $0x154] sm:$0xf]
    %v960 = vld [vmem:[%s8 + $0x158] sm:$0xf]
    %v961 = vld [vmem:[%s8 + $0x15c] sm:$0xf]
    %v962 = vld [vmem:[%s8 + $0x160] sm:$0xf]
    %v963 = vld [vmem:[%s8 + $0x164] sm:$0xf]
    %v964 = vld [vmem:[%s8 + $0x168] sm:$0xf]
    %v965 = vld [vmem:[%s8 + $0x16c] sm:$0xf]
    %v966 = vld [vmem:[%s8 + $0x170] sm:$0xf]
    %v967 = vld [vmem:[%s8 + $0x174] sm:$0xf]
    %v968 = vld [vmem:[%s8 + $0x178] sm:$0xf]
    %v969 = vld [vmem:[%s8 + $0x17c] sm:$0xf]
    %v970 = vld [vmem:[%s8 + $0x180] sm:$0xf]
    %v971 = vld [vmem:[%s8 + $0x184] sm:$0xf]
    %v972 = vld [vmem:[%s8 + $0x188] sm:$0xf]
    %v973 = vld [vmem:[%s8 + $0x18c] sm:$0xf]
    %v974 = vld [vmem:[%s8 + $0x190] sm:$0xf]
    %v975 = vld [vmem:[%s8 + $0x194] sm:$0xf]
    %v976 = vld [vmem:[%s8 + $0x198] sm:$0xf]
    %v977 = vld [vmem:[%s8 + $0x19c] sm:$0xf]
    %v978 = vld [vmem:[%s8 + $0x1a0] sm:$0xf]
    %v979 = vld [vmem:[%s8 + $0x1a4] sm:$0xf]
    %v980 = vld [vmem:[%s8 + $0x1a8] sm:$0xf]
    %v981 = vld [vmem:[%s8 + $0x1ac] sm:$0xf]
    %v982 = vld [vmem:[%s8 + $0x1b0] sm:$0xf]
    %v983 = vld [vmem:[%s8 + $0x1b4] sm:$0xf]
    %v984 = vld [vmem:[%s8 + $0x1b8] sm:$0xf]
    %v985 = vld [vmem:[%s8 + $0x1bc] sm:$0xf]
    %v986 = vld [vmem:[%s8 + $0x1c0] sm:$0xf]
    %v987 = vld [vmem:[%s8 + $0x1c4] sm:$0xf]
    %v988 = vld [vmem:[%s8 + $0x1c8] sm:$0xf]
    %v989 = vld [vmem:[%s8 + $0x1cc] sm:$0xf]
    %v990 = vld [vmem:[%s8 + $0x1d0] sm:$0xf]
    %v991 = vld [vmem:[%s8 + $0x1d4] sm:$0xf]
    %v992 = vld [vmem:[%s8 + $0x1d8] sm:$0xf]
    %v993 = vld [vmem:[%s8 + $0x1dc] sm:$0xf]
    %v994 = vld [vmem:[%s8 + $0x1e0] sm:$0xf]
    %v995 = vld [vmem:[%s8 + $0x1e4] sm:$0xf]
    %v996 = vld [vmem:[%s8 + $0x1e8] sm:$0xf]
    %v997 = vld [vmem:[%s8 + $0x1ec] sm:$0xf]
    %v998 = vld [vmem:[%s8 + $0x1f0] sm:$0xf]
    %v999 = vld [vmem:[%s8 + $0x1f4] sm:$0xf]
    %v1000 = vld [vmem:[%s8 + $0x1f8] sm:$0xf]
    %v1001 = vld [vmem:[%s8 + $0x1fc] sm:$0xf]
    %v1002 = vld [vmem:[%s8 + $0x200] sm:$0xf]
    %v1003 = vld [vmem:[%s8 + $0x204] sm:$0xf]
    %v1004 = vld [vmem:[%s8 + $0x208] sm:$0xf]
    %v1005 = vld [vmem:[%s8 + $0x20c] sm:$0xf]
    %v1006 = vld [vmem:[%s8 + $0x210] sm:$0xf]
    %v1007 = vld [vmem:[%s8 + $0x214] sm:$0xf]
    %v1008 = vld [vmem:[%s8 + $0x218] sm:$0xf]
    %v1009 = vld [vmem:[%s8 + $0x21c] sm:$0xf]
    %v1010 = vld [vmem:[%s8 + $0x220] sm:$0xf]
    %v1011 = vld [vmem:[%s8 + $0x224] sm:$0xf]
    %v1012 = vld [vmem:[%s8 + $0x228] sm:$0xf]
    %v1013 = vld [vmem:[%s8 + $0x22c] sm:$0xf]
    %v1014 = vld [vmem:[%s8 + $0x230] sm:$0xf]
    %v1015 = vld [vmem:[%s8 + $0x234] sm:$0xf]
    %v1016 = vld [vmem:[%s8 + $0x238] sm:$0xf]
    %v1017 = vld [vmem:[%s8 + $0x23c] sm:$0xf]
    %v1018 = vpack.c.bf16 %v807, %v814
    %v1019 = vpack.c.bf16 %v821, %v819
    %v1020 = vpack.c.bf16 %v830, %v828
    %v1021 = vpack.c.bf16 %v839, %v837
    %v1022 = vpack.c.bf16 %v849, %v847
    %v1023 = vpack.c.bf16 %v860, %v858
    %v1024 = vpack.c.bf16 %v809, %v807
    %v1025 = vpack.c.bf16 %v867, %v821
    %v1026 = vpack.c.bf16 %v871, %v830
    %v1027 = vpack.c.bf16 %v809, %v809
    %v1028 = vpack.c.bf16 %v820, %v820
    %v1029 = vpack.c.bf16 %v829, %v829
    %v1030 = vpack.c.bf16 %v841, %v841
    %v1031 = vpack.c.bf16 %v851, %v851
    %v1032 = vpack.c.bf16 %v862, %v862
    %v1033 = vpack.c.bf16 %v815, %v815
    %v1034 = vpack.c.bf16 %v866, %v866
    %v1035 = vpack.c.bf16 %v870, %v870
    %v1180 = vunpack.c.l.b16 %v874
    %v1181 = vunpack.c.l.b16 %v875
    %v1182 = vunpack.c.l.b16 %v876
    %v1183 = vunpack.c.l.b16 %v877
    %v1184 = vunpack.c.l.b16 %v878
    %v1185 = vunpack.c.l.b16 %v879
    %v1186 = vunpack.c.l.b16 %v880
    %v1187 = vunpack.c.l.b16 %v881
    %v1188 = vunpack.c.l.b16 %v882
    %v1189 = vunpack.c.l.b16 %v883
    %v1190 = vunpack.c.l.b16 %v884
    %v1191 = vunpack.c.l.b16 %v885
    %v1192 = vunpack.c.l.b16 %v886
    %v1193 = vunpack.c.l.b16 %v887
    %v1194 = vunpack.c.l.b16 %v888
    %v1195 = vunpack.c.l.b16 %v889
    %v1196 = vunpack.c.l.b16 %v890
    %v1197 = vunpack.c.l.b16 %v891
    %v1198 = vunpack.c.l.b16 %v892
    %v1199 = vunpack.c.l.b16 %v893
    %v1200 = vunpack.c.l.b16 %v894
    %v1201 = vunpack.c.l.b16 %v895
    %v1202 = vunpack.c.l.b16 %v896
    %v1203 = vunpack.c.l.b16 %v897
    %v1204 = vunpack.c.l.b16 %v898
    %v1205 = vunpack.c.l.b16 %v899
    %v1206 = vunpack.c.l.b16 %v900
    %v1207 = vunpack.c.l.b16 %v901
    %v1208 = vunpack.c.l.b16 %v902
    %v1209 = vunpack.c.l.b16 %v903
    %v1210 = vunpack.c.l.b16 %v904
    %v1211 = vunpack.c.l.b16 %v905
    %v1212 = vunpack.c.l.b16 %v906
    %v1213 = vunpack.c.l.b16 %v907
    %v1214 = vunpack.c.l.b16 %v908
    %v1215 = vunpack.c.l.b16 %v909
    %v1216 = vunpack.c.l.b16 %v910
    %v1217 = vunpack.c.l.b16 %v911
    %v1218 = vunpack.c.l.b16 %v912
    %v1219 = vunpack.c.l.b16 %v913
    %v1220 = vunpack.c.l.b16 %v914
    %v1221 = vunpack.c.l.b16 %v915
    %v1222 = vunpack.c.l.b16 %v916
    %v1223 = vunpack.c.l.b16 %v917
    %v1224 = vunpack.c.l.b16 %v918
    %v1225 = vunpack.c.l.b16 %v919
    %v1226 = vunpack.c.l.b16 %v920
    %v1227 = vunpack.c.l.b16 %v921
    %v1228 = vunpack.c.l.b16 %v922
    %v1229 = vunpack.c.l.b16 %v923
    %v1230 = vunpack.c.l.b16 %v924
    %v1231 = vunpack.c.l.b16 %v925
    %v1232 = vunpack.c.l.b16 %v926
    %v1233 = vunpack.c.l.b16 %v927
    %v1234 = vunpack.c.l.b16 %v928
    %v1235 = vunpack.c.l.b16 %v929
    %v1236 = vunpack.c.l.b16 %v930
    %v1237 = vunpack.c.l.b16 %v931
    %v1238 = vunpack.c.l.b16 %v932
    %v1239 = vunpack.c.l.b16 %v933
    %v1240 = vunpack.c.l.b16 %v934
    %v1241 = vunpack.c.l.b16 %v935
    %v1242 = vunpack.c.l.b16 %v936
    %v1243 = vunpack.c.l.b16 %v937
    %v1244 = vunpack.c.l.b16 %v938
    %v1245 = vunpack.c.l.b16 %v939
    %v1246 = vunpack.c.l.b16 %v940
    %v1247 = vunpack.c.l.b16 %v941
    %v1248 = vunpack.c.l.b16 %v942
    %v1249 = vunpack.c.l.b16 %v943
    %v1250 = vunpack.c.l.b16 %v944
    %v1251 = vunpack.c.l.b16 %v945
    %v1252 = vunpack.c.l.b16 %v946
    %v1253 = vunpack.c.l.b16 %v947
    %v1254 = vunpack.c.l.b16 %v948
    %v1255 = vunpack.c.l.b16 %v949
    %v1256 = vunpack.c.l.b16 %v950
    %v1257 = vunpack.c.l.b16 %v951
    %v1258 = vunpack.c.l.b16 %v952
    %v1259 = vunpack.c.l.b16 %v953
    %v1260 = vunpack.c.l.b16 %v954
    %v1261 = vunpack.c.l.b16 %v955
    %v1262 = vunpack.c.l.b16 %v956
    %v1263 = vunpack.c.l.b16 %v957
    %v1264 = vunpack.c.l.b16 %v958
    %v1265 = vunpack.c.l.b16 %v959
    %v1266 = vunpack.c.l.b16 %v960
    %v1267 = vunpack.c.l.b16 %v961
    %v1268 = vunpack.c.l.b16 %v962
    %v1269 = vunpack.c.l.b16 %v963
    %v1270 = vunpack.c.l.b16 %v964
    %v1271 = vunpack.c.l.b16 %v965
    %v1272 = vunpack.c.l.b16 %v966
    %v1273 = vunpack.c.l.b16 %v967
    %v1274 = vunpack.c.l.b16 %v968
    %v1275 = vunpack.c.l.b16 %v969
    %v1276 = vunpack.c.l.b16 %v970
    %v1277 = vunpack.c.l.b16 %v971
    %v1278 = vunpack.c.l.b16 %v972
    %v1279 = vunpack.c.l.b16 %v973
    %v1280 = vunpack.c.l.b16 %v974
    %v1281 = vunpack.c.l.b16 %v975
    %v1282 = vunpack.c.l.b16 %v976
    %v1283 = vunpack.c.l.b16 %v977
    %v1284 = vunpack.c.l.b16 %v978
    %v1285 = vunpack.c.l.b16 %v979
    %v1286 = vunpack.c.l.b16 %v980
    %v1287 = vunpack.c.l.b16 %v981
    %v1288 = vunpack.c.l.b16 %v982
    %v1289 = vunpack.c.l.b16 %v983
    %v1290 = vunpack.c.l.b16 %v984
    %v1291 = vunpack.c.l.b16 %v985
    %v1292 = vunpack.c.l.b16 %v986
    %v1293 = vunpack.c.l.b16 %v987
    %v1294 = vunpack.c.l.b16 %v988
    %v1295 = vunpack.c.l.b16 %v989
    %v1296 = vunpack.c.l.b16 %v990
    %v1297 = vunpack.c.l.b16 %v991
    %v1298 = vunpack.c.l.b16 %v992
    %v1299 = vunpack.c.l.b16 %v993
    %v1300 = vunpack.c.l.b16 %v994
    %v1301 = vunpack.c.l.b16 %v995
    %v1302 = vunpack.c.l.b16 %v996
    %v1303 = vunpack.c.l.b16 %v997
    %v1304 = vunpack.c.l.b16 %v998
    %v1305 = vunpack.c.l.b16 %v999
    %v1306 = vunpack.c.l.b16 %v1000
    %v1307 = vunpack.c.l.b16 %v1001
    %v1308 = vunpack.c.l.b16 %v1002
    %v1309 = vunpack.c.l.b16 %v1003
    %v1310 = vunpack.c.l.b16 %v1004
    %v1311 = vunpack.c.l.b16 %v1005
    %v1312 = vunpack.c.l.b16 %v1006
    %v1313 = vunpack.c.l.b16 %v1007
    %v1314 = vunpack.c.l.b16 %v1008
    %v1315 = vunpack.c.l.b16 %v1009
    %v1316 = vunpack.c.l.b16 %v1010
    %v1317 = vunpack.c.l.b16 %v1011
    %v1318 = vunpack.c.l.b16 %v1012
    %v1319 = vunpack.c.l.b16 %v1013
    %v1320 = vunpack.c.l.b16 %v1014
    %v1321 = vunpack.c.l.b16 %v1015
    %v1322 = vunpack.c.l.b16 %v1016
    %v1323 = vunpack.c.l.b16 %v1017
    %v1324 = vpack.c.b16 %v1181, %v1180
    %v1325 = vpack.c.b16 %v1183, %v1182
    %v1326 = vpack.c.b16 %v1185, %v1184
    %v1327 = vpack.c.b16 %v1187, %v1186
    %v1328 = vpack.c.b16 %v1189, %v1188
    %v1329 = vpack.c.b16 %v1191, %v1190
    %v1330 = vpack.c.b16 %v1193, %v1192
    %v1331 = vpack.c.b16 %v1195, %v1194
    %v1332 = vpack.c.b16 %v1197, %v1196
    %v1333 = vpack.c.b16 %v1199, %v1198
    %v1334 = vpack.c.b16 %v1201, %v1200
    %v1335 = vpack.c.b16 %v1203, %v1202
    %v1336 = vpack.c.b16 %v1205, %v1204
    %v1337 = vpack.c.b16 %v1207, %v1206
    %v1338 = vpack.c.b16 %v1209, %v1208
    %v1339 = vpack.c.b16 %v1211, %v1210
    %v1340 = vpack.c.b16 %v1213, %v1212
    %v1341 = vpack.c.b16 %v1215, %v1214
    %v1342 = vpack.c.b16 %v1217, %v1216
    %v1343 = vpack.c.b16 %v1219, %v1218
    %v1344 = vpack.c.b16 %v1221, %v1220
    %v1345 = vpack.c.b16 %v1223, %v1222
    %v1346 = vpack.c.b16 %v1225, %v1224
    %v1347 = vpack.c.b16 %v1227, %v1226
    %v1348 = vpack.c.b16 %v1229, %v1228
    %v1349 = vpack.c.b16 %v1231, %v1230
    %v1350 = vpack.c.b16 %v1233, %v1232
    %v1351 = vpack.c.b16 %v1235, %v1234
    %v1352 = vpack.c.b16 %v1237, %v1236
    %v1353 = vpack.c.b16 %v1239, %v1238
    %v1354 = vpack.c.b16 %v1241, %v1240
    %v1355 = vpack.c.b16 %v1243, %v1242
    %v1356 = vpack.c.b16 %v1245, %v1244
    %v1357 = vpack.c.b16 %v1247, %v1246
    %v1358 = vpack.c.b16 %v1249, %v1248
    %v1359 = vpack.c.b16 %v1251, %v1250
    %v1360 = vpack.c.b16 %v1253, %v1252
    %v1361 = vpack.c.b16 %v1255, %v1254
    %v1362 = vpack.c.b16 %v1257, %v1256
    %v1363 = vpack.c.b16 %v1259, %v1258
    %v1364 = vpack.c.b16 %v1261, %v1260
    %v1365 = vpack.c.b16 %v1263, %v1262
    %v1366 = vpack.c.b16 %v1265, %v1264
    %v1367 = vpack.c.b16 %v1267, %v1266
    %v1368 = vpack.c.b16 %v1269, %v1268
    %v1369 = vpack.c.b16 %v1271, %v1270
    %v1370 = vpack.c.b16 %v1273, %v1272
    %v1371 = vpack.c.b16 %v1275, %v1274
    %v1372 = vpack.c.b16 %v1277, %v1276
    %v1373 = vpack.c.b16 %v1279, %v1278
    %v1374 = vpack.c.b16 %v1281, %v1280
    %v1375 = vpack.c.b16 %v1283, %v1282
    %v1376 = vpack.c.b16 %v1285, %v1284
    %v1377 = vpack.c.b16 %v1287, %v1286
    %v1378 = vpack.c.b16 %v1289, %v1288
    %v1379 = vpack.c.b16 %v1291, %v1290
    %v1380 = vpack.c.b16 %v1293, %v1292
    %v1381 = vpack.c.b16 %v1295, %v1294
    %v1382 = vpack.c.b16 %v1297, %v1296
    %v1383 = vpack.c.b16 %v1299, %v1298
    %v1384 = vpack.c.b16 %v1301, %v1300
    %v1385 = vpack.c.b16 %v1303, %v1302
    %v1386 = vpack.c.b16 %v1305, %v1304
    %v1387 = vpack.c.b16 %v1307, %v1306
    %v1388 = vpack.c.b16 %v1309, %v1308
    %v1389 = vpack.c.b16 %v1311, %v1310
    %v1390 = vpack.c.b16 %v1313, %v1312
    %v1391 = vpack.c.b16 %v1315, %v1314
    %v1392 = vpack.c.b16 %v1317, %v1316
    %v1393 = vpack.c.b16 %v1319, %v1318
    %v1394 = vpack.c.b16 %v1321, %v1320
    %v1395 = vpack.c.b16 %v1323, %v1322
    %1468 = vmatprep.subr.bf16.mxu0 0
    %1469 = vmatpush1.bf16.msra.mxu0 %v1324
    %1470 = vmatprep.subr.bf16.mxu0 0
    %1471 = vmatpush1.bf16.msra.mxu0 %v1325
    %1472 = vmatprep.subr.bf16.mxu0 0
    %1473 = vmatpush1.bf16.msra.mxu0 %v1326
    %1474 = vmatprep.subr.bf16.mxu0 0
    %1475 = vmatpush1.bf16.msra.mxu0 %v1327
    %1476 = vmatprep.subr.bf16.mxu0 0
    %1477 = vmatpush1.bf16.msra.mxu0 %v1328
    %1478 = vmatprep.subr.bf16.mxu0 0
    %1479 = vmatpush1.bf16.msra.mxu0 %v1329
    %1480 = vmatprep.subr.bf16.mxu0 0
    %1481 = vmatpush1.bf16.msra.mxu0 %v1330
    %1482 = vmatprep.subr.bf16.mxu0 0
    %1483 = vmatpush1.bf16.msra.mxu0 %v1331
    %1484 = vmatprep.subr.bf16.mxu0 0
    %1485 = vmatpush1.bf16.msra.mxu0 %v1332
    %1486 = vmatprep.subr.bf16.mxu0 0
    %1487 = vmatpush1.bf16.msra.mxu0 %v1333
    %1488 = vmatprep.subr.bf16.mxu0 0
    %1489 = vmatpush1.bf16.msra.mxu0 %v1334
    %1490 = vmatprep.subr.bf16.mxu0 0
    %1491 = vmatpush1.bf16.msra.mxu0 %v1335
    %1492 = vmatprep.subr.bf16.mxu0 0
    %1493 = vmatpush1.bf16.msra.mxu0 %v1336
    %1494 = vmatprep.subr.bf16.mxu0 0
    %1495 = vmatpush1.bf16.msra.mxu0 %v1337
    %1496 = vmatprep.subr.bf16.mxu0 0
    %1497 = vmatpush1.bf16.msra.mxu0 %v1338
    %1498 = vmatprep.subr.bf16.mxu0 0
    %1499 = vmatpush1.bf16.msra.mxu0 %v1339
    %1500 = vmatprep.mubr.bf16.mxu0 %v1019
    %1501 = vmatmul.mubr.bf16.gmra.mrb[0].mxu0 %v1018
    %v1502 = vpop.f32.mrb[0].mxu0
    %v1503 = vadd.f32 0.0, %v1502
    %v1504 = vpop.f32.mrb[0].mxu0
    %v1505 = vpop.f32.mrb[0].mxu0
    %v1506 = vadd.f32 0.0, %v1505
    %v1507 = vpop.f32.mrb[0].mxu0
    %1508 = vmatprep.mubr.bf16.mxu0 %v1028
    %1509 = vmatmul.mubr.bf16.gmra.mrb[0].mxu0 %v1027
    %v1510 = vpop.f32.mrb[0].mxu0
    %v1511 = vadd.f32 0.0, %v1510
    %v1512 = vpop.f32.mrb[0].mxu0
    %v1513 = vpop.f32.mrb[0].mxu0
    %v1514 = vpop.f32.mrb[0].mxu0
    %1515 = vdwg.mxu0
    %1516 = vmatprep.subr.bf16.mxu0 0
    %1517 = vmatpush1.bf16.msra.mxu0 %v1340
    %1518 = vmatprep.subr.bf16.mxu0 0
    %1519 = vmatpush1.bf16.msra.mxu0 %v1341
    %1520 = vmatprep.subr.bf16.mxu0 0
    %1521 = vmatpush1.bf16.msra.mxu0 %v1342
    %1522 = vmatprep.subr.bf16.mxu0 0
    %1523 = vmatpush1.bf16.msra.mxu0 %v1343
    %1524 = vmatprep.subr.bf16.mxu0 0
    %1525 = vmatpush1.bf16.msra.mxu0 %v1344
    %1526 = vmatprep.subr.bf16.mxu0 0
    %1527 = vmatpush1.bf16.msra.mxu0 %v1345
    %1528 = vmatprep.subr.bf16.mxu0 0
    %1529 = vmatpush1.bf16.msra.mxu0 %v1346
    %1530 = vmatprep.subr.bf16.mxu0 0
    %1531 = vmatpush1.bf16.msra.mxu0 %v1347
    %1532 = vmatprep.subr.bf16.mxu0 0
    %1533 = vmatpush1.bf16.msra.mxu0 %v1348
    %1534 = vmatprep.subr.bf16.mxu0 0
    %1535 = vmatpush1.bf16.msra.mxu0 %v1349
    %1536 = vmatprep.subr.bf16.mxu0 0
    %1537 = vmatpush1.bf16.msra.mxu0 %v1350
    %1538 = vmatprep.subr.bf16.mxu0 0
    %1539 = vmatpush1.bf16.msra.mxu0 %v1351
    %1540 = vmatprep.subr.bf16.mxu0 0
    %1541 = vmatpush1.bf16.msra.mxu0 %v1352
    %1542 = vmatprep.subr.bf16.mxu0 0
    %1543 = vmatpush1.bf16.msra.mxu0 %v1353
    %1544 = vmatprep.subr.bf16.mxu0 0
    %1545 = vmatpush1.bf16.msra.mxu0 %v1354
    %1546 = vmatprep.subr.bf16.mxu0 0
    %1547 = vmatpush1.bf16.msra.mxu0 %v1355
    %1548 = vmatprep.mubr.bf16.mxu0 %v1021
    %1549 = vmatmul.mubr.bf16.gmra.mrb[0].mxu0 %v1020
    %v1550 = vpop.f32.mrb[0].mxu0
    %v1551 = vadd.f32 %v1503, %v1550
    %v1552 = vpop.f32.mrb[0].mxu0
    %v1553 = vpop.f32.mrb[0].mxu0
    %v1554 = vadd.f32 %v1506, %v1553
    %v1555 = vpop.f32.mrb[0].mxu0
    %1556 = vmatprep.mubr.bf16.mxu0 %v1030
    %1557 = vmatmul.mubr.bf16.gmra.mrb[0].mxu0 %v1029
    %v1558 = vpop.f32.mrb[0].mxu0
    %v1559 = vadd.f32 %v1511, %v1558
    %v1560 = vpop.f32.mrb[0].mxu0
    %v1561 = vpop.f32.mrb[0].mxu0
    %v1562 = vpop.f32.mrb[0].mxu0
    %1563 = vdwg.mxu0
    %1564 = vmatprep.subr.bf16.mxu0 0
    %1565 = vmatpush1.bf16.msra.mxu0 %v1356
    %1566 = vmatprep.subr.bf16.mxu0 0
    %1567 = vmatpush1.bf16.msra.mxu0 %v1357
    %1568 = vmatprep.subr.bf16.mxu0 0
    %1569 = vmatpush1.bf16.msra.mxu0 %v1358
    %1570 = vmatprep.subr.bf16.mxu0 0
    %1571 = vmatpush1.bf16.msra.mxu0 %v1359
    %1572 = vmatprep.subr.bf16.mxu0 0
    %1573 = vmatpush1.bf16.msra.mxu0 %v1360
    %1574 = vmatprep.subr.bf16.mxu0 0
    %1575 = vmatpush1.bf16.msra.mxu0 %v1361
    %1576 = vmatprep.subr.bf16.mxu0 0
    %1577 = vmatpush1.bf16.msra.mxu0 %v1362
    %1578 = vmatprep.subr.bf16.mxu0 0
    %1579 = vmatpush1.bf16.msra.mxu0 %v1363
    %1580 = vmatprep.subr.bf16.mxu0 0
    %1581 = vmatpush1.bf16.msra.mxu0 %v1364
    %1582 = vmatprep.subr.bf16.mxu0 0
    %1583 = vmatpush1.bf16.msra.mxu0 %v1365
    %1584 = vmatprep.subr.bf16.mxu0 0
    %1585 = vmatpush1.bf16.msra.mxu0 %v1366
    %1586 = vmatprep.subr.bf16.mxu0 0
    %1587 = vmatpush1.bf16.msra.mxu0 %v1367
    %1588 = vmatprep.subr.bf16.mxu0 0
    %1589 = vmatpush1.bf16.msra.mxu0 %v1368
    %1590 = vmatprep.subr.bf16.mxu0 0
    %1591 = vmatpush1.bf16.msra.mxu0 %v1369
    %1592 = vmatprep.subr.bf16.mxu0 0
    %1593 = vmatpush1.bf16.msra.mxu0 %v1370
    %1594 = vmatprep.subr.bf16.mxu0 0
    %1595 = vmatpush1.bf16.msra.mxu0 %v1371
    %1596 = vmatprep.mubr.bf16.mxu0 %v1023
    %1597 = vmatmul.mubr.bf16.gmra.mrb[0].mxu0 %v1022
    %v1598 = vpop.f32.mrb[0].mxu0
    %v1599 = vadd.f32 %v1551, %v1598
    %v1600 = vpop.f32.mrb[0].mxu0
    %v1601 = vpop.f32.mrb[0].mxu0
    %v1602 = vadd.f32 %v1554, %v1601
    %v1603 = vpop.f32.mrb[0].mxu0
    %1604 = vmatprep.mubr.bf16.mxu0 %v1032
    %1605 = vmatmul.mubr.bf16.gmra.mrb[0].mxu0 %v1031
    %v1606 = vpop.f32.mrb[0].mxu0
    %v1607 = vadd.f32 %v1559, %v1606
    %v1608 = vpop.f32.mrb[0].mxu0
    %v1609 = vpop.f32.mrb[0].mxu0
    %v1610 = vpop.f32.mrb[0].mxu0
    %1611 = vdwg.mxu0
    %1612 = vmatprep.subr.bf16.mxu0 0
    %1613 = vmatpush1.bf16.msra.mxu0 %v1372
    %1614 = vmatprep.subr.bf16.mxu0 0
    %1615 = vmatpush1.bf16.msra.mxu0 %v1373
    %1616 = vmatprep.subr.bf16.mxu0 0
    %1617 = vmatpush1.bf16.msra.mxu0 %v1374
    %1618 = vmatprep.subr.bf16.mxu0 0
    %1619 = vmatpush1.bf16.msra.mxu0 %v1375
    %1620 = vmatprep.subr.bf16.mxu0 0
    %1621 = vmatpush1.bf16.msra.mxu0 %v1376
    %1622 = vmatprep.subr.bf16.mxu0 0
    %1623 = vmatpush1.bf16.msra.mxu0 %v1377
    %1624 = vmatprep.subr.bf16.mxu0 0
    %1625 = vmatpush1.bf16.msra.mxu0 %v1378
    %1626 = vmatprep.subr.bf16.mxu0 0
    %1627 = vmatpush1.bf16.msra.mxu0 %v1379
    %1628 = vmatprep.subr.bf16.mxu0 0
    %1629 = vmatpush1.bf16.msra.mxu0 %v1380
    %1630 = vmatprep.subr.bf16.mxu0 0
    %1631 = vmatpush1.bf16.msra.mxu0 %v1381
    %1632 = vmatprep.subr.bf16.mxu0 0
    %1633 = vmatpush1.bf16.msra.mxu0 %v1382
    %1634 = vmatprep.subr.bf16.mxu0 0
    %1635 = vmatpush1.bf16.msra.mxu0 %v1383
    %1636 = vmatprep.subr.bf16.mxu0 0
    %1637 = vmatpush1.bf16.msra.mxu0 %v1384
    %1638 = vmatprep.subr.bf16.mxu0 0
    %1639 = vmatpush1.bf16.msra.mxu0 %v1385
    %1640 = vmatprep.subr.bf16.mxu0 0
    %1641 = vmatpush1.bf16.msra.mxu0 %v1386
    %1642 = vmatprep.subr.bf16.mxu0 0
    %1643 = vmatpush1.bf16.msra.mxu0 %v1387
    %1644 = vmatprep.mubr.bf16.mxu0 %v1025
    %1645 = vmatmul.mubr.bf16.gmra.mrb[0].mxu0 %v1024
    %v1646 = vpop.f32.mrb[0].mxu0
    %v1647 = vadd.f32 %v1599, %v1646
    %v1648 = vpop.f32.mrb[0].mxu0
    %v1649 = vpop.f32.mrb[0].mxu0
    %v1650 = vadd.f32 %v1602, %v1649
    %v1651 = vpop.f32.mrb[0].mxu0
    %1652 = vmatprep.mubr.bf16.mxu0 %v1034
    %1653 = vmatmul.mubr.bf16.gmra.mrb[0].mxu0 %v1033
    %v1654 = vpop.f32.mrb[0].mxu0
    %v1655 = vadd.f32 %v1607, %v1654
    %v1656 = vpop.f32.mrb[0].mxu0
    %v1657 = vpop.f32.mrb[0].mxu0
    %v1658 = vpop.f32.mrb[0].mxu0
    %1659 = vdwg.mxu0
    %1660 = vmatprep.subr.bf16.mxu0 0
    %1661 = vmatpush1.bf16.msra.mxu0 %v1388
    %1662 = vmatprep.subr.bf16.mxu0 0
    %1663 = vmatpush1.bf16.msra.mxu0 %v1389
    %1664 = vmatprep.subr.bf16.mxu0 0
    %1665 = vmatpush1.bf16.msra.mxu0 %v1390
    %1666 = vmatprep.subr.bf16.mxu0 0
    %1667 = vmatpush1.bf16.msra.mxu0 %v1391
    %1668 = vmatprep.subr.bf16.mxu0 0
    %1669 = vmatpush1.bf16.msra.mxu0 %v1392
    %1670 = vmatprep.subr.bf16.mxu0 0
    %1671 = vmatpush1.bf16.msra.mxu0 %v1393
    %1672 = vmatprep.subr.bf16.mxu0 0
    %1673 = vmatpush1.bf16.msra.mxu0 %v1394
    %1674 = vmatprep.subr.bf16.mxu0 0
    %1675 = vmatpush1.bf16.msra.mxu0 %v1395
    %1676 = vmatprep.subr.bf16.mxu0 0
    %1677 = vmatpush1.bf16.msra.mxu0 0
    %1678 = vmatprep.subr.bf16.mxu0 0
    %1679 = vmatpush1.bf16.msra.mxu0 0
    %1680 = vmatprep.subr.bf16.mxu0 0
    %1681 = vmatpush1.bf16.msra.mxu0 0
    %1682 = vmatprep.subr.bf16.mxu0 0
    %1683 = vmatpush1.bf16.msra.mxu0 0
    %1684 = vmatprep.subr.bf16.mxu0 0
    %1685 = vmatpush1.bf16.msra.mxu0 0
    %1686 = vmatprep.subr.bf16.mxu0 0
    %1687 = vmatpush1.bf16.msra.mxu0 0
    %1688 = vmatprep.subr.bf16.mxu0 0
    %1689 = vmatpush1.bf16.msra.mxu0 0
    %1690 = vmatprep.subr.bf16.mxu0 0
    %1691 = vmatpush1.bf16.msra.mxu0 0
    %1692 = vmatprep.mubr.bf16.mxu0 0
    %1693 = vmatmul.mubr.bf16.gmra.mrb[0].mxu0 %v1026
    %v1694 = vpop.f32.mrb[0].mxu0
    %v1695 = vadd.f32 %v1647, %v1694
    %v1696 = vpop.f32.mrb[0].mxu0
    %v1697 = vpop.f32.mrb[0].mxu0
    %v1698 = vadd.f32 %v1650, %v1697
    %v1699 = vpop.f32.mrb[0].mxu0
    %1700 = vmatprep.mubr.bf16.mxu0 0
    %1701 = vmatmul.mubr.bf16.gmra.mrb[0].mxu0 %v1035
    %v1702 = vpop.f32.mrb[0].mxu0
    %v1703 = vadd.f32 %v1655, %v1702
    %v1704 = vpop.f32.mrb[0].mxu0
    %v1705 = vpop.f32.mrb[0].mxu0
    %v1706 = vpop.f32.mrb[0].mxu0
    %1707 = vdwg.mxu0
    %v1708 = vld [vmem:[%s11] sm:$0x1]
    %v1710 = vlaneseq
    %v1711 = vshrl.u32 %v1710, 7
    %v1712 = vsub.s32 0, %v1711
    %v1713 = vrot.slane %v1708, %v1712
    %v1715 = vmul.f32 %v1695, %v1713
    %v1716 = vmul.f32 %v1698, %v1713
    %v1717 = vmul.f32 %v1703, %v1713
    %v1718 = vld [vmem:[%s12] sm:$0x1]
    %v1720 = vlaneseq
    %v1721 = vshrl.u32 %v1720, 7
    %v1722 = vsub.s32 0, %v1721
    %v1723 = vrot.slane %v1718, %v1722
    %v1725 = vadd.f32 %v1715, %v1723
    %v1726 = vadd.f32 %v1716, %v1723
    %v1727 = vadd.f32 %v1717, %v1723
    %v1728 = vld [vmem:[%s13] sm:$0x1]
    %v1730 = vlaneseq
    %v1731 = vshrl.u32 %v1730, 7
    %v1732 = vsub.s32 0, %v1731
    %v1733 = vrot.slane %v1728, %v1732
    %v1735 = vmul.f32 %v758, %v1733
    %v1736 = vmul.f32 %v762, %v1733
    %v1737 = vmul.f32 %v768, %v1733
    %v1738 = vld [vmem:[%s14] sm:$0x1]
    %v1740 = vlaneseq
    %v1741 = vshrl.u32 %v1740, 7
    %v1742 = vsub.s32 0, %v1741
    %v1743 = vrot.slane %v1738, %v1742
    %v1745 = vadd.f32 %v1735, %v1743
    %v1746 = vadd.f32 %v1736, %v1743
    %v1747 = vadd.f32 %v1737, %v1743
    %v1748 = vadd.f32 %v1725, %v1745
    %v1749 = vadd.f32 %v1726, %v1746
    %v1750 = vadd.f32 %v1727, %v1747
    %v1751 = vmax.f32 %v1748, 0.0
    %v1752 = vmax.f32 %v1749, 0.0
    %v1753 = vmax.f32 %v1750, 0.0
    %vm1754 = vcmp.eq.s32.totalorder %v123, 1
    %vm1755 = vcmp.eq.s32.totalorder %v124, 1
    %vm1756 = vcmp.eq.s32.totalorder %v125, 1
    %v1757 = vsel %vm1754, %v1751, -1.0
    %v1758 = vsel %vm1755, %v1752, -1.0
    %v1759 = vsel %vm1756, %v1753, -1.0
    %v1760 = vsel %vm167, %v1758, -inf
    %v1761 = vmax.f32 %v1757, %v1760
    %v1762 = vrot.slane %v1761, 4
    %v1763 = vmax.f32 %v1761, %v1762
    %v1764 = vrot.slane %v1763, 2
    %v1765 = vmax.f32 %v1763, %v1764
    %v1766 = vrot.slane %v1765, 1
    %v1767 = vmax.f32 %v1765, %v1766
    %vm1768 = vcmask 1047555
    %v1769 = vsel %vm1768, %v1758, -inf
    %v1770 = vsel %vm825, %v1759, -inf
    %v1771 = vmax.f32 %v1769, %v1770
    %v1772 = vrot.slane %v1771, 4
    %v1773 = vmax.f32 %v1771, %v1772
    %v1774 = vrot.slane %v1773, 2
    %v1775 = vmax.f32 %v1773, %v1774
    %v1776 = vrot.slane %v1775, 1
    %v1777 = vmax.f32 %v1775, %v1776
    %vm1778 = vcmask 1040384
    %v1779 = vsel %vm1778, %v1767, %v1777
    %v1780 = vld [vmem:[%s15] sm:$0xf]
    %v1781 = vld [vmem:[%s15 + $0x4] sm:$0xf]
    %v1782 = vld [vmem:[%s15 + $0x8] sm:$0xf]
    %v1783 = vld [vmem:[%s15 + $0xc] sm:$0xf]
    %v1784 = vld [vmem:[%s15 + $0x10] sm:$0xf]
    %v1785 = vld [vmem:[%s15 + $0x14] sm:$0xf]
    %v1786 = vld [vmem:[%s15 + $0x18] sm:$0xf]
    %v1787 = vld [vmem:[%s15 + $0x1c] sm:$0xf]
    %v1788 = vld [vmem:[%s15 + $0x20] sm:$0xf]
    %v1789 = vld [vmem:[%s15 + $0x24] sm:$0xf]
    %v1790 = vld [vmem:[%s15 + $0x28] sm:$0xf]
    %v1791 = vld [vmem:[%s15 + $0x2c] sm:$0xf]
    %v1792 = vld [vmem:[%s15 + $0x30] sm:$0xf]
    %v1793 = vld [vmem:[%s15 + $0x34] sm:$0xf]
    %v1794 = vld [vmem:[%s15 + $0x38] sm:$0xf]
    %v1795 = vld [vmem:[%s15 + $0x3c] sm:$0xf]
    %v1796 = vpack.c.bf16 %v1779, %v1779
    %v1797 = vld [vmem:[%s16] sm:$0x1]
    %v1799 = vlaneseq
    %v1800 = vshrl.u32 %v1799, 7
    %v1801 = vsub.s32 0, %v1800
    %v1802 = vrot.slane %v1797, %v1801
    %v1820 = vunpack.c.l.b16 %v1780
    %v1821 = vunpack.c.l.b16 %v1781
    %v1822 = vunpack.c.l.b16 %v1782
    %v1823 = vunpack.c.l.b16 %v1783
    %v1824 = vunpack.c.l.b16 %v1784
    %v1825 = vunpack.c.l.b16 %v1785
    %v1826 = vunpack.c.l.b16 %v1786
    %v1827 = vunpack.c.l.b16 %v1787
    %v1828 = vunpack.c.l.b16 %v1788
    %v1829 = vunpack.c.l.b16 %v1789
    %v1830 = vunpack.c.l.b16 %v1790
    %v1831 = vunpack.c.l.b16 %v1791
    %v1832 = vunpack.c.l.b16 %v1792
    %v1833 = vunpack.c.l.b16 %v1793
    %v1834 = vunpack.c.l.b16 %v1794
    %v1835 = vunpack.c.l.b16 %v1795
    %v1836 = vpack.c.b16 %v1821, %v1820
    %v1837 = vpack.c.b16 %v1823, %v1822
    %v1838 = vpack.c.b16 %v1825, %v1824
    %v1839 = vpack.c.b16 %v1827, %v1826
    %v1840 = vpack.c.b16 %v1829, %v1828
    %v1841 = vpack.c.b16 %v1831, %v1830
    %v1842 = vpack.c.b16 %v1833, %v1832
    %v1843 = vpack.c.b16 %v1835, %v1834
    %1852 = vmatprep.subr.bf16.mxu0 0
    %1853 = vmatpush1.bf16.msra.mxu0 %v1836
    %1854 = vmatprep.subr.bf16.mxu0 0
    %1855 = vmatpush1.bf16.msra.mxu0 %v1837
    %1856 = vmatprep.subr.bf16.mxu0 0
    %1857 = vmatpush1.bf16.msra.mxu0 %v1838
    %1858 = vmatprep.subr.bf16.mxu0 0
    %1859 = vmatpush1.bf16.msra.mxu0 %v1839
    %1860 = vmatprep.subr.bf16.mxu0 0
    %1861 = vmatpush1.bf16.msra.mxu0 %v1840
    %1862 = vmatprep.subr.bf16.mxu0 0
    %1863 = vmatpush1.bf16.msra.mxu0 %v1841
    %1864 = vmatprep.subr.bf16.mxu0 0
    %1865 = vmatpush1.bf16.msra.mxu0 %v1842
    %1866 = vmatprep.subr.bf16.mxu0 0
    %1867 = vmatpush1.bf16.msra.mxu0 %v1843
    %1868 = vmatprep.subr.bf16.mxu0 0
    %1869 = vmatpush1.bf16.msra.mxu0 0
    %1870 = vmatprep.subr.bf16.mxu0 0
    %1871 = vmatpush1.bf16.msra.mxu0 0
    %1872 = vmatprep.subr.bf16.mxu0 0
    %1873 = vmatpush1.bf16.msra.mxu0 0
    %1874 = vmatprep.subr.bf16.mxu0 0
    %1875 = vmatpush1.bf16.msra.mxu0 0
    %1876 = vmatprep.subr.bf16.mxu0 0
    %1877 = vmatpush1.bf16.msra.mxu0 0
    %1878 = vmatprep.subr.bf16.mxu0 0
    %1879 = vmatpush1.bf16.msra.mxu0 0
    %1880 = vmatprep.subr.bf16.mxu0 0
    %1881 = vmatpush1.bf16.msra.mxu0 0
    %1882 = vmatprep.subr.bf16.mxu0 0
    %1883 = vmatpush1.bf16.msra.mxu0 0
    %1884 = vmatprep.mubr.bf16.mxu0 0
    %1885 = vmatmul.mubr.bf16.gmra.mrb[0].mxu0 %v1796
    %v1886 = vpop.f32.mrb[0].mxu0
    %v1887 = vadd.f32 %v1802, %v1886
    %v1888 = vpop.f32.mrb[0].mxu0
    %v1889 = vpop.f32.mrb[0].mxu0
    %v1890 = vpop.f32.mrb[0].mxu0
    %1891 = vdwg.mxu0
    %vm1892 = vcmask 50176
    %v1893 = vsel %vm1892, %v1887, -inf
    %1894 = vmax.xlane.f32.xlu0 %v1893
    %v1895 = vpop.xlane.xlu0 %1894
    %v1896 = vsub.f32 %v1887, %v1895
    %v1897 = vmul.f32 %v1896, 1.442695
    %v1898 = vpow.pop %v1897
    %v1899 = vsel %vm1892, %v1898, 0.0
    %1900 = vadd.xlane.f32.xlu0 %v1899
    %v1901 = vpop.xlane.xlu0 %1900
    %v1902 = vlog2.pop %v1901
    %v1903 = vmul.f32 %v1902, 0.6931472
    %v1904 = vadd.f32 %v1903, %v1895
    %v1905 = vsub.f32 %v1887, %v1904
    %1906 = vst.msk [vmem:[#allocation2] sm:$0x3] %vm1892, %v1905
    %1908 = vrot.lane.b32.xlu0 %v1887, 121
    %v1909 = vpop.permute.xlu0 %1908
    %vm1911 = vcmask 25600
    %1912 = vst.msk [vmem:[#allocation4] sm:$0x3] %vm1911, %v1909
    // Predicated region
    $region70: #{forward.5} parent=1 // pred_check
      _
    $region71: #{forward.5} parent=1 // pred_check_branch
      %1914 = sbr.rel (0) target = $region73
    $region72: #{forward.5} parent=1 // pred_region
      %s1916 = ssub.s32 32, 32
      %1917 = vsyncadd [#allocation3], %s1916
      %s1919 = sshll.u32 [#allocation2], 4
      %s1920 = int_to_ptr.vmem [resolvable:$true] %s1919
      %1922 = dma.vmem_to_hbm [thread:$0]  %s1920, 32, %s17, [#allocation3]
    $region73: #{forward.5} parent=1 // pred_fallthru
      _
    // Predicated region
    $region74: #{forward.5} parent=1 // pred_check
      _
    $region75: #{forward.5} parent=1 // pred_check_branch
      %1924 = sbr.rel (0) target = $region77
    $region76: #{forward.5} parent=1 // pred_region
      %s1926 = ssub.s32 32, 32
      %1927 = vsyncadd [#allocation5], %s1926
      %s1929 = sshll.u32 [#allocation4], 4
      %s1930 = int_to_ptr.vmem [resolvable:$true] %s1929
      %1932 = dma.vmem_to_hbm [thread:$0]  %s1930, 32, %s18, [#allocation5]
    $region77: #{forward.5} parent=1 // pred_fallthru
      _
    // Predicated region
    $region78: #{forward.5} parent=1 // pred_check
      _
    $region79: #{forward.5} parent=1 // pred_check_branch
      %1934 = sbr.rel (0) target = $region81
    $region80: #{forward.5} parent=1 // pred_region
      %1935 = dma.done [#allocation3], 32
    $region81: #{forward.5} parent=1 // pred_fallthru
      _
    // Predicated region
    $region82: #{forward.5} parent=1 // pred_check
      _
    $region83: #{forward.5} parent=1 // pred_check_branch
      %1937 = sbr.rel (0) target = $region85
    $region84: #{forward.5} parent=1 // pred_region
      %1938 = dma.done [#allocation5], 32
    $region85: #{forward.5} parent=1 // pred_fallthru
      _
    %1939 = vsyncpa [#allocation3], 1
    %1940 = vsyncpa [#allocation5], 1

// kernel: forward.3
$region0: #{forward.3}
  #allocation0 [shape = 'u32[]', space=smem, size = 0x4, offset = 0x4, fixed_abs, tag = 'smem constant byte address 0x4 - core index']
  #allocation1 [shape = 'u32[144,128]{1,0:T(1,128)}', space=vmem, size = 0x12000, scoped, tag = 'internal scratch']
  %s0 = inlined_call_operand.vmem [shape: bf16[648,8], index: 0, kind: input, shape index: {}]
  %s1 = inlined_call_operand.vmem [shape: bf16[72,32], index: 1, kind: input, shape index: {}]
  %s2 = inlined_call_operand.vmem [shape: f32[1,32], index: 2, kind: input, shape index: {}]
  %s3 = inlined_call_operand.vmem [shape: f32[1,32], index: 3, kind: input, shape index: {}]
  %s4 = inlined_call_operand.vmem [shape: f32[1,32], index: 4, kind: input, shape index: {}]
  %s5 = inlined_call_operand.vmem [shape: bf16[591,32], index: 5, kind: output, shape index: {}]
  %s6 = sld [smem:[#allocation0]]
  $region30: #{forward.3} parent=0
    _
  %s8 = ssub.s32 1, %s6
  %s9 = scalar_select 0, %s8, %s6
  // Predicated region
  $region2: #{forward.3} parent=0 // pred_check
    _
  $region3: #{forward.3} parent=0 // pred_check_branch
    %11 = sbr.rel (0) target = $region5
  $region4: #{forward.3} parent=0 // pred_region
    _
  $region5: #{forward.3} parent=0 // pred_fallthru
    _
  // Predicated region
  $region6: #{forward.3} parent=0 // pred_check
    _
  $region7: #{forward.3} parent=0 // pred_check_branch
    %13 = sbr.rel (0) target = $region9
  $region8: #{forward.3} parent=0 // pred_region
    _
  $region9: #{forward.3} parent=0 // pred_fallthru
    _
  // Predicated region
  $region10: #{forward.3} parent=0 // pred_check
    _
  $region11: #{forward.3} parent=0 // pred_check_branch
    %15 = sbr.rel (0) target = $region13
  $region12: #{forward.3} parent=0 // pred_region
    _
  $region13: #{forward.3} parent=0 // pred_fallthru
    _
  // Predicated region
  $region14: #{forward.3} parent=0 // pred_check
    _
  $region15: #{forward.3} parent=0 // pred_check_branch
    %17 = sbr.rel (0) target = $region17
  $region16: #{forward.3} parent=0 // pred_region
    _
  $region17: #{forward.3} parent=0 // pred_fallthru
    _
  // Predicated region
  $region18: #{forward.3} parent=0 // pred_check
    _
  $region19: #{forward.3} parent=0 // pred_check_branch
    %19 = sbr.rel (0) target = $region21
  $region20: #{forward.3} parent=0 // pred_region
    _
  $region21: #{forward.3} parent=0 // pred_fallthru
    _
  %v21 = vld [vmem:[%s0] sm:$0xf]
  %v22 = vld [vmem:[%s0 + $0x4] sm:$0xf]
  %v23 = vld [vmem:[%s0 + $0x8] sm:$0xf]
  %v24 = vld [vmem:[%s0 + $0xc] sm:$0xf]
  %v25 = vld [vmem:[%s0 + $0x10] sm:$0xf]
  %v26 = vld [vmem:[%s0 + $0x14] sm:$0xf]
  %v27 = vld [vmem:[%s0 + $0x18] sm:$0xf]
  %v28 = vld [vmem:[%s0 + $0x1c] sm:$0xf]
  %v29 = vld [vmem:[%s0 + $0x20] sm:$0xf]
  %v30 = vld [vmem:[%s0 + $0x24] sm:$0xf]
  %v31 = vld [vmem:[%s0 + $0x28] sm:$0xf]
  %v32 = vld [vmem:[%s0 + $0x2c] sm:$0xf]
  %v33 = vld [vmem:[%s0 + $0x30] sm:$0xf]
  %v34 = vld [vmem:[%s0 + $0x34] sm:$0xf]
  %v35 = vld [vmem:[%s0 + $0x38] sm:$0xf]
  %v36 = vld [vmem:[%s0 + $0x3c] sm:$0xf]
  %v37 = vld [vmem:[%s0 + $0x40] sm:$0xf]
  %v38 = vld [vmem:[%s0 + $0x44] sm:$0xf]
  %v39 = vld [vmem:[%s0 + $0x48] sm:$0xf]
  %v40 = vld [vmem:[%s0 + $0x4c] sm:$0xf]
  %v41 = vld [vmem:[%s0 + $0x50] sm:$0xf]
  %v42 = vld [vmem:[%s0 + $0x54] sm:$0xf]
  %v43 = vld [vmem:[%s0 + $0x58] sm:$0xf]
  %v44 = vld [vmem:[%s0 + $0x5c] sm:$0xf]
  %v45 = vld [vmem:[%s0 + $0x60] sm:$0xf]
  %v46 = vld [vmem:[%s0 + $0x64] sm:$0xf]
  %v47 = vld [vmem:[%s0 + $0x68] sm:$0xf]
  %v48 = vld [vmem:[%s0 + $0x6c] sm:$0xf]
  %v49 = vld [vmem:[%s0 + $0x70] sm:$0xf]
  %v50 = vld [vmem:[%s0 + $0x74] sm:$0xf]
  %v51 = vld [vmem:[%s0 + $0x78] sm:$0xf]
  %v52 = vld [vmem:[%s0 + $0x7c] sm:$0xf]
  %v53 = vld [vmem:[%s0 + $0x80] sm:$0xf]
  %v54 = vld [vmem:[%s0 + $0x84] sm:$0xf]
  %v55 = vld [vmem:[%s0 + $0x88] sm:$0xf]
  %v56 = vld [vmem:[%s0 + $0x8c] sm:$0xf]
  %v57 = vld [vmem:[%s0 + $0x90] sm:$0xf]
  %v58 = vld [vmem:[%s0 + $0x94] sm:$0xf]
  %v59 = vld [vmem:[%s0 + $0x98] sm:$0xf]
  %v60 = vld [vmem:[%s0 + $0x9c] sm:$0xf]
  %v61 = vld [vmem:[%s0 + $0xa0] sm:$0xf]
  %v62 = vld [vmem:[%s0 + $0xa4] sm:$0xf]
  %v63 = vld [vmem:[%s0 + $0xa8] sm:$0xf]
  %v64 = vld [vmem:[%s0 + $0xac] sm:$0xf]
  %v65 = vld [vmem:[%s0 + $0xb0] sm:$0xf]
  %v66 = vld [vmem:[%s0 + $0xb4] sm:$0xf]
  %v67 = vld [vmem:[%s0 + $0xb8] sm:$0xf]
  %v68 = vld [vmem:[%s0 + $0xbc] sm:$0xf]
  %v69 = vld [vmem:[%s0 + $0xc0] sm:$0xf]
  %v70 = vld [vmem:[%s0 + $0xc4] sm:$0xf]
  %v71 = vld [vmem:[%s0 + $0xc8] sm:$0xf]
  %v72 = vld [vmem:[%s0 + $0xcc] sm:$0xf]
  %v73 = vld [vmem:[%s0 + $0xd0] sm:$0xf]
  %v74 = vld [vmem:[%s0 + $0xd4] sm:$0xf]
  %v75 = vld [vmem:[%s0 + $0xd8] sm:$0xf]
  %v76 = vld [vmem:[%s0 + $0xdc] sm:$0xf]
  %v77 = vld [vmem:[%s0 + $0xe0] sm:$0xf]
  %v78 = vld [vmem:[%s0 + $0xe4] sm:$0xf]
  %v79 = vld [vmem:[%s0 + $0xe8] sm:$0xf]
  %v80 = vld [vmem:[%s0 + $0xec] sm:$0xf]
  %v81 = vld [vmem:[%s0 + $0xf0] sm:$0xf]
  %v82 = vld [vmem:[%s0 + $0xf4] sm:$0xf]
  %v83 = vld [vmem:[%s0 + $0xf8] sm:$0xf]
  %v84 = vld [vmem:[%s0 + $0xfc] sm:$0xf]
  %v85 = vld [vmem:[%s0 + $0x100] sm:$0xf]
  %v86 = vld [vmem:[%s0 + $0x104] sm:$0xf]
  %v87 = vld [vmem:[%s0 + $0x108] sm:$0xf]
  %v88 = vld [vmem:[%s0 + $0x10c] sm:$0xf]
  %v89 = vld [vmem:[%s0 + $0x110] sm:$0xf]
  %v90 = vld [vmem:[%s0 + $0x114] sm:$0xf]
  %v91 = vld [vmem:[%s0 + $0x118] sm:$0xf]
  %v92 = vld [vmem:[%s0 + $0x11c] sm:$0xf]
  %v93 = vld [vmem:[%s0 + $0x120] sm:$0xf]
  %v94 = vld [vmem:[%s0 + $0x124] sm:$0xf]
  %v95 = vld [vmem:[%s0 + $0x128] sm:$0xf]
  %v96 = vld [vmem:[%s0 + $0x12c] sm:$0xf]
  %v97 = vld [vmem:[%s0 + $0x130] sm:$0xf]
  %v98 = vld [vmem:[%s0 + $0x134] sm:$0xf]
  %v99 = vld [vmem:[%s0 + $0x138] sm:$0xf]
  %v100 = vld [vmem:[%s0 + $0x13c] sm:$0xf]
  %v101 = vld [vmem:[%s0 + $0x140] sm:$0xf]
  %v102 = vunpack.c.l.bf16 %v21
  %v103 = vunpack.c.l.bf16 %v22
  %v104 = vunpack.c.l.bf16 %v23
  %v105 = vunpack.c.l.bf16 %v24
  %v106 = vunpack.c.l.bf16 %v25
  %v107 = vunpack.c.l.bf16 %v26
  %v108 = vunpack.c.l.bf16 %v27
  %v109 = vunpack.c.l.bf16 %v28
  %v110 = vunpack.c.l.bf16 %v29
  %v111 = vunpack.c.l.bf16 %v30
  %v112 = vunpack.c.l.bf16 %v31
  %v113 = vunpack.c.l.bf16 %v32
  %v114 = vunpack.c.l.bf16 %v33
  %v115 = vunpack.c.l.bf16 %v34
  %v116 = vunpack.c.l.bf16 %v35
  %v117 = vunpack.c.l.bf16 %v36
  %v118 = vunpack.c.l.bf16 %v37
  %v119 = vunpack.c.l.bf16 %v38
  %v120 = vunpack.c.l.bf16 %v39
  %v121 = vunpack.c.l.bf16 %v40
  %v122 = vunpack.c.l.bf16 %v41
  %v123 = vunpack.c.l.bf16 %v42
  %v124 = vunpack.c.l.bf16 %v43
  %v125 = vunpack.c.l.bf16 %v44
  %v126 = vunpack.c.l.bf16 %v45
  %v127 = vunpack.c.l.bf16 %v46
  %v128 = vunpack.c.l.bf16 %v47
  %v129 = vunpack.c.l.bf16 %v48
  %v130 = vunpack.c.l.bf16 %v49
  %v131 = vunpack.c.l.bf16 %v50
  %v132 = vunpack.c.l.bf16 %v51
  %v133 = vunpack.c.l.bf16 %v52
  %v134 = vunpack.c.l.bf16 %v53
  %v135 = vunpack.c.l.bf16 %v54
  %v136 = vunpack.c.l.bf16 %v55
  %v137 = vunpack.c.l.bf16 %v56
  %v138 = vunpack.c.l.bf16 %v57
  %v139 = vunpack.c.l.bf16 %v58
  %v140 = vunpack.c.l.bf16 %v59
  %v141 = vunpack.c.l.bf16 %v60
  %v142 = vunpack.c.l.bf16 %v61
  %v143 = vunpack.c.l.bf16 %v62
  %v144 = vunpack.c.l.bf16 %v63
  %v145 = vunpack.c.l.bf16 %v64
  %v146 = vunpack.c.l.bf16 %v65
  %v147 = vunpack.c.l.bf16 %v66
  %v148 = vunpack.c.l.bf16 %v67
  %v149 = vunpack.c.l.bf16 %v68
  %v150 = vunpack.c.l.bf16 %v69
  %v151 = vunpack.c.l.bf16 %v70
  %v152 = vunpack.c.l.bf16 %v71
  %v153 = vunpack.c.l.bf16 %v72
  %v154 = vunpack.c.l.bf16 %v73
  %v155 = vunpack.c.l.bf16 %v74
  %v156 = vunpack.c.l.bf16 %v75
  %v157 = vunpack.c.l.bf16 %v76
  %v158 = vunpack.c.l.bf16 %v77
  %v159 = vunpack.c.l.bf16 %v78
  %v160 = vunpack.c.l.bf16 %v79
  %v161 = vunpack.c.l.bf16 %v80
  %v162 = vunpack.c.l.bf16 %v81
  %v163 = vunpack.c.l.bf16 %v82
  %v164 = vunpack.c.l.bf16 %v83
  %v165 = vunpack.c.l.bf16 %v84
  %v166 = vunpack.c.l.bf16 %v85
  %v167 = vunpack.c.l.bf16 %v86
  %v168 = vunpack.c.l.bf16 %v87
  %v169 = vunpack.c.l.bf16 %v88
  %v170 = vunpack.c.l.bf16 %v89
  %v171 = vunpack.c.l.bf16 %v90
  %v172 = vunpack.c.l.bf16 %v91
  %v173 = vunpack.c.l.bf16 %v92
  %v174 = vunpack.c.l.bf16 %v93
  %v175 = vunpack.c.l.bf16 %v94
  %v176 = vunpack.c.l.bf16 %v95
  %v177 = vunpack.c.l.bf16 %v96
  %v178 = vunpack.c.l.bf16 %v97
  %v179 = vunpack.c.l.bf16 %v98
  %v180 = vunpack.c.l.bf16 %v99
  %v181 = vunpack.c.l.bf16 %v100
  %v182 = vunpack.c.l.bf16 %v101
  %vm260 = vcmask 1046528
  %v261 = vrot.slane %v102, 1
  %v262 = vrot.slane %v103, 1
  %v263 = vsel %vm260, %v261, %v262
  %v264 = vrot.slane %v104, 1
  %v265 = vsel %vm260, %v262, %v264
  %v266 = vrot.slane %v105, 1
  %v267 = vsel %vm260, %v264, %v266
  %v268 = vrot.slane %v106, 1
  %v269 = vsel %vm260, %v266, %v268
  %v270 = vrot.slane %v107, 1
  %v271 = vsel %vm260, %v268, %v270
  %v272 = vrot.slane %v108, 1
  %v273 = vsel %vm260, %v270, %v272
  %v274 = vrot.slane %v109, 1
  %v275 = vsel %vm260, %v272, %v274
  %v276 = vrot.slane %v110, 1
  %v277 = vsel %vm260, %v274, %v276
  %v278 = vrot.slane %v111, 1
  %v279 = vsel %vm260, %v276, %v278
  %v280 = vrot.slane %v112, 1
  %v281 = vsel %vm260, %v278, %v280
  %v282 = vrot.slane %v113, 1
  %v283 = vsel %vm260, %v280, %v282
  %v284 = vrot.slane %v114, 1
  %v285 = vsel %vm260, %v282, %v284
  %v286 = vrot.slane %v115, 1
  %v287 = vsel %vm260, %v284, %v286
  %v288 = vrot.slane %v116, 1
  %v289 = vsel %vm260, %v286, %v288
  %v290 = vrot.slane %v117, 1
  %v291 = vsel %vm260, %v288, %v290
  %v292 = vrot.slane %v118, 1
  %v293 = vsel %vm260, %v290, %v292
  %v294 = vrot.slane %v119, 1
  %v295 = vsel %vm260, %v292, %v294
  %v296 = vrot.slane %v120, 1
  %v297 = vsel %vm260, %v294, %v296
  %v298 = vrot.slane %v121, 1
  %v299 = vsel %vm260, %v296, %v298
  %v300 = vrot.slane %v122, 1
  %v301 = vsel %vm260, %v298, %v300
  %v302 = vrot.slane %v123, 1
  %v303 = vsel %vm260, %v300, %v302
  %v304 = vrot.slane %v124, 1
  %v305 = vsel %vm260, %v302, %v304
  %v306 = vrot.slane %v125, 1
  %v307 = vsel %vm260, %v304, %v306
  %v308 = vrot.slane %v126, 1
  %v309 = vsel %vm260, %v306, %v308
  %v310 = vrot.slane %v127, 1
  %v311 = vsel %vm260, %v308, %v310
  %v312 = vrot.slane %v128, 1
  %v313 = vsel %vm260, %v310, %v312
  %v314 = vrot.slane %v129, 1
  %v315 = vsel %vm260, %v312, %v314
  %v316 = vrot.slane %v130, 1
  %v317 = vsel %vm260, %v314, %v316
  %v318 = vrot.slane %v131, 1
  %v319 = vsel %vm260, %v316, %v318
  %v320 = vrot.slane %v132, 1
  %v321 = vsel %vm260, %v318, %v320
  %v322 = vrot.slane %v133, 1
  %v323 = vsel %vm260, %v320, %v322
  %v324 = vrot.slane %v134, 1
  %v325 = vsel %vm260, %v322, %v324
  %v326 = vrot.slane %v135, 1
  %v327 = vsel %vm260, %v324, %v326
  %v328 = vrot.slane %v136, 1
  %v329 = vsel %vm260, %v326, %v328
  %v330 = vrot.slane %v137, 1
  %v331 = vsel %vm260, %v328, %v330
  %v332 = vrot.slane %v138, 1
  %v333 = vsel %vm260, %v330, %v332
  %v334 = vrot.slane %v139, 1
  %v335 = vsel %vm260, %v332, %v334
  %v336 = vrot.slane %v140, 1
  %v337 = vsel %vm260, %v334, %v336
  %v338 = vrot.slane %v141, 1
  %v339 = vsel %vm260, %v336, %v338
  %v340 = vrot.slane %v142, 1
  %v341 = vsel %vm260, %v338, %v340
  %v342 = vrot.slane %v143, 1
  %v343 = vsel %vm260, %v340, %v342
  %v344 = vrot.slane %v144, 1
  %v345 = vsel %vm260, %v342, %v344
  %v346 = vrot.slane %v145, 1
  %v347 = vsel %vm260, %v344, %v346
  %v348 = vrot.slane %v146, 1
  %v349 = vsel %vm260, %v346, %v348
  %v350 = vrot.slane %v147, 1
  %v351 = vsel %vm260, %v348, %v350
  %v352 = vrot.slane %v148, 1
  %v353 = vsel %vm260, %v350, %v352
  %v354 = vrot.slane %v149, 1
  %v355 = vsel %vm260, %v352, %v354
  %v356 = vrot.slane %v150, 1
  %v357 = vsel %vm260, %v354, %v356
  %v358 = vrot.slane %v151, 1
  %v359 = vsel %vm260, %v356, %v358
  %v360 = vrot.slane %v152, 1
  %v361 = vsel %vm260, %v358, %v360
  %v362 = vrot.slane %v153, 1
  %v363 = vsel %vm260, %v360, %v362
  %v364 = vrot.slane %v154, 1
  %v365 = vsel %vm260, %v362, %v364
  %v366 = vrot.slane %v155, 1
  %v367 = vsel %vm260, %v364, %v366
  %v368 = vrot.slane %v156, 1
  %v369 = vsel %vm260, %v366, %v368
  %v370 = vrot.slane %v157, 1
  %v371 = vsel %vm260, %v368, %v370
  %v372 = vrot.slane %v158, 1
  %v373 = vsel %vm260, %v370, %v372
  %v374 = vrot.slane %v159, 1
  %v375 = vsel %vm260, %v372, %v374
  %v376 = vrot.slane %v160, 1
  %v377 = vsel %vm260, %v374, %v376
  %v378 = vrot.slane %v161, 1
  %v379 = vsel %vm260, %v376, %v378
  %v380 = vrot.slane %v162, 1
  %v381 = vsel %vm260, %v378, %v380
  %v382 = vrot.slane %v163, 1
  %v383 = vsel %vm260, %v380, %v382
  %v384 = vrot.slane %v164, 1
  %v385 = vsel %vm260, %v382, %v384
  %v386 = vrot.slane %v165, 1
  %v387 = vsel %vm260, %v384, %v386
  %v388 = vrot.slane %v166, 1
  %v389 = vsel %vm260, %v386, %v388
  %v390 = vrot.slane %v167, 1
  %v391 = vsel %vm260, %v388, %v390
  %v392 = vrot.slane %v168, 1
  %v393 = vsel %vm260, %v390, %v392
  %v394 = vrot.slane %v169, 1
  %v395 = vsel %vm260, %v392, %v394
  %v396 = vrot.slane %v170, 1
  %v397 = vsel %vm260, %v394, %v396
  %v398 = vrot.slane %v171, 1
  %v399 = vsel %vm260, %v396, %v398
  %v400 = vrot.slane %v172, 1
  %v401 = vsel %vm260, %v398, %v400
  %v402 = vrot.slane %v173, 1
  %v403 = vsel %vm260, %v400, %v402
  %v404 = vrot.slane %v174, 1
  %v405 = vsel %vm260, %v402, %v404
  %v406 = vrot.slane %v175, 1
  %v407 = vsel %vm260, %v404, %v406
  %v408 = vrot.slane %v176, 1
  %v409 = vsel %vm260, %v406, %v408
  %v410 = vrot.slane %v177, 1
  %v411 = vsel %vm260, %v408, %v410
  %v412 = vrot.slane %v178, 1
  %v413 = vsel %vm260, %v410, %v412
  %414 = vrot.lane.b32.xlu0 %v263, 8
  %v415 = vpop.permute.xlu0 %414
  %416 = vrot.lane.b32.xlu0 %v265, 8
  %v417 = vpop.permute.xlu0 %416
  %418 = vrot.lane.b32.xlu0 %v267, 8
  %v419 = vpop.permute.xlu0 %418
  %420 = vrot.lane.b32.xlu0 %v269, 8
  %v421 = vpop.permute.xlu0 %420
  %422 = vrot.lane.b32.xlu0 %v271, 8
  %v423 = vpop.permute.xlu0 %422
  %424 = vrot.lane.b32.xlu0 %v273, 8
  %v425 = vpop.permute.xlu0 %424
  %426 = vrot.lane.b32.xlu0 %v275, 8
  %v427 = vpop.permute.xlu0 %426
  %428 = vrot.lane.b32.xlu0 %v277, 8
  %v429 = vpop.permute.xlu0 %428
  %430 = vrot.lane.b32.xlu0 %v279, 8
  %v431 = vpop.permute.xlu0 %430
  %432 = vrot.lane.b32.xlu0 %v281, 8
  %v433 = vpop.permute.xlu0 %432
  %434 = vrot.lane.b32.xlu0 %v283, 8
  %v435 = vpop.permute.xlu0 %434
  %436 = vrot.lane.b32.xlu0 %v285, 8
  %v437 = vpop.permute.xlu0 %436
  %438 = vrot.lane.b32.xlu0 %v287, 8
  %v439 = vpop.permute.xlu0 %438
  %440 = vrot.lane.b32.xlu0 %v289, 8
  %v441 = vpop.permute.xlu0 %440
  %442 = vrot.lane.b32.xlu0 %v291, 8
  %v443 = vpop.permute.xlu0 %442
  %444 = vrot.lane.b32.xlu0 %v293, 8
  %v445 = vpop.permute.xlu0 %444
  %446 = vrot.lane.b32.xlu0 %v295, 8
  %v447 = vpop.permute.xlu0 %446
  %448 = vrot.lane.b32.xlu0 %v297, 8
  %v449 = vpop.permute.xlu0 %448
  %450 = vrot.lane.b32.xlu0 %v299, 8
  %v451 = vpop.permute.xlu0 %450
  %452 = vrot.lane.b32.xlu0 %v301, 8
  %v453 = vpop.permute.xlu0 %452
  %454 = vrot.lane.b32.xlu0 %v303, 8
  %v455 = vpop.permute.xlu0 %454
  %456 = vrot.lane.b32.xlu0 %v305, 8
  %v457 = vpop.permute.xlu0 %456
  %458 = vrot.lane.b32.xlu0 %v307, 8
  %v459 = vpop.permute.xlu0 %458
  %460 = vrot.lane.b32.xlu0 %v309, 8
  %v461 = vpop.permute.xlu0 %460
  %462 = vrot.lane.b32.xlu0 %v311, 8
  %v463 = vpop.permute.xlu0 %462
  %464 = vrot.lane.b32.xlu0 %v313, 8
  %v465 = vpop.permute.xlu0 %464
  %466 = vrot.lane.b32.xlu0 %v315, 8
  %v467 = vpop.permute.xlu0 %466
  %468 = vrot.lane.b32.xlu0 %v317, 8
  %v469 = vpop.permute.xlu0 %468
  %470 = vrot.lane.b32.xlu0 %v319, 8
  %v471 = vpop.permute.xlu0 %470
  %472 = vrot.lane.b32.xlu0 %v321, 8
  %v473 = vpop.permute.xlu0 %472
  %474 = vrot.lane.b32.xlu0 %v323, 8
  %v475 = vpop.permute.xlu0 %474
  %476 = vrot.lane.b32.xlu0 %v325, 8
  %v477 = vpop.permute.xlu0 %476
  %478 = vrot.lane.b32.xlu0 %v327, 8
  %v479 = vpop.permute.xlu0 %478
  %480 = vrot.lane.b32.xlu0 %v329, 8
  %v481 = vpop.permute.xlu0 %480
  %482 = vrot.lane.b32.xlu0 %v331, 8
  %v483 = vpop.permute.xlu0 %482
  %484 = vrot.lane.b32.xlu0 %v333, 8
  %v485 = vpop.permute.xlu0 %484
  %486 = vrot.lane.b32.xlu0 %v335, 8
  %v487 = vpop.permute.xlu0 %486
  %488 = vrot.lane.b32.xlu0 %v337, 8
  %v489 = vpop.permute.xlu0 %488
  %490 = vrot.lane.b32.xlu0 %v339, 8
  %v491 = vpop.permute.xlu0 %490
  %492 = vrot.lane.b32.xlu0 %v341, 8
  %v493 = vpop.permute.xlu0 %492
  %494 = vrot.lane.b32.xlu0 %v343, 8
  %v495 = vpop.permute.xlu0 %494
  %496 = vrot.lane.b32.xlu0 %v345, 8
  %v497 = vpop.permute.xlu0 %496
  %498 = vrot.lane.b32.xlu0 %v347, 8
  %v499 = vpop.permute.xlu0 %498
  %500 = vrot.lane.b32.xlu0 %v349, 8
  %v501 = vpop.permute.xlu0 %500
  %502 = vrot.lane.b32.xlu0 %v351, 8
  %v503 = vpop.permute.xlu0 %502
  %504 = vrot.lane.b32.xlu0 %v353, 8
  %v505 = vpop.permute.xlu0 %504
  %506 = vrot.lane.b32.xlu0 %v355, 8
  %v507 = vpop.permute.xlu0 %506
  %508 = vrot.lane.b32.xlu0 %v357, 8
  %v509 = vpop.permute.xlu0 %508
  %510 = vrot.lane.b32.xlu0 %v359, 8
  %v511 = vpop.permute.xlu0 %510
  %512 = vrot.lane.b32.xlu0 %v361, 8
  %v513 = vpop.permute.xlu0 %512
  %514 = vrot.lane.b32.xlu0 %v363, 8
  %v515 = vpop.permute.xlu0 %514
  %516 = vrot.lane.b32.xlu0 %v365, 8
  %v517 = vpop.permute.xlu0 %516
  %518 = vrot.lane.b32.xlu0 %v367, 8
  %v519 = vpop.permute.xlu0 %518
  %520 = vrot.lane.b32.xlu0 %v369, 8
  %v521 = vpop.permute.xlu0 %520
  %522 = vrot.lane.b32.xlu0 %v371, 8
  %v523 = vpop.permute.xlu0 %522
  %524 = vrot.lane.b32.xlu0 %v373, 8
  %v525 = vpop.permute.xlu0 %524
  %526 = vrot.lane.b32.xlu0 %v375, 8
  %v527 = vpop.permute.xlu0 %526
  %528 = vrot.lane.b32.xlu0 %v377, 8
  %v529 = vpop.permute.xlu0 %528
  %530 = vrot.lane.b32.xlu0 %v379, 8
  %v531 = vpop.permute.xlu0 %530
  %532 = vrot.lane.b32.xlu0 %v381, 8
  %v533 = vpop.permute.xlu0 %532
  %534 = vrot.lane.b32.xlu0 %v383, 8
  %v535 = vpop.permute.xlu0 %534
  %536 = vrot.lane.b32.xlu0 %v385, 8
  %v537 = vpop.permute.xlu0 %536
  %538 = vrot.lane.b32.xlu0 %v387, 8
  %v539 = vpop.permute.xlu0 %538
  %540 = vrot.lane.b32.xlu0 %v389, 8
  %v541 = vpop.permute.xlu0 %540
  %542 = vrot.lane.b32.xlu0 %v391, 8
  %v543 = vpop.permute.xlu0 %542
  %544 = vrot.lane.b32.xlu0 %v393, 8
  %v545 = vpop.permute.xlu0 %544
  %546 = vrot.lane.b32.xlu0 %v395, 8
  %v547 = vpop.permute.xlu0 %546
  %548 = vrot.lane.b32.xlu0 %v397, 8
  %v549 = vpop.permute.xlu0 %548
  %550 = vrot.lane.b32.xlu0 %v399, 8
  %v551 = vpop.permute.xlu0 %550
  %552 = vrot.lane.b32.xlu0 %v401, 8
  %v553 = vpop.permute.xlu0 %552
  %554 = vrot.lane.b32.xlu0 %v403, 8
  %v555 = vpop.permute.xlu0 %554
  %556 = vrot.lane.b32.xlu0 %v405, 8
  %v557 = vpop.permute.xlu0 %556
  %558 = vrot.lane.b32.xlu0 %v407, 8
  %v559 = vpop.permute.xlu0 %558
  %560 = vrot.lane.b32.xlu0 %v409, 8
  %v561 = vpop.permute.xlu0 %560
  %562 = vrot.lane.b32.xlu0 %v411, 8
  %v563 = vpop.permute.xlu0 %562
  %564 = vrot.lane.b32.xlu0 %v413, 8
  %v565 = vpop.permute.xlu0 %564
  %566 = vrot.lane.b32.xlu0 %v412, 8
  %v567 = vpop.permute.xlu0 %566
  %vm645 = vcmask 1045504
  %v646 = vrot.slane %v102, 2
  %v647 = vrot.slane %v103, 2
  %v648 = vsel %vm645, %v646, %v647
  %v649 = vrot.slane %v104, 2
  %v650 = vsel %vm645, %v647, %v649
  %v651 = vrot.slane %v105, 2
  %v652 = vsel %vm645, %v649, %v651
  %v653 = vrot.slane %v106, 2
  %v654 = vsel %vm645, %v651, %v653
  %v655 = vrot.slane %v107, 2
  %v656 = vsel %vm645, %v653, %v655
  %v657 = vrot.slane %v108, 2
  %v658 = vsel %vm645, %v655, %v657
  %v659 = vrot.slane %v109, 2
  %v660 = vsel %vm645, %v657, %v659
  %v661 = vrot.slane %v110, 2
  %v662 = vsel %vm645, %v659, %v661
  %v663 = vrot.slane %v111, 2
  %v664 = vsel %vm645, %v661, %v663
  %v665 = vrot.slane %v112, 2
  %v666 = vsel %vm645, %v663, %v665
  %v667 = vrot.slane %v113, 2
  %v668 = vsel %vm645, %v665, %v667
  %v669 = vrot.slane %v114, 2
  %v670 = vsel %vm645, %v667, %v669
  %v671 = vrot.slane %v115, 2
  %v672 = vsel %vm645, %v669, %v671
  %v673 = vrot.slane %v116, 2
  %v674 = vsel %vm645, %v671, %v673
  %v675 = vrot.slane %v117, 2
  %v676 = vsel %vm645, %v673, %v675
  %v677 = vrot.slane %v118, 2
  %v678 = vsel %vm645, %v675, %v677
  %v679 = vrot.slane %v119, 2
  %v680 = vsel %vm645, %v677, %v679
  %v681 = vrot.slane %v120, 2
  %v682 = vsel %vm645, %v679, %v681
  %v683 = vrot.slane %v121, 2
  %v684 = vsel %vm645, %v681, %v683
  %v685 = vrot.slane %v122, 2
  %v686 = vsel %vm645, %v683, %v685
  %v687 = vrot.slane %v123, 2
  %v688 = vsel %vm645, %v685, %v687
  %v689 = vrot.slane %v124, 2
  %v690 = vsel %vm645, %v687, %v689
  %v691 = vrot.slane %v125, 2
  %v692 = vsel %vm645, %v689, %v691
  %v693 = vrot.slane %v126, 2
  %v694 = vsel %vm645, %v691, %v693
  %v695 = vrot.slane %v127, 2
  %v696 = vsel %vm645, %v693, %v695
  %v697 = vrot.slane %v128, 2
  %v698 = vsel %vm645, %v695, %v697
  %v699 = vrot.slane %v129, 2
  %v700 = vsel %vm645, %v697, %v699
  %v701 = vrot.slane %v130, 2
  %v702 = vsel %vm645, %v699, %v701
  %v703 = vrot.slane %v131, 2
  %v704 = vsel %vm645, %v701, %v703
  %v705 = vrot.slane %v132, 2
  %v706 = vsel %vm645, %v703, %v705
  %v707 = vrot.slane %v133, 2
  %v708 = vsel %vm645, %v705, %v707
  %v709 = vrot.slane %v134, 2
  %v710 = vsel %vm645, %v707, %v709
  %v711 = vrot.slane %v135, 2
  %v712 = vsel %vm645, %v709, %v711
  %v713 = vrot.slane %v136, 2
  %v714 = vsel %vm645, %v711, %v713
  %v715 = vrot.slane %v137, 2
  %v716 = vsel %vm645, %v713, %v715
  %v717 = vrot.slane %v138, 2
  %v718 = vsel %vm645, %v715, %v717
  %v719 = vrot.slane %v139, 2
  %v720 = vsel %vm645, %v717, %v719
  %v721 = vrot.slane %v140, 2
  %v722 = vsel %vm645, %v719, %v721
  %v723 = vrot.slane %v141, 2
  %v724 = vsel %vm645, %v721, %v723
  %v725 = vrot.slane %v142, 2
  %v726 = vsel %vm645, %v723, %v725
  %v727 = vrot.slane %v143, 2
  %v728 = vsel %vm645, %v725, %v727
  %v729 = vrot.slane %v144, 2
  %v730 = vsel %vm645, %v727, %v729
  %v731 = vrot.slane %v145, 2
  %v732 = vsel %vm645, %v729, %v731
  %v733 = vrot.slane %v146, 2
  %v734 = vsel %vm645, %v731, %v733
  %v735 = vrot.slane %v147, 2
  %v736 = vsel %vm645, %v733, %v735
  %v737 = vrot.slane %v148, 2
  %v738 = vsel %vm645, %v735, %v737
  %v739 = vrot.slane %v149, 2
  %v740 = vsel %vm645, %v737, %v739
  %v741 = vrot.slane %v150, 2
  %v742 = vsel %vm645, %v739, %v741
  %v743 = vrot.slane %v151, 2
  %v744 = vsel %vm645, %v741, %v743
  %v745 = vrot.slane %v152, 2
  %v746 = vsel %vm645, %v743, %v745
  %v747 = vrot.slane %v153, 2
  %v748 = vsel %vm645, %v745, %v747
  %v749 = vrot.slane %v154, 2
  %v750 = vsel %vm645, %v747, %v749
  %v751 = vrot.slane %v155, 2
  %v752 = vsel %vm645, %v749, %v751
  %v753 = vrot.slane %v156, 2
  %v754 = vsel %vm645, %v751, %v753
  %v755 = vrot.slane %v157, 2
  %v756 = vsel %vm645, %v753, %v755
  %v757 = vrot.slane %v158, 2
  %v758 = vsel %vm645, %v755, %v757
  %v759 = vrot.slane %v159, 2
  %v760 = vsel %vm645, %v757, %v759
  %v761 = vrot.slane %v160, 2
  %v762 = vsel %vm645, %v759, %v761
  %v763 = vrot.slane %v161, 2
  %v764 = vsel %vm645, %v761, %v763
  %v765 = vrot.slane %v162, 2
  %v766 = vsel %vm645, %v763, %v765
  %v767 = vrot.slane %v163, 2
  %v768 = vsel %vm645, %v765, %v767
  %v769 = vrot.slane %v164, 2
  %v770 = vsel %vm645, %v767, %v769
  %v771 = vrot.slane %v165, 2
  %v772 = vsel %vm645, %v769, %v771
  %v773 = vrot.slane %v166, 2
  %v774 = vsel %vm645, %v771, %v773
  %v775 = vrot.slane %v167, 2
  %v776 = vsel %vm645, %v773, %v775
  %v777 = vrot.slane %v168, 2
  %v778 = vsel %vm645, %v775, %v777
  %v779 = vrot.slane %v169, 2
  %v780 = vsel %vm645, %v777, %v779
  %v781 = vrot.slane %v170, 2
  %v782 = vsel %vm645, %v779, %v781
  %v783 = vrot.slane %v171, 2
  %v784 = vsel %vm645, %v781, %v783
  %v785 = vrot.slane %v172, 2
  %v786 = vsel %vm645, %v783, %v785
  %v787 = vrot.slane %v173, 2
  %v788 = vsel %vm645, %v785, %v787
  %v789 = vrot.slane %v174, 2
  %v790 = vsel %vm645, %v787, %v789
  %v791 = vrot.slane %v175, 2
  %v792 = vsel %vm645, %v789, %v791
  %v793 = vrot.slane %v176, 2
  %v794 = vsel %vm645, %v791, %v793
  %v795 = vrot.slane %v177, 2
  %v796 = vsel %vm645, %v793, %v795
  %v797 = vrot.slane %v178, 2
  %v798 = vsel %vm645, %v795, %v797
  %799 = vrot.lane.b32.xlu0 %v648, 16
  %v800 = vpop.permute.xlu0 %799
  %801 = vrot.lane.b32.xlu0 %v650, 16
  %v802 = vpop.permute.xlu0 %801
  %803 = vrot.lane.b32.xlu0 %v652, 16
  %v804 = vpop.permute.xlu0 %803
  %805 = vrot.lane.b32.xlu0 %v654, 16
  %v806 = vpop.permute.xlu0 %805
  %807 = vrot.lane.b32.xlu0 %v656, 16
  %v808 = vpop.permute.xlu0 %807
  %809 = vrot.lane.b32.xlu0 %v658, 16
  %v810 = vpop.permute.xlu0 %809
  %811 = vrot.lane.b32.xlu0 %v660, 16
  %v812 = vpop.permute.xlu0 %811
  %813 = vrot.lane.b32.xlu0 %v662, 16
  %v814 = vpop.permute.xlu0 %813
  %815 = vrot.lane.b32.xlu0 %v664, 16
  %v816 = vpop.permute.xlu0 %815
  %817 = vrot.lane.b32.xlu0 %v666, 16
  %v818 = vpop.permute.xlu0 %817
  %819 = vrot.lane.b32.xlu0 %v668, 16
  %v820 = vpop.permute.xlu0 %819
  %821 = vrot.lane.b32.xlu0 %v670, 16
  %v822 = vpop.permute.xlu0 %821
  %823 = vrot.lane.b32.xlu0 %v672, 16
  %v824 = vpop.permute.xlu0 %823
  %825 = vrot.lane.b32.xlu0 %v674, 16
  %v826 = vpop.permute.xlu0 %825
  %827 = vrot.lane.b32.xlu0 %v676, 16
  %v828 = vpop.permute.xlu0 %827
  %829 = vrot.lane.b32.xlu0 %v678, 16
  %v830 = vpop.permute.xlu0 %829
  %831 = vrot.lane.b32.xlu0 %v680, 16
  %v832 = vpop.permute.xlu0 %831
  %833 = vrot.lane.b32.xlu0 %v682, 16
  %v834 = vpop.permute.xlu0 %833
  %835 = vrot.lane.b32.xlu0 %v684, 16
  %v836 = vpop.permute.xlu0 %835
  %837 = vrot.lane.b32.xlu0 %v686, 16
  %v838 = vpop.permute.xlu0 %837
  %839 = vrot.lane.b32.xlu0 %v688, 16
  %v840 = vpop.permute.xlu0 %839
  %841 = vrot.lane.b32.xlu0 %v690, 16
  %v842 = vpop.permute.xlu0 %841
  %843 = vrot.lane.b32.xlu0 %v692, 16
  %v844 = vpop.permute.xlu0 %843
  %845 = vrot.lane.b32.xlu0 %v694, 16
  %v846 = vpop.permute.xlu0 %845
  %847 = vrot.lane.b32.xlu0 %v696, 16
  %v848 = vpop.permute.xlu0 %847
  %849 = vrot.lane.b32.xlu0 %v698, 16
  %v850 = vpop.permute.xlu0 %849
  %851 = vrot.lane.b32.xlu0 %v700, 16
  %v852 = vpop.permute.xlu0 %851
  %853 = vrot.lane.b32.xlu0 %v702, 16
  %v854 = vpop.permute.xlu0 %853
  %855 = vrot.lane.b32.xlu0 %v704, 16
  %v856 = vpop.permute.xlu0 %855
  %857 = vrot.lane.b32.xlu0 %v706, 16
  %v858 = vpop.permute.xlu0 %857
  %859 = vrot.lane.b32.xlu0 %v708, 16
  %v860 = vpop.permute.xlu0 %859
  %861 = vrot.lane.b32.xlu0 %v710, 16
  %v862 = vpop.permute.xlu0 %861
  %863 = vrot.lane.b32.xlu0 %v712, 16
  %v864 = vpop.permute.xlu0 %863
  %865 = vrot.lane.b32.xlu0 %v714, 16
  %v866 = vpop.permute.xlu0 %865
  %867 = vrot.lane.b32.xlu0 %v716, 16
  %v868 = vpop.permute.xlu0 %867
  %869 = vrot.lane.b32.xlu0 %v718, 16
  %v870 = vpop.permute.xlu0 %869
  %871 = vrot.lane.b32.xlu0 %v720, 16
  %v872 = vpop.permute.xlu0 %871
  %873 = vrot.lane.b32.xlu0 %v722, 16
  %v874 = vpop.permute.xlu0 %873
  %875 = vrot.lane.b32.xlu0 %v724, 16
  %v876 = vpop.permute.xlu0 %875
  %877 = vrot.lane.b32.xlu0 %v726, 16
  %v878 = vpop.permute.xlu0 %877
  %879 = vrot.lane.b32.xlu0 %v728, 16
  %v880 = vpop.permute.xlu0 %879
  %881 = vrot.lane.b32.xlu0 %v730, 16
  %v882 = vpop.permute.xlu0 %881
  %883 = vrot.lane.b32.xlu0 %v732, 16
  %v884 = vpop.permute.xlu0 %883
  %885 = vrot.lane.b32.xlu0 %v734, 16
  %v886 = vpop.permute.xlu0 %885
  %887 = vrot.lane.b32.xlu0 %v736, 16
  %v888 = vpop.permute.xlu0 %887
  %889 = vrot.lane.b32.xlu0 %v738, 16
  %v890 = vpop.permute.xlu0 %889
  %891 = vrot.lane.b32.xlu0 %v740, 16
  %v892 = vpop.permute.xlu0 %891
  %893 = vrot.lane.b32.xlu0 %v742, 16
  %v894 = vpop.permute.xlu0 %893
  %895 = vrot.lane.b32.xlu0 %v744, 16
  %v896 = vpop.permute.xlu0 %895
  %897 = vrot.lane.b32.xlu0 %v746, 16
  %v898 = vpop.permute.xlu0 %897
  %899 = vrot.lane.b32.xlu0 %v748, 16
  %v900 = vpop.permute.xlu0 %899
  %901 = vrot.lane.b32.xlu0 %v750, 16
  %v902 = vpop.permute.xlu0 %901
  %903 = vrot.lane.b32.xlu0 %v752, 16
  %v904 = vpop.permute.xlu0 %903
  %905 = vrot.lane.b32.xlu0 %v754, 16
  %v906 = vpop.permute.xlu0 %905
  %907 = vrot.lane.b32.xlu0 %v756, 16
  %v908 = vpop.permute.xlu0 %907
  %909 = vrot.lane.b32.xlu0 %v758, 16
  %v910 = vpop.permute.xlu0 %909
  %911 = vrot.lane.b32.xlu0 %v760, 16
  %v912 = vpop.permute.xlu0 %911
  %913 = vrot.lane.b32.xlu0 %v762, 16
  %v914 = vpop.permute.xlu0 %913
  %915 = vrot.lane.b32.xlu0 %v764, 16
  %v916 = vpop.permute.xlu0 %915
  %917 = vrot.lane.b32.xlu0 %v766, 16
  %v918 = vpop.permute.xlu0 %917
  %919 = vrot.lane.b32.xlu0 %v768, 16
  %v920 = vpop.permute.xlu0 %919
  %921 = vrot.lane.b32.xlu0 %v770, 16
  %v922 = vpop.permute.xlu0 %921
  %923 = vrot.lane.b32.xlu0 %v772, 16
  %v924 = vpop.permute.xlu0 %923
  %925 = vrot.lane.b32.xlu0 %v774, 16
  %v926 = vpop.permute.xlu0 %925
  %927 = vrot.lane.b32.xlu0 %v776, 16
  %v928 = vpop.permute.xlu0 %927
  %929 = vrot.lane.b32.xlu0 %v778, 16
  %v930 = vpop.permute.xlu0 %929
  %931 = vrot.lane.b32.xlu0 %v780, 16
  %v932 = vpop.permute.xlu0 %931
  %933 = vrot.lane.b32.xlu0 %v782, 16
  %v934 = vpop.permute.xlu0 %933
  %935 = vrot.lane.b32.xlu0 %v784, 16
  %v936 = vpop.permute.xlu0 %935
  %937 = vrot.lane.b32.xlu0 %v786, 16
  %v938 = vpop.permute.xlu0 %937
  %939 = vrot.lane.b32.xlu0 %v788, 16
  %v940 = vpop.permute.xlu0 %939
  %941 = vrot.lane.b32.xlu0 %v790, 16
  %v942 = vpop.permute.xlu0 %941
  %943 = vrot.lane.b32.xlu0 %v792, 16
  %v944 = vpop.permute.xlu0 %943
  %945 = vrot.lane.b32.xlu0 %v794, 16
  %v946 = vpop.permute.xlu0 %945
  %947 = vrot.lane.b32.xlu0 %v796, 16
  %v948 = vpop.permute.xlu0 %947
  %949 = vrot.lane.b32.xlu0 %v798, 16
  %v950 = vpop.permute.xlu0 %949
  %951 = vrot.lane.b32.xlu0 %v797, 16
  %v952 = vpop.permute.xlu0 %951
  %v1032 = vrot.slane %v179, 2
  %v1033 = vsel %vm645, %v797, %v1032
  %v1034 = vrot.slane %v180, 2
  %v1035 = vsel %vm645, %v1032, %v1034
  %1036 = vrot.lane.b32.xlu0 %v652, 24
  %v1037 = vpop.permute.xlu0 %1036
  %1038 = vrot.lane.b32.xlu0 %v654, 24
  %v1039 = vpop.permute.xlu0 %1038
  %1040 = vrot.lane.b32.xlu0 %v656, 24
  %v1041 = vpop.permute.xlu0 %1040
  %1042 = vrot.lane.b32.xlu0 %v658, 24
  %v1043 = vpop.permute.xlu0 %1042
  %1044 = vrot.lane.b32.xlu0 %v660, 24
  %v1045 = vpop.permute.xlu0 %1044
  %1046 = vrot.lane.b32.xlu0 %v662, 24
  %v1047 = vpop.permute.xlu0 %1046
  %1048 = vrot.lane.b32.xlu0 %v664, 24
  %v1049 = vpop.permute.xlu0 %1048
  %1050 = vrot.lane.b32.xlu0 %v666, 24
  %v1051 = vpop.permute.xlu0 %1050
  %1052 = vrot.lane.b32.xlu0 %v668, 24
  %v1053 = vpop.permute.xlu0 %1052
  %1054 = vrot.lane.b32.xlu0 %v670, 24
  %v1055 = vpop.permute.xlu0 %1054
  %1056 = vrot.lane.b32.xlu0 %v672, 24
  %v1057 = vpop.permute.xlu0 %1056
  %1058 = vrot.lane.b32.xlu0 %v674, 24
  %v1059 = vpop.permute.xlu0 %1058
  %1060 = vrot.lane.b32.xlu0 %v676, 24
  %v1061 = vpop.permute.xlu0 %1060
  %1062 = vrot.lane.b32.xlu0 %v678, 24
  %v1063 = vpop.permute.xlu0 %1062
  %1064 = vrot.lane.b32.xlu0 %v680, 24
  %v1065 = vpop.permute.xlu0 %1064
  %1066 = vrot.lane.b32.xlu0 %v682, 24
  %v1067 = vpop.permute.xlu0 %1066
  %1068 = vrot.lane.b32.xlu0 %v684, 24
  %v1069 = vpop.permute.xlu0 %1068
  %1070 = vrot.lane.b32.xlu0 %v686, 24
  %v1071 = vpop.permute.xlu0 %1070
  %1072 = vrot.lane.b32.xlu0 %v688, 24
  %v1073 = vpop.permute.xlu0 %1072
  %1074 = vrot.lane.b32.xlu0 %v690, 24
  %v1075 = vpop.permute.xlu0 %1074
  %1076 = vrot.lane.b32.xlu0 %v692, 24
  %v1077 = vpop.permute.xlu0 %1076
  %1078 = vrot.lane.b32.xlu0 %v694, 24
  %v1079 = vpop.permute.xlu0 %1078
  %1080 = vrot.lane.b32.xlu0 %v696, 24
  %v1081 = vpop.permute.xlu0 %1080
  %1082 = vrot.lane.b32.xlu0 %v698, 24
  %v1083 = vpop.permute.xlu0 %1082
  %1084 = vrot.lane.b32.xlu0 %v700, 24
  %v1085 = vpop.permute.xlu0 %1084
  %1086 = vrot.lane.b32.xlu0 %v702, 24
  %v1087 = vpop.permute.xlu0 %1086
  %1088 = vrot.lane.b32.xlu0 %v704, 24
  %v1089 = vpop.permute.xlu0 %1088
  %1090 = vrot.lane.b32.xlu0 %v706, 24
  %v1091 = vpop.permute.xlu0 %1090
  %1092 = vrot.lane.b32.xlu0 %v708, 24
  %v1093 = vpop.permute.xlu0 %1092
  %1094 = vrot.lane.b32.xlu0 %v710, 24
  %v1095 = vpop.permute.xlu0 %1094
  %1096 = vrot.lane.b32.xlu0 %v712, 24
  %v1097 = vpop.permute.xlu0 %1096
  %1098 = vrot.lane.b32.xlu0 %v714, 24
  %v1099 = vpop.permute.xlu0 %1098
  %1100 = vrot.lane.b32.xlu0 %v716, 24
  %v1101 = vpop.permute.xlu0 %1100
  %1102 = vrot.lane.b32.xlu0 %v718, 24
  %v1103 = vpop.permute.xlu0 %1102
  %1104 = vrot.lane.b32.xlu0 %v720, 24
  %v1105 = vpop.permute.xlu0 %1104
  %1106 = vrot.lane.b32.xlu0 %v722, 24
  %v1107 = vpop.permute.xlu0 %1106
  %1108 = vrot.lane.b32.xlu0 %v724, 24
  %v1109 = vpop.permute.xlu0 %1108
  %1110 = vrot.lane.b32.xlu0 %v726, 24
  %v1111 = vpop.permute.xlu0 %1110
  %1112 = vrot.lane.b32.xlu0 %v728, 24
  %v1113 = vpop.permute.xlu0 %1112
  %1114 = vrot.lane.b32.xlu0 %v730, 24
  %v1115 = vpop.permute.xlu0 %1114
  %1116 = vrot.lane.b32.xlu0 %v732, 24
  %v1117 = vpop.permute.xlu0 %1116
  %1118 = vrot.lane.b32.xlu0 %v734, 24
  %v1119 = vpop.permute.xlu0 %1118
  %1120 = vrot.lane.b32.xlu0 %v736, 24
  %v1121 = vpop.permute.xlu0 %1120
  %1122 = vrot.lane.b32.xlu0 %v738, 24
  %v1123 = vpop.permute.xlu0 %1122
  %1124 = vrot.lane.b32.xlu0 %v740, 24
  %v1125 = vpop.permute.xlu0 %1124
  %1126 = vrot.lane.b32.xlu0 %v742, 24
  %v1127 = vpop.permute.xlu0 %1126
  %1128 = vrot.lane.b32.xlu0 %v744, 24
  %v1129 = vpop.permute.xlu0 %1128
  %1130 = vrot.lane.b32.xlu0 %v746, 24
  %v1131 = vpop.permute.xlu0 %1130
  %1132 = vrot.lane.b32.xlu0 %v748, 24
  %v1133 = vpop.permute.xlu0 %1132
  %1134 = vrot.lane.b32.xlu0 %v750, 24
  %v1135 = vpop.permute.xlu0 %1134
  %1136 = vrot.lane.b32.xlu0 %v752, 24
  %v1137 = vpop.permute.xlu0 %1136
  %1138 = vrot.lane.b32.xlu0 %v754, 24
  %v1139 = vpop.permute.xlu0 %1138
  %1140 = vrot.lane.b32.xlu0 %v756, 24
  %v1141 = vpop.permute.xlu0 %1140
  %1142 = vrot.lane.b32.xlu0 %v758, 24
  %v1143 = vpop.permute.xlu0 %1142
  %1144 = vrot.lane.b32.xlu0 %v760, 24
  %v1145 = vpop.permute.xlu0 %1144
  %1146 = vrot.lane.b32.xlu0 %v762, 24
  %v1147 = vpop.permute.xlu0 %1146
  %1148 = vrot.lane.b32.xlu0 %v764, 24
  %v1149 = vpop.permute.xlu0 %1148
  %1150 = vrot.lane.b32.xlu0 %v766, 24
  %v1151 = vpop.permute.xlu0 %1150
  %1152 = vrot.lane.b32.xlu0 %v768, 24
  %v1153 = vpop.permute.xlu0 %1152
  %1154 = vrot.lane.b32.xlu0 %v770, 24
  %v1155 = vpop.permute.xlu0 %1154
  %1156 = vrot.lane.b32.xlu0 %v772, 24
  %v1157 = vpop.permute.xlu0 %1156
  %1158 = vrot.lane.b32.xlu0 %v774, 24
  %v1159 = vpop.permute.xlu0 %1158
  %1160 = vrot.lane.b32.xlu0 %v776, 24
  %v1161 = vpop.permute.xlu0 %1160
  %1162 = vrot.lane.b32.xlu0 %v778, 24
  %v1163 = vpop.permute.xlu0 %1162
  %1164 = vrot.lane.b32.xlu0 %v780, 24
  %v1165 = vpop.permute.xlu0 %1164
  %1166 = vrot.lane.b32.xlu0 %v782, 24
  %v1167 = vpop.permute.xlu0 %1166
  %1168 = vrot.lane.b32.xlu0 %v784, 24
  %v1169 = vpop.permute.xlu0 %1168
  %1170 = vrot.lane.b32.xlu0 %v786, 24
  %v1171 = vpop.permute.xlu0 %1170
  %1172 = vrot.lane.b32.xlu0 %v788, 24
  %v1173 = vpop.permute.xlu0 %1172
  %1174 = vrot.lane.b32.xlu0 %v790, 24
  %v1175 = vpop.permute.xlu0 %1174
  %1176 = vrot.lane.b32.xlu0 %v792, 24
  %v1177 = vpop.permute.xlu0 %1176
  %1178 = vrot.lane.b32.xlu0 %v794, 24
  %v1179 = vpop.permute.xlu0 %1178
  %1180 = vrot.lane.b32.xlu0 %v796, 24
  %v1181 = vpop.permute.xlu0 %1180
  %1182 = vrot.lane.b32.xlu0 %v798, 24
  %v1183 = vpop.permute.xlu0 %1182
  %1184 = vrot.lane.b32.xlu0 %v1033, 24
  %v1185 = vpop.permute.xlu0 %1184
  %1186 = vrot.lane.b32.xlu0 %v1035, 24
  %v1187 = vpop.permute.xlu0 %1186
  %1188 = vrot.lane.b32.xlu0 %v1034, 24
  %v1189 = vpop.permute.xlu0 %1188
  %vm1267 = vcmask 1044480
  %v1268 = vrot.slane %v104, 3
  %v1269 = vrot.slane %v105, 3
  %v1270 = vsel %vm1267, %v1268, %v1269
  %v1271 = vrot.slane %v106, 3
  %v1272 = vsel %vm1267, %v1269, %v1271
  %v1273 = vrot.slane %v107, 3
  %v1274 = vsel %vm1267, %v1271, %v1273
  %v1275 = vrot.slane %v108, 3
  %v1276 = vsel %vm1267, %v1273, %v1275
  %v1277 = vrot.slane %v109, 3
  %v1278 = vsel %vm1267, %v1275, %v1277
  %v1279 = vrot.slane %v110, 3
  %v1280 = vsel %vm1267, %v1277, %v1279
  %v1281 = vrot.slane %v111, 3
  %v1282 = vsel %vm1267, %v1279, %v1281
  %v1283 = vrot.slane %v112, 3
  %v1284 = vsel %vm1267, %v1281, %v1283
  %v1285 = vrot.slane %v113, 3
  %v1286 = vsel %vm1267, %v1283, %v1285
  %v1287 = vrot.slane %v114, 3
  %v1288 = vsel %vm1267, %v1285, %v1287
  %v1289 = vrot.slane %v115, 3
  %v1290 = vsel %vm1267, %v1287, %v1289
  %v1291 = vrot.slane %v116, 3
  %v1292 = vsel %vm1267, %v1289, %v1291
  %v1293 = vrot.slane %v117, 3
  %v1294 = vsel %vm1267, %v1291, %v1293
  %v1295 = vrot.slane %v118, 3
  %v1296 = vsel %vm1267, %v1293, %v1295
  %v1297 = vrot.slane %v119, 3
  %v1298 = vsel %vm1267, %v1295, %v1297
  %v1299 = vrot.slane %v120, 3
  %v1300 = vsel %vm1267, %v1297, %v1299
  %v1301 = vrot.slane %v121, 3
  %v1302 = vsel %vm1267, %v1299, %v1301
  %v1303 = vrot.slane %v122, 3
  %v1304 = vsel %vm1267, %v1301, %v1303
  %v1305 = vrot.slane %v123, 3
  %v1306 = vsel %vm1267, %v1303, %v1305
  %v1307 = vrot.slane %v124, 3
  %v1308 = vsel %vm1267, %v1305, %v1307
  %v1309 = vrot.slane %v125, 3
  %v1310 = vsel %vm1267, %v1307, %v1309
  %v1311 = vrot.slane %v126, 3
  %v1312 = vsel %vm1267, %v1309, %v1311
  %v1313 = vrot.slane %v127, 3
  %v1314 = vsel %vm1267, %v1311, %v1313
  %v1315 = vrot.slane %v128, 3
  %v1316 = vsel %vm1267, %v1313, %v1315
  %v1317 = vrot.slane %v129, 3
  %v1318 = vsel %vm1267, %v1315, %v1317
  %v1319 = vrot.slane %v130, 3
  %v1320 = vsel %vm1267, %v1317, %v1319
  %v1321 = vrot.slane %v131, 3
  %v1322 = vsel %vm1267, %v1319, %v1321
  %v1323 = vrot.slane %v132, 3
  %v1324 = vsel %vm1267, %v1321, %v1323
  %v1325 = vrot.slane %v133, 3
  %v1326 = vsel %vm1267, %v1323, %v1325
  %v1327 = vrot.slane %v134, 3
  %v1328 = vsel %vm1267, %v1325, %v1327
  %v1329 = vrot.slane %v135, 3
  %v1330 = vsel %vm1267, %v1327, %v1329
  %v1331 = vrot.slane %v136, 3
  %v1332 = vsel %vm1267, %v1329, %v1331
  %v1333 = vrot.slane %v137, 3
  %v1334 = vsel %vm1267, %v1331, %v1333
  %v1335 = vrot.slane %v138, 3
  %v1336 = vsel %vm1267, %v1333, %v1335
  %v1337 = vrot.slane %v139, 3
  %v1338 = vsel %vm1267, %v1335, %v1337
  %v1339 = vrot.slane %v140, 3
  %v1340 = vsel %vm1267, %v1337, %v1339
  %v1341 = vrot.slane %v141, 3
  %v1342 = vsel %vm1267, %v1339, %v1341
  %v1343 = vrot.slane %v142, 3
  %v1344 = vsel %vm1267, %v1341, %v1343
  %v1345 = vrot.slane %v143, 3
  %v1346 = vsel %vm1267, %v1343, %v1345
  %v1347 = vrot.slane %v144, 3
  %v1348 = vsel %vm1267, %v1345, %v1347
  %v1349 = vrot.slane %v145, 3
  %v1350 = vsel %vm1267, %v1347, %v1349
  %v1351 = vrot.slane %v146, 3
  %v1352 = vsel %vm1267, %v1349, %v1351
  %v1353 = vrot.slane %v147, 3
  %v1354 = vsel %vm1267, %v1351, %v1353
  %v1355 = vrot.slane %v148, 3
  %v1356 = vsel %vm1267, %v1353, %v1355
  %v1357 = vrot.slane %v149, 3
  %v1358 = vsel %vm1267, %v1355, %v1357
  %v1359 = vrot.slane %v150, 3
  %v1360 = vsel %vm1267, %v1357, %v1359
  %v1361 = vrot.slane %v151, 3
  %v1362 = vsel %vm1267, %v1359, %v1361
  %v1363 = vrot.slane %v152, 3
  %v1364 = vsel %vm1267, %v1361, %v1363
  %v1365 = vrot.slane %v153, 3
  %v1366 = vsel %vm1267, %v1363, %v1365
  %v1367 = vrot.slane %v154, 3
  %v1368 = vsel %vm1267, %v1365, %v1367
  %v1369 = vrot.slane %v155, 3
  %v1370 = vsel %vm1267, %v1367, %v1369
  %v1371 = vrot.slane %v156, 3
  %v1372 = vsel %vm1267, %v1369, %v1371
  %v1373 = vrot.slane %v157, 3
  %v1374 = vsel %vm1267, %v1371, %v1373
  %v1375 = vrot.slane %v158, 3
  %v1376 = vsel %vm1267, %v1373, %v1375
  %v1377 = vrot.slane %v159, 3
  %v1378 = vsel %vm1267, %v1375, %v1377
  %v1379 = vrot.slane %v160, 3
  %v1380 = vsel %vm1267, %v1377, %v1379
  %v1381 = vrot.slane %v161, 3
  %v1382 = vsel %vm1267, %v1379, %v1381
  %v1383 = vrot.slane %v162, 3
  %v1384 = vsel %vm1267, %v1381, %v1383
  %v1385 = vrot.slane %v163, 3
  %v1386 = vsel %vm1267, %v1383, %v1385
  %v1387 = vrot.slane %v164, 3
  %v1388 = vsel %vm1267, %v1385, %v1387
  %v1389 = vrot.slane %v165, 3
  %v1390 = vsel %vm1267, %v1387, %v1389
  %v1391 = vrot.slane %v166, 3
  %v1392 = vsel %vm1267, %v1389, %v1391
  %v1393 = vrot.slane %v167, 3
  %v1394 = vsel %vm1267, %v1391, %v1393
  %v1395 = vrot.slane %v168, 3
  %v1396 = vsel %vm1267, %v1393, %v1395
  %v1397 = vrot.slane %v169, 3
  %v1398 = vsel %vm1267, %v1395, %v1397
  %v1399 = vrot.slane %v170, 3
  %v1400 = vsel %vm1267, %v1397, %v1399
  %v1401 = vrot.slane %v171, 3
  %v1402 = vsel %vm1267, %v1399, %v1401
  %v1403 = vrot.slane %v172, 3
  %v1404 = vsel %vm1267, %v1401, %v1403
  %v1405 = vrot.slane %v173, 3
  %v1406 = vsel %vm1267, %v1403, %v1405
  %v1407 = vrot.slane %v174, 3
  %v1408 = vsel %vm1267, %v1405, %v1407
  %v1409 = vrot.slane %v175, 3
  %v1410 = vsel %vm1267, %v1407, %v1409
  %v1411 = vrot.slane %v176, 3
  %v1412 = vsel %vm1267, %v1409, %v1411
  %v1413 = vrot.slane %v177, 3
  %v1414 = vsel %vm1267, %v1411, %v1413
  %v1415 = vrot.slane %v178, 3
  %v1416 = vsel %vm1267, %v1413, %v1415
  %v1417 = vrot.slane %v179, 3
  %v1418 = vsel %vm1267, %v1415, %v1417
  %v1419 = vrot.slane %v180, 3
  %v1420 = vsel %vm1267, %v1417, %v1419
  %1421 = vrot.lane.b32.xlu0 %v1270, 32
  %v1422 = vpop.permute.xlu0 %1421
  %1423 = vrot.lane.b32.xlu0 %v1272, 32
  %v1424 = vpop.permute.xlu0 %1423
  %1425 = vrot.lane.b32.xlu0 %v1274, 32
  %v1426 = vpop.permute.xlu0 %1425
  %1427 = vrot.lane.b32.xlu0 %v1276, 32
  %v1428 = vpop.permute.xlu0 %1427
  %1429 = vrot.lane.b32.xlu0 %v1278, 32
  %v1430 = vpop.permute.xlu0 %1429
  %1431 = vrot.lane.b32.xlu0 %v1280, 32
  %v1432 = vpop.permute.xlu0 %1431
  %1433 = vrot.lane.b32.xlu0 %v1282, 32
  %v1434 = vpop.permute.xlu0 %1433
  %1435 = vrot.lane.b32.xlu0 %v1284, 32
  %v1436 = vpop.permute.xlu0 %1435
  %1437 = vrot.lane.b32.xlu0 %v1286, 32
  %v1438 = vpop.permute.xlu0 %1437
  %1439 = vrot.lane.b32.xlu0 %v1288, 32
  %v1440 = vpop.permute.xlu0 %1439
  %1441 = vrot.lane.b32.xlu0 %v1290, 32
  %v1442 = vpop.permute.xlu0 %1441
  %1443 = vrot.lane.b32.xlu0 %v1292, 32
  %v1444 = vpop.permute.xlu0 %1443
  %1445 = vrot.lane.b32.xlu0 %v1294, 32
  %v1446 = vpop.permute.xlu0 %1445
  %1447 = vrot.lane.b32.xlu0 %v1296, 32
  %v1448 = vpop.permute.xlu0 %1447
  %1449 = vrot.lane.b32.xlu0 %v1298, 32
  %v1450 = vpop.permute.xlu0 %1449
  %1451 = vrot.lane.b32.xlu0 %v1300, 32
  %v1452 = vpop.permute.xlu0 %1451
  %1453 = vrot.lane.b32.xlu0 %v1302, 32
  %v1454 = vpop.permute.xlu0 %1453
  %1455 = vrot.lane.b32.xlu0 %v1304, 32
  %v1456 = vpop.permute.xlu0 %1455
  %1457 = vrot.lane.b32.xlu0 %v1306, 32
  %v1458 = vpop.permute.xlu0 %1457
  %1459 = vrot.lane.b32.xlu0 %v1308, 32
  %v1460 = vpop.permute.xlu0 %1459
  %1461 = vrot.lane.b32.xlu0 %v1310, 32
  %v1462 = vpop.permute.xlu0 %1461
  %1463 = vrot.lane.b32.xlu0 %v1312, 32
  %v1464 = vpop.permute.xlu0 %1463
  %1465 = vrot.lane.b32.xlu0 %v1314, 32
  %v1466 = vpop.permute.xlu0 %1465
  %1467 = vrot.lane.b32.xlu0 %v1316, 32
  %v1468 = vpop.permute.xlu0 %1467
  %1469 = vrot.lane.b32.xlu0 %v1318, 32
  %v1470 = vpop.permute.xlu0 %1469
  %1471 = vrot.lane.b32.xlu0 %v1320, 32
  %v1472 = vpop.permute.xlu0 %1471
  %1473 = vrot.lane.b32.xlu0 %v1322, 32
  %v1474 = vpop.permute.xlu0 %1473
  %1475 = vrot.lane.b32.xlu0 %v1324, 32
  %v1476 = vpop.permute.xlu0 %1475
  %1477 = vrot.lane.b32.xlu0 %v1326, 32
  %v1478 = vpop.permute.xlu0 %1477
  %1479 = vrot.lane.b32.xlu0 %v1328, 32
  %v1480 = vpop.permute.xlu0 %1479
  %1481 = vrot.lane.b32.xlu0 %v1330, 32
  %v1482 = vpop.permute.xlu0 %1481
  %1483 = vrot.lane.b32.xlu0 %v1332, 32
  %v1484 = vpop.permute.xlu0 %1483
  %1485 = vrot.lane.b32.xlu0 %v1334, 32
  %v1486 = vpop.permute.xlu0 %1485
  %1487 = vrot.lane.b32.xlu0 %v1336, 32
  %v1488 = vpop.permute.xlu0 %1487
  %1489 = vrot.lane.b32.xlu0 %v1338, 32
  %v1490 = vpop.permute.xlu0 %1489
  %1491 = vrot.lane.b32.xlu0 %v1340, 32
  %v1492 = vpop.permute.xlu0 %1491
  %1493 = vrot.lane.b32.xlu0 %v1342, 32
  %v1494 = vpop.permute.xlu0 %1493
  %1495 = vrot.lane.b32.xlu0 %v1344, 32
  %v1496 = vpop.permute.xlu0 %1495
  %1497 = vrot.lane.b32.xlu0 %v1346, 32
  %v1498 = vpop.permute.xlu0 %1497
  %1499 = vrot.lane.b32.xlu0 %v1348, 32
  %v1500 = vpop.permute.xlu0 %1499
  %1501 = vrot.lane.b32.xlu0 %v1350, 32
  %v1502 = vpop.permute.xlu0 %1501
  %1503 = vrot.lane.b32.xlu0 %v1352, 32
  %v1504 = vpop.permute.xlu0 %1503
  %1505 = vrot.lane.b32.xlu0 %v1354, 32
  %v1506 = vpop.permute.xlu0 %1505
  %1507 = vrot.lane.b32.xlu0 %v1356, 32
  %v1508 = vpop.permute.xlu0 %1507
  %1509 = vrot.lane.b32.xlu0 %v1358, 32
  %v1510 = vpop.permute.xlu0 %1509
  %1511 = vrot.lane.b32.xlu0 %v1360, 32
  %v1512 = vpop.permute.xlu0 %1511
  %1513 = vrot.lane.b32.xlu0 %v1362, 32
  %v1514 = vpop.permute.xlu0 %1513
  %1515 = vrot.lane.b32.xlu0 %v1364, 32
  %v1516 = vpop.permute.xlu0 %1515
  %1517 = vrot.lane.b32.xlu0 %v1366, 32
  %v1518 = vpop.permute.xlu0 %1517
  %1519 = vrot.lane.b32.xlu0 %v1368, 32
  %v1520 = vpop.permute.xlu0 %1519
  %1521 = vrot.lane.b32.xlu0 %v1370, 32
  %v1522 = vpop.permute.xlu0 %1521
  %1523 = vrot.lane.b32.xlu0 %v1372, 32
  %v1524 = vpop.permute.xlu0 %1523
  %1525 = vrot.lane.b32.xlu0 %v1374, 32
  %v1526 = vpop.permute.xlu0 %1525
  %1527 = vrot.lane.b32.xlu0 %v1376, 32
  %v1528 = vpop.permute.xlu0 %1527
  %1529 = vrot.lane.b32.xlu0 %v1378, 32
  %v1530 = vpop.permute.xlu0 %1529
  %1531 = vrot.lane.b32.xlu0 %v1380, 32
  %v1532 = vpop.permute.xlu0 %1531
  %1533 = vrot.lane.b32.xlu0 %v1382, 32
  %v1534 = vpop.permute.xlu0 %1533
  %1535 = vrot.lane.b32.xlu0 %v1384, 32
  %v1536 = vpop.permute.xlu0 %1535
  %1537 = vrot.lane.b32.xlu0 %v1386, 32
  %v1538 = vpop.permute.xlu0 %1537
  %1539 = vrot.lane.b32.xlu0 %v1388, 32
  %v1540 = vpop.permute.xlu0 %1539
  %1541 = vrot.lane.b32.xlu0 %v1390, 32
  %v1542 = vpop.permute.xlu0 %1541
  %1543 = vrot.lane.b32.xlu0 %v1392, 32
  %v1544 = vpop.permute.xlu0 %1543
  %1545 = vrot.lane.b32.xlu0 %v1394, 32
  %v1546 = vpop.permute.xlu0 %1545
  %1547 = vrot.lane.b32.xlu0 %v1396, 32
  %v1548 = vpop.permute.xlu0 %1547
  %1549 = vrot.lane.b32.xlu0 %v1398, 32
  %v1550 = vpop.permute.xlu0 %1549
  %1551 = vrot.lane.b32.xlu0 %v1400, 32
  %v1552 = vpop.permute.xlu0 %1551
  %1553 = vrot.lane.b32.xlu0 %v1402, 32
  %v1554 = vpop.permute.xlu0 %1553
  %1555 = vrot.lane.b32.xlu0 %v1404, 32
  %v1556 = vpop.permute.xlu0 %1555
  %1557 = vrot.lane.b32.xlu0 %v1406, 32
  %v1558 = vpop.permute.xlu0 %1557
  %1559 = vrot.lane.b32.xlu0 %v1408, 32
  %v1560 = vpop.permute.xlu0 %1559
  %1561 = vrot.lane.b32.xlu0 %v1410, 32
  %v1562 = vpop.permute.xlu0 %1561
  %1563 = vrot.lane.b32.xlu0 %v1412, 32
  %v1564 = vpop.permute.xlu0 %1563
  %1565 = vrot.lane.b32.xlu0 %v1414, 32
  %v1566 = vpop.permute.xlu0 %1565
  %1567 = vrot.lane.b32.xlu0 %v1416, 32
  %v1568 = vpop.permute.xlu0 %1567
  %1569 = vrot.lane.b32.xlu0 %v1418, 32
  %v1570 = vpop.permute.xlu0 %1569
  %1571 = vrot.lane.b32.xlu0 %v1420, 32
  %v1572 = vpop.permute.xlu0 %1571
  %1573 = vrot.lane.b32.xlu0 %v1419, 32
  %v1574 = vpop.permute.xlu0 %1573
  %vm1652 = vcmask 1043456
  %v1653 = vrot.slane %v104, 4
  %v1654 = vrot.slane %v105, 4
  %v1655 = vsel %vm1652, %v1653, %v1654
  %v1656 = vrot.slane %v106, 4
  %v1657 = vsel %vm1652, %v1654, %v1656
  %v1658 = vrot.slane %v107, 4
  %v1659 = vsel %vm1652, %v1656, %v1658
  %v1660 = vrot.slane %v108, 4
  %v1661 = vsel %vm1652, %v1658, %v1660
  %v1662 = vrot.slane %v109, 4
  %v1663 = vsel %vm1652, %v1660, %v1662
  %v1664 = vrot.slane %v110, 4
  %v1665 = vsel %vm1652, %v1662, %v1664
  %v1666 = vrot.slane %v111, 4
  %v1667 = vsel %vm1652, %v1664, %v1666
  %v1668 = vrot.slane %v112, 4
  %v1669 = vsel %vm1652, %v1666, %v1668
  %v1670 = vrot.slane %v113, 4
  %v1671 = vsel %vm1652, %v1668, %v1670
  %v1672 = vrot.slane %v114, 4
  %v1673 = vsel %vm1652, %v1670, %v1672
  %v1674 = vrot.slane %v115, 4
  %v1675 = vsel %vm1652, %v1672, %v1674
  %v1676 = vrot.slane %v116, 4
  %v1677 = vsel %vm1652, %v1674, %v1676
  %v1678 = vrot.slane %v117, 4
  %v1679 = vsel %vm1652, %v1676, %v1678
  %v1680 = vrot.slane %v118, 4
  %v1681 = vsel %vm1652, %v1678, %v1680
  %v1682 = vrot.slane %v119, 4
  %v1683 = vsel %vm1652, %v1680, %v1682
  %v1684 = vrot.slane %v120, 4
  %v1685 = vsel %vm1652, %v1682, %v1684
  %v1686 = vrot.slane %v121, 4
  %v1687 = vsel %vm1652, %v1684, %v1686
  %v1688 = vrot.slane %v122, 4
  %v1689 = vsel %vm1652, %v1686, %v1688
  %v1690 = vrot.slane %v123, 4
  %v1691 = vsel %vm1652, %v1688, %v1690
  %v1692 = vrot.slane %v124, 4
  %v1693 = vsel %vm1652, %v1690, %v1692
  %v1694 = vrot.slane %v125, 4
  %v1695 = vsel %vm1652, %v1692, %v1694
  %v1696 = vrot.slane %v126, 4
  %v1697 = vsel %vm1652, %v1694, %v1696
  %v1698 = vrot.slane %v127, 4
  %v1699 = vsel %vm1652, %v1696, %v1698
  %v1700 = vrot.slane %v128, 4
  %v1701 = vsel %vm1652, %v1698, %v1700
  %v1702 = vrot.slane %v129, 4
  %v1703 = vsel %vm1652, %v1700, %v1702
  %v1704 = vrot.slane %v130, 4
  %v1705 = vsel %vm1652, %v1702, %v1704
  %v1706 = vrot.slane %v131, 4
  %v1707 = vsel %vm1652, %v1704, %v1706
  %v1708 = vrot.slane %v132, 4
  %v1709 = vsel %vm1652, %v1706, %v1708
  %v1710 = vrot.slane %v133, 4
  %v1711 = vsel %vm1652, %v1708, %v1710
  %v1712 = vrot.slane %v134, 4
  %v1713 = vsel %vm1652, %v1710, %v1712
  %v1714 = vrot.slane %v135, 4
  %v1715 = vsel %vm1652, %v1712, %v1714
  %v1716 = vrot.slane %v136, 4
  %v1717 = vsel %vm1652, %v1714, %v1716
  %v1718 = vrot.slane %v137, 4
  %v1719 = vsel %vm1652, %v1716, %v1718
  %v1720 = vrot.slane %v138, 4
  %v1721 = vsel %vm1652, %v1718, %v1720
  %v1722 = vrot.slane %v139, 4
  %v1723 = vsel %vm1652, %v1720, %v1722
  %v1724 = vrot.slane %v140, 4
  %v1725 = vsel %vm1652, %v1722, %v1724
  %v1726 = vrot.slane %v141, 4
  %v1727 = vsel %vm1652, %v1724, %v1726
  %v1728 = vrot.slane %v142, 4
  %v1729 = vsel %vm1652, %v1726, %v1728
  %v1730 = vrot.slane %v143, 4
  %v1731 = vsel %vm1652, %v1728, %v1730
  %v1732 = vrot.slane %v144, 4
  %v1733 = vsel %vm1652, %v1730, %v1732
  %v1734 = vrot.slane %v145, 4
  %v1735 = vsel %vm1652, %v1732, %v1734
  %v1736 = vrot.slane %v146, 4
  %v1737 = vsel %vm1652, %v1734, %v1736
  %v1738 = vrot.slane %v147, 4
  %v1739 = vsel %vm1652, %v1736, %v1738
  %v1740 = vrot.slane %v148, 4
  %v1741 = vsel %vm1652, %v1738, %v1740
  %v1742 = vrot.slane %v149, 4
  %v1743 = vsel %vm1652, %v1740, %v1742
  %v1744 = vrot.slane %v150, 4
  %v1745 = vsel %vm1652, %v1742, %v1744
  %v1746 = vrot.slane %v151, 4
  %v1747 = vsel %vm1652, %v1744, %v1746
  %v1748 = vrot.slane %v152, 4
  %v1749 = vsel %vm1652, %v1746, %v1748
  %v1750 = vrot.slane %v153, 4
  %v1751 = vsel %vm1652, %v1748, %v1750
  %v1752 = vrot.slane %v154, 4
  %v1753 = vsel %vm1652, %v1750, %v1752
  %v1754 = vrot.slane %v155, 4
  %v1755 = vsel %vm1652, %v1752, %v1754
  %v1756 = vrot.slane %v156, 4
  %v1757 = vsel %vm1652, %v1754, %v1756
  %v1758 = vrot.slane %v157, 4
  %v1759 = vsel %vm1652, %v1756, %v1758
  %v1760 = vrot.slane %v158, 4
  %v1761 = vsel %vm1652, %v1758, %v1760
  %v1762 = vrot.slane %v159, 4
  %v1763 = vsel %vm1652, %v1760, %v1762
  %v1764 = vrot.slane %v160, 4
  %v1765 = vsel %vm1652, %v1762, %v1764
  %v1766 = vrot.slane %v161, 4
  %v1767 = vsel %vm1652, %v1764, %v1766
  %v1768 = vrot.slane %v162, 4
  %v1769 = vsel %vm1652, %v1766, %v1768
  %v1770 = vrot.slane %v163, 4
  %v1771 = vsel %vm1652, %v1768, %v1770
  %v1772 = vrot.slane %v164, 4
  %v1773 = vsel %vm1652, %v1770, %v1772
  %v1774 = vrot.slane %v165, 4
  %v1775 = vsel %vm1652, %v1772, %v1774
  %v1776 = vrot.slane %v166, 4
  %v1777 = vsel %vm1652, %v1774, %v1776
  %v1778 = vrot.slane %v167, 4
  %v1779 = vsel %vm1652, %v1776, %v1778
  %v1780 = vrot.slane %v168, 4
  %v1781 = vsel %vm1652, %v1778, %v1780
  %v1782 = vrot.slane %v169, 4
  %v1783 = vsel %vm1652, %v1780, %v1782
  %v1784 = vrot.slane %v170, 4
  %v1785 = vsel %vm1652, %v1782, %v1784
  %v1786 = vrot.slane %v171, 4
  %v1787 = vsel %vm1652, %v1784, %v1786
  %v1788 = vrot.slane %v172, 4
  %v1789 = vsel %vm1652, %v1786, %v1788
  %v1790 = vrot.slane %v173, 4
  %v1791 = vsel %vm1652, %v1788, %v1790
  %v1792 = vrot.slane %v174, 4
  %v1793 = vsel %vm1652, %v1790, %v1792
  %v1794 = vrot.slane %v175, 4
  %v1795 = vsel %vm1652, %v1792, %v1794
  %v1796 = vrot.slane %v176, 4
  %v1797 = vsel %vm1652, %v1794, %v1796
  %v1798 = vrot.slane %v177, 4
  %v1799 = vsel %vm1652, %v1796, %v1798
  %v1800 = vrot.slane %v178, 4
  %v1801 = vsel %vm1652, %v1798, %v1800
  %v1802 = vrot.slane %v179, 4
  %v1803 = vsel %vm1652, %v1800, %v1802
  %v1804 = vrot.slane %v180, 4
  %v1805 = vsel %vm1652, %v1802, %v1804
  %1806 = vrot.lane.b32.xlu0 %v1655, 40
  %v1807 = vpop.permute.xlu0 %1806
  %1808 = vrot.lane.b32.xlu0 %v1657, 40
  %v1809 = vpop.permute.xlu0 %1808
  %1810 = vrot.lane.b32.xlu0 %v1659, 40
  %v1811 = vpop.permute.xlu0 %1810
  %1812 = vrot.lane.b32.xlu0 %v1661, 40
  %v1813 = vpop.permute.xlu0 %1812
  %1814 = vrot.lane.b32.xlu0 %v1663, 40
  %v1815 = vpop.permute.xlu0 %1814
  %1816 = vrot.lane.b32.xlu0 %v1665, 40
  %v1817 = vpop.permute.xlu0 %1816
  %1818 = vrot.lane.b32.xlu0 %v1667, 40
  %v1819 = vpop.permute.xlu0 %1818
  %1820 = vrot.lane.b32.xlu0 %v1669, 40
  %v1821 = vpop.permute.xlu0 %1820
  %1822 = vrot.lane.b32.xlu0 %v1671, 40
  %v1823 = vpop.permute.xlu0 %1822
  %1824 = vrot.lane.b32.xlu0 %v1673, 40
  %v1825 = vpop.permute.xlu0 %1824
  %1826 = vrot.lane.b32.xlu0 %v1675, 40
  %v1827 = vpop.permute.xlu0 %1826
  %1828 = vrot.lane.b32.xlu0 %v1677, 40
  %v1829 = vpop.permute.xlu0 %1828
  %1830 = vrot.lane.b32.xlu0 %v1679, 40
  %v1831 = vpop.permute.xlu0 %1830
  %1832 = vrot.lane.b32.xlu0 %v1681, 40
  %v1833 = vpop.permute.xlu0 %1832
  %1834 = vrot.lane.b32.xlu0 %v1683, 40
  %v1835 = vpop.permute.xlu0 %1834
  %1836 = vrot.lane.b32.xlu0 %v1685, 40
  %v1837 = vpop.permute.xlu0 %1836
  %1838 = vrot.lane.b32.xlu0 %v1687, 40
  %v1839 = vpop.permute.xlu0 %1838
  %1840 = vrot.lane.b32.xlu0 %v1689, 40
  %v1841 = vpop.permute.xlu0 %1840
  %1842 = vrot.lane.b32.xlu0 %v1691, 40
  %v1843 = vpop.permute.xlu0 %1842
  %1844 = vrot.lane.b32.xlu0 %v1693, 40
  %v1845 = vpop.permute.xlu0 %1844
  %1846 = vrot.lane.b32.xlu0 %v1695, 40
  %v1847 = vpop.permute.xlu0 %1846
  %1848 = vrot.lane.b32.xlu0 %v1697, 40
  %v1849 = vpop.permute.xlu0 %1848
  %1850 = vrot.lane.b32.xlu0 %v1699, 40
  %v1851 = vpop.permute.xlu0 %1850
  %1852 = vrot.lane.b32.xlu0 %v1701, 40
  %v1853 = vpop.permute.xlu0 %1852
  %1854 = vrot.lane.b32.xlu0 %v1703, 40
  %v1855 = vpop.permute.xlu0 %1854
  %1856 = vrot.lane.b32.xlu0 %v1705, 40
  %v1857 = vpop.permute.xlu0 %1856
  %1858 = vrot.lane.b32.xlu0 %v1707, 40
  %v1859 = vpop.permute.xlu0 %1858
  %1860 = vrot.lane.b32.xlu0 %v1709, 40
  %v1861 = vpop.permute.xlu0 %1860
  %1862 = vrot.lane.b32.xlu0 %v1711, 40
  %v1863 = vpop.permute.xlu0 %1862
  %1864 = vrot.lane.b32.xlu0 %v1713, 40
  %v1865 = vpop.permute.xlu0 %1864
  %1866 = vrot.lane.b32.xlu0 %v1715, 40
  %v1867 = vpop.permute.xlu0 %1866
  %1868 = vrot.lane.b32.xlu0 %v1717, 40
  %v1869 = vpop.permute.xlu0 %1868
  %1870 = vrot.lane.b32.xlu0 %v1719, 40
  %v1871 = vpop.permute.xlu0 %1870
  %1872 = vrot.lane.b32.xlu0 %v1721, 40
  %v1873 = vpop.permute.xlu0 %1872
  %1874 = vrot.lane.b32.xlu0 %v1723, 40
  %v1875 = vpop.permute.xlu0 %1874
  %1876 = vrot.lane.b32.xlu0 %v1725, 40
  %v1877 = vpop.permute.xlu0 %1876
  %1878 = vrot.lane.b32.xlu0 %v1727, 40
  %v1879 = vpop.permute.xlu0 %1878
  %1880 = vrot.lane.b32.xlu0 %v1729, 40
  %v1881 = vpop.permute.xlu0 %1880
  %1882 = vrot.lane.b32.xlu0 %v1731, 40
  %v1883 = vpop.permute.xlu0 %1882
  %1884 = vrot.lane.b32.xlu0 %v1733, 40
  %v1885 = vpop.permute.xlu0 %1884
  %1886 = vrot.lane.b32.xlu0 %v1735, 40
  %v1887 = vpop.permute.xlu0 %1886
  %1888 = vrot.lane.b32.xlu0 %v1737, 40
  %v1889 = vpop.permute.xlu0 %1888
  %1890 = vrot.lane.b32.xlu0 %v1739, 40
  %v1891 = vpop.permute.xlu0 %1890
  %1892 = vrot.lane.b32.xlu0 %v1741, 40
  %v1893 = vpop.permute.xlu0 %1892
  %1894 = vrot.lane.b32.xlu0 %v1743, 40
  %v1895 = vpop.permute.xlu0 %1894
  %1896 = vrot.lane.b32.xlu0 %v1745, 40
  %v1897 = vpop.permute.xlu0 %1896
  %1898 = vrot.lane.b32.xlu0 %v1747, 40
  %v1899 = vpop.permute.xlu0 %1898
  %1900 = vrot.lane.b32.xlu0 %v1749, 40
  %v1901 = vpop.permute.xlu0 %1900
  %1902 = vrot.lane.b32.xlu0 %v1751, 40
  %v1903 = vpop.permute.xlu0 %1902
  %1904 = vrot.lane.b32.xlu0 %v1753, 40
  %v1905 = vpop.permute.xlu0 %1904
  %1906 = vrot.lane.b32.xlu0 %v1755, 40
  %v1907 = vpop.permute.xlu0 %1906
  %1908 = vrot.lane.b32.xlu0 %v1757, 40
  %v1909 = vpop.permute.xlu0 %1908
  %1910 = vrot.lane.b32.xlu0 %v1759, 40
  %v1911 = vpop.permute.xlu0 %1910
  %1912 = vrot.lane.b32.xlu0 %v1761, 40
  %v1913 = vpop.permute.xlu0 %1912
  %1914 = vrot.lane.b32.xlu0 %v1763, 40
  %v1915 = vpop.permute.xlu0 %1914
  %1916 = vrot.lane.b32.xlu0 %v1765, 40
  %v1917 = vpop.permute.xlu0 %1916
  %1918 = vrot.lane.b32.xlu0 %v1767, 40
  %v1919 = vpop.permute.xlu0 %1918
  %1920 = vrot.lane.b32.xlu0 %v1769, 40
  %v1921 = vpop.permute.xlu0 %1920
  %1922 = vrot.lane.b32.xlu0 %v1771, 40
  %v1923 = vpop.permute.xlu0 %1922
  %1924 = vrot.lane.b32.xlu0 %v1773, 40
  %v1925 = vpop.permute.xlu0 %1924
  %1926 = vrot.lane.b32.xlu0 %v1775, 40
  %v1927 = vpop.permute.xlu0 %1926
  %1928 = vrot.lane.b32.xlu0 %v1777, 40
  %v1929 = vpop.permute.xlu0 %1928
  %1930 = vrot.lane.b32.xlu0 %v1779, 40
  %v1931 = vpop.permute.xlu0 %1930
  %1932 = vrot.lane.b32.xlu0 %v1781, 40
  %v1933 = vpop.permute.xlu0 %1932
  %1934 = vrot.lane.b32.xlu0 %v1783, 40
  %v1935 = vpop.permute.xlu0 %1934
  %1936 = vrot.lane.b32.xlu0 %v1785, 40
  %v1937 = vpop.permute.xlu0 %1936
  %1938 = vrot.lane.b32.xlu0 %v1787, 40
  %v1939 = vpop.permute.xlu0 %1938
  %1940 = vrot.lane.b32.xlu0 %v1789, 40
  %v1941 = vpop.permute.xlu0 %1940
  %1942 = vrot.lane.b32.xlu0 %v1791, 40
  %v1943 = vpop.permute.xlu0 %1942
  %1944 = vrot.lane.b32.xlu0 %v1793, 40
  %v1945 = vpop.permute.xlu0 %1944
  %1946 = vrot.lane.b32.xlu0 %v1795, 40
  %v1947 = vpop.permute.xlu0 %1946
  %1948 = vrot.lane.b32.xlu0 %v1797, 40
  %v1949 = vpop.permute.xlu0 %1948
  %1950 = vrot.lane.b32.xlu0 %v1799, 40
  %v1951 = vpop.permute.xlu0 %1950
  %1952 = vrot.lane.b32.xlu0 %v1801, 40
  %v1953 = vpop.permute.xlu0 %1952
  %1954 = vrot.lane.b32.xlu0 %v1803, 40
  %v1955 = vpop.permute.xlu0 %1954
  %1956 = vrot.lane.b32.xlu0 %v1805, 40
  %v1957 = vpop.permute.xlu0 %1956
  %1958 = vrot.lane.b32.xlu0 %v1804, 40
  %v1959 = vpop.permute.xlu0 %1958
  %v2039 = vrot.slane %v181, 4
  %v2040 = vsel %vm1652, %v1804, %v2039
  %v2041 = vrot.slane %v182, 4
  %v2042 = vsel %vm1652, %v2039, %v2041
  %2043 = vrot.lane.b32.xlu0 %v1659, 48
  %v2044 = vpop.permute.xlu0 %2043
  %2045 = vrot.lane.b32.xlu0 %v1661, 48
  %v2046 = vpop.permute.xlu0 %2045
  %2047 = vrot.lane.b32.xlu0 %v1663, 48
  %v2048 = vpop.permute.xlu0 %2047
  %2049 = vrot.lane.b32.xlu0 %v1665, 48
  %v2050 = vpop.permute.xlu0 %2049
  %2051 = vrot.lane.b32.xlu0 %v1667, 48
  %v2052 = vpop.permute.xlu0 %2051
  %2053 = vrot.lane.b32.xlu0 %v1669, 48
  %v2054 = vpop.permute.xlu0 %2053
  %2055 = vrot.lane.b32.xlu0 %v1671, 48
  %v2056 = vpop.permute.xlu0 %2055
  %2057 = vrot.lane.b32.xlu0 %v1673, 48
  %v2058 = vpop.permute.xlu0 %2057
  %2059 = vrot.lane.b32.xlu0 %v1675, 48
  %v2060 = vpop.permute.xlu0 %2059
  %2061 = vrot.lane.b32.xlu0 %v1677, 48
  %v2062 = vpop.permute.xlu0 %2061
  %2063 = vrot.lane.b32.xlu0 %v1679, 48
  %v2064 = vpop.permute.xlu0 %2063
  %2065 = vrot.lane.b32.xlu0 %v1681, 48
  %v2066 = vpop.permute.xlu0 %2065
  %2067 = vrot.lane.b32.xlu0 %v1683, 48
  %v2068 = vpop.permute.xlu0 %2067
  %2069 = vrot.lane.b32.xlu0 %v1685, 48
  %v2070 = vpop.permute.xlu0 %2069
  %2071 = vrot.lane.b32.xlu0 %v1687, 48
  %v2072 = vpop.permute.xlu0 %2071
  %2073 = vrot.lane.b32.xlu0 %v1689, 48
  %v2074 = vpop.permute.xlu0 %2073
  %2075 = vrot.lane.b32.xlu0 %v1691, 48
  %v2076 = vpop.permute.xlu0 %2075
  %2077 = vrot.lane.b32.xlu0 %v1693, 48
  %v2078 = vpop.permute.xlu0 %2077
  %2079 = vrot.lane.b32.xlu0 %v1695, 48
  %v2080 = vpop.permute.xlu0 %2079
  %2081 = vrot.lane.b32.xlu0 %v1697, 48
  %v2082 = vpop.permute.xlu0 %2081
  %2083 = vrot.lane.b32.xlu0 %v1699, 48
  %v2084 = vpop.permute.xlu0 %2083
  %2085 = vrot.lane.b32.xlu0 %v1701, 48
  %v2086 = vpop.permute.xlu0 %2085
  %2087 = vrot.lane.b32.xlu0 %v1703, 48
  %v2088 = vpop.permute.xlu0 %2087
  %2089 = vrot.lane.b32.xlu0 %v1705, 48
  %v2090 = vpop.permute.xlu0 %2089
  %2091 = vrot.lane.b32.xlu0 %v1707, 48
  %v2092 = vpop.permute.xlu0 %2091
  %2093 = vrot.lane.b32.xlu0 %v1709, 48
  %v2094 = vpop.permute.xlu0 %2093
  %2095 = vrot.lane.b32.xlu0 %v1711, 48
  %v2096 = vpop.permute.xlu0 %2095
  %2097 = vrot.lane.b32.xlu0 %v1713, 48
  %v2098 = vpop.permute.xlu0 %2097
  %2099 = vrot.lane.b32.xlu0 %v1715, 48
  %v2100 = vpop.permute.xlu0 %2099
  %2101 = vrot.lane.b32.xlu0 %v1717, 48
  %v2102 = vpop.permute.xlu0 %2101
  %2103 = vrot.lane.b32.xlu0 %v1719, 48
  %v2104 = vpop.permute.xlu0 %2103
  %2105 = vrot.lane.b32.xlu0 %v1721, 48
  %v2106 = vpop.permute.xlu0 %2105
  %2107 = vrot.lane.b32.xlu0 %v1723, 48
  %v2108 = vpop.permute.xlu0 %2107
  %2109 = vrot.lane.b32.xlu0 %v1725, 48
  %v2110 = vpop.permute.xlu0 %2109
  %2111 = vrot.lane.b32.xlu0 %v1727, 48
  %v2112 = vpop.permute.xlu0 %2111
  %2113 = vrot.lane.b32.xlu0 %v1729, 48
  %v2114 = vpop.permute.xlu0 %2113
  %2115 = vrot.lane.b32.xlu0 %v1731, 48
  %v2116 = vpop.permute.xlu0 %2115
  %2117 = vrot.lane.b32.xlu0 %v1733, 48
  %v2118 = vpop.permute.xlu0 %2117
  %2119 = vrot.lane.b32.xlu0 %v1735, 48
  %v2120 = vpop.permute.xlu0 %2119
  %2121 = vrot.lane.b32.xlu0 %v1737, 48
  %v2122 = vpop.permute.xlu0 %2121
  %2123 = vrot.lane.b32.xlu0 %v1739, 48
  %v2124 = vpop.permute.xlu0 %2123
  %2125 = vrot.lane.b32.xlu0 %v1741, 48
  %v2126 = vpop.permute.xlu0 %2125
  %2127 = vrot.lane.b32.xlu0 %v1743, 48
  %v2128 = vpop.permute.xlu0 %2127
  %2129 = vrot.lane.b32.xlu0 %v1745, 48
  %v2130 = vpop.permute.xlu0 %2129
  %2131 = vrot.lane.b32.xlu0 %v1747, 48
  %v2132 = vpop.permute.xlu0 %2131
  %2133 = vrot.lane.b32.xlu0 %v1749, 48
  %v2134 = vpop.permute.xlu0 %2133
  %2135 = vrot.lane.b32.xlu0 %v1751, 48
  %v2136 = vpop.permute.xlu0 %2135
  %2137 = vrot.lane.b32.xlu0 %v1753, 48
  %v2138 = vpop.permute.xlu0 %2137
  %2139 = vrot.lane.b32.xlu0 %v1755, 48
  %v2140 = vpop.permute.xlu0 %2139
  %2141 = vrot.lane.b32.xlu0 %v1757, 48
  %v2142 = vpop.permute.xlu0 %2141
  %2143 = vrot.lane.b32.xlu0 %v1759, 48
  %v2144 = vpop.permute.xlu0 %2143
  %2145 = vrot.lane.b32.xlu0 %v1761, 48
  %v2146 = vpop.permute.xlu0 %2145
  %2147 = vrot.lane.b32.xlu0 %v1763, 48
  %v2148 = vpop.permute.xlu0 %2147
  %2149 = vrot.lane.b32.xlu0 %v1765, 48
  %v2150 = vpop.permute.xlu0 %2149
  %2151 = vrot.lane.b32.xlu0 %v1767, 48
  %v2152 = vpop.permute.xlu0 %2151
  %2153 = vrot.lane.b32.xlu0 %v1769, 48
  %v2154 = vpop.permute.xlu0 %2153
  %2155 = vrot.lane.b32.xlu0 %v1771, 48
  %v2156 = vpop.permute.xlu0 %2155
  %2157 = vrot.lane.b32.xlu0 %v1773, 48
  %v2158 = vpop.permute.xlu0 %2157
  %2159 = vrot.lane.b32.xlu0 %v1775, 48
  %v2160 = vpop.permute.xlu0 %2159
  %2161 = vrot.lane.b32.xlu0 %v1777, 48
  %v2162 = vpop.permute.xlu0 %2161
  %2163 = vrot.lane.b32.xlu0 %v1779, 48
  %v2164 = vpop.permute.xlu0 %2163
  %2165 = vrot.lane.b32.xlu0 %v1781, 48
  %v2166 = vpop.permute.xlu0 %2165
  %2167 = vrot.lane.b32.xlu0 %v1783, 48
  %v2168 = vpop.permute.xlu0 %2167
  %2169 = vrot.lane.b32.xlu0 %v1785, 48
  %v2170 = vpop.permute.xlu0 %2169
  %2171 = vrot.lane.b32.xlu0 %v1787, 48
  %v2172 = vpop.permute.xlu0 %2171
  %2173 = vrot.lane.b32.xlu0 %v1789, 48
  %v2174 = vpop.permute.xlu0 %2173
  %2175 = vrot.lane.b32.xlu0 %v1791, 48
  %v2176 = vpop.permute.xlu0 %2175
  %2177 = vrot.lane.b32.xlu0 %v1793, 48
  %v2178 = vpop.permute.xlu0 %2177
  %2179 = vrot.lane.b32.xlu0 %v1795, 48
  %v2180 = vpop.permute.xlu0 %2179
  %2181 = vrot.lane.b32.xlu0 %v1797, 48
  %v2182 = vpop.permute.xlu0 %2181
  %2183 = vrot.lane.b32.xlu0 %v1799, 48
  %v2184 = vpop.permute.xlu0 %2183
  %2185 = vrot.lane.b32.xlu0 %v1801, 48
  %v2186 = vpop.permute.xlu0 %2185
  %2187 = vrot.lane.b32.xlu0 %v1803, 48
  %v2188 = vpop.permute.xlu0 %2187
  %2189 = vrot.lane.b32.xlu0 %v1805, 48
  %v2190 = vpop.permute.xlu0 %2189
  %2191 = vrot.lane.b32.xlu0 %v2040, 48
  %v2192 = vpop.permute.xlu0 %2191
  %2193 = vrot.lane.b32.xlu0 %v2042, 48
  %v2194 = vpop.permute.xlu0 %2193
  %2195 = vrot.lane.b32.xlu0 %v2041, 48
  %v2196 = vpop.permute.xlu0 %2195
  %vm2274 = vcmask 1042432
  %v2275 = vrot.slane %v106, 5
  %v2276 = vrot.slane %v107, 5
  %v2277 = vsel %vm2274, %v2275, %v2276
  %v2278 = vrot.slane %v108, 5
  %v2279 = vsel %vm2274, %v2276, %v2278
  %v2280 = vrot.slane %v109, 5
  %v2281 = vsel %vm2274, %v2278, %v2280
  %v2282 = vrot.slane %v110, 5
  %v2283 = vsel %vm2274, %v2280, %v2282
  %v2284 = vrot.slane %v111, 5
  %v2285 = vsel %vm2274, %v2282, %v2284
  %v2286 = vrot.slane %v112, 5
  %v2287 = vsel %vm2274, %v2284, %v2286
  %v2288 = vrot.slane %v113, 5
  %v2289 = vsel %vm2274, %v2286, %v2288
  %v2290 = vrot.slane %v114, 5
  %v2291 = vsel %vm2274, %v2288, %v2290
  %v2292 = vrot.slane %v115, 5
  %v2293 = vsel %vm2274, %v2290, %v2292
  %v2294 = vrot.slane %v116, 5
  %v2295 = vsel %vm2274, %v2292, %v2294
  %v2296 = vrot.slane %v117, 5
  %v2297 = vsel %vm2274, %v2294, %v2296
  %v2298 = vrot.slane %v118, 5
  %v2299 = vsel %vm2274, %v2296, %v2298
  %v2300 = vrot.slane %v119, 5
  %v2301 = vsel %vm2274, %v2298, %v2300
  %v2302 = vrot.slane %v120, 5
  %v2303 = vsel %vm2274, %v2300, %v2302
  %v2304 = vrot.slane %v121, 5
  %v2305 = vsel %vm2274, %v2302, %v2304
  %v2306 = vrot.slane %v122, 5
  %v2307 = vsel %vm2274, %v2304, %v2306
  %v2308 = vrot.slane %v123, 5
  %v2309 = vsel %vm2274, %v2306, %v2308
  %v2310 = vrot.slane %v124, 5
  %v2311 = vsel %vm2274, %v2308, %v2310
  %v2312 = vrot.slane %v125, 5
  %v2313 = vsel %vm2274, %v2310, %v2312
  %v2314 = vrot.slane %v126, 5
  %v2315 = vsel %vm2274, %v2312, %v2314
  %v2316 = vrot.slane %v127, 5
  %v2317 = vsel %vm2274, %v2314, %v2316
  %v2318 = vrot.slane %v128, 5
  %v2319 = vsel %vm2274, %v2316, %v2318
  %v2320 = vrot.slane %v129, 5
  %v2321 = vsel %vm2274, %v2318, %v2320
  %v2322 = vrot.slane %v130, 5
  %v2323 = vsel %vm2274, %v2320, %v2322
  %v2324 = vrot.slane %v131, 5
  %v2325 = vsel %vm2274, %v2322, %v2324
  %v2326 = vrot.slane %v132, 5
  %v2327 = vsel %vm2274, %v2324, %v2326
  %v2328 = vrot.slane %v133, 5
  %v2329 = vsel %vm2274, %v2326, %v2328
  %v2330 = vrot.slane %v134, 5
  %v2331 = vsel %vm2274, %v2328, %v2330
  %v2332 = vrot.slane %v135, 5
  %v2333 = vsel %vm2274, %v2330, %v2332
  %v2334 = vrot.slane %v136, 5
  %v2335 = vsel %vm2274, %v2332, %v2334
  %v2336 = vrot.slane %v137, 5
  %v2337 = vsel %vm2274, %v2334, %v2336
  %v2338 = vrot.slane %v138, 5
  %v2339 = vsel %vm2274, %v2336, %v2338
  %v2340 = vrot.slane %v139, 5
  %v2341 = vsel %vm2274, %v2338, %v2340
  %v2342 = vrot.slane %v140, 5
  %v2343 = vsel %vm2274, %v2340, %v2342
  %v2344 = vrot.slane %v141, 5
  %v2345 = vsel %vm2274, %v2342, %v2344
  %v2346 = vrot.slane %v142, 5
  %v2347 = vsel %vm2274, %v2344, %v2346
  %v2348 = vrot.slane %v143, 5
  %v2349 = vsel %vm2274, %v2346, %v2348
  %v2350 = vrot.slane %v144, 5
  %v2351 = vsel %vm2274, %v2348, %v2350
  %v2352 = vrot.slane %v145, 5
  %v2353 = vsel %vm2274, %v2350, %v2352
  %v2354 = vrot.slane %v146, 5
  %v2355 = vsel %vm2274, %v2352, %v2354
  %v2356 = vrot.slane %v147, 5
  %v2357 = vsel %vm2274, %v2354, %v2356
  %v2358 = vrot.slane %v148, 5
  %v2359 = vsel %vm2274, %v2356, %v2358
  %v2360 = vrot.slane %v149, 5
  %v2361 = vsel %vm2274, %v2358, %v2360
  %v2362 = vrot.slane %v150, 5
  %v2363 = vsel %vm2274, %v2360, %v2362
  %v2364 = vrot.slane %v151, 5
  %v2365 = vsel %vm2274, %v2362, %v2364
  %v2366 = vrot.slane %v152, 5
  %v2367 = vsel %vm2274, %v2364, %v2366
  %v2368 = vrot.slane %v153, 5
  %v2369 = vsel %vm2274, %v2366, %v2368
  %v2370 = vrot.slane %v154, 5
  %v2371 = vsel %vm2274, %v2368, %v2370
  %v2372 = vrot.slane %v155, 5
  %v2373 = vsel %vm2274, %v2370, %v2372
  %v2374 = vrot.slane %v156, 5
  %v2375 = vsel %vm2274, %v2372, %v2374
  %v2376 = vrot.slane %v157, 5
  %v2377 = vsel %vm2274, %v2374, %v2376
  %v2378 = vrot.slane %v158, 5
  %v2379 = vsel %vm2274, %v2376, %v2378
  %v2380 = vrot.slane %v159, 5
  %v2381 = vsel %vm2274, %v2378, %v2380
  %v2382 = vrot.slane %v160, 5
  %v2383 = vsel %vm2274, %v2380, %v2382
  %v2384 = vrot.slane %v161, 5
  %v2385 = vsel %vm2274, %v2382, %v2384
  %v2386 = vrot.slane %v162, 5
  %v2387 = vsel %vm2274, %v2384, %v2386
  %v2388 = vrot.slane %v163, 5
  %v2389 = vsel %vm2274, %v2386, %v2388
  %v2390 = vrot.slane %v164, 5
  %v2391 = vsel %vm2274, %v2388, %v2390
  %v2392 = vrot.slane %v165, 5
  %v2393 = vsel %vm2274, %v2390, %v2392
  %v2394 = vrot.slane %v166, 5
  %v2395 = vsel %vm2274, %v2392, %v2394
  %v2396 = vrot.slane %v167, 5
  %v2397 = vsel %vm2274, %v2394, %v2396
  %v2398 = vrot.slane %v168, 5
  %v2399 = vsel %vm2274, %v2396, %v2398
  %v2400 = vrot.slane %v169, 5
  %v2401 = vsel %vm2274, %v2398, %v2400
  %v2402 = vrot.slane %v170, 5
  %v2403 = vsel %vm2274, %v2400, %v2402
  %v2404 = vrot.slane %v171, 5
  %v2405 = vsel %vm2274, %v2402, %v2404
  %v2406 = vrot.slane %v172, 5
  %v2407 = vsel %vm2274, %v2404, %v2406
  %v2408 = vrot.slane %v173, 5
  %v2409 = vsel %vm2274, %v2406, %v2408
  %v2410 = vrot.slane %v174, 5
  %v2411 = vsel %vm2274, %v2408, %v2410
  %v2412 = vrot.slane %v175, 5
  %v2413 = vsel %vm2274, %v2410, %v2412
  %v2414 = vrot.slane %v176, 5
  %v2415 = vsel %vm2274, %v2412, %v2414
  %v2416 = vrot.slane %v177, 5
  %v2417 = vsel %vm2274, %v2414, %v2416
  %v2418 = vrot.slane %v178, 5
  %v2419 = vsel %vm2274, %v2416, %v2418
  %v2420 = vrot.slane %v179, 5
  %v2421 = vsel %vm2274, %v2418, %v2420
  %v2422 = vrot.slane %v180, 5
  %v2423 = vsel %vm2274, %v2420, %v2422
  %v2424 = vrot.slane %v181, 5
  %v2425 = vsel %vm2274, %v2422, %v2424
  %v2426 = vrot.slane %v182, 5
  %v2427 = vsel %vm2274, %v2424, %v2426
  %2428 = vrot.lane.b32.xlu0 %v2277, 56
  %v2429 = vpop.permute.xlu0 %2428
  %2430 = vrot.lane.b32.xlu0 %v2279, 56
  %v2431 = vpop.permute.xlu0 %2430
  %2432 = vrot.lane.b32.xlu0 %v2281, 56
  %v2433 = vpop.permute.xlu0 %2432
  %2434 = vrot.lane.b32.xlu0 %v2283, 56
  %v2435 = vpop.permute.xlu0 %2434
  %2436 = vrot.lane.b32.xlu0 %v2285, 56
  %v2437 = vpop.permute.xlu0 %2436
  %2438 = vrot.lane.b32.xlu0 %v2287, 56
  %v2439 = vpop.permute.xlu0 %2438
  %2440 = vrot.lane.b32.xlu0 %v2289, 56
  %v2441 = vpop.permute.xlu0 %2440
  %2442 = vrot.lane.b32.xlu0 %v2291, 56
  %v2443 = vpop.permute.xlu0 %2442
  %2444 = vrot.lane.b32.xlu0 %v2293, 56
  %v2445 = vpop.permute.xlu0 %2444
  %2446 = vrot.lane.b32.xlu0 %v2295, 56
  %v2447 = vpop.permute.xlu0 %2446
  %2448 = vrot.lane.b32.xlu0 %v2297, 56
  %v2449 = vpop.permute.xlu0 %2448
  %2450 = vrot.lane.b32.xlu0 %v2299, 56
  %v2451 = vpop.permute.xlu0 %2450
  %2452 = vrot.lane.b32.xlu0 %v2301, 56
  %v2453 = vpop.permute.xlu0 %2452
  %2454 = vrot.lane.b32.xlu0 %v2303, 56
  %v2455 = vpop.permute.xlu0 %2454
  %2456 = vrot.lane.b32.xlu0 %v2305, 56
  %v2457 = vpop.permute.xlu0 %2456
  %2458 = vrot.lane.b32.xlu0 %v2307, 56
  %v2459 = vpop.permute.xlu0 %2458
  %2460 = vrot.lane.b32.xlu0 %v2309, 56
  %v2461 = vpop.permute.xlu0 %2460
  %2462 = vrot.lane.b32.xlu0 %v2311, 56
  %v2463 = vpop.permute.xlu0 %2462
  %2464 = vrot.lane.b32.xlu0 %v2313, 56
  %v2465 = vpop.permute.xlu0 %2464
  %2466 = vrot.lane.b32.xlu0 %v2315, 56
  %v2467 = vpop.permute.xlu0 %2466
  %2468 = vrot.lane.b32.xlu0 %v2317, 56
  %v2469 = vpop.permute.xlu0 %2468
  %2470 = vrot.lane.b32.xlu0 %v2319, 56
  %v2471 = vpop.permute.xlu0 %2470
  %2472 = vrot.lane.b32.xlu0 %v2321, 56
  %v2473 = vpop.permute.xlu0 %2472
  %2474 = vrot.lane.b32.xlu0 %v2323, 56
  %v2475 = vpop.permute.xlu0 %2474
  %2476 = vrot.lane.b32.xlu0 %v2325, 56
  %v2477 = vpop.permute.xlu0 %2476
  %2478 = vrot.lane.b32.xlu0 %v2327, 56
  %v2479 = vpop.permute.xlu0 %2478
  %2480 = vrot.lane.b32.xlu0 %v2329, 56
  %v2481 = vpop.permute.xlu0 %2480
  %2482 = vrot.lane.b32.xlu0 %v2331, 56
  %v2483 = vpop.permute.xlu0 %2482
  %2484 = vrot.lane.b32.xlu0 %v2333, 56
  %v2485 = vpop.permute.xlu0 %2484
  %2486 = vrot.lane.b32.xlu0 %v2335, 56
  %v2487 = vpop.permute.xlu0 %2486
  %2488 = vrot.lane.b32.xlu0 %v2337, 56
  %v2489 = vpop.permute.xlu0 %2488
  %2490 = vrot.lane.b32.xlu0 %v2339, 56
  %v2491 = vpop.permute.xlu0 %2490
  %2492 = vrot.lane.b32.xlu0 %v2341, 56
  %v2493 = vpop.permute.xlu0 %2492
  %2494 = vrot.lane.b32.xlu0 %v2343, 56
  %v2495 = vpop.permute.xlu0 %2494
  %2496 = vrot.lane.b32.xlu0 %v2345, 56
  %v2497 = vpop.permute.xlu0 %2496
  %2498 = vrot.lane.b32.xlu0 %v2347, 56
  %v2499 = vpop.permute.xlu0 %2498
  %2500 = vrot.lane.b32.xlu0 %v2349, 56
  %v2501 = vpop.permute.xlu0 %2500
  %2502 = vrot.lane.b32.xlu0 %v2351, 56
  %v2503 = vpop.permute.xlu0 %2502
  %2504 = vrot.lane.b32.xlu0 %v2353, 56
  %v2505 = vpop.permute.xlu0 %2504
  %2506 = vrot.lane.b32.xlu0 %v2355, 56
  %v2507 = vpop.permute.xlu0 %2506
  %2508 = vrot.lane.b32.xlu0 %v2357, 56
  %v2509 = vpop.permute.xlu0 %2508
  %2510 = vrot.lane.b32.xlu0 %v2359, 56
  %v2511 = vpop.permute.xlu0 %2510
  %2512 = vrot.lane.b32.xlu0 %v2361, 56
  %v2513 = vpop.permute.xlu0 %2512
  %2514 = vrot.lane.b32.xlu0 %v2363, 56
  %v2515 = vpop.permute.xlu0 %2514
  %2516 = vrot.lane.b32.xlu0 %v2365, 56
  %v2517 = vpop.permute.xlu0 %2516
  %2518 = vrot.lane.b32.xlu0 %v2367, 56
  %v2519 = vpop.permute.xlu0 %2518
  %2520 = vrot.lane.b32.xlu0 %v2369, 56
  %v2521 = vpop.permute.xlu0 %2520
  %2522 = vrot.lane.b32.xlu0 %v2371, 56
  %v2523 = vpop.permute.xlu0 %2522
  %2524 = vrot.lane.b32.xlu0 %v2373, 56
  %v2525 = vpop.permute.xlu0 %2524
  %2526 = vrot.lane.b32.xlu0 %v2375, 56
  %v2527 = vpop.permute.xlu0 %2526
  %2528 = vrot.lane.b32.xlu0 %v2377, 56
  %v2529 = vpop.permute.xlu0 %2528
  %2530 = vrot.lane.b32.xlu0 %v2379, 56
  %v2531 = vpop.permute.xlu0 %2530
  %2532 = vrot.lane.b32.xlu0 %v2381, 56
  %v2533 = vpop.permute.xlu0 %2532
  %2534 = vrot.lane.b32.xlu0 %v2383, 56
  %v2535 = vpop.permute.xlu0 %2534
  %2536 = vrot.lane.b32.xlu0 %v2385, 56
  %v2537 = vpop.permute.xlu0 %2536
  %2538 = vrot.lane.b32.xlu0 %v2387, 56
  %v2539 = vpop.permute.xlu0 %2538
  %2540 = vrot.lane.b32.xlu0 %v2389, 56
  %v2541 = vpop.permute.xlu0 %2540
  %2542 = vrot.lane.b32.xlu0 %v2391, 56
  %v2543 = vpop.permute.xlu0 %2542
  %2544 = vrot.lane.b32.xlu0 %v2393, 56
  %v2545 = vpop.permute.xlu0 %2544
  %2546 = vrot.lane.b32.xlu0 %v2395, 56
  %v2547 = vpop.permute.xlu0 %2546
  %2548 = vrot.lane.b32.xlu0 %v2397, 56
  %v2549 = vpop.permute.xlu0 %2548
  %2550 = vrot.lane.b32.xlu0 %v2399, 56
  %v2551 = vpop.permute.xlu0 %2550
  %2552 = vrot.lane.b32.xlu0 %v2401, 56
  %v2553 = vpop.permute.xlu0 %2552
  %2554 = vrot.lane.b32.xlu0 %v2403, 56
  %v2555 = vpop.permute.xlu0 %2554
  %2556 = vrot.lane.b32.xlu0 %v2405, 56
  %v2557 = vpop.permute.xlu0 %2556
  %2558 = vrot.lane.b32.xlu0 %v2407, 56
  %v2559 = vpop.permute.xlu0 %2558
  %2560 = vrot.lane.b32.xlu0 %v2409, 56
  %v2561 = vpop.permute.xlu0 %2560
  %2562 = vrot.lane.b32.xlu0 %v2411, 56
  %v2563 = vpop.permute.xlu0 %2562
  %2564 = vrot.lane.b32.xlu0 %v2413, 56
  %v2565 = vpop.permute.xlu0 %2564
  %2566 = vrot.lane.b32.xlu0 %v2415, 56
  %v2567 = vpop.permute.xlu0 %2566
  %2568 = vrot.lane.b32.xlu0 %v2417, 56
  %v2569 = vpop.permute.xlu0 %2568
  %2570 = vrot.lane.b32.xlu0 %v2419, 56
  %v2571 = vpop.permute.xlu0 %2570
  %2572 = vrot.lane.b32.xlu0 %v2421, 56
  %v2573 = vpop.permute.xlu0 %2572
  %2574 = vrot.lane.b32.xlu0 %v2423, 56
  %v2575 = vpop.permute.xlu0 %2574
  %2576 = vrot.lane.b32.xlu0 %v2425, 56
  %v2577 = vpop.permute.xlu0 %2576
  %2578 = vrot.lane.b32.xlu0 %v2427, 56
  %v2579 = vpop.permute.xlu0 %2578
  %2580 = vrot.lane.b32.xlu0 %v2426, 56
  %v2581 = vpop.permute.xlu0 %2580
  %vm2659 = vcmask 1041408
  %v2660 = vrot.slane %v106, 6
  %v2661 = vrot.slane %v107, 6
  %v2662 = vsel %vm2659, %v2660, %v2661
  %v2663 = vrot.slane %v108, 6
  %v2664 = vsel %vm2659, %v2661, %v2663
  %v2665 = vrot.slane %v109, 6
  %v2666 = vsel %vm2659, %v2663, %v2665
  %v2667 = vrot.slane %v110, 6
  %v2668 = vsel %vm2659, %v2665, %v2667
  %v2669 = vrot.slane %v111, 6
  %v2670 = vsel %vm2659, %v2667, %v2669
  %v2671 = vrot.slane %v112, 6
  %v2672 = vsel %vm2659, %v2669, %v2671
  %v2673 = vrot.slane %v113, 6
  %v2674 = vsel %vm2659, %v2671, %v2673
  %v2675 = vrot.slane %v114, 6
  %v2676 = vsel %vm2659, %v2673, %v2675
  %v2677 = vrot.slane %v115, 6
  %v2678 = vsel %vm2659, %v2675, %v2677
  %v2679 = vrot.slane %v116, 6
  %v2680 = vsel %vm2659, %v2677, %v2679
  %v2681 = vrot.slane %v117, 6
  %v2682 = vsel %vm2659, %v2679, %v2681
  %v2683 = vrot.slane %v118, 6
  %v2684 = vsel %vm2659, %v2681, %v2683
  %v2685 = vrot.slane %v119, 6
  %v2686 = vsel %vm2659, %v2683, %v2685
  %v2687 = vrot.slane %v120, 6
  %v2688 = vsel %vm2659, %v2685, %v2687
  %v2689 = vrot.slane %v121, 6
  %v2690 = vsel %vm2659, %v2687, %v2689
  %v2691 = vrot.slane %v122, 6
  %v2692 = vsel %vm2659, %v2689, %v2691
  %v2693 = vrot.slane %v123, 6
  %v2694 = vsel %vm2659, %v2691, %v2693
  %v2695 = vrot.slane %v124, 6
  %v2696 = vsel %vm2659, %v2693, %v2695
  %v2697 = vrot.slane %v125, 6
  %v2698 = vsel %vm2659, %v2695, %v2697
  %v2699 = vrot.slane %v126, 6
  %v2700 = vsel %vm2659, %v2697, %v2699
  %v2701 = vrot.slane %v127, 6
  %v2702 = vsel %vm2659, %v2699, %v2701
  %v2703 = vrot.slane %v128, 6
  %v2704 = vsel %vm2659, %v2701, %v2703
  %v2705 = vrot.slane %v129, 6
  %v2706 = vsel %vm2659, %v2703, %v2705
  %v2707 = vrot.slane %v130, 6
  %v2708 = vsel %vm2659, %v2705, %v2707
  %v2709 = vrot.slane %v131, 6
  %v2710 = vsel %vm2659, %v2707, %v2709
  %v2711 = vrot.slane %v132, 6
  %v2712 = vsel %vm2659, %v2709, %v2711
  %v2713 = vrot.slane %v133, 6
  %v2714 = vsel %vm2659, %v2711, %v2713
  %v2715 = vrot.slane %v134, 6
  %v2716 = vsel %vm2659, %v2713, %v2715
  %v2717 = vrot.slane %v135, 6
  %v2718 = vsel %vm2659, %v2715, %v2717
  %v2719 = vrot.slane %v136, 6
  %v2720 = vsel %vm2659, %v2717, %v2719
  %v2721 = vrot.slane %v137, 6
  %v2722 = vsel %vm2659, %v2719, %v2721
  %v2723 = vrot.slane %v138, 6
  %v2724 = vsel %vm2659, %v2721, %v2723
  %v2725 = vrot.slane %v139, 6
  %v2726 = vsel %vm2659, %v2723, %v2725
  %v2727 = vrot.slane %v140, 6
  %v2728 = vsel %vm2659, %v2725, %v2727
  %v2729 = vrot.slane %v141, 6
  %v2730 = vsel %vm2659, %v2727, %v2729
  %v2731 = vrot.slane %v142, 6
  %v2732 = vsel %vm2659, %v2729, %v2731
  %v2733 = vrot.slane %v143, 6
  %v2734 = vsel %vm2659, %v2731, %v2733
  %v2735 = vrot.slane %v144, 6
  %v2736 = vsel %vm2659, %v2733, %v2735
  %v2737 = vrot.slane %v145, 6
  %v2738 = vsel %vm2659, %v2735, %v2737
  %v2739 = vrot.slane %v146, 6
  %v2740 = vsel %vm2659, %v2737, %v2739
  %v2741 = vrot.slane %v147, 6
  %v2742 = vsel %vm2659, %v2739, %v2741
  %v2743 = vrot.slane %v148, 6
  %v2744 = vsel %vm2659, %v2741, %v2743
  %v2745 = vrot.slane %v149, 6
  %v2746 = vsel %vm2659, %v2743, %v2745
  %v2747 = vrot.slane %v150, 6
  %v2748 = vsel %vm2659, %v2745, %v2747
  %v2749 = vrot.slane %v151, 6
  %v2750 = vsel %vm2659, %v2747, %v2749
  %v2751 = vrot.slane %v152, 6
  %v2752 = vsel %vm2659, %v2749, %v2751
  %v2753 = vrot.slane %v153, 6
  %v2754 = vsel %vm2659, %v2751, %v2753
  %v2755 = vrot.slane %v154, 6
  %v2756 = vsel %vm2659, %v2753, %v2755
  %v2757 = vrot.slane %v155, 6
  %v2758 = vsel %vm2659, %v2755, %v2757
  %v2759 = vrot.slane %v156, 6
  %v2760 = vsel %vm2659, %v2757, %v2759
  %v2761 = vrot.slane %v157, 6
  %v2762 = vsel %vm2659, %v2759, %v2761
  %v2763 = vrot.slane %v158, 6
  %v2764 = vsel %vm2659, %v2761, %v2763
  %v2765 = vrot.slane %v159, 6
  %v2766 = vsel %vm2659, %v2763, %v2765
  %v2767 = vrot.slane %v160, 6
  %v2768 = vsel %vm2659, %v2765, %v2767
  %v2769 = vrot.slane %v161, 6
  %v2770 = vsel %vm2659, %v2767, %v2769
  %v2771 = vrot.slane %v162, 6
  %v2772 = vsel %vm2659, %v2769, %v2771
  %v2773 = vrot.slane %v163, 6
  %v2774 = vsel %vm2659, %v2771, %v2773
  %v2775 = vrot.slane %v164, 6
  %v2776 = vsel %vm2659, %v2773, %v2775
  %v2777 = vrot.slane %v165, 6
  %v2778 = vsel %vm2659, %v2775, %v2777
  %v2779 = vrot.slane %v166, 6
  %v2780 = vsel %vm2659, %v2777, %v2779
  %v2781 = vrot.slane %v167, 6
  %v2782 = vsel %vm2659, %v2779, %v2781
  %v2783 = vrot.slane %v168, 6
  %v2784 = vsel %vm2659, %v2781, %v2783
  %v2785 = vrot.slane %v169, 6
  %v2786 = vsel %vm2659, %v2783, %v2785
  %v2787 = vrot.slane %v170, 6
  %v2788 = vsel %vm2659, %v2785, %v2787
  %v2789 = vrot.slane %v171, 6
  %v2790 = vsel %vm2659, %v2787, %v2789
  %v2791 = vrot.slane %v172, 6
  %v2792 = vsel %vm2659, %v2789, %v2791
  %v2793 = vrot.slane %v173, 6
  %v2794 = vsel %vm2659, %v2791, %v2793
  %v2795 = vrot.slane %v174, 6
  %v2796 = vsel %vm2659, %v2793, %v2795
  %v2797 = vrot.slane %v175, 6
  %v2798 = vsel %vm2659, %v2795, %v2797
  %v2799 = vrot.slane %v176, 6
  %v2800 = vsel %vm2659, %v2797, %v2799
  %v2801 = vrot.slane %v177, 6
  %v2802 = vsel %vm2659, %v2799, %v2801
  %v2803 = vrot.slane %v178, 6
  %v2804 = vsel %vm2659, %v2801, %v2803
  %v2805 = vrot.slane %v179, 6
  %v2806 = vsel %vm2659, %v2803, %v2805
  %v2807 = vrot.slane %v180, 6
  %v2808 = vsel %vm2659, %v2805, %v2807
  %v2809 = vrot.slane %v181, 6
  %v2810 = vsel %vm2659, %v2807, %v2809
  %v2811 = vrot.slane %v182, 6
  %v2812 = vsel %vm2659, %v2809, %v2811
  %2813 = vrot.lane.b32.xlu0 %v2662, 64
  %v2814 = vpop.permute.xlu0 %2813
  %2815 = vrot.lane.b32.xlu0 %v2664, 64
  %v2816 = vpop.permute.xlu0 %2815
  %2817 = vrot.lane.b32.xlu0 %v2666, 64
  %v2818 = vpop.permute.xlu0 %2817
  %2819 = vrot.lane.b32.xlu0 %v2668, 64
  %v2820 = vpop.permute.xlu0 %2819
  %2821 = vrot.lane.b32.xlu0 %v2670, 64
  %v2822 = vpop.permute.xlu0 %2821
  %2823 = vrot.lane.b32.xlu0 %v2672, 64
  %v2824 = vpop.permute.xlu0 %2823
  %2825 = vrot.lane.b32.xlu0 %v2674, 64
  %v2826 = vpop.permute.xlu0 %2825
  %2827 = vrot.lane.b32.xlu0 %v2676, 64
  %v2828 = vpop.permute.xlu0 %2827
  %2829 = vrot.lane.b32.xlu0 %v2678, 64
  %v2830 = vpop.permute.xlu0 %2829
  %2831 = vrot.lane.b32.xlu0 %v2680, 64
  %v2832 = vpop.permute.xlu0 %2831
  %2833 = vrot.lane.b32.xlu0 %v2682, 64
  %v2834 = vpop.permute.xlu0 %2833
  %2835 = vrot.lane.b32.xlu0 %v2684, 64
  %v2836 = vpop.permute.xlu0 %2835
  %2837 = vrot.lane.b32.xlu0 %v2686, 64
  %v2838 = vpop.permute.xlu0 %2837
  %2839 = vrot.lane.b32.xlu0 %v2688, 64
  %v2840 = vpop.permute.xlu0 %2839
  %2841 = vrot.lane.b32.xlu0 %v2690, 64
  %v2842 = vpop.permute.xlu0 %2841
  %2843 = vrot.lane.b32.xlu0 %v2692, 64
  %v2844 = vpop.permute.xlu0 %2843
  %2845 = vrot.lane.b32.xlu0 %v2694, 64
  %v2846 = vpop.permute.xlu0 %2845
  %2847 = vrot.lane.b32.xlu0 %v2696, 64
  %v2848 = vpop.permute.xlu0 %2847
  %2849 = vrot.lane.b32.xlu0 %v2698, 64
  %v2850 = vpop.permute.xlu0 %2849
  %2851 = vrot.lane.b32.xlu0 %v2700, 64
  %v2852 = vpop.permute.xlu0 %2851
  %2853 = vrot.lane.b32.xlu0 %v2702, 64
  %v2854 = vpop.permute.xlu0 %2853
  %2855 = vrot.lane.b32.xlu0 %v2704, 64
  %v2856 = vpop.permute.xlu0 %2855
  %2857 = vrot.lane.b32.xlu0 %v2706, 64
  %v2858 = vpop.permute.xlu0 %2857
  %2859 = vrot.lane.b32.xlu0 %v2708, 64
  %v2860 = vpop.permute.xlu0 %2859
  %2861 = vrot.lane.b32.xlu0 %v2710, 64
  %v2862 = vpop.permute.xlu0 %2861
  %2863 = vrot.lane.b32.xlu0 %v2712, 64
  %v2864 = vpop.permute.xlu0 %2863
  %2865 = vrot.lane.b32.xlu0 %v2714, 64
  %v2866 = vpop.permute.xlu0 %2865
  %2867 = vrot.lane.b32.xlu0 %v2716, 64
  %v2868 = vpop.permute.xlu0 %2867
  %2869 = vrot.lane.b32.xlu0 %v2718, 64
  %v2870 = vpop.permute.xlu0 %2869
  %2871 = vrot.lane.b32.xlu0 %v2720, 64
  %v2872 = vpop.permute.xlu0 %2871
  %2873 = vrot.lane.b32.xlu0 %v2722, 64
  %v2874 = vpop.permute.xlu0 %2873
  %2875 = vrot.lane.b32.xlu0 %v2724, 64
  %v2876 = vpop.permute.xlu0 %2875
  %2877 = vrot.lane.b32.xlu0 %v2726, 64
  %v2878 = vpop.permute.xlu0 %2877
  %2879 = vrot.lane.b32.xlu0 %v2728, 64
  %v2880 = vpop.permute.xlu0 %2879
  %2881 = vrot.lane.b32.xlu0 %v2730, 64
  %v2882 = vpop.permute.xlu0 %2881
  %2883 = vrot.lane.b32.xlu0 %v2732, 64
  %v2884 = vpop.permute.xlu0 %2883
  %2885 = vrot.lane.b32.xlu0 %v2734, 64
  %v2886 = vpop.permute.xlu0 %2885
  %2887 = vrot.lane.b32.xlu0 %v2736, 64
  %v2888 = vpop.permute.xlu0 %2887
  %2889 = vrot.lane.b32.xlu0 %v2738, 64
  %v2890 = vpop.permute.xlu0 %2889
  %2891 = vrot.lane.b32.xlu0 %v2740, 64
  %v2892 = vpop.permute.xlu0 %2891
  %2893 = vrot.lane.b32.xlu0 %v2742, 64
  %v2894 = vpop.permute.xlu0 %2893
  %2895 = vrot.lane.b32.xlu0 %v2744, 64
  %v2896 = vpop.permute.xlu0 %2895
  %2897 = vrot.lane.b32.xlu0 %v2746, 64
  %v2898 = vpop.permute.xlu0 %2897
  %2899 = vrot.lane.b32.xlu0 %v2748, 64
  %v2900 = vpop.permute.xlu0 %2899
  %2901 = vrot.lane.b32.xlu0 %v2750, 64
  %v2902 = vpop.permute.xlu0 %2901
  %2903 = vrot.lane.b32.xlu0 %v2752, 64
  %v2904 = vpop.permute.xlu0 %2903
  %2905 = vrot.lane.b32.xlu0 %v2754, 64
  %v2906 = vpop.permute.xlu0 %2905
  %2907 = vrot.lane.b32.xlu0 %v2756, 64
  %v2908 = vpop.permute.xlu0 %2907
  %2909 = vrot.lane.b32.xlu0 %v2758, 64
  %v2910 = vpop.permute.xlu0 %2909
  %2911 = vrot.lane.b32.xlu0 %v2760, 64
  %v2912 = vpop.permute.xlu0 %2911
  %2913 = vrot.lane.b32.xlu0 %v2762, 64
  %v2914 = vpop.permute.xlu0 %2913
  %2915 = vrot.lane.b32.xlu0 %v2764, 64
  %v2916 = vpop.permute.xlu0 %2915
  %2917 = vrot.lane.b32.xlu0 %v2766, 64
  %v2918 = vpop.permute.xlu0 %2917
  %2919 = vrot.lane.b32.xlu0 %v2768, 64
  %v2920 = vpop.permute.xlu0 %2919
  %2921 = vrot.lane.b32.xlu0 %v2770, 64
  %v2922 = vpop.permute.xlu0 %2921
  %2923 = vrot.lane.b32.xlu0 %v2772, 64
  %v2924 = vpop.permute.xlu0 %2923
  %2925 = vrot.lane.b32.xlu0 %v2774, 64
  %v2926 = vpop.permute.xlu0 %2925
  %2927 = vrot.lane.b32.xlu0 %v2776, 64
  %v2928 = vpop.permute.xlu0 %2927
  %2929 = vrot.lane.b32.xlu0 %v2778, 64
  %v2930 = vpop.permute.xlu0 %2929
  %2931 = vrot.lane.b32.xlu0 %v2780, 64
  %v2932 = vpop.permute.xlu0 %2931
  %2933 = vrot.lane.b32.xlu0 %v2782, 64
  %v2934 = vpop.permute.xlu0 %2933
  %2935 = vrot.lane.b32.xlu0 %v2784, 64
  %v2936 = vpop.permute.xlu0 %2935
  %2937 = vrot.lane.b32.xlu0 %v2786, 64
  %v2938 = vpop.permute.xlu0 %2937
  %2939 = vrot.lane.b32.xlu0 %v2788, 64
  %v2940 = vpop.permute.xlu0 %2939
  %2941 = vrot.lane.b32.xlu0 %v2790, 64
  %v2942 = vpop.permute.xlu0 %2941
  %2943 = vrot.lane.b32.xlu0 %v2792, 64
  %v2944 = vpop.permute.xlu0 %2943
  %2945 = vrot.lane.b32.xlu0 %v2794, 64
  %v2946 = vpop.permute.xlu0 %2945
  %2947 = vrot.lane.b32.xlu0 %v2796, 64
  %v2948 = vpop.permute.xlu0 %2947
  %2949 = vrot.lane.b32.xlu0 %v2798, 64
  %v2950 = vpop.permute.xlu0 %2949
  %2951 = vrot.lane.b32.xlu0 %v2800, 64
  %v2952 = vpop.permute.xlu0 %2951
  %2953 = vrot.lane.b32.xlu0 %v2802, 64
  %v2954 = vpop.permute.xlu0 %2953
  %2955 = vrot.lane.b32.xlu0 %v2804, 64
  %v2956 = vpop.permute.xlu0 %2955
  %2957 = vrot.lane.b32.xlu0 %v2806, 64
  %v2958 = vpop.permute.xlu0 %2957
  %2959 = vrot.lane.b32.xlu0 %v2808, 64
  %v2960 = vpop.permute.xlu0 %2959
  %2961 = vrot.lane.b32.xlu0 %v2810, 64
  %v2962 = vpop.permute.xlu0 %2961
  %2963 = vrot.lane.b32.xlu0 %v2812, 64
  %v2964 = vpop.permute.xlu0 %2963
  %2965 = vrot.lane.b32.xlu0 %v2811, 64
  %v2966 = vpop.permute.xlu0 %2965
  %vm3044 = vcmask 64512
  %v3045 = vsel %vm3044, %v102, %v415
  %v3046 = vsel %vm3044, %v103, %v417
  %v3047 = vsel %vm3044, %v104, %v419
  %v3048 = vsel %vm3044, %v105, %v421
  %v3049 = vsel %vm3044, %v106, %v423
  %v3050 = vsel %vm3044, %v107, %v425
  %v3051 = vsel %vm3044, %v108, %v427
  %v3052 = vsel %vm3044, %v109, %v429
  %v3053 = vsel %vm3044, %v110, %v431
  %v3054 = vsel %vm3044, %v111, %v433
  %v3055 = vsel %vm3044, %v112, %v435
  %v3056 = vsel %vm3044, %v113, %v437
  %v3057 = vsel %vm3044, %v114, %v439
  %v3058 = vsel %vm3044, %v115, %v441
  %v3059 = vsel %vm3044, %v116, %v443
  %v3060 = vsel %vm3044, %v117, %v445
  %v3061 = vsel %vm3044, %v118, %v447
  %v3062 = vsel %vm3044, %v119, %v449
  %v3063 = vsel %vm3044, %v120, %v451
  %v3064 = vsel %vm3044, %v121, %v453
  %v3065 = vsel %vm3044, %v122, %v455
  %v3066 = vsel %vm3044, %v123, %v457
  %v3067 = vsel %vm3044, %v124, %v459
  %v3068 = vsel %vm3044, %v125, %v461
  %v3069 = vsel %vm3044, %v126, %v463
  %v3070 = vsel %vm3044, %v127, %v465
  %v3071 = vsel %vm3044, %v128, %v467
  %v3072 = vsel %vm3044, %v129, %v469
  %v3073 = vsel %vm3044, %v130, %v471
  %v3074 = vsel %vm3044, %v131, %v473
  %v3075 = vsel %vm3044, %v132, %v475
  %v3076 = vsel %vm3044, %v133, %v477
  %v3077 = vsel %vm3044, %v134, %v479
  %v3078 = vsel %vm3044, %v135, %v481
  %v3079 = vsel %vm3044, %v136, %v483
  %v3080 = vsel %vm3044, %v137, %v485
  %v3081 = vsel %vm3044, %v138, %v487
  %v3082 = vsel %vm3044, %v139, %v489
  %v3083 = vsel %vm3044, %v140, %v491
  %v3084 = vsel %vm3044, %v141, %v493
  %v3085 = vsel %vm3044, %v142, %v495
  %v3086 = vsel %vm3044, %v143, %v497
  %v3087 = vsel %vm3044, %v144, %v499
  %v3088 = vsel %vm3044, %v145, %v501
  %v3089 = vsel %vm3044, %v146, %v503
  %v3090 = vsel %vm3044, %v147, %v505
  %v3091 = vsel %vm3044, %v148, %v507
  %v3092 = vsel %vm3044, %v149, %v509
  %v3093 = vsel %vm3044, %v150, %v511
  %v3094 = vsel %vm3044, %v151, %v513
  %v3095 = vsel %vm3044, %v152, %v515
  %v3096 = vsel %vm3044, %v153, %v517
  %v3097 = vsel %vm3044, %v154, %v519
  %v3098 = vsel %vm3044, %v155, %v521
  %v3099 = vsel %vm3044, %v156, %v523
  %v3100 = vsel %vm3044, %v157, %v525
  %v3101 = vsel %vm3044, %v158, %v527
  %v3102 = vsel %vm3044, %v159, %v529
  %v3103 = vsel %vm3044, %v160, %v531
  %v3104 = vsel %vm3044, %v161, %v533
  %v3105 = vsel %vm3044, %v162, %v535
  %v3106 = vsel %vm3044, %v163, %v537
  %v3107 = vsel %vm3044, %v164, %v539
  %v3108 = vsel %vm3044, %v165, %v541
  %v3109 = vsel %vm3044, %v166, %v543
  %v3110 = vsel %vm3044, %v167, %v545
  %v3111 = vsel %vm3044, %v168, %v547
  %v3112 = vsel %vm3044, %v169, %v549
  %v3113 = vsel %vm3044, %v170, %v551
  %v3114 = vsel %vm3044, %v171, %v553
  %v3115 = vsel %vm3044, %v172, %v555
  %v3116 = vsel %vm3044, %v173, %v557
  %v3117 = vsel %vm3044, %v174, %v559
  %v3118 = vsel %vm3044, %v175, %v561
  %v3119 = vsel %vm3044, %v176, %v563
  %v3120 = vsel %vm3044, %v177, %v565
  %v3121 = vsel %vm3044, %v178, %v567
  %vm3122 = vcmask 130048
  %v3123 = vsel %vm3122, %v3045, %v800
  %v3124 = vsel %vm3122, %v3046, %v802
  %v3125 = vsel %vm3122, %v3047, %v804
  %v3126 = vsel %vm3122, %v3048, %v806
  %v3127 = vsel %vm3122, %v3049, %v808
  %v3128 = vsel %vm3122, %v3050, %v810
  %v3129 = vsel %vm3122, %v3051, %v812
  %v3130 = vsel %vm3122, %v3052, %v814
  %v3131 = vsel %vm3122, %v3053, %v816
  %v3132 = vsel %vm3122, %v3054, %v818
  %v3133 = vsel %vm3122, %v3055, %v820
  %v3134 = vsel %vm3122, %v3056, %v822
  %v3135 = vsel %vm3122, %v3057, %v824
  %v3136 = vsel %vm3122, %v3058, %v826
  %v3137 = vsel %vm3122, %v3059, %v828
  %v3138 = vsel %vm3122, %v3060, %v830
  %v3139 = vsel %vm3122, %v3061, %v832
  %v3140 = vsel %vm3122, %v3062, %v834
  %v3141 = vsel %vm3122, %v3063, %v836
  %v3142 = vsel %vm3122, %v3064, %v838
  %v3143 = vsel %vm3122, %v3065, %v840
  %v3144 = vsel %vm3122, %v3066, %v842
  %v3145 = vsel %vm3122, %v3067, %v844
  %v3146 = vsel %vm3122, %v3068, %v846
  %v3147 = vsel %vm3122, %v3069, %v848
  %v3148 = vsel %vm3122, %v3070, %v850
  %v3149 = vsel %vm3122, %v3071, %v852
  %v3150 = vsel %vm3122, %v3072, %v854
  %v3151 = vsel %vm3122, %v3073, %v856
  %v3152 = vsel %vm3122, %v3074, %v858
  %v3153 = vsel %vm3122, %v3075, %v860
  %v3154 = vsel %vm3122, %v3076, %v862
  %v3155 = vsel %vm3122, %v3077, %v864
  %v3156 = vsel %vm3122, %v3078, %v866
  %v3157 = vsel %vm3122, %v3079, %v868
  %v3158 = vsel %vm3122, %v3080, %v870
  %v3159 = vsel %vm3122, %v3081, %v872
  %v3160 = vsel %vm3122, %v3082, %v874
  %v3161 = vsel %vm3122, %v3083, %v876
  %v3162 = vsel %vm3122, %v3084, %v878
  %v3163 = vsel %vm3122, %v3085, %v880
  %v3164 = vsel %vm3122, %v3086, %v882
  %v3165 = vsel %vm3122, %v3087, %v884
  %v3166 = vsel %vm3122, %v3088, %v886
  %v3167 = vsel %vm3122, %v3089, %v888
  %v3168 = vsel %vm3122, %v3090, %v890
  %v3169 = vsel %vm3122, %v3091, %v892
  %v3170 = vsel %vm3122, %v3092, %v894
  %v3171 = vsel %vm3122, %v3093, %v896
  %v3172 = vsel %vm3122, %v3094, %v898
  %v3173 = vsel %vm3122, %v3095, %v900
  %v3174 = vsel %vm3122, %v3096, %v902
  %v3175 = vsel %vm3122, %v3097, %v904
  %v3176 = vsel %vm3122, %v3098, %v906
  %v3177 = vsel %vm3122, %v3099, %v908
  %v3178 = vsel %vm3122, %v3100, %v910
  %v3179 = vsel %vm3122, %v3101, %v912
  %v3180 = vsel %vm3122, %v3102, %v914
  %v3181 = vsel %vm3122, %v3103, %v916
  %v3182 = vsel %vm3122, %v3104, %v918
  %v3183 = vsel %vm3122, %v3105, %v920
  %v3184 = vsel %vm3122, %v3106, %v922
  %v3185 = vsel %vm3122, %v3107, %v924
  %v3186 = vsel %vm3122, %v3108, %v926
  %v3187 = vsel %vm3122, %v3109, %v928
  %v3188 = vsel %vm3122, %v3110, %v930
  %v3189 = vsel %vm3122, %v3111, %v932
  %v3190 = vsel %vm3122, %v3112, %v934
  %v3191 = vsel %vm3122, %v3113, %v936
  %v3192 = vsel %vm3122, %v3114, %v938
  %v3193 = vsel %vm3122, %v3115, %v940
  %v3194 = vsel %vm3122, %v3116, %v942
  %v3195 = vsel %vm3122, %v3117, %v944
  %v3196 = vsel %vm3122, %v3118, %v946
  %v3197 = vsel %vm3122, %v3119, %v948
  %v3198 = vsel %vm3122, %v3120, %v950
  %v3199 = vsel %vm3122, %v3121, %v952
  %vm3200 = vcmask 195584
  %v3201 = vsel %vm3200, %v3123, %v1037
  %v3202 = vsel %vm3200, %v3124, %v1039
  %v3203 = vsel %vm3200, %v3125, %v1041
  %v3204 = vsel %vm3200, %v3126, %v1043
  %v3205 = vsel %vm3200, %v3127, %v1045
  %v3206 = vsel %vm3200, %v3128, %v1047
  %v3207 = vsel %vm3200, %v3129, %v1049
  %v3208 = vsel %vm3200, %v3130, %v1051
  %v3209 = vsel %vm3200, %v3131, %v1053
  %v3210 = vsel %vm3200, %v3132, %v1055
  %v3211 = vsel %vm3200, %v3133, %v1057
  %v3212 = vsel %vm3200, %v3134, %v1059
  %v3213 = vsel %vm3200, %v3135, %v1061
  %v3214 = vsel %vm3200, %v3136, %v1063
  %v3215 = vsel %vm3200, %v3137, %v1065
  %v3216 = vsel %vm3200, %v3138, %v1067
  %v3217 = vsel %vm3200, %v3139, %v1069
  %v3218 = vsel %vm3200, %v3140, %v1071
  %v3219 = vsel %vm3200, %v3141, %v1073
  %v3220 = vsel %vm3200, %v3142, %v1075
  %v3221 = vsel %vm3200, %v3143, %v1077
  %v3222 = vsel %vm3200, %v3144, %v1079
  %v3223 = vsel %vm3200, %v3145, %v1081
  %v3224 = vsel %vm3200, %v3146, %v1083
  %v3225 = vsel %vm3200, %v3147, %v1085
  %v3226 = vsel %vm3200, %v3148, %v1087
  %v3227 = vsel %vm3200, %v3149, %v1089
  %v3228 = vsel %vm3200, %v3150, %v1091
  %v3229 = vsel %vm3200, %v3151, %v1093
  %v3230 = vsel %vm3200, %v3152, %v1095
  %v3231 = vsel %vm3200, %v3153, %v1097
  %v3232 = vsel %vm3200, %v3154, %v1099
  %v3233 = vsel %vm3200, %v3155, %v1101
  %v3234 = vsel %vm3200, %v3156, %v1103
  %v3235 = vsel %vm3200, %v3157, %v1105
  %v3236 = vsel %vm3200, %v3158, %v1107
  %v3237 = vsel %vm3200, %v3159, %v1109
  %v3238 = vsel %vm3200, %v3160, %v1111
  %v3239 = vsel %vm3200, %v3161, %v1113
  %v3240 = vsel %vm3200, %v3162, %v1115
  %v3241 = vsel %vm3200, %v3163, %v1117
  %v3242 = vsel %vm3200, %v3164, %v1119
  %v3243 = vsel %vm3200, %v3165, %v1121
  %v3244 = vsel %vm3200, %v3166, %v1123
  %v3245 = vsel %vm3200, %v3167, %v1125
  %v3246 = vsel %vm3200, %v3168, %v1127
  %v3247 = vsel %vm3200, %v3169, %v1129
  %v3248 = vsel %vm3200, %v3170, %v1131
  %v3249 = vsel %vm3200, %v3171, %v1133
  %v3250 = vsel %vm3200, %v3172, %v1135
  %v3251 = vsel %vm3200, %v3173, %v1137
  %v3252 = vsel %vm3200, %v3174, %v1139
  %v3253 = vsel %vm3200, %v3175, %v1141
  %v3254 = vsel %vm3200, %v3176, %v1143
  %v3255 = vsel %vm3200, %v3177, %v1145
  %v3256 = vsel %vm3200, %v3178, %v1147
  %v3257 = vsel %vm3200, %v3179, %v1149
  %v3258 = vsel %vm3200, %v3180, %v1151
  %v3259 = vsel %vm3200, %v3181, %v1153
  %v3260 = vsel %vm3200, %v3182, %v1155
  %v3261 = vsel %vm3200, %v3183, %v1157
  %v3262 = vsel %vm3200, %v3184, %v1159
  %v3263 = vsel %vm3200, %v3185, %v1161
  %v3264 = vsel %vm3200, %v3186, %v1163
  %v3265 = vsel %vm3200, %v3187, %v1165
  %v3266 = vsel %vm3200, %v3188, %v1167
  %v3267 = vsel %vm3200, %v3189, %v1169
  %v3268 = vsel %vm3200, %v3190, %v1171
  %v3269 = vsel %vm3200, %v3191, %v1173
  %v3270 = vsel %vm3200, %v3192, %v1175
  %v3271 = vsel %vm3200, %v3193, %v1177
  %v3272 = vsel %vm3200, %v3194, %v1179
  %v3273 = vsel %vm3200, %v3195, %v1181
  %v3274 = vsel %vm3200, %v3196, %v1183
  %v3275 = vsel %vm3200, %v3197, %v1185
  %v3276 = vsel %vm3200, %v3198, %v1187
  %v3277 = vsel %vm3200, %v3199, %v1189
  %vm3278 = vcmask 261120
  %v3279 = vsel %vm3278, %v3201, %v1422
  %v3280 = vsel %vm3278, %v3202, %v1424
  %v3281 = vsel %vm3278, %v3203, %v1426
  %v3282 = vsel %vm3278, %v3204, %v1428
  %v3283 = vsel %vm3278, %v3205, %v1430
  %v3284 = vsel %vm3278, %v3206, %v1432
  %v3285 = vsel %vm3278, %v3207, %v1434
  %v3286 = vsel %vm3278, %v3208, %v1436
  %v3287 = vsel %vm3278, %v3209, %v1438
  %v3288 = vsel %vm3278, %v3210, %v1440
  %v3289 = vsel %vm3278, %v3211, %v1442
  %v3290 = vsel %vm3278, %v3212, %v1444
  %v3291 = vsel %vm3278, %v3213, %v1446
  %v3292 = vsel %vm3278, %v3214, %v1448
  %v3293 = vsel %vm3278, %v3215, %v1450
  %v3294 = vsel %vm3278, %v3216, %v1452
  %v3295 = vsel %vm3278, %v3217, %v1454
  %v3296 = vsel %vm3278, %v3218, %v1456
  %v3297 = vsel %vm3278, %v3219, %v1458
  %v3298 = vsel %vm3278, %v3220, %v1460
  %v3299 = vsel %vm3278, %v3221, %v1462
  %v3300 = vsel %vm3278, %v3222, %v1464
  %v3301 = vsel %vm3278, %v3223, %v1466
  %v3302 = vsel %vm3278, %v3224, %v1468
  %v3303 = vsel %vm3278, %v3225, %v1470
  %v3304 = vsel %vm3278, %v3226, %v1472
  %v3305 = vsel %vm3278, %v3227, %v1474
  %v3306 = vsel %vm3278, %v3228, %v1476
  %v3307 = vsel %vm3278, %v3229, %v1478
  %v3308 = vsel %vm3278, %v3230, %v1480
  %v3309 = vsel %vm3278, %v3231, %v1482
  %v3310 = vsel %vm3278, %v3232, %v1484
  %v3311 = vsel %vm3278, %v3233, %v1486
  %v3312 = vsel %vm3278, %v3234, %v1488
  %v3313 = vsel %vm3278, %v3235, %v1490
  %v3314 = vsel %vm3278, %v3236, %v1492
  %v3315 = vsel %vm3278, %v3237, %v1494
  %v3316 = vsel %vm3278, %v3238, %v1496
  %v3317 = vsel %vm3278, %v3239, %v1498
  %v3318 = vsel %vm3278, %v3240, %v1500
  %v3319 = vsel %vm3278, %v3241, %v1502
  %v3320 = vsel %vm3278, %v3242, %v1504
  %v3321 = vsel %vm3278, %v3243, %v1506
  %v3322 = vsel %vm3278, %v3244, %v1508
  %v3323 = vsel %vm3278, %v3245, %v1510
  %v3324 = vsel %vm3278, %v3246, %v1512
  %v3325 = vsel %vm3278, %v3247, %v1514
  %v3326 = vsel %vm3278, %v3248, %v1516
  %v3327 = vsel %vm3278, %v3249, %v1518
  %v3328 = vsel %vm3278, %v3250, %v1520
  %v3329 = vsel %vm3278, %v3251, %v1522
  %v3330 = vsel %vm3278, %v3252, %v1524
  %v3331 = vsel %vm3278, %v3253, %v1526
  %v3332 = vsel %vm3278, %v3254, %v1528
  %v3333 = vsel %vm3278, %v3255, %v1530
  %v3334 = vsel %vm3278, %v3256, %v1532
  %v3335 = vsel %vm3278, %v3257, %v1534
  %v3336 = vsel %vm3278, %v3258, %v1536
  %v3337 = vsel %vm3278, %v3259, %v1538
  %v3338 = vsel %vm3278, %v3260, %v1540
  %v3339 = vsel %vm3278, %v3261, %v1542
  %v3340 = vsel %vm3278, %v3262, %v1544
  %v3341 = vsel %vm3278, %v3263, %v1546
  %v3342 = vsel %vm3278, %v3264, %v1548
  %v3343 = vsel %vm3278, %v3265, %v1550
  %v3344 = vsel %vm3278, %v3266, %v1552
  %v3345 = vsel %vm3278, %v3267, %v1554
  %v3346 = vsel %vm3278, %v3268, %v1556
  %v3347 = vsel %vm3278, %v3269, %v1558
  %v3348 = vsel %vm3278, %v3270, %v1560
  %v3349 = vsel %vm3278, %v3271, %v1562
  %v3350 = vsel %vm3278, %v3272, %v1564
  %v3351 = vsel %vm3278, %v3273, %v1566
  %v3352 = vsel %vm3278, %v3274, %v1568
  %v3353 = vsel %vm3278, %v3275, %v1570
  %v3354 = vsel %vm3278, %v3276, %v1572
  %v3355 = vsel %vm3278, %v3277, %v1574
  %vm3356 = vcmask 326656
  %v3357 = vsel %vm3356, %v3279, %v1807
  %v3358 = vsel %vm3356, %v3280, %v1809
  %v3359 = vsel %vm3356, %v3281, %v1811
  %v3360 = vsel %vm3356, %v3282, %v1813
  %v3361 = vsel %vm3356, %v3283, %v1815
  %v3362 = vsel %vm3356, %v3284, %v1817
  %v3363 = vsel %vm3356, %v3285, %v1819
  %v3364 = vsel %vm3356, %v3286, %v1821
  %v3365 = vsel %vm3356, %v3287, %v1823
  %v3366 = vsel %vm3356, %v3288, %v1825
  %v3367 = vsel %vm3356, %v3289, %v1827
  %v3368 = vsel %vm3356, %v3290, %v1829
  %v3369 = vsel %vm3356, %v3291, %v1831
  %v3370 = vsel %vm3356, %v3292, %v1833
  %v3371 = vsel %vm3356, %v3293, %v1835
  %v3372 = vsel %vm3356, %v3294, %v1837
  %v3373 = vsel %vm3356, %v3295, %v1839
  %v3374 = vsel %vm3356, %v3296, %v1841
  %v3375 = vsel %vm3356, %v3297, %v1843
  %v3376 = vsel %vm3356, %v3298, %v1845
  %v3377 = vsel %vm3356, %v3299, %v1847
  %v3378 = vsel %vm3356, %v3300, %v1849
  %v3379 = vsel %vm3356, %v3301, %v1851
  %v3380 = vsel %vm3356, %v3302, %v1853
  %v3381 = vsel %vm3356, %v3303, %v1855
  %v3382 = vsel %vm3356, %v3304, %v1857
  %v3383 = vsel %vm3356, %v3305, %v1859
  %v3384 = vsel %vm3356, %v3306, %v1861
  %v3385 = vsel %vm3356, %v3307, %v1863
  %v3386 = vsel %vm3356, %v3308, %v1865
  %v3387 = vsel %vm3356, %v3309, %v1867
  %v3388 = vsel %vm3356, %v3310, %v1869
  %v3389 = vsel %vm3356, %v3311, %v1871
  %v3390 = vsel %vm3356, %v3312, %v1873
  %v3391 = vsel %vm3356, %v3313, %v1875
  %v3392 = vsel %vm3356, %v3314, %v1877
  %v3393 = vsel %vm3356, %v3315, %v1879
  %v3394 = vsel %vm3356, %v3316, %v1881
  %v3395 = vsel %vm3356, %v3317, %v1883
  %v3396 = vsel %vm3356, %v3318, %v1885
  %v3397 = vsel %vm3356, %v3319, %v1887
  %v3398 = vsel %vm3356, %v3320, %v1889
  %v3399 = vsel %vm3356, %v3321, %v1891
  %v3400 = vsel %vm3356, %v3322, %v1893
  %v3401 = vsel %vm3356, %v3323, %v1895
  %v3402 = vsel %vm3356, %v3324, %v1897
  %v3403 = vsel %vm3356, %v3325, %v1899
  %v3404 = vsel %vm3356, %v3326, %v1901
  %v3405 = vsel %vm3356, %v3327, %v1903
  %v3406 = vsel %vm3356, %v3328, %v1905
  %v3407 = vsel %vm3356, %v3329, %v1907
  %v3408 = vsel %vm3356, %v3330, %v1909
  %v3409 = vsel %vm3356, %v3331, %v1911
  %v3410 = vsel %vm3356, %v3332, %v1913
  %v3411 = vsel %vm3356, %v3333, %v1915
  %v3412 = vsel %vm3356, %v3334, %v1917
  %v3413 = vsel %vm3356, %v3335, %v1919
  %v3414 = vsel %vm3356, %v3336, %v1921
  %v3415 = vsel %vm3356, %v3337, %v1923
  %v3416 = vsel %vm3356, %v3338, %v1925
  %v3417 = vsel %vm3356, %v3339, %v1927
  %v3418 = vsel %vm3356, %v3340, %v1929
  %v3419 = vsel %vm3356, %v3341, %v1931
  %v3420 = vsel %vm3356, %v3342, %v1933
  %v3421 = vsel %vm3356, %v3343, %v1935
  %v3422 = vsel %vm3356, %v3344, %v1937
  %v3423 = vsel %vm3356, %v3345, %v1939
  %v3424 = vsel %vm3356, %v3346, %v1941
  %v3425 = vsel %vm3356, %v3347, %v1943
  %v3426 = vsel %vm3356, %v3348, %v1945
  %v3427 = vsel %vm3356, %v3349, %v1947
  %v3428 = vsel %vm3356, %v3350, %v1949
  %v3429 = vsel %vm3356, %v3351, %v1951
  %v3430 = vsel %vm3356, %v3352, %v1953
  %v3431 = vsel %vm3356, %v3353, %v1955
  %v3432 = vsel %vm3356, %v3354, %v1957
  %v3433 = vsel %vm3356, %v3355, %v1959
  %vm3434 = vcmask 392192
  %v3435 = vsel %vm3434, %v3357, %v2044
  %v3436 = vsel %vm3434, %v3358, %v2046
  %v3437 = vsel %vm3434, %v3359, %v2048
  %v3438 = vsel %vm3434, %v3360, %v2050
  %v3439 = vsel %vm3434, %v3361, %v2052
  %v3440 = vsel %vm3434, %v3362, %v2054
  %v3441 = vsel %vm3434, %v3363, %v2056
  %v3442 = vsel %vm3434, %v3364, %v2058
  %v3443 = vsel %vm3434, %v3365, %v2060
  %v3444 = vsel %vm3434, %v3366, %v2062
  %v3445 = vsel %vm3434, %v3367, %v2064
  %v3446 = vsel %vm3434, %v3368, %v2066
  %v3447 = vsel %vm3434, %v3369, %v2068
  %v3448 = vsel %vm3434, %v3370, %v2070
  %v3449 = vsel %vm3434, %v3371, %v2072
  %v3450 = vsel %vm3434, %v3372, %v2074
  %v3451 = vsel %vm3434, %v3373, %v2076
  %v3452 = vsel %vm3434, %v3374, %v2078
  %v3453 = vsel %vm3434, %v3375, %v2080
  %v3454 = vsel %vm3434, %v3376, %v2082
  %v3455 = vsel %vm3434, %v3377, %v2084
  %v3456 = vsel %vm3434, %v3378, %v2086
  %v3457 = vsel %vm3434, %v3379, %v2088
  %v3458 = vsel %vm3434, %v3380, %v2090
  %v3459 = vsel %vm3434, %v3381, %v2092
  %v3460 = vsel %vm3434, %v3382, %v2094
  %v3461 = vsel %vm3434, %v3383, %v2096
  %v3462 = vsel %vm3434, %v3384, %v2098
  %v3463 = vsel %vm3434, %v3385, %v2100
  %v3464 = vsel %vm3434, %v3386, %v2102
  %v3465 = vsel %vm3434, %v3387, %v2104
  %v3466 = vsel %vm3434, %v3388, %v2106
  %v3467 = vsel %vm3434, %v3389, %v2108
  %v3468 = vsel %vm3434, %v3390, %v2110
  %v3469 = vsel %vm3434, %v3391, %v2112
  %v3470 = vsel %vm3434, %v3392, %v2114
  %v3471 = vsel %vm3434, %v3393, %v2116
  %v3472 = vsel %vm3434, %v3394, %v2118
  %v3473 = vsel %vm3434, %v3395, %v2120
  %v3474 = vsel %vm3434, %v3396, %v2122
  %v3475 = vsel %vm3434, %v3397, %v2124
  %v3476 = vsel %vm3434, %v3398, %v2126
  %v3477 = vsel %vm3434, %v3399, %v2128
  %v3478 = vsel %vm3434, %v3400, %v2130
  %v3479 = vsel %vm3434, %v3401, %v2132
  %v3480 = vsel %vm3434, %v3402, %v2134
  %v3481 = vsel %vm3434, %v3403, %v2136
  %v3482 = vsel %vm3434, %v3404, %v2138
  %v3483 = vsel %vm3434, %v3405, %v2140
  %v3484 = vsel %vm3434, %v3406, %v2142
  %v3485 = vsel %vm3434, %v3407, %v2144
  %v3486 = vsel %vm3434, %v3408, %v2146
  %v3487 = vsel %vm3434, %v3409, %v2148
  %v3488 = vsel %vm3434, %v3410, %v2150
  %v3489 = vsel %vm3434, %v3411, %v2152
  %v3490 = vsel %vm3434, %v3412, %v2154
  %v3491 = vsel %vm3434, %v3413, %v2156
  %v3492 = vsel %vm3434, %v3414, %v2158
  %v3493 = vsel %vm3434, %v3415, %v2160
  %v3494 = vsel %vm3434, %v3416, %v2162
  %v3495 = vsel %vm3434, %v3417, %v2164
  %v3496 = vsel %vm3434, %v3418, %v2166
  %v3497 = vsel %vm3434, %v3419, %v2168
  %v3498 = vsel %vm3434, %v3420, %v2170
  %v3499 = vsel %vm3434, %v3421, %v2172
  %v3500 = vsel %vm3434, %v3422, %v2174
  %v3501 = vsel %vm3434, %v3423, %v2176
  %v3502 = vsel %vm3434, %v3424, %v2178
  %v3503 = vsel %vm3434, %v3425, %v2180
  %v3504 = vsel %vm3434, %v3426, %v2182
  %v3505 = vsel %vm3434, %v3427, %v2184
  %v3506 = vsel %vm3434, %v3428, %v2186
  %v3507 = vsel %vm3434, %v3429, %v2188
  %v3508 = vsel %vm3434, %v3430, %v2190
  %v3509 = vsel %vm3434, %v3431, %v2192
  %v3510 = vsel %vm3434, %v3432, %v2194
  %v3511 = vsel %vm3434, %v3433, %v2196
  %vm3512 = vcmask 457728
  %v3513 = vsel %vm3512, %v3435, %v2429
  %v3514 = vsel %vm3512, %v3436, %v2431
  %v3515 = vsel %vm3512, %v3437, %v2433
  %v3516 = vsel %vm3512, %v3438, %v2435
  %v3517 = vsel %vm3512, %v3439, %v2437
  %v3518 = vsel %vm3512, %v3440, %v2439
  %v3519 = vsel %vm3512, %v3441, %v2441
  %v3520 = vsel %vm3512, %v3442, %v2443
  %v3521 = vsel %vm3512, %v3443, %v2445
  %v3522 = vsel %vm3512, %v3444, %v2447
  %v3523 = vsel %vm3512, %v3445, %v2449
  %v3524 = vsel %vm3512, %v3446, %v2451
  %v3525 = vsel %vm3512, %v3447, %v2453
  %v3526 = vsel %vm3512, %v3448, %v2455
  %v3527 = vsel %vm3512, %v3449, %v2457
  %v3528 = vsel %vm3512, %v3450, %v2459
  %v3529 = vsel %vm3512, %v3451, %v2461
  %v3530 = vsel %vm3512, %v3452, %v2463
  %v3531 = vsel %vm3512, %v3453, %v2465
  %v3532 = vsel %vm3512, %v3454, %v2467
  %v3533 = vsel %vm3512, %v3455, %v2469
  %v3534 = vsel %vm3512, %v3456, %v2471
  %v3535 = vsel %vm3512, %v3457, %v2473
  %v3536 = vsel %vm3512, %v3458, %v2475
  %v3537 = vsel %vm3512, %v3459, %v2477
  %v3538 = vsel %vm3512, %v3460, %v2479
  %v3539 = vsel %vm3512, %v3461, %v2481
  %v3540 = vsel %vm3512, %v3462, %v2483
  %v3541 = vsel %vm3512, %v3463, %v2485
  %v3542 = vsel %vm3512, %v3464, %v2487
  %v3543 = vsel %vm3512, %v3465, %v2489
  %v3544 = vsel %vm3512, %v3466, %v2491
  %v3545 = vsel %vm3512, %v3467, %v2493
  %v3546 = vsel %vm3512, %v3468, %v2495
  %v3547 = vsel %vm3512, %v3469, %v2497
  %v3548 = vsel %vm3512, %v3470, %v2499
  %v3549 = vsel %vm3512, %v3471, %v2501
  %v3550 = vsel %vm3512, %v3472, %v2503
  %v3551 = vsel %vm3512, %v3473, %v2505
  %v3552 = vsel %vm3512, %v3474, %v2507
  %v3553 = vsel %vm3512, %v3475, %v2509
  %v3554 = vsel %vm3512, %v3476, %v2511
  %v3555 = vsel %vm3512, %v3477, %v2513
  %v3556 = vsel %vm3512, %v3478, %v2515
  %v3557 = vsel %vm3512, %v3479, %v2517
  %v3558 = vsel %vm3512, %v3480, %v2519
  %v3559 = vsel %vm3512, %v3481, %v2521
  %v3560 = vsel %vm3512, %v3482, %v2523
  %v3561 = vsel %vm3512, %v3483, %v2525
  %v3562 = vsel %vm3512, %v3484, %v2527
  %v3563 = vsel %vm3512, %v3485, %v2529
  %v3564 = vsel %vm3512, %v3486, %v2531
  %v3565 = vsel %vm3512, %v3487, %v2533
  %v3566 = vsel %vm3512, %v3488, %v2535
  %v3567 = vsel %vm3512, %v3489, %v2537
  %v3568 = vsel %vm3512, %v3490, %v2539
  %v3569 = vsel %vm3512, %v3491, %v2541
  %v3570 = vsel %vm3512, %v3492, %v2543
  %v3571 = vsel %vm3512, %v3493, %v2545
  %v3572 = vsel %vm3512, %v3494, %v2547
  %v3573 = vsel %vm3512, %v3495, %v2549
  %v3574 = vsel %vm3512, %v3496, %v2551
  %v3575 = vsel %vm3512, %v3497, %v2553
  %v3576 = vsel %vm3512, %v3498, %v2555
  %v3577 = vsel %vm3512, %v3499, %v2557
  %v3578 = vsel %vm3512, %v3500, %v2559
  %v3579 = vsel %vm3512, %v3501, %v2561
  %v3580 = vsel %vm3512, %v3502, %v2563
  %v3581 = vsel %vm3512, %v3503, %v2565
  %v3582 = vsel %vm3512, %v3504, %v2567
  %v3583 = vsel %vm3512, %v3505, %v2569
  %v3584 = vsel %vm3512, %v3506, %v2571
  %v3585 = vsel %vm3512, %v3507, %v2573
  %v3586 = vsel %vm3512, %v3508, %v2575
  %v3587 = vsel %vm3512, %v3509, %v2577
  %v3588 = vsel %vm3512, %v3510, %v2579
  %v3589 = vsel %vm3512, %v3511, %v2581
  %vm3590 = vcmask 523264
  %v3591 = vsel %vm3590, %v3513, %v2814
  %v3592 = vsel %vm3590, %v3514, %v2816
  %v3593 = vsel %vm3590, %v3515, %v2818
  %v3594 = vsel %vm3590, %v3516, %v2820
  %v3595 = vsel %vm3590, %v3517, %v2822
  %v3596 = vsel %vm3590, %v3518, %v2824
  %v3597 = vsel %vm3590, %v3519, %v2826
  %v3598 = vsel %vm3590, %v3520, %v2828
  %v3599 = vsel %vm3590, %v3521, %v2830
  %v3600 = vsel %vm3590, %v3522, %v2832
  %v3601 = vsel %vm3590, %v3523, %v2834
  %v3602 = vsel %vm3590, %v3524, %v2836
  %v3603 = vsel %vm3590, %v3525, %v2838
  %v3604 = vsel %vm3590, %v3526, %v2840
  %v3605 = vsel %vm3590, %v3527, %v2842
  %v3606 = vsel %vm3590, %v3528, %v2844
  %v3607 = vsel %vm3590, %v3529, %v2846
  %v3608 = vsel %vm3590, %v3530, %v2848
  %v3609 = vsel %vm3590, %v3531, %v2850
  %v3610 = vsel %vm3590, %v3532, %v2852
  %v3611 = vsel %vm3590, %v3533, %v2854
  %v3612 = vsel %vm3590, %v3534, %v2856
  %v3613 = vsel %vm3590, %v3535, %v2858
  %v3614 = vsel %vm3590, %v3536, %v2860
  %v3615 = vsel %vm3590, %v3537, %v2862
  %v3616 = vsel %vm3590, %v3538, %v2864
  %v3617 = vsel %vm3590, %v3539, %v2866
  %v3618 = vsel %vm3590, %v3540, %v2868
  %v3619 = vsel %vm3590, %v3541, %v2870
  %v3620 = vsel %vm3590, %v3542, %v2872
  %v3621 = vsel %vm3590, %v3543, %v2874
  %v3622 = vsel %vm3590, %v3544, %v2876
  %v3623 = vsel %vm3590, %v3545, %v2878
  %v3624 = vsel %vm3590, %v3546, %v2880
  %v3625 = vsel %vm3590, %v3547, %v2882
  %v3626 = vsel %vm3590, %v3548, %v2884
  %v3627 = vsel %vm3590, %v3549, %v2886
  %v3628 = vsel %vm3590, %v3550, %v2888
  %v3629 = vsel %vm3590, %v3551, %v2890
  %v3630 = vsel %vm3590, %v3552, %v2892
  %v3631 = vsel %vm3590, %v3553, %v2894
  %v3632 = vsel %vm3590, %v3554, %v2896
  %v3633 = vsel %vm3590, %v3555, %v2898
  %v3634 = vsel %vm3590, %v3556, %v2900
  %v3635 = vsel %vm3590, %v3557, %v2902
  %v3636 = vsel %vm3590, %v3558, %v2904
  %v3637 = vsel %vm3590, %v3559, %v2906
  %v3638 = vsel %vm3590, %v3560, %v2908
  %v3639 = vsel %vm3590, %v3561, %v2910
  %v3640 = vsel %vm3590, %v3562, %v2912
  %v3641 = vsel %vm3590, %v3563, %v2914
  %v3642 = vsel %vm3590, %v3564, %v2916
  %v3643 = vsel %vm3590, %v3565, %v2918
  %v3644 = vsel %vm3590, %v3566, %v2920
  %v3645 = vsel %vm3590, %v3567, %v2922
  %v3646 = vsel %vm3590, %v3568, %v2924
  %v3647 = vsel %vm3590, %v3569, %v2926
  %v3648 = vsel %vm3590, %v3570, %v2928
  %v3649 = vsel %vm3590, %v3571, %v2930
  %v3650 = vsel %vm3590, %v3572, %v2932
  %v3651 = vsel %vm3590, %v3573, %v2934
  %v3652 = vsel %vm3590, %v3574, %v2936
  %v3653 = vsel %vm3590, %v3575, %v2938
  %v3654 = vsel %vm3590, %v3576, %v2940
  %v3655 = vsel %vm3590, %v3577, %v2942
  %v3656 = vsel %vm3590, %v3578, %v2944
  %v3657 = vsel %vm3590, %v3579, %v2946
  %v3658 = vsel %vm3590, %v3580, %v2948
  %v3659 = vsel %vm3590, %v3581, %v2950
  %v3660 = vsel %vm3590, %v3582, %v2952
  %v3661 = vsel %vm3590, %v3583, %v2954
  %v3662 = vsel %vm3590, %v3584, %v2956
  %v3663 = vsel %vm3590, %v3585, %v2958
  %v3664 = vsel %vm3590, %v3586, %v2960
  %v3665 = vsel %vm3590, %v3587, %v2962
  %v3666 = vsel %vm3590, %v3588, %v2964
  %v3667 = vsel %vm3590, %v3589, %v2966
  %v3668 = vld [vmem:[%s1] sm:$0xf]
  %v3669 = vld [vmem:[%s1 + $0x4] sm:$0xf]
  %v3670 = vld [vmem:[%s1 + $0x8] sm:$0xf]
  %v3671 = vld [vmem:[%s1 + $0xc] sm:$0xf]
  %v3672 = vld [vmem:[%s1 + $0x10] sm:$0xf]
  %v3673 = vld [vmem:[%s1 + $0x14] sm:$0xf]
  %v3674 = vld [vmem:[%s1 + $0x18] sm:$0xf]
  %v3675 = vld [vmem:[%s1 + $0x1c] sm:$0xf]
  %v3676 = vld [vmem:[%s1 + $0x20] sm:$0xf]
  %v3677 = vpack.c.bf16 %v3592, %v3591
  %v3678 = vpack.c.bf16 %v3594, %v3593
  %v3679 = vpack.c.bf16 %v3596, %v3595
  %v3680 = vpack.c.bf16 %v3598, %v3597
  %v3681 = vpack.c.bf16 %v3600, %v3599
  %v3682 = vpack.c.bf16 %v3602, %v3601
  %v3683 = vpack.c.bf16 %v3604, %v3603
  %v3684 = vpack.c.bf16 %v3606, %v3605
  %v3685 = vpack.c.bf16 %v3608, %v3607
  %v3686 = vpack.c.bf16 %v3610, %v3609
  %v3687 = vpack.c.bf16 %v3612, %v3611
  %v3688 = vpack.c.bf16 %v3614, %v3613
  %v3689 = vpack.c.bf16 %v3616, %v3615
  %v3690 = vpack.c.bf16 %v3618, %v3617
  %v3691 = vpack.c.bf16 %v3620, %v3619
  %v3692 = vpack.c.bf16 %v3622, %v3621
  %v3693 = vpack.c.bf16 %v3624, %v3623
  %v3694 = vpack.c.bf16 %v3626, %v3625
  %v3695 = vpack.c.bf16 %v3628, %v3627
  %v3696 = vpack.c.bf16 %v3630, %v3629
  %v3697 = vpack.c.bf16 %v3632, %v3631
  %v3698 = vpack.c.bf16 %v3634, %v3633
  %v3699 = vpack.c.bf16 %v3636, %v3635
  %v3700 = vpack.c.bf16 %v3638, %v3637
  %v3701 = vpack.c.bf16 %v3640, %v3639
  %v3702 = vpack.c.bf16 %v3642, %v3641
  %v3703 = vpack.c.bf16 %v3644, %v3643
  %v3704 = vpack.c.bf16 %v3646, %v3645
  %v3705 = vpack.c.bf16 %v3648, %v3647
  %v3706 = vpack.c.bf16 %v3650, %v3649
  %v3707 = vpack.c.bf16 %v3652, %v3651
  %v3708 = vpack.c.bf16 %v3654, %v3653
  %v3709 = vpack.c.bf16 %v3656, %v3655
  %v3710 = vpack.c.bf16 %v3658, %v3657
  %v3711 = vpack.c.bf16 %v3660, %v3659
  %v3712 = vpack.c.bf16 %v3662, %v3661
  %v3713 = vpack.c.bf16 %v3664, %v3663
  %v3714 = vpack.c.bf16 %v3666, %v3665
  %v3715 = vpack.c.bf16 %v3667, %v3667
  %v3716 = vld [vmem:[%s2] sm:$0x1]
  %v3718 = vlaneseq
  %v3719 = vshrl.u32 %v3718, 7
  %v3720 = vsub.s32 0, %v3719
  %v3721 = vrot.slane %v3716, %v3720
  %v3732 = vunpack.c.l.b16 %v3668
  %v3733 = vunpack.c.l.b16 %v3669
  %v3734 = vunpack.c.l.b16 %v3670
  %v3735 = vunpack.c.l.b16 %v3671
  %v3736 = vunpack.c.l.b16 %v3672
  %v3737 = vunpack.c.l.b16 %v3673
  %v3738 = vunpack.c.l.b16 %v3674
  %v3739 = vunpack.c.l.b16 %v3675
  %v3740 = vunpack.c.l.b16 %v3676
  %v3741 = vpack.c.b16 %v3733, %v3732
  %v3742 = vpack.c.b16 %v3735, %v3734
  %v3743 = vpack.c.b16 %v3737, %v3736
  %v3744 = vpack.c.b16 %v3739, %v3738
  %v3745 = vpack.c.b16 %v3740, %v3740
  %vm3750 = vcmask 588800
  %v3752 = vsel %vm3750, %v3677, 0
  %v3755 = vsel %vm3750, %v3678, 0
  %v3758 = vsel %vm3750, %v3679, 0
  %v3761 = vsel %vm3750, %v3680, 0
  %v3764 = vsel %vm3750, %v3681, 0
  %v3767 = vsel %vm3750, %v3682, 0
  %v3770 = vsel %vm3750, %v3683, 0
  %v3773 = vsel %vm3750, %v3684, 0
  %v3776 = vsel %vm3750, %v3685, 0
  %v3779 = vsel %vm3750, %v3686, 0
  %v3782 = vsel %vm3750, %v3687, 0
  %v3785 = vsel %vm3750, %v3688, 0
  %v3788 = vsel %vm3750, %v3689, 0
  %v3791 = vsel %vm3750, %v3690, 0
  %v3794 = vsel %vm3750, %v3691, 0
  %v3797 = vsel %vm3750, %v3692, 0
  %v3800 = vsel %vm3750, %v3693, 0
  %v3803 = vsel %vm3750, %v3694, 0
  %v3806 = vsel %vm3750, %v3695, 0
  %v3809 = vsel %vm3750, %v3696, 0
  %v3812 = vsel %vm3750, %v3697, 0
  %v3815 = vsel %vm3750, %v3698, 0
  %v3818 = vsel %vm3750, %v3699, 0
  %v3821 = vsel %vm3750, %v3700, 0
  %v3824 = vsel %vm3750, %v3701, 0
  %v3827 = vsel %vm3750, %v3702, 0
  %v3830 = vsel %vm3750, %v3703, 0
  %v3833 = vsel %vm3750, %v3704, 0
  %v3836 = vsel %vm3750, %v3705, 0
  %v3839 = vsel %vm3750, %v3706, 0
  %v3842 = vsel %vm3750, %v3707, 0
  %v3845 = vsel %vm3750, %v3708, 0
  %v3848 = vsel %vm3750, %v3709, 0
  %v3851 = vsel %vm3750, %v3710, 0
  %v3854 = vsel %vm3750, %v3711, 0
  %v3857 = vsel %vm3750, %v3712, 0
  %v3860 = vsel %vm3750, %v3713, 0
  %v3863 = vsel %vm3750, %v3714, 0
  %v3866 = vsel %vm3750, %v3715, 0
  %v3869 = vsel %vm1652, %v3745, 0
  %3871 = vmatprep.subr.bf16.mxu0 0
  %3872 = vmatpush1.bf16.msra.mxu0 %v3741
  %3873 = vmatprep.subr.bf16.mxu0 0
  %3874 = vmatpush1.bf16.msra.mxu0 %v3742
  %3875 = vmatprep.subr.bf16.mxu0 0
  %3876 = vmatpush1.bf16.msra.mxu0 %v3743
  %3877 = vmatprep.subr.bf16.mxu0 0
  %3878 = vmatpush1.bf16.msra.mxu0 %v3744
  %3879 = vmatprep.subr.bf16.mxu0 0
  %3880 = vmatpush1.bf16.msra.mxu0 %v3869
  %3881 = vmatprep.subr.bf16.mxu0 0
  %3882 = vmatpush1.bf16.msra.mxu0 0
  %3883 = vmatprep.subr.bf16.mxu0 0
  %3884 = vmatpush1.bf16.msra.mxu0 0
  %3885 = vmatprep.subr.bf16.mxu0 0
  %3886 = vmatpush1.bf16.msra.mxu0 0
  %3887 = vmatprep.subr.bf16.mxu0 0
  %3888 = vmatpush1.bf16.msra.mxu0 0
  %3889 = vmatprep.subr.bf16.mxu0 0
  %3890 = vmatpush1.bf16.msra.mxu0 0
  %3891 = vmatprep.subr.bf16.mxu0 0
  %3892 = vmatpush1.bf16.msra.mxu0 0
  %3893 = vmatprep.subr.bf16.mxu0 0
  %3894 = vmatpush1.bf16.msra.mxu0 0
  %3895 = vmatprep.subr.bf16.mxu0 0
  %3896 = vmatpush1.bf16.msra.mxu0 0
  %3897 = vmatprep.subr.bf16.mxu0 0
  %3898 = vmatpush1.bf16.msra.mxu0 0
  %3899 = vmatprep.subr.bf16.mxu0 0
  %3900 = vmatpush1.bf16.msra.mxu0 0
  %3901 = vmatprep.subr.bf16.mxu0 0
  %3902 = vmatpush1.bf16.msra.mxu0 0
  %3903 = vmatprep.mubr.bf16.mxu0 0
  %3904 = vmatmul.mubr.bf16.gmra.mrb[0].mxu0 %v3752
  %v3905 = vpop.f32.mrb[0].mxu0
  %v3906 = vadd.f32 %v3721, %v3905
  %v3907 = vpop.f32.mrb[0].mxu0
  %v3908 = vpop.f32.mrb[0].mxu0
  %v3909 = vadd.f32 %v3721, %v3908
  %v3910 = vpop.f32.mrb[0].mxu0
  %3911 = vmatprep.mubr.bf16.mxu0 0
  %3912 = vmatmul.mubr.bf16.gmra.mrb[0].mxu0 %v3755
  %v3913 = vpop.f32.mrb[0].mxu0
  %v3914 = vadd.f32 %v3721, %v3913
  %v3915 = vpop.f32.mrb[0].mxu0
  %v3916 = vpop.f32.mrb[0].mxu0
  %v3917 = vadd.f32 %v3721, %v3916
  %v3918 = vpop.f32.mrb[0].mxu0
  %3919 = vmatprep.mubr.bf16.mxu0 0
  %3920 = vmatmul.mubr.bf16.gmra.mrb[0].mxu0 %v3758
  %v3921 = vpop.f32.mrb[0].mxu0
  %v3922 = vadd.f32 %v3721, %v3921
  %v3923 = vpop.f32.mrb[0].mxu0
  %v3924 = vpop.f32.mrb[0].mxu0
  %v3925 = vadd.f32 %v3721, %v3924
  %v3926 = vpop.f32.mrb[0].mxu0
  %3927 = vmatprep.mubr.bf16.mxu0 0
  %3928 = vmatmul.mubr.bf16.gmra.mrb[0].mxu0 %v3761
  %v3929 = vpop.f32.mrb[0].mxu0
  %v3930 = vadd.f32 %v3721, %v3929
  %v3931 = vpop.f32.mrb[0].mxu0
  %v3932 = vpop.f32.mrb[0].mxu0
  %v3933 = vadd.f32 %v3721, %v3932
  %v3934 = vpop.f32.mrb[0].mxu0
  %3935 = vmatprep.mubr.bf16.mxu0 0
  %3936 = vmatmul.mubr.bf16.gmra.mrb[0].mxu0 %v3764
  %v3937 = vpop.f32.mrb[0].mxu0
  %v3938 = vadd.f32 %v3721, %v3937
  %v3939 = vpop.f32.mrb[0].mxu0
  %v3940 = vpop.f32.mrb[0].mxu0
  %v3941 = vadd.f32 %v3721, %v3940
  %v3942 = vpop.f32.mrb[0].mxu0
  %3943 = vmatprep.mubr.bf16.mxu0 0
  %3944 = vmatmul.mubr.bf16.gmra.mrb[0].mxu0 %v3767
  %v3945 = vpop.f32.mrb[0].mxu0
  %v3946 = vadd.f32 %v3721, %v3945
  %v3947 = vpop.f32.mrb[0].mxu0
  %v3948 = vpop.f32.mrb[0].mxu0
  %v3949 = vadd.f32 %v3721, %v3948
  %v3950 = vpop.f32.mrb[0].mxu0
  %3951 = vmatprep.mubr.bf16.mxu0 0
  %3952 = vmatmul.mubr.bf16.gmra.mrb[0].mxu0 %v3770
  %v3953 = vpop.f32.mrb[0].mxu0
  %v3954 = vadd.f32 %v3721, %v3953
  %v3955 = vpop.f32.mrb[0].mxu0
  %v3956 = vpop.f32.mrb[0].mxu0
  %v3957 = vadd.f32 %v3721, %v3956
  %v3958 = vpop.f32.mrb[0].mxu0
  %3959 = vmatprep.mubr.bf16.mxu0 0
  %3960 = vmatmul.mubr.bf16.gmra.mrb[0].mxu0 %v3773
  %v3961 = vpop.f32.mrb[0].mxu0
  %v3962 = vadd.f32 %v3721, %v3961
  %v3963 = vpop.f32.mrb[0].mxu0
  %v3964 = vpop.f32.mrb[0].mxu0
  %v3965 = vadd.f32 %v3721, %v3964
  %v3966 = vpop.f32.mrb[0].mxu0
  %3967 = vmatprep.mubr.bf16.mxu0 0
  %3968 = vmatmul.mubr.bf16.gmra.mrb[0].mxu0 %v3776
  %v3969 = vpop.f32.mrb[0].mxu0
  %v3970 = vadd.f32 %v3721, %v3969
  %v3971 = vpop.f32.mrb[0].mxu0
  %v3972 = vpop.f32.mrb[0].mxu0
  %v3973 = vadd.f32 %v3721, %v3972
  %v3974 = vpop.f32.mrb[0].mxu0
  %3975 = vmatprep.mubr.bf16.mxu0 0
  %3976 = vmatmul.mubr.bf16.gmra.mrb[0].mxu0 %v3779
  %v3977 = vpop.f32.mrb[0].mxu0
  %v3978 = vadd.f32 %v3721, %v3977
  %v3979 = vpop.f32.mrb[0].mxu0
  %v3980 = vpop.f32.mrb[0].mxu0
  %v3981 = vadd.f32 %v3721, %v3980
  %v3982 = vpop.f32.mrb[0].mxu0
  %3983 = vmatprep.mubr.bf16.mxu0 0
  %3984 = vmatmul.mubr.bf16.gmra.mrb[0].mxu0 %v3782
  %v3985 = vpop.f32.mrb[0].mxu0
  %v3986 = vadd.f32 %v3721, %v3985
  %v3987 = vpop.f32.mrb[0].mxu0
  %v3988 = vpop.f32.mrb[0].mxu0
  %v3989 = vadd.f32 %v3721, %v3988
  %v3990 = vpop.f32.mrb[0].mxu0
  %3991 = vmatprep.mubr.bf16.mxu0 0
  %3992 = vmatmul.mubr.bf16.gmra.mrb[0].mxu0 %v3785
  %v3993 = vpop.f32.mrb[0].mxu0
  %v3994 = vadd.f32 %v3721, %v3993
  %v3995 = vpop.f32.mrb[0].mxu0
  %v3996 = vpop.f32.mrb[0].mxu0
  %v3997 = vadd.f32 %v3721, %v3996
  %v3998 = vpop.f32.mrb[0].mxu0
  %3999 = vmatprep.mubr.bf16.mxu0 0
  %4000 = vmatmul.mubr.bf16.gmra.mrb[0].mxu0 %v3788
  %v4001 = vpop.f32.mrb[0].mxu0
  %v4002 = vadd.f32 %v3721, %v4001
  %v4003 = vpop.f32.mrb[0].mxu0
  %v4004 = vpop.f32.mrb[0].mxu0
  %v4005 = vadd.f32 %v3721, %v4004
  %v4006 = vpop.f32.mrb[0].mxu0
  %4007 = vmatprep.mubr.bf16.mxu0 0
  %4008 = vmatmul.mubr.bf16.gmra.mrb[0].mxu0 %v3791
  %v4009 = vpop.f32.mrb[0].mxu0
  %v4010 = vadd.f32 %v3721, %v4009
  %v4011 = vpop.f32.mrb[0].mxu0
  %v4012 = vpop.f32.mrb[0].mxu0
  %v4013 = vadd.f32 %v3721, %v4012
  %v4014 = vpop.f32.mrb[0].mxu0
  %4015 = vmatprep.mubr.bf16.mxu0 0
  %4016 = vmatmul.mubr.bf16.gmra.mrb[0].mxu0 %v3794
  %v4017 = vpop.f32.mrb[0].mxu0
  %v4018 = vadd.f32 %v3721, %v4017
  %v4019 = vpop.f32.mrb[0].mxu0
  %v4020 = vpop.f32.mrb[0].mxu0
  %v4021 = vadd.f32 %v3721, %v4020
  %v4022 = vpop.f32.mrb[0].mxu0
  %4023 = vmatprep.mubr.bf16.mxu0 0
  %4024 = vmatmul.mubr.bf16.gmra.mrb[0].mxu0 %v3797
  %v4025 = vpop.f32.mrb[0].mxu0
  %v4026 = vadd.f32 %v3721, %v4025
  %v4027 = vpop.f32.mrb[0].mxu0
  %v4028 = vpop.f32.mrb[0].mxu0
  %v4029 = vadd.f32 %v3721, %v4028
  %v4030 = vpop.f32.mrb[0].mxu0
  %4031 = vmatprep.mubr.bf16.mxu0 0
  %4032 = vmatmul.mubr.bf16.gmra.mrb[0].mxu0 %v3800
  %v4033 = vpop.f32.mrb[0].mxu0
  %v4034 = vadd.f32 %v3721, %v4033
  %v4035 = vpop.f32.mrb[0].mxu0
  %v4036 = vpop.f32.mrb[0].mxu0
  %v4037 = vadd.f32 %v3721, %v4036
  %v4038 = vpop.f32.mrb[0].mxu0
  %4039 = vmatprep.mubr.bf16.mxu0 0
  %4040 = vmatmul.mubr.bf16.gmra.mrb[0].mxu0 %v3803
  %v4041 = vpop.f32.mrb[0].mxu0
  %v4042 = vadd.f32 %v3721, %v4041
  %v4043 = vpop.f32.mrb[0].mxu0
  %v4044 = vpop.f32.mrb[0].mxu0
  %v4045 = vadd.f32 %v3721, %v4044
  %v4046 = vpop.f32.mrb[0].mxu0
  %4047 = vmatprep.mubr.bf16.mxu0 0
  %4048 = vmatmul.mubr.bf16.gmra.mrb[0].mxu0 %v3806
  %v4049 = vpop.f32.mrb[0].mxu0
  %v4050 = vadd.f32 %v3721, %v4049
  %v4051 = vpop.f32.mrb[0].mxu0
  %v4052 = vpop.f32.mrb[0].mxu0
  %v4053 = vadd.f32 %v3721, %v4052
  %v4054 = vpop.f32.mrb[0].mxu0
  %4055 = vmatprep.mubr.bf16.mxu0 0
  %4056 = vmatmul.mubr.bf16.gmra.mrb[0].mxu0 %v3809
  %v4057 = vpop.f32.mrb[0].mxu0
  %v4058 = vadd.f32 %v3721, %v4057
  %v4059 = vpop.f32.mrb[0].mxu0
  %v4060 = vpop.f32.mrb[0].mxu0
  %v4061 = vadd.f32 %v3721, %v4060
  %v4062 = vpop.f32.mrb[0].mxu0
  %4063 = vmatprep.mubr.bf16.mxu0 0
  %4064 = vmatmul.mubr.bf16.gmra.mrb[0].mxu0 %v3812
  %v4065 = vpop.f32.mrb[0].mxu0
  %v4066 = vadd.f32 %v3721, %v4065
  %v4067 = vpop.f32.mrb[0].mxu0
  %v4068 = vpop.f32.mrb[0].mxu0
  %v4069 = vadd.f32 %v3721, %v4068
  %v4070 = vpop.f32.mrb[0].mxu0
  %4071 = vmatprep.mubr.bf16.mxu0 0
  %4072 = vmatmul.mubr.bf16.gmra.mrb[0].mxu0 %v3815
  %v4073 = vpop.f32.mrb[0].mxu0
  %v4074 = vadd.f32 %v3721, %v4073
  %v4075 = vpop.f32.mrb[0].mxu0
  %v4076 = vpop.f32.mrb[0].mxu0
  %v4077 = vadd.f32 %v3721, %v4076
  %v4078 = vpop.f32.mrb[0].mxu0
  %4079 = vmatprep.mubr.bf16.mxu0 0
  %4080 = vmatmul.mubr.bf16.gmra.mrb[0].mxu0 %v3818
  %v4081 = vpop.f32.mrb[0].mxu0
  %v4082 = vadd.f32 %v3721, %v4081
  %v4083 = vpop.f32.mrb[0].mxu0
  %v4084 = vpop.f32.mrb[0].mxu0
  %v4085 = vadd.f32 %v3721, %v4084
  %v4086 = vpop.f32.mrb[0].mxu0
  %4087 = vmatprep.mubr.bf16.mxu0 0
  %4088 = vmatmul.mubr.bf16.gmra.mrb[0].mxu0 %v3821
  %v4089 = vpop.f32.mrb[0].mxu0
  %v4090 = vadd.f32 %v3721, %v4089
  %v4091 = vpop.f32.mrb[0].mxu0
  %v4092 = vpop.f32.mrb[0].mxu0
  %v4093 = vadd.f32 %v3721, %v4092
  %v4094 = vpop.f32.mrb[0].mxu0
  %4095 = vmatprep.mubr.bf16.mxu0 0
  %4096 = vmatmul.mubr.bf16.gmra.mrb[0].mxu0 %v3824
  %v4097 = vpop.f32.mrb[0].mxu0
  %v4098 = vadd.f32 %v3721, %v4097
  %v4099 = vpop.f32.mrb[0].mxu0
  %v4100 = vpop.f32.mrb[0].mxu0
  %v4101 = vadd.f32 %v3721, %v4100
  %v4102 = vpop.f32.mrb[0].mxu0
  %4103 = vmatprep.mubr.bf16.mxu0 0
  %4104 = vmatmul.mubr.bf16.gmra.mrb[0].mxu0 %v3827
  %v4105 = vpop.f32.mrb[0].mxu0
  %v4106 = vadd.f32 %v3721, %v4105
  %v4107 = vpop.f32.mrb[0].mxu0
  %v4108 = vpop.f32.mrb[0].mxu0
  %v4109 = vadd.f32 %v3721, %v4108
  %v4110 = vpop.f32.mrb[0].mxu0
  %4111 = vmatprep.mubr.bf16.mxu0 0
  %4112 = vmatmul.mubr.bf16.gmra.mrb[0].mxu0 %v3830
  %v4113 = vpop.f32.mrb[0].mxu0
  %v4114 = vadd.f32 %v3721, %v4113
  %v4115 = vpop.f32.mrb[0].mxu0
  %v4116 = vpop.f32.mrb[0].mxu0
  %v4117 = vadd.f32 %v3721, %v4116
  %v4118 = vpop.f32.mrb[0].mxu0
  %4119 = vmatprep.mubr.bf16.mxu0 0
  %4120 = vmatmul.mubr.bf16.gmra.mrb[0].mxu0 %v3833
  %v4121 = vpop.f32.mrb[0].mxu0
  %v4122 = vadd.f32 %v3721, %v4121
  %v4123 = vpop.f32.mrb[0].mxu0
  %v4124 = vpop.f32.mrb[0].mxu0
  %v4125 = vadd.f32 %v3721, %v4124
  %v4126 = vpop.f32.mrb[0].mxu0
  %4127 = vmatprep.mubr.bf16.mxu0 0
  %4128 = vmatmul.mubr.bf16.gmra.mrb[0].mxu0 %v3836
  %v4129 = vpop.f32.mrb[0].mxu0
  %v4130 = vadd.f32 %v3721, %v4129
  %v4131 = vpop.f32.mrb[0].mxu0
  %v4132 = vpop.f32.mrb[0].mxu0
  %v4133 = vadd.f32 %v3721, %v4132
  %v4134 = vpop.f32.mrb[0].mxu0
  %4135 = vmatprep.mubr.bf16.mxu0 0
  %4136 = vmatmul.mubr.bf16.gmra.mrb[0].mxu0 %v3839
  %v4137 = vpop.f32.mrb[0].mxu0
  %v4138 = vadd.f32 %v3721, %v4137
  %v4139 = vpop.f32.mrb[0].mxu0
  %v4140 = vpop.f32.mrb[0].mxu0
  %v4141 = vadd.f32 %v3721, %v4140
  %v4142 = vpop.f32.mrb[0].mxu0
  %4143 = vmatprep.mubr.bf16.mxu0 0
  %4144 = vmatmul.mubr.bf16.gmra.mrb[0].mxu0 %v3842
  %v4145 = vpop.f32.mrb[0].mxu0
  %v4146 = vadd.f32 %v3721, %v4145
  %v4147 = vpop.f32.mrb[0].mxu0
  %v4148 = vpop.f32.mrb[0].mxu0
  %v4149 = vadd.f32 %v3721, %v4148
  %v4150 = vpop.f32.mrb[0].mxu0
  %4151 = vmatprep.mubr.bf16.mxu0 0
  %4152 = vmatmul.mubr.bf16.gmra.mrb[0].mxu0 %v3845
  %v4153 = vpop.f32.mrb[0].mxu0
  %v4154 = vadd.f32 %v3721, %v4153
  %v4155 = vpop.f32.mrb[0].mxu0
  %v4156 = vpop.f32.mrb[0].mxu0
  %v4157 = vadd.f32 %v3721, %v4156
  %v4158 = vpop.f32.mrb[0].mxu0
  %4159 = vmatprep.mubr.bf16.mxu0 0
  %4160 = vmatmul.mubr.bf16.gmra.mrb[0].mxu0 %v3848
  %v4161 = vpop.f32.mrb[0].mxu0
  %v4162 = vadd.f32 %v3721, %v4161
  %v4163 = vpop.f32.mrb[0].mxu0
  %v4164 = vpop.f32.mrb[0].mxu0
  %v4165 = vadd.f32 %v3721, %v4164
  %v4166 = vpop.f32.mrb[0].mxu0
  %4167 = vmatprep.mubr.bf16.mxu0 0
  %4168 = vmatmul.mubr.bf16.gmra.mrb[0].mxu0 %v3851
  %v4169 = vpop.f32.mrb[0].mxu0
  %v4170 = vadd.f32 %v3721, %v4169
  %v4171 = vpop.f32.mrb[0].mxu0
  %v4172 = vpop.f32.mrb[0].mxu0
  %v4173 = vadd.f32 %v3721, %v4172
  %v4174 = vpop.f32.mrb[0].mxu0
  %4175 = vmatprep.mubr.bf16.mxu0 0
  %4176 = vmatmul.mubr.bf16.gmra.mrb[0].mxu0 %v3854
  %v4177 = vpop.f32.mrb[0].mxu0
  %v4178 = vadd.f32 %v3721, %v4177
  %v4179 = vpop.f32.mrb[0].mxu0
  %v4180 = vpop.f32.mrb[0].mxu0
  %v4181 = vadd.f32 %v3721, %v4180
  %v4182 = vpop.f32.mrb[0].mxu0
  %4183 = vmatprep.mubr.bf16.mxu0 0
  %4184 = vmatmul.mubr.bf16.gmra.mrb[0].mxu0 %v3857
  %v4185 = vpop.f32.mrb[0].mxu0
  %v4186 = vadd.f32 %v3721, %v4185
  %v4187 = vpop.f32.mrb[0].mxu0
  %v4188 = vpop.f32.mrb[0].mxu0
  %v4189 = vadd.f32 %v3721, %v4188
  %v4190 = vpop.f32.mrb[0].mxu0
  %4191 = vmatprep.mubr.bf16.mxu0 0
  %4192 = vmatmul.mubr.bf16.gmra.mrb[0].mxu0 %v3860
  %v4193 = vpop.f32.mrb[0].mxu0
  %v4194 = vadd.f32 %v3721, %v4193
  %v4195 = vpop.f32.mrb[0].mxu0
  %v4196 = vpop.f32.mrb[0].mxu0
  %v4197 = vadd.f32 %v3721, %v4196
  %v4198 = vpop.f32.mrb[0].mxu0
  %4199 = vmatprep.mubr.bf16.mxu0 0
  %4200 = vmatmul.mubr.bf16.gmra.mrb[0].mxu0 %v3863
  %v4201 = vpop.f32.mrb[0].mxu0
  %v4202 = vadd.f32 %v3721, %v4201
  %v4203 = vpop.f32.mrb[0].mxu0
  %v4204 = vpop.f32.mrb[0].mxu0
  %v4205 = vadd.f32 %v3721, %v4204
  %v4206 = vpop.f32.mrb[0].mxu0
  %4207 = vmatprep.mubr.bf16.mxu0 0
  %4208 = vmatmul.mubr.bf16.gmra.mrb[0].mxu0 %v3866
  %v4209 = vpop.f32.mrb[0].mxu0
  %v4210 = vadd.f32 %v3721, %v4209
  %v4211 = vpop.f32.mrb[0].mxu0
  %v4212 = vpop.f32.mrb[0].mxu0
  %v4213 = vpop.f32.mrb[0].mxu0
  %4214 = vdwg.mxu0
  %v4215 = vmax.f32 %v3906, 0.0
  %v4216 = vmax.f32 %v3909, 0.0
  %v4217 = vmax.f32 %v3914, 0.0
  %v4218 = vmax.f32 %v3917, 0.0
  %v4219 = vmax.f32 %v3922, 0.0
  %v4220 = vmax.f32 %v3925, 0.0
  %v4221 = vmax.f32 %v3930, 0.0
  %v4222 = vmax.f32 %v3933, 0.0
  %v4223 = vmax.f32 %v3938, 0.0
  %v4224 = vmax.f32 %v3941, 0.0
  %v4225 = vmax.f32 %v3946, 0.0
  %v4226 = vmax.f32 %v3949, 0.0
  %v4227 = vmax.f32 %v3954, 0.0
  %v4228 = vmax.f32 %v3957, 0.0
  %v4229 = vmax.f32 %v3962, 0.0
  %v4230 = vmax.f32 %v3965, 0.0
  %v4231 = vmax.f32 %v3970, 0.0
  %v4232 = vmax.f32 %v3973, 0.0
  %v4233 = vmax.f32 %v3978, 0.0
  %v4234 = vmax.f32 %v3981, 0.0
  %v4235 = vmax.f32 %v3986, 0.0
  %v4236 = vmax.f32 %v3989, 0.0
  %v4237 = vmax.f32 %v3994, 0.0
  %v4238 = vmax.f32 %v3997, 0.0
  %v4239 = vmax.f32 %v4002, 0.0
  %v4240 = vmax.f32 %v4005, 0.0
  %v4241 = vmax.f32 %v4010, 0.0
  %v4242 = vmax.f32 %v4013, 0.0
  %v4243 = vmax.f32 %v4018, 0.0
  %v4244 = vmax.f32 %v4021, 0.0
  %v4245 = vmax.f32 %v4026, 0.0
  %v4246 = vmax.f32 %v4029, 0.0
  %v4247 = vmax.f32 %v4034, 0.0
  %v4248 = vmax.f32 %v4037, 0.0
  %v4249 = vmax.f32 %v4042, 0.0
  %v4250 = vmax.f32 %v4045, 0.0
  %v4251 = vmax.f32 %v4050, 0.0
  %v4252 = vmax.f32 %v4053, 0.0
  %v4253 = vmax.f32 %v4058, 0.0
  %v4254 = vmax.f32 %v4061, 0.0
  %v4255 = vmax.f32 %v4066, 0.0
  %v4256 = vmax.f32 %v4069, 0.0
  %v4257 = vmax.f32 %v4074, 0.0
  %v4258 = vmax.f32 %v4077, 0.0
  %v4259 = vmax.f32 %v4082, 0.0
  %v4260 = vmax.f32 %v4085, 0.0
  %v4261 = vmax.f32 %v4090, 0.0
  %v4262 = vmax.f32 %v4093, 0.0
  %v4263 = vmax.f32 %v4098, 0.0
  %v4264 = vmax.f32 %v4101, 0.0
  %v4265 = vmax.f32 %v4106, 0.0
  %v4266 = vmax.f32 %v4109, 0.0
  %v4267 = vmax.f32 %v4114, 0.0
  %v4268 = vmax.f32 %v4117, 0.0
  %v4269 = vmax.f32 %v4122, 0.0
  %v4270 = vmax.f32 %v4125, 0.0
  %v4271 = vmax.f32 %v4130, 0.0
  %v4272 = vmax.f32 %v4133, 0.0
  %v4273 = vmax.f32 %v4138, 0.0
  %v4274 = vmax.f32 %v4141, 0.0
  %v4275 = vmax.f32 %v4146, 0.0
  %v4276 = vmax.f32 %v4149, 0.0
  %v4277 = vmax.f32 %v4154, 0.0
  %v4278 = vmax.f32 %v4157, 0.0
  %v4279 = vmax.f32 %v4162, 0.0
  %v4280 = vmax.f32 %v4165, 0.0
  %v4281 = vmax.f32 %v4170, 0.0
  %v4282 = vmax.f32 %v4173, 0.0
  %v4283 = vmax.f32 %v4178, 0.0
  %v4284 = vmax.f32 %v4181, 0.0
  %v4285 = vmax.f32 %v4186, 0.0
  %v4286 = vmax.f32 %v4189, 0.0
  %v4287 = vmax.f32 %v4194, 0.0
  %v4288 = vmax.f32 %v4197, 0.0
  %v4289 = vmax.f32 %v4202, 0.0
  %v4290 = vmax.f32 %v4205, 0.0
  %v4291 = vmax.f32 %v4210, 0.0
  %v4292 = vld [vmem:[%s3] sm:$0x1]
  %v4294 = vlaneseq
  %v4295 = vshrl.u32 %v4294, 7
  %v4296 = vsub.s32 0, %v4295
  %v4297 = vrot.slane %v4292, %v4296
  %v4299 = vmul.f32 %v4215, %v4297
  %v4300 = vmul.f32 %v4216, %v4297
  %v4301 = vmul.f32 %v4217, %v4297
  %v4302 = vmul.f32 %v4218, %v4297
  %v4303 = vmul.f32 %v4219, %v4297
  %v4304 = vmul.f32 %v4220, %v4297
  %v4305 = vmul.f32 %v4221, %v4297
  %v4306 = vmul.f32 %v4222, %v4297
  %v4307 = vmul.f32 %v4223, %v4297
  %v4308 = vmul.f32 %v4224, %v4297
  %v4309 = vmul.f32 %v4225, %v4297
  %v4310 = vmul.f32 %v4226, %v4297
  %v4311 = vmul.f32 %v4227, %v4297
  %v4312 = vmul.f32 %v4228, %v4297
  %v4313 = vmul.f32 %v4229, %v4297
  %v4314 = vmul.f32 %v4230, %v4297
  %v4315 = vmul.f32 %v4231, %v4297
  %v4316 = vmul.f32 %v4232, %v4297
  %v4317 = vmul.f32 %v4233, %v4297
  %v4318 = vmul.f32 %v4234, %v4297
  %v4319 = vmul.f32 %v4235, %v4297
  %v4320 = vmul.f32 %v4236, %v4297
  %v4321 = vmul.f32 %v4237, %v4297
  %v4322 = vmul.f32 %v4238, %v4297
  %v4323 = vmul.f32 %v4239, %v4297
  %v4324 = vmul.f32 %v4240, %v4297
  %v4325 = vmul.f32 %v4241, %v4297
  %v4326 = vmul.f32 %v4242, %v4297
  %v4327 = vmul.f32 %v4243, %v4297
  %v4328 = vmul.f32 %v4244, %v4297
  %v4329 = vmul.f32 %v4245, %v4297
  %v4330 = vmul.f32 %v4246, %v4297
  %v4331 = vmul.f32 %v4247, %v4297
  %v4332 = vmul.f32 %v4248, %v4297
  %v4333 = vmul.f32 %v4249, %v4297
  %v4334 = vmul.f32 %v4250, %v4297
  %v4335 = vmul.f32 %v4251, %v4297
  %v4336 = vmul.f32 %v4252, %v4297
  %v4337 = vmul.f32 %v4253, %v4297
  %v4338 = vmul.f32 %v4254, %v4297
  %v4339 = vmul.f32 %v4255, %v4297
  %v4340 = vmul.f32 %v4256, %v4297
  %v4341 = vmul.f32 %v4257, %v4297
  %v4342 = vmul.f32 %v4258, %v4297
  %v4343 = vmul.f32 %v4259, %v4297
  %v4344 = vmul.f32 %v4260, %v4297
  %v4345 = vmul.f32 %v4261, %v4297
  %v4346 = vmul.f32 %v4262, %v4297
  %v4347 = vmul.f32 %v4263, %v4297
  %v4348 = vmul.f32 %v4264, %v4297
  %v4349 = vmul.f32 %v4265, %v4297
  %v4350 = vmul.f32 %v4266, %v4297
  %v4351 = vmul.f32 %v4267, %v4297
  %v4352 = vmul.f32 %v4268, %v4297
  %v4353 = vmul.f32 %v4269, %v4297
  %v4354 = vmul.f32 %v4270, %v4297
  %v4355 = vmul.f32 %v4271, %v4297
  %v4356 = vmul.f32 %v4272, %v4297
  %v4357 = vmul.f32 %v4273, %v4297
  %v4358 = vmul.f32 %v4274, %v4297
  %v4359 = vmul.f32 %v4275, %v4297
  %v4360 = vmul.f32 %v4276, %v4297
  %v4361 = vmul.f32 %v4277, %v4297
  %v4362 = vmul.f32 %v4278, %v4297
  %v4363 = vmul.f32 %v4279, %v4297
  %v4364 = vmul.f32 %v4280, %v4297
  %v4365 = vmul.f32 %v4281, %v4297
  %v4366 = vmul.f32 %v4282, %v4297
  %v4367 = vmul.f32 %v4283, %v4297
  %v4368 = vmul.f32 %v4284, %v4297
  %v4369 = vmul.f32 %v4285, %v4297
  %v4370 = vmul.f32 %v4286, %v4297
  %v4371 = vmul.f32 %v4287, %v4297
  %v4372 = vmul.f32 %v4288, %v4297
  %v4373 = vmul.f32 %v4289, %v4297
  %v4374 = vmul.f32 %v4290, %v4297
  %v4375 = vmul.f32 %v4291, %v4297
  %v4376 = vld [vmem:[%s4] sm:$0x1]
  %v4378 = vlaneseq
  %v4379 = vshrl.u32 %v4378, 7
  %v4380 = vsub.s32 0, %v4379
  %v4381 = vrot.slane %v4376, %v4380
  %v4383 = vadd.f32 %v4299, %v4381
  %v4384 = vadd.f32 %v4300, %v4381
  %v4385 = vadd.f32 %v4301, %v4381
  %v4386 = vadd.f32 %v4302, %v4381
  %v4387 = vadd.f32 %v4303, %v4381
  %v4388 = vadd.f32 %v4304, %v4381
  %v4389 = vadd.f32 %v4305, %v4381
  %v4390 = vadd.f32 %v4306, %v4381
  %v4391 = vadd.f32 %v4307, %v4381
  %v4392 = vadd.f32 %v4308, %v4381
  %v4393 = vadd.f32 %v4309, %v4381
  %v4394 = vadd.f32 %v4310, %v4381
  %v4395 = vadd.f32 %v4311, %v4381
  %v4396 = vadd.f32 %v4312, %v4381
  %v4397 = vadd.f32 %v4313, %v4381
  %v4398 = vadd.f32 %v4314, %v4381
  %v4399 = vadd.f32 %v4315, %v4381
  %v4400 = vadd.f32 %v4316, %v4381
  %v4401 = vadd.f32 %v4317, %v4381
  %v4402 = vadd.f32 %v4318, %v4381
  %v4403 = vadd.f32 %v4319, %v4381
  %v4404 = vadd.f32 %v4320, %v4381
  %v4405 = vadd.f32 %v4321, %v4381
  %v4406 = vadd.f32 %v4322, %v4381
  %v4407 = vadd.f32 %v4323, %v4381
  %v4408 = vadd.f32 %v4324, %v4381
  %v4409 = vadd.f32 %v4325, %v4381
  %v4410 = vadd.f32 %v4326, %v4381
  %v4411 = vadd.f32 %v4327, %v4381
  %v4412 = vadd.f32 %v4328, %v4381
  %v4413 = vadd.f32 %v4329, %v4381
  %v4414 = vadd.f32 %v4330, %v4381
  %v4415 = vadd.f32 %v4331, %v4381
  %v4416 = vadd.f32 %v4332, %v4381
  %v4417 = vadd.f32 %v4333, %v4381
  %v4418 = vadd.f32 %v4334, %v4381
  %v4419 = vadd.f32 %v4335, %v4381
  %v4420 = vadd.f32 %v4336, %v4381
  %v4421 = vadd.f32 %v4337, %v4381
  %v4422 = vadd.f32 %v4338, %v4381
  %v4423 = vadd.f32 %v4339, %v4381
  %v4424 = vadd.f32 %v4340, %v4381
  %v4425 = vadd.f32 %v4341, %v4381
  %v4426 = vadd.f32 %v4342, %v4381
  %v4427 = vadd.f32 %v4343, %v4381
  %v4428 = vadd.f32 %v4344, %v4381
  %v4429 = vadd.f32 %v4345, %v4381
  %v4430 = vadd.f32 %v4346, %v4381
  %v4431 = vadd.f32 %v4347, %v4381
  %v4432 = vadd.f32 %v4348, %v4381
  %v4433 = vadd.f32 %v4349, %v4381
  %v4434 = vadd.f32 %v4350, %v4381
  %v4435 = vadd.f32 %v4351, %v4381
  %v4436 = vadd.f32 %v4352, %v4381
  %v4437 = vadd.f32 %v4353, %v4381
  %v4438 = vadd.f32 %v4354, %v4381
  %v4439 = vadd.f32 %v4355, %v4381
  %v4440 = vadd.f32 %v4356, %v4381
  %v4441 = vadd.f32 %v4357, %v4381
  %v4442 = vadd.f32 %v4358, %v4381
  %v4443 = vadd.f32 %v4359, %v4381
  %v4444 = vadd.f32 %v4360, %v4381
  %v4445 = vadd.f32 %v4361, %v4381
  %v4446 = vadd.f32 %v4362, %v4381
  %v4447 = vadd.f32 %v4363, %v4381
  %v4448 = vadd.f32 %v4364, %v4381
  %v4449 = vadd.f32 %v4365, %v4381
  %v4450 = vadd.f32 %v4366, %v4381
  %v4451 = vadd.f32 %v4367, %v4381
  %v4452 = vadd.f32 %v4368, %v4381
  %v4453 = vadd.f32 %v4369, %v4381
  %v4454 = vadd.f32 %v4370, %v4381
  %v4455 = vadd.f32 %v4371, %v4381
  %v4456 = vadd.f32 %v4372, %v4381
  %v4457 = vadd.f32 %v4373, %v4381
  %v4458 = vadd.f32 %v4374, %v4381
  %v4459 = vadd.f32 %v4375, %v4381
  %v4534 = vrot.slane %v4383, 1
  %v4535 = vrot.slane %v4384, 1
  %v4536 = vsel %vm260, %v4534, %v4535
  %v4537 = vrot.slane %v4385, 1
  %v4538 = vsel %vm260, %v4535, %v4537
  %v4539 = vrot.slane %v4386, 1
  %v4540 = vsel %vm260, %v4537, %v4539
  %v4541 = vrot.slane %v4387, 1
  %v4542 = vsel %vm260, %v4539, %v4541
  %v4543 = vrot.slane %v4388, 1
  %v4544 = vsel %vm260, %v4541, %v4543
  %v4545 = vrot.slane %v4389, 1
  %v4546 = vsel %vm260, %v4543, %v4545
  %v4547 = vrot.slane %v4390, 1
  %v4548 = vsel %vm260, %v4545, %v4547
  %v4549 = vrot.slane %v4391, 1
  %v4550 = vsel %vm260, %v4547, %v4549
  %v4551 = vrot.slane %v4392, 1
  %v4552 = vsel %vm260, %v4549, %v4551
  %v4553 = vrot.slane %v4393, 1
  %v4554 = vsel %vm260, %v4551, %v4553
  %v4555 = vrot.slane %v4394, 1
  %v4556 = vsel %vm260, %v4553, %v4555
  %v4557 = vrot.slane %v4395, 1
  %v4558 = vsel %vm260, %v4555, %v4557
  %v4559 = vrot.slane %v4396, 1
  %v4560 = vsel %vm260, %v4557, %v4559
  %v4561 = vrot.slane %v4397, 1
  %v4562 = vsel %vm260, %v4559, %v4561
  %v4563 = vrot.slane %v4398, 1
  %v4564 = vsel %vm260, %v4561, %v4563
  %v4565 = vrot.slane %v4399, 1
  %v4566 = vsel %vm260, %v4563, %v4565
  %v4567 = vrot.slane %v4400, 1
  %v4568 = vsel %vm260, %v4565, %v4567
  %v4569 = vrot.slane %v4401, 1
  %v4570 = vsel %vm260, %v4567, %v4569
  %v4571 = vrot.slane %v4402, 1
  %v4572 = vsel %vm260, %v4569, %v4571
  %v4573 = vrot.slane %v4403, 1
  %v4574 = vsel %vm260, %v4571, %v4573
  %v4575 = vrot.slane %v4404, 1
  %v4576 = vsel %vm260, %v4573, %v4575
  %v4577 = vrot.slane %v4405, 1
  %v4578 = vsel %vm260, %v4575, %v4577
  %v4579 = vrot.slane %v4406, 1
  %v4580 = vsel %vm260, %v4577, %v4579
  %v4581 = vrot.slane %v4407, 1
  %v4582 = vsel %vm260, %v4579, %v4581
  %v4583 = vrot.slane %v4408, 1
  %v4584 = vsel %vm260, %v4581, %v4583
  %v4585 = vrot.slane %v4409, 1
  %v4586 = vsel %vm260, %v4583, %v4585
  %v4587 = vrot.slane %v4410, 1
  %v4588 = vsel %vm260, %v4585, %v4587
  %v4589 = vrot.slane %v4411, 1
  %v4590 = vsel %vm260, %v4587, %v4589
  %v4591 = vrot.slane %v4412, 1
  %v4592 = vsel %vm260, %v4589, %v4591
  %v4593 = vrot.slane %v4413, 1
  %v4594 = vsel %vm260, %v4591, %v4593
  %v4595 = vrot.slane %v4414, 1
  %v4596 = vsel %vm260, %v4593, %v4595
  %v4597 = vrot.slane %v4415, 1
  %v4598 = vsel %vm260, %v4595, %v4597
  %v4599 = vrot.slane %v4416, 1
  %v4600 = vsel %vm260, %v4597, %v4599
  %v4601 = vrot.slane %v4417, 1
  %v4602 = vsel %vm260, %v4599, %v4601
  %v4603 = vrot.slane %v4418, 1
  %v4604 = vsel %vm260, %v4601, %v4603
  %v4605 = vrot.slane %v4419, 1
  %v4606 = vsel %vm260, %v4603, %v4605
  %v4607 = vrot.slane %v4420, 1
  %v4608 = vsel %vm260, %v4605, %v4607
  %v4609 = vrot.slane %v4421, 1
  %v4610 = vsel %vm260, %v4607, %v4609
  %v4611 = vrot.slane %v4422, 1
  %v4612 = vsel %vm260, %v4609, %v4611
  %v4613 = vrot.slane %v4423, 1
  %v4614 = vsel %vm260, %v4611, %v4613
  %v4615 = vrot.slane %v4424, 1
  %v4616 = vsel %vm260, %v4613, %v4615
  %v4617 = vrot.slane %v4425, 1
  %v4618 = vsel %vm260, %v4615, %v4617
  %v4619 = vrot.slane %v4426, 1
  %v4620 = vsel %vm260, %v4617, %v4619
  %v4621 = vrot.slane %v4427, 1
  %v4622 = vsel %vm260, %v4619, %v4621
  %v4623 = vrot.slane %v4428, 1
  %v4624 = vsel %vm260, %v4621, %v4623
  %v4625 = vrot.slane %v4429, 1
  %v4626 = vsel %vm260, %v4623, %v4625
  %v4627 = vrot.slane %v4430, 1
  %v4628 = vsel %vm260, %v4625, %v4627
  %v4629 = vrot.slane %v4431, 1
  %v4630 = vsel %vm260, %v4627, %v4629
  %v4631 = vrot.slane %v4432, 1
  %v4632 = vsel %vm260, %v4629, %v4631
  %v4633 = vrot.slane %v4433, 1
  %v4634 = vsel %vm260, %v4631, %v4633
  %v4635 = vrot.slane %v4434, 1
  %v4636 = vsel %vm260, %v4633, %v4635
  %v4637 = vrot.slane %v4435, 1
  %v4638 = vsel %vm260, %v4635, %v4637
  %v4639 = vrot.slane %v4436, 1
  %v4640 = vsel %vm260, %v4637, %v4639
  %v4641 = vrot.slane %v4437, 1
  %v4642 = vsel %vm260, %v4639, %v4641
  %v4643 = vrot.slane %v4438, 1
  %v4644 = vsel %vm260, %v4641, %v4643
  %v4645 = vrot.slane %v4439, 1
  %v4646 = vsel %vm260, %v4643, %v4645
  %v4647 = vrot.slane %v4440, 1
  %v4648 = vsel %vm260, %v4645, %v4647
  %v4649 = vrot.slane %v4441, 1
  %v4650 = vsel %vm260, %v4647, %v4649
  %v4651 = vrot.slane %v4442, 1
  %v4652 = vsel %vm260, %v4649, %v4651
  %v4653 = vrot.slane %v4443, 1
  %v4654 = vsel %vm260, %v4651, %v4653
  %v4655 = vrot.slane %v4444, 1
  %v4656 = vsel %vm260, %v4653, %v4655
  %v4657 = vrot.slane %v4445, 1
  %v4658 = vsel %vm260, %v4655, %v4657
  %v4659 = vrot.slane %v4446, 1
  %v4660 = vsel %vm260, %v4657, %v4659
  %v4661 = vrot.slane %v4447, 1
  %v4662 = vsel %vm260, %v4659, %v4661
  %v4663 = vrot.slane %v4448, 1
  %v4664 = vsel %vm260, %v4661, %v4663
  %v4665 = vrot.slane %v4449, 1
  %v4666 = vsel %vm260, %v4663, %v4665
  %v4667 = vrot.slane %v4450, 1
  %v4668 = vsel %vm260, %v4665, %v4667
  %v4669 = vrot.slane %v4451, 1
  %v4670 = vsel %vm260, %v4667, %v4669
  %v4671 = vrot.slane %v4452, 1
  %v4672 = vsel %vm260, %v4669, %v4671
  %v4673 = vrot.slane %v4453, 1
  %v4674 = vsel %vm260, %v4671, %v4673
  %v4675 = vrot.slane %v4454, 1
  %v4676 = vsel %vm260, %v4673, %v4675
  %v4677 = vrot.slane %v4455, 1
  %v4678 = vsel %vm260, %v4675, %v4677
  %v4679 = vrot.slane %v4456, 1
  %v4680 = vsel %vm260, %v4677, %v4679
  %v4755 = vmax.f32 %v4383, %v4536
  %v4756 = vmax.f32 %v4384, %v4538
  %v4757 = vmax.f32 %v4385, %v4540
  %v4758 = vmax.f32 %v4386, %v4542
  %v4759 = vmax.f32 %v4387, %v4544
  %v4760 = vmax.f32 %v4388, %v4546
  %v4761 = vmax.f32 %v4389, %v4548
  %v4762 = vmax.f32 %v4390, %v4550
  %v4763 = vmax.f32 %v4391, %v4552
  %v4764 = vmax.f32 %v4392, %v4554
  %v4765 = vmax.f32 %v4393, %v4556
  %v4766 = vmax.f32 %v4394, %v4558
  %v4767 = vmax.f32 %v4395, %v4560
  %v4768 = vmax.f32 %v4396, %v4562
  %v4769 = vmax.f32 %v4397, %v4564
  %v4770 = vmax.f32 %v4398, %v4566
  %v4771 = vmax.f32 %v4399, %v4568
  %v4772 = vmax.f32 %v4400, %v4570
  %v4773 = vmax.f32 %v4401, %v4572
  %v4774 = vmax.f32 %v4402, %v4574
  %v4775 = vmax.f32 %v4403, %v4576
  %v4776 = vmax.f32 %v4404, %v4578
  %v4777 = vmax.f32 %v4405, %v4580
  %v4778 = vmax.f32 %v4406, %v4582
  %v4779 = vmax.f32 %v4407, %v4584
  %v4780 = vmax.f32 %v4408, %v4586
  %v4781 = vmax.f32 %v4409, %v4588
  %v4782 = vmax.f32 %v4410, %v4590
  %v4783 = vmax.f32 %v4411, %v4592
  %v4784 = vmax.f32 %v4412, %v4594
  %v4785 = vmax.f32 %v4413, %v4596
  %v4786 = vmax.f32 %v4414, %v4598
  %v4787 = vmax.f32 %v4415, %v4600
  %v4788 = vmax.f32 %v4416, %v4602
  %v4789 = vmax.f32 %v4417, %v4604
  %v4790 = vmax.f32 %v4418, %v4606
  %v4791 = vmax.f32 %v4419, %v4608
  %v4792 = vmax.f32 %v4420, %v4610
  %v4793 = vmax.f32 %v4421, %v4612
  %v4794 = vmax.f32 %v4422, %v4614
  %v4795 = vmax.f32 %v4423, %v4616
  %v4796 = vmax.f32 %v4424, %v4618
  %v4797 = vmax.f32 %v4425, %v4620
  %v4798 = vmax.f32 %v4426, %v4622
  %v4799 = vmax.f32 %v4427, %v4624
  %v4800 = vmax.f32 %v4428, %v4626
  %v4801 = vmax.f32 %v4429, %v4628
  %v4802 = vmax.f32 %v4430, %v4630
  %v4803 = vmax.f32 %v4431, %v4632
  %v4804 = vmax.f32 %v4432, %v4634
  %v4805 = vmax.f32 %v4433, %v4636
  %v4806 = vmax.f32 %v4434, %v4638
  %v4807 = vmax.f32 %v4435, %v4640
  %v4808 = vmax.f32 %v4436, %v4642
  %v4809 = vmax.f32 %v4437, %v4644
  %v4810 = vmax.f32 %v4438, %v4646
  %v4811 = vmax.f32 %v4439, %v4648
  %v4812 = vmax.f32 %v4440, %v4650
  %v4813 = vmax.f32 %v4441, %v4652
  %v4814 = vmax.f32 %v4442, %v4654
  %v4815 = vmax.f32 %v4443, %v4656
  %v4816 = vmax.f32 %v4444, %v4658
  %v4817 = vmax.f32 %v4445, %v4660
  %v4818 = vmax.f32 %v4446, %v4662
  %v4819 = vmax.f32 %v4447, %v4664
  %v4820 = vmax.f32 %v4448, %v4666
  %v4821 = vmax.f32 %v4449, %v4668
  %v4822 = vmax.f32 %v4450, %v4670
  %v4823 = vmax.f32 %v4451, %v4672
  %v4824 = vmax.f32 %v4452, %v4674
  %v4825 = vmax.f32 %v4453, %v4676
  %v4826 = vmax.f32 %v4454, %v4678
  %v4827 = vmax.f32 %v4455, %v4680
  %v4828 = vmax.f32 %v4456, %v4679
  %v4832 = vrot.slane %v4457, 1
  %v4833 = vsel %vm260, %v4679, %v4832
  %v4834 = vrot.slane %v4458, 1
  %v4835 = vsel %vm260, %v4832, %v4834
  %v4836 = vrot.slane %v4459, 1
  %v4837 = vsel %vm260, %v4834, %v4836
  %v4842 = vmax.f32 %v4456, %v4833
  %v4843 = vmax.f32 %v4457, %v4835
  %v4844 = vmax.f32 %v4458, %v4837
  %v4845 = vmax.f32 %v4459, %v4836
  %v4921 = vrot.slane %v4757, 2
  %v4922 = vrot.slane %v4758, 2
  %v4923 = vsel %vm645, %v4921, %v4922
  %v4924 = vrot.slane %v4759, 2
  %v4925 = vsel %vm645, %v4922, %v4924
  %v4926 = vrot.slane %v4760, 2
  %v4927 = vsel %vm645, %v4924, %v4926
  %v4928 = vrot.slane %v4761, 2
  %v4929 = vsel %vm645, %v4926, %v4928
  %v4930 = vrot.slane %v4762, 2
  %v4931 = vsel %vm645, %v4928, %v4930
  %v4932 = vrot.slane %v4763, 2
  %v4933 = vsel %vm645, %v4930, %v4932
  %v4934 = vrot.slane %v4764, 2
  %v4935 = vsel %vm645, %v4932, %v4934
  %v4936 = vrot.slane %v4765, 2
  %v4937 = vsel %vm645, %v4934, %v4936
  %v4938 = vrot.slane %v4766, 2
  %v4939 = vsel %vm645, %v4936, %v4938
  %v4940 = vrot.slane %v4767, 2
  %v4941 = vsel %vm645, %v4938, %v4940
  %v4942 = vrot.slane %v4768, 2
  %v4943 = vsel %vm645, %v4940, %v4942
  %v4944 = vrot.slane %v4769, 2
  %v4945 = vsel %vm645, %v4942, %v4944
  %v4946 = vrot.slane %v4770, 2
  %v4947 = vsel %vm645, %v4944, %v4946
  %v4948 = vrot.slane %v4771, 2
  %v4949 = vsel %vm645, %v4946, %v4948
  %v4950 = vrot.slane %v4772, 2
  %v4951 = vsel %vm645, %v4948, %v4950
  %v4952 = vrot.slane %v4773, 2
  %v4953 = vsel %vm645, %v4950, %v4952
  %v4954 = vrot.slane %v4774, 2
  %v4955 = vsel %vm645, %v4952, %v4954
  %v4956 = vrot.slane %v4775, 2
  %v4957 = vsel %vm645, %v4954, %v4956
  %v4958 = vrot.slane %v4776, 2
  %v4959 = vsel %vm645, %v4956, %v4958
  %v4960 = vrot.slane %v4777, 2
  %v4961 = vsel %vm645, %v4958, %v4960
  %v4962 = vrot.slane %v4778, 2
  %v4963 = vsel %vm645, %v4960, %v4962
  %v4964 = vrot.slane %v4779, 2
  %v4965 = vsel %vm645, %v4962, %v4964
  %v4966 = vrot.slane %v4780, 2
  %v4967 = vsel %vm645, %v4964, %v4966
  %v4968 = vrot.slane %v4781, 2
  %v4969 = vsel %vm645, %v4966, %v4968
  %v4970 = vrot.slane %v4782, 2
  %v4971 = vsel %vm645, %v4968, %v4970
  %v4972 = vrot.slane %v4783, 2
  %v4973 = vsel %vm645, %v4970, %v4972
  %v4974 = vrot.slane %v4784, 2
  %v4975 = vsel %vm645, %v4972, %v4974
  %v4976 = vrot.slane %v4785, 2
  %v4977 = vsel %vm645, %v4974, %v4976
  %v4978 = vrot.slane %v4786, 2
  %v4979 = vsel %vm645, %v4976, %v4978
  %v4980 = vrot.slane %v4787, 2
  %v4981 = vsel %vm645, %v4978, %v4980
  %v4982 = vrot.slane %v4788, 2
  %v4983 = vsel %vm645, %v4980, %v4982
  %v4984 = vrot.slane %v4789, 2
  %v4985 = vsel %vm645, %v4982, %v4984
  %v4986 = vrot.slane %v4790, 2
  %v4987 = vsel %vm645, %v4984, %v4986
  %v4988 = vrot.slane %v4791, 2
  %v4989 = vsel %vm645, %v4986, %v4988
  %v4990 = vrot.slane %v4792, 2
  %v4991 = vsel %vm645, %v4988, %v4990
  %v4992 = vrot.slane %v4793, 2
  %v4993 = vsel %vm645, %v4990, %v4992
  %v4994 = vrot.slane %v4794, 2
  %v4995 = vsel %vm645, %v4992, %v4994
  %v4996 = vrot.slane %v4795, 2
  %v4997 = vsel %vm645, %v4994, %v4996
  %v4998 = vrot.slane %v4796, 2
  %v4999 = vsel %vm645, %v4996, %v4998
  %v5000 = vrot.slane %v4797, 2
  %v5001 = vsel %vm645, %v4998, %v5000
  %v5002 = vrot.slane %v4798, 2
  %v5003 = vsel %vm645, %v5000, %v5002
  %v5004 = vrot.slane %v4799, 2
  %v5005 = vsel %vm645, %v5002, %v5004
  %v5006 = vrot.slane %v4800, 2
  %v5007 = vsel %vm645, %v5004, %v5006
  %v5008 = vrot.slane %v4801, 2
  %v5009 = vsel %vm645, %v5006, %v5008
  %v5010 = vrot.slane %v4802, 2
  %v5011 = vsel %vm645, %v5008, %v5010
  %v5012 = vrot.slane %v4803, 2
  %v5013 = vsel %vm645, %v5010, %v5012
  %v5014 = vrot.slane %v4804, 2
  %v5015 = vsel %vm645, %v5012, %v5014
  %v5016 = vrot.slane %v4805, 2
  %v5017 = vsel %vm645, %v5014, %v5016
  %v5018 = vrot.slane %v4806, 2
  %v5019 = vsel %vm645, %v5016, %v5018
  %v5020 = vrot.slane %v4807, 2
  %v5021 = vsel %vm645, %v5018, %v5020
  %v5022 = vrot.slane %v4808, 2
  %v5023 = vsel %vm645, %v5020, %v5022
  %v5024 = vrot.slane %v4809, 2
  %v5025 = vsel %vm645, %v5022, %v5024
  %v5026 = vrot.slane %v4810, 2
  %v5027 = vsel %vm645, %v5024, %v5026
  %v5028 = vrot.slane %v4811, 2
  %v5029 = vsel %vm645, %v5026, %v5028
  %v5030 = vrot.slane %v4812, 2
  %v5031 = vsel %vm645, %v5028, %v5030
  %v5032 = vrot.slane %v4813, 2
  %v5033 = vsel %vm645, %v5030, %v5032
  %v5034 = vrot.slane %v4814, 2
  %v5035 = vsel %vm645, %v5032, %v5034
  %v5036 = vrot.slane %v4815, 2
  %v5037 = vsel %vm645, %v5034, %v5036
  %v5038 = vrot.slane %v4816, 2
  %v5039 = vsel %vm645, %v5036, %v5038
  %v5040 = vrot.slane %v4817, 2
  %v5041 = vsel %vm645, %v5038, %v5040
  %v5042 = vrot.slane %v4818, 2
  %v5043 = vsel %vm645, %v5040, %v5042
  %v5044 = vrot.slane %v4819, 2
  %v5045 = vsel %vm645, %v5042, %v5044
  %v5046 = vrot.slane %v4820, 2
  %v5047 = vsel %vm645, %v5044, %v5046
  %v5048 = vrot.slane %v4821, 2
  %v5049 = vsel %vm645, %v5046, %v5048
  %v5050 = vrot.slane %v4822, 2
  %v5051 = vsel %vm645, %v5048, %v5050
  %v5052 = vrot.slane %v4823, 2
  %v5053 = vsel %vm645, %v5050, %v5052
  %v5054 = vrot.slane %v4824, 2
  %v5055 = vsel %vm645, %v5052, %v5054
  %v5056 = vrot.slane %v4825, 2
  %v5057 = vsel %vm645, %v5054, %v5056
  %v5058 = vrot.slane %v4826, 2
  %v5059 = vsel %vm645, %v5056, %v5058
  %v5060 = vrot.slane %v4827, 2
  %v5061 = vsel %vm645, %v5058, %v5060
  %v5062 = vrot.slane %v4842, 2
  %v5063 = vsel %vm645, %v5060, %v5062
  %v5064 = vrot.slane %v4843, 2
  %v5065 = vsel %vm645, %v5062, %v5064
  %v5066 = vrot.slane %v4844, 2
  %v5067 = vsel %vm645, %v5064, %v5066
  %v5068 = vrot.slane %v4845, 2
  %v5069 = vsel %vm645, %v5066, %v5068
  %v5144 = vmax.f32 %v4755, %v4923
  %v5145 = vmax.f32 %v4756, %v4925
  %v5146 = vmax.f32 %v4757, %v4927
  %v5147 = vmax.f32 %v4758, %v4929
  %v5148 = vmax.f32 %v4759, %v4931
  %v5149 = vmax.f32 %v4760, %v4933
  %v5150 = vmax.f32 %v4761, %v4935
  %v5151 = vmax.f32 %v4762, %v4937
  %v5152 = vmax.f32 %v4763, %v4939
  %v5153 = vmax.f32 %v4764, %v4941
  %v5154 = vmax.f32 %v4765, %v4943
  %v5155 = vmax.f32 %v4766, %v4945
  %v5156 = vmax.f32 %v4767, %v4947
  %v5157 = vmax.f32 %v4768, %v4949
  %v5158 = vmax.f32 %v4769, %v4951
  %v5159 = vmax.f32 %v4770, %v4953
  %v5160 = vmax.f32 %v4771, %v4955
  %v5161 = vmax.f32 %v4772, %v4957
  %v5162 = vmax.f32 %v4773, %v4959
  %v5163 = vmax.f32 %v4774, %v4961
  %v5164 = vmax.f32 %v4775, %v4963
  %v5165 = vmax.f32 %v4776, %v4965
  %v5166 = vmax.f32 %v4777, %v4967
  %v5167 = vmax.f32 %v4778, %v4969
  %v5168 = vmax.f32 %v4779, %v4971
  %v5169 = vmax.f32 %v4780, %v4973
  %v5170 = vmax.f32 %v4781, %v4975
  %v5171 = vmax.f32 %v4782, %v4977
  %v5172 = vmax.f32 %v4783, %v4979
  %v5173 = vmax.f32 %v4784, %v4981
  %v5174 = vmax.f32 %v4785, %v4983
  %v5175 = vmax.f32 %v4786, %v4985
  %v5176 = vmax.f32 %v4787, %v4987
  %v5177 = vmax.f32 %v4788, %v4989
  %v5178 = vmax.f32 %v4789, %v4991
  %v5179 = vmax.f32 %v4790, %v4993
  %v5180 = vmax.f32 %v4791, %v4995
  %v5181 = vmax.f32 %v4792, %v4997
  %v5182 = vmax.f32 %v4793, %v4999
  %v5183 = vmax.f32 %v4794, %v5001
  %v5184 = vmax.f32 %v4795, %v5003
  %v5185 = vmax.f32 %v4796, %v5005
  %v5186 = vmax.f32 %v4797, %v5007
  %v5187 = vmax.f32 %v4798, %v5009
  %v5188 = vmax.f32 %v4799, %v5011
  %v5189 = vmax.f32 %v4800, %v5013
  %v5190 = vmax.f32 %v4801, %v5015
  %v5191 = vmax.f32 %v4802, %v5017
  %v5192 = vmax.f32 %v4803, %v5019
  %v5193 = vmax.f32 %v4804, %v5021
  %v5194 = vmax.f32 %v4805, %v5023
  %v5195 = vmax.f32 %v4806, %v5025
  %v5196 = vmax.f32 %v4807, %v5027
  %v5197 = vmax.f32 %v4808, %v5029
  %v5198 = vmax.f32 %v4809, %v5031
  %v5199 = vmax.f32 %v4810, %v5033
  %v5200 = vmax.f32 %v4811, %v5035
  %v5201 = vmax.f32 %v4812, %v5037
  %v5202 = vmax.f32 %v4813, %v5039
  %v5203 = vmax.f32 %v4814, %v5041
  %v5204 = vmax.f32 %v4815, %v5043
  %v5205 = vmax.f32 %v4816, %v5045
  %v5206 = vmax.f32 %v4817, %v5047
  %v5207 = vmax.f32 %v4818, %v5049
  %v5208 = vmax.f32 %v4819, %v5051
  %v5209 = vmax.f32 %v4820, %v5053
  %v5210 = vmax.f32 %v4821, %v5055
  %v5211 = vmax.f32 %v4822, %v5057
  %v5212 = vmax.f32 %v4823, %v5059
  %v5213 = vmax.f32 %v4824, %v5061
  %v5214 = vmax.f32 %v4825, %v5063
  %v5215 = vmax.f32 %v4826, %v5065
  %v5216 = vmax.f32 %v4827, %v5067
  %v5217 = vmax.f32 %v4828, %v5069
  %v5218 = vpack.c.bf16 %v5145, %v5144
  %v5219 = vpack.c.bf16 %v5147, %v5146
  %v5220 = vpack.c.bf16 %v5149, %v5148
  %v5221 = vpack.c.bf16 %v5151, %v5150
  %v5222 = vpack.c.bf16 %v5153, %v5152
  %v5223 = vpack.c.bf16 %v5155, %v5154
  %v5224 = vpack.c.bf16 %v5157, %v5156
  %v5225 = vpack.c.bf16 %v5159, %v5158
  %v5226 = vpack.c.bf16 %v5161, %v5160
  %v5227 = vpack.c.bf16 %v5163, %v5162
  %v5228 = vpack.c.bf16 %v5165, %v5164
  %v5229 = vpack.c.bf16 %v5167, %v5166
  %v5230 = vpack.c.bf16 %v5169, %v5168
  %v5231 = vpack.c.bf16 %v5171, %v5170
  %v5232 = vpack.c.bf16 %v5173, %v5172
  %v5233 = vpack.c.bf16 %v5175, %v5174
  %v5234 = vpack.c.bf16 %v5177, %v5176
  %v5235 = vpack.c.bf16 %v5179, %v5178
  %v5236 = vpack.c.bf16 %v5181, %v5180
  %v5237 = vpack.c.bf16 %v5183, %v5182
  %v5238 = vpack.c.bf16 %v5185, %v5184
  %v5239 = vpack.c.bf16 %v5187, %v5186
  %v5240 = vpack.c.bf16 %v5189, %v5188
  %v5241 = vpack.c.bf16 %v5191, %v5190
  %v5242 = vpack.c.bf16 %v5193, %v5192
  %v5243 = vpack.c.bf16 %v5195, %v5194
  %v5244 = vpack.c.bf16 %v5197, %v5196
  %v5245 = vpack.c.bf16 %v5199, %v5198
  %v5246 = vpack.c.bf16 %v5201, %v5200
  %v5247 = vpack.c.bf16 %v5203, %v5202
  %v5248 = vpack.c.bf16 %v5205, %v5204
  %v5249 = vpack.c.bf16 %v5207, %v5206
  %v5250 = vpack.c.bf16 %v5209, %v5208
  %v5251 = vpack.c.bf16 %v5211, %v5210
  %v5252 = vpack.c.bf16 %v5213, %v5212
  %v5253 = vpack.c.bf16 %v5215, %v5214
  %v5254 = vpack.c.bf16 %v5217, %v5216
  %v5292 = vunpack.c.l.b16 %v5218
  %v5293 = vunpack.c.h.b16 %v5218
  %v5294 = vunpack.c.l.b16 %v5219
  %v5295 = vunpack.c.h.b16 %v5219
  %v5296 = vunpack.c.l.b16 %v5220
  %v5297 = vunpack.c.h.b16 %v5220
  %v5298 = vunpack.c.l.b16 %v5221
  %v5299 = vunpack.c.h.b16 %v5221
  %v5300 = vunpack.c.l.b16 %v5222
  %v5301 = vunpack.c.h.b16 %v5222
  %v5302 = vunpack.c.l.b16 %v5223
  %v5303 = vunpack.c.h.b16 %v5223
  %v5304 = vunpack.c.l.b16 %v5224
  %v5305 = vunpack.c.h.b16 %v5224
  %v5306 = vunpack.c.l.b16 %v5225
  %v5307 = vunpack.c.h.b16 %v5225
  %v5308 = vunpack.c.l.b16 %v5226
  %v5309 = vunpack.c.h.b16 %v5226
  %v5310 = vunpack.c.l.b16 %v5227
  %v5311 = vunpack.c.h.b16 %v5227
  %v5312 = vunpack.c.l.b16 %v5228
  %v5313 = vunpack.c.h.b16 %v5228
  %v5314 = vunpack.c.l.b16 %v5229
  %v5315 = vunpack.c.h.b16 %v5229
  %v5316 = vunpack.c.l.b16 %v5230
  %v5317 = vunpack.c.h.b16 %v5230
  %v5318 = vunpack.c.l.b16 %v5231
  %v5319 = vunpack.c.h.b16 %v5231
  %v5320 = vunpack.c.l.b16 %v5232
  %v5321 = vunpack.c.h.b16 %v5232
  %v5322 = vunpack.c.l.b16 %v5233
  %v5323 = vunpack.c.h.b16 %v5233
  %v5324 = vunpack.c.l.b16 %v5234
  %v5325 = vunpack.c.h.b16 %v5234
  %v5326 = vunpack.c.l.b16 %v5235
  %v5327 = vunpack.c.h.b16 %v5235
  %v5328 = vunpack.c.l.b16 %v5236
  %v5329 = vunpack.c.h.b16 %v5236
  %v5330 = vunpack.c.l.b16 %v5237
  %v5331 = vunpack.c.h.b16 %v5237
  %v5332 = vunpack.c.l.b16 %v5238
  %v5333 = vunpack.c.h.b16 %v5238
  %v5334 = vunpack.c.l.b16 %v5239
  %v5335 = vunpack.c.h.b16 %v5239
  %v5336 = vunpack.c.l.b16 %v5240
  %v5337 = vunpack.c.h.b16 %v5240
  %v5338 = vunpack.c.l.b16 %v5241
  %v5339 = vunpack.c.h.b16 %v5241
  %v5340 = vunpack.c.l.b16 %v5242
  %v5341 = vunpack.c.h.b16 %v5242
  %v5342 = vunpack.c.l.b16 %v5243
  %v5343 = vunpack.c.h.b16 %v5243
  %v5344 = vunpack.c.l.b16 %v5244
  %v5345 = vunpack.c.h.b16 %v5244
  %v5346 = vunpack.c.l.b16 %v5245
  %v5347 = vunpack.c.h.b16 %v5245
  %v5348 = vunpack.c.l.b16 %v5246
  %v5349 = vunpack.c.h.b16 %v5246
  %v5350 = vunpack.c.l.b16 %v5247
  %v5351 = vunpack.c.h.b16 %v5247
  %v5352 = vunpack.c.l.b16 %v5248
  %v5353 = vunpack.c.h.b16 %v5248
  %v5354 = vunpack.c.l.b16 %v5249
  %v5355 = vunpack.c.h.b16 %v5249
  %v5356 = vunpack.c.l.b16 %v5250
  %v5357 = vunpack.c.h.b16 %v5250
  %v5358 = vunpack.c.l.b16 %v5251
  %v5359 = vunpack.c.h.b16 %v5251
  %v5360 = vunpack.c.l.b16 %v5252
  %v5361 = vunpack.c.h.b16 %v5252
  %v5362 = vunpack.c.l.b16 %v5253
  %v5363 = vunpack.c.h.b16 %v5253
  %v5364 = vunpack.c.l.b16 %v5254
  %v5365 = vunpack.c.h.b16 %v5254
  %v5366 = vpack.c.b16 %v5292, %v5292
  %v5367 = vpack.c.b16 %v5293, %v5293
  %v5368 = vpack.c.b16 %v5294, %v5294
  %v5369 = vpack.c.b16 %v5295, %v5295
  %v5370 = vpack.c.b16 %v5296, %v5296
  %v5371 = vpack.c.b16 %v5297, %v5297
  %v5372 = vpack.c.b16 %v5298, %v5298
  %v5373 = vpack.c.b16 %v5299, %v5299
  %v5374 = vpack.c.b16 %v5300, %v5300
  %v5375 = vpack.c.b16 %v5301, %v5301
  %v5376 = vpack.c.b16 %v5302, %v5302
  %v5377 = vpack.c.b16 %v5303, %v5303
  %v5378 = vpack.c.b16 %v5304, %v5304
  %v5379 = vpack.c.b16 %v5305, %v5305
  %v5380 = vpack.c.b16 %v5306, %v5306
  %v5381 = vpack.c.b16 %v5307, %v5307
  %v5382 = vpack.c.b16 %v5308, %v5308
  %v5383 = vpack.c.b16 %v5309, %v5309
  %v5384 = vpack.c.b16 %v5310, %v5310
  %v5385 = vpack.c.b16 %v5311, %v5311
  %v5386 = vpack.c.b16 %v5312, %v5312
  %v5387 = vpack.c.b16 %v5313, %v5313
  %v5388 = vpack.c.b16 %v5314, %v5314
  %v5389 = vpack.c.b16 %v5315, %v5315
  %v5390 = vpack.c.b16 %v5316, %v5316
  %v5391 = vpack.c.b16 %v5317, %v5317
  %v5392 = vpack.c.b16 %v5318, %v5318
  %v5393 = vpack.c.b16 %v5319, %v5319
  %v5394 = vpack.c.b16 %v5320, %v5320
  %v5395 = vpack.c.b16 %v5321, %v5321
  %v5396 = vpack.c.b16 %v5322, %v5322
  %v5397 = vpack.c.b16 %v5323, %v5323
  %v5398 = vpack.c.b16 %v5324, %v5324
  %v5399 = vpack.c.b16 %v5325, %v5325
  %v5400 = vpack.c.b16 %v5326, %v5326
  %v5401 = vpack.c.b16 %v5327, %v5327
  %v5402 = vpack.c.b16 %v5328, %v5328
  %v5403 = vpack.c.b16 %v5329, %v5329
  %v5404 = vpack.c.b16 %v5330, %v5330
  %v5405 = vpack.c.b16 %v5331, %v5331
  %v5406 = vpack.c.b16 %v5332, %v5332
  %v5407 = vpack.c.b16 %v5333, %v5333
  %v5408 = vpack.c.b16 %v5334, %v5334
  %v5409 = vpack.c.b16 %v5335, %v5335
  %v5410 = vpack.c.b16 %v5336, %v5336
  %v5411 = vpack.c.b16 %v5337, %v5337
  %v5412 = vpack.c.b16 %v5338, %v5338
  %v5413 = vpack.c.b16 %v5339, %v5339
  %v5414 = vpack.c.b16 %v5340, %v5340
  %v5415 = vpack.c.b16 %v5341, %v5341
  %v5416 = vpack.c.b16 %v5342, %v5342
  %v5417 = vpack.c.b16 %v5343, %v5343
  %v5418 = vpack.c.b16 %v5344, %v5344
  %v5419 = vpack.c.b16 %v5345, %v5345
  %v5420 = vpack.c.b16 %v5346, %v5346
  %v5421 = vpack.c.b16 %v5347, %v5347
  %v5422 = vpack.c.b16 %v5348, %v5348
  %v5423 = vpack.c.b16 %v5349, %v5349
  %v5424 = vpack.c.b16 %v5350, %v5350
  %v5425 = vpack.c.b16 %v5351, %v5351
  %v5426 = vpack.c.b16 %v5352, %v5352
  %v5427 = vpack.c.b16 %v5353, %v5353
  %v5428 = vpack.c.b16 %v5354, %v5354
  %v5429 = vpack.c.b16 %v5355, %v5355
  %v5430 = vpack.c.b16 %v5356, %v5356
  %v5431 = vpack.c.b16 %v5357, %v5357
  %v5432 = vpack.c.b16 %v5358, %v5358
  %v5433 = vpack.c.b16 %v5359, %v5359
  %v5434 = vpack.c.b16 %v5360, %v5360
  %v5435 = vpack.c.b16 %v5361, %v5361
  %v5436 = vpack.c.b16 %v5362, %v5362
  %v5437 = vpack.c.b16 %v5363, %v5363
  %v5438 = vpack.c.b16 %v5364, %v5364
  %v5439 = vpack.c.b16 %v5365, %v5365
  %vm5514 = vcmask 257024
  %5515 = vst.msk [vmem:[%s5] sm:$0xf] %vm5514, %v5366
  %5516 = vst.msk [vmem:[%s5 + $0x4] sm:$0xf] %vm5514, %v5367
  %5517 = vst.msk [vmem:[%s5 + $0x8] sm:$0xf] %vm5514, %v5368
  %5518 = vst.msk [vmem:[%s5 + $0xc] sm:$0xf] %vm5514, %v5369
  %5519 = vst.msk [vmem:[%s5 + $0x10] sm:$0xf] %vm5514, %v5370
  %5520 = vst.msk [vmem:[%s5 + $0x14] sm:$0xf] %vm5514, %v5371
  %5521 = vst.msk [vmem:[%s5 + $0x18] sm:$0xf] %vm5514, %v5372
  %5522 = vst.msk [vmem:[%s5 + $0x1c] sm:$0xf] %vm5514, %v5373
  %5523 = vst.msk [vmem:[%s5 + $0x20] sm:$0xf] %vm5514, %v5374
  %5524 = vst.msk [vmem:[%s5 + $0x24] sm:$0xf] %vm5514, %v5375
  %5525 = vst.msk [vmem:[%s5 + $0x28] sm:$0xf] %vm5514, %v5376
  %5526 = vst.msk [vmem:[%s5 + $0x2c] sm:$0xf] %vm5514, %v5377
  %5527 = vst.msk [vmem:[%s5 + $0x30] sm:$0xf] %vm5514, %v5378
  %5528 = vst.msk [vmem:[%s5 + $0x34] sm:$0xf] %vm5514, %v5379
  %5529 = vst.msk [vmem:[%s5 + $0x38] sm:$0xf] %vm5514, %v5380
  %5530 = vst.msk [vmem:[%s5 + $0x3c] sm:$0xf] %vm5514, %v5381
  %5531 = vst.msk [vmem:[%s5 + $0x40] sm:$0xf] %vm5514, %v5382
  %5532 = vst.msk [vmem:[%s5 + $0x44] sm:$0xf] %vm5514, %v5383
  %5533 = vst.msk [vmem:[%s5 + $0x48] sm:$0xf] %vm5514, %v5384
  %5534 = vst.msk [vmem:[%s5 + $0x4c] sm:$0xf] %vm5514, %v5385
  %5535 = vst.msk [vmem:[%s5 + $0x50] sm:$0xf] %vm5514, %v5386
  %5536 = vst.msk [vmem:[%s5 + $0x54] sm:$0xf] %vm5514, %v5387
  %5537 = vst.msk [vmem:[%s5 + $0x58] sm:$0xf] %vm5514, %v5388
  %5538 = vst.msk [vmem:[%s5 + $0x5c] sm:$0xf] %vm5514, %v5389
  %5539 = vst.msk [vmem:[%s5 + $0x60] sm:$0xf] %vm5514, %v5390
  %5540 = vst.msk [vmem:[%s5 + $0x64] sm:$0xf] %vm5514, %v5391
  %5541 = vst.msk [vmem:[%s5 + $0x68] sm:$0xf] %vm5514, %v5392
  %5542 = vst.msk [vmem:[%s5 + $0x6c] sm:$0xf] %vm5514, %v5393
  %5543 = vst.msk [vmem:[%s5 + $0x70] sm:$0xf] %vm5514, %v5394
  %5544 = vst.msk [vmem:[%s5 + $0x74] sm:$0xf] %vm5514, %v5395
  %5545 = vst.msk [vmem:[%s5 + $0x78] sm:$0xf] %vm5514, %v5396
  %5546 = vst.msk [vmem:[%s5 + $0x7c] sm:$0xf] %vm5514, %v5397
  %5547 = vst.msk [vmem:[%s5 + $0x80] sm:$0xf] %vm5514, %v5398
  %5548 = vst.msk [vmem:[%s5 + $0x84] sm:$0xf] %vm5514, %v5399
  %5549 = vst.msk [vmem:[%s5 + $0x88] sm:$0xf] %vm5514, %v5400
  %5550 = vst.msk [vmem:[%s5 + $0x8c] sm:$0xf] %vm5514, %v5401
  %5551 = vst.msk [vmem:[%s5 + $0x90] sm:$0xf] %vm5514, %v5402
  %5552 = vst.msk [vmem:[%s5 + $0x94] sm:$0xf] %vm5514, %v5403
  %5553 = vst.msk [vmem:[%s5 + $0x98] sm:$0xf] %vm5514, %v5404
  %5554 = vst.msk [vmem:[%s5 + $0x9c] sm:$0xf] %vm5514, %v5405
  %5555 = vst.msk [vmem:[%s5 + $0xa0] sm:$0xf] %vm5514, %v5406
  %5556 = vst.msk [vmem:[%s5 + $0xa4] sm:$0xf] %vm5514, %v5407
  %5557 = vst.msk [vmem:[%s5 + $0xa8] sm:$0xf] %vm5514, %v5408
  %5558 = vst.msk [vmem:[%s5 + $0xac] sm:$0xf] %vm5514, %v5409
  %5559 = vst.msk [vmem:[%s5 + $0xb0] sm:$0xf] %vm5514, %v5410
  %5560 = vst.msk [vmem:[%s5 + $0xb4] sm:$0xf] %vm5514, %v5411
  %5561 = vst.msk [vmem:[%s5 + $0xb8] sm:$0xf] %vm5514, %v5412
  %5562 = vst.msk [vmem:[%s5 + $0xbc] sm:$0xf] %vm5514, %v5413
  %5563 = vst.msk [vmem:[%s5 + $0xc0] sm:$0xf] %vm5514, %v5414
  %5564 = vst.msk [vmem:[%s5 + $0xc4] sm:$0xf] %vm5514, %v5415
  %5565 = vst.msk [vmem:[%s5 + $0xc8] sm:$0xf] %vm5514, %v5416
  %5566 = vst.msk [vmem:[%s5 + $0xcc] sm:$0xf] %vm5514, %v5417
  %5567 = vst.msk [vmem:[%s5 + $0xd0] sm:$0xf] %vm5514, %v5418
  %5568 = vst.msk [vmem:[%s5 + $0xd4] sm:$0xf] %vm5514, %v5419
  %5569 = vst.msk [vmem:[%s5 + $0xd8] sm:$0xf] %vm5514, %v5420
  %5570 = vst.msk [vmem:[%s5 + $0xdc] sm:$0xf] %vm5514, %v5421
  %5571 = vst.msk [vmem:[%s5 + $0xe0] sm:$0xf] %vm5514, %v5422
  %5572 = vst.msk [vmem:[%s5 + $0xe4] sm:$0xf] %vm5514, %v5423
  %5573 = vst.msk [vmem:[%s5 + $0xe8] sm:$0xf] %vm5514, %v5424
  %5574 = vst.msk [vmem:[%s5 + $0xec] sm:$0xf] %vm5514, %v5425
  %5575 = vst.msk [vmem:[%s5 + $0xf0] sm:$0xf] %vm5514, %v5426
  %5576 = vst.msk [vmem:[%s5 + $0xf4] sm:$0xf] %vm5514, %v5427
  %5577 = vst.msk [vmem:[%s5 + $0xf8] sm:$0xf] %vm5514, %v5428
  %5578 = vst.msk [vmem:[%s5 + $0xfc] sm:$0xf] %vm5514, %v5429
  %5579 = vst.msk [vmem:[%s5 + $0x100] sm:$0xf] %vm5514, %v5430
  %5580 = vst.msk [vmem:[%s5 + $0x104] sm:$0xf] %vm5514, %v5431
  %5581 = vst.msk [vmem:[%s5 + $0x108] sm:$0xf] %vm5514, %v5432
  %5582 = vst.msk [vmem:[%s5 + $0x10c] sm:$0xf] %vm5514, %v5433
  %5583 = vst.msk [vmem:[%s5 + $0x110] sm:$0xf] %vm5514, %v5434
  %5584 = vst.msk [vmem:[%s5 + $0x114] sm:$0xf] %vm5514, %v5435
  %5585 = vst.msk [vmem:[%s5 + $0x118] sm:$0xf] %vm5514, %v5436
  %5586 = vst.msk [vmem:[%s5 + $0x11c] sm:$0xf] %vm5514, %v5437
  %5587 = vst.msk [vmem:[%s5 + $0x120] sm:$0xf] %vm5514, %v5438
  %vm5588 = vcmask 257024
  %vm5589 = vsmask.f32 3328
  %vm5590 = vmand %vm5588, %vm5589
  %v5591 = vld [vmem:[%s5 + $0x124] sm:$0xf]
  %v5592 = vsel %vm5590, %v5439, %v5591
  %5593 = vst [vmem:[%s5 + $0x124] sm:$0xf] %v5592
  // Predicated region
  $region22: #{forward.3} parent=0 // pred_check
    _
  $region23: #{forward.3} parent=0 // pred_check_branch
    %5595 = sbr.rel (0) target = $region25
  $region24: #{forward.3} parent=0 // pred_region
    _
  $region25: #{forward.3} parent=0 // pred_fallthru
    _
  // Predicated region
  $region26: #{forward.3} parent=0 // pred_check
    _
  $region27: #{forward.3} parent=0 // pred_check_branch
    %5597 = sbr.rel (0) target = $region29
  $region28: #{forward.3} parent=0 // pred_region
    _
  $region29: #{forward.3} parent=0 // pred_fallthru
    _

</llo_original>
